<compile_context>
chip_gen: v6e
topology: v6e:2x2x1
jax: 0.10.0
libtpu: 0.0.40
codegen_flags: <defaults>
</compile_context>

<pallas_src>
import jax
import jax.numpy as jnp
from jax.experimental import pallas as pl
from jax.experimental.pallas import tpu as pltpu

LAYER_START = 4  # WeightedLayerPooling default (num_hidden_layers=12 -> 9 pooled layers)


def attention_pooling_kernel(lw_ref, b_ref, first_ref, pooled_ref, mask_ref, w_ref,
                             out_ref, m_sc, l_sc, acc_sc):
    # lw_ref:     (n_pool,)              SMEM  pre-normalized layer-pooling weights
    # b_ref:      (1, 1)                 SMEM  attention linear bias
    # first_ref:  (Bt, Ts, D)            VMEM  layer-0 embeddings tile (native dtype)
    # pooled_ref: (n_pool, Bt, Ts, D)    VMEM  layers[4:] embeddings tile (native dtype)
    # mask_ref:   (Bt, Ts)               VMEM  attention mask (1 = token, 0 = pad), f32
    # w_ref:      (2, D)                 VMEM  split attention weight (row0: first, row1: inp)
    # out_ref:    (Bt, D)                VMEM  sentence embedding (written on last seq step)
    # m_sc/l_sc/acc_sc: online-softmax running max / denom / weighted-sum accumulator
    s_idx = pl.program_id(1)
    n_pool = pooled_ref.shape[0]

    @pl.when(s_idx == 0)
    def _():
        m_sc[...] = jnp.full_like(m_sc, -jnp.inf)
        l_sc[...] = jnp.zeros_like(l_sc)
        acc_sc[...] = jnp.zeros_like(acc_sc)

    # --- WeightedLayerPooling: pre-normalized weights, pairwise (tree) summation ---
    def wsum(lo, hi):
        if hi - lo == 1:
            return lw_ref[lo] * pooled_ref[lo].astype(jnp.float32)
        mid = (lo + hi) // 2
        return wsum(lo, mid) + wsum(mid, hi)

    pooled = wsum(0, n_pool)                                             # (Bt, Ts, D) f32

    # --- attention scores: Linear(2D -> 1) on concat([first, inp]) == split-weight dot ---
    # TODO(synk): if profiling shows the VALU slot binding, these two dots can move to the
    # idle MXU as (Bt*Ts, D) x (D, 1) bf16 matmuls.
    s_first = jnp.sum(first_ref[...].astype(jnp.float32) * w_ref[0:1, :], axis=-1)  # (Bt, Ts)
    s_inp = jnp.sum(pooled * w_ref[1:2, :], axis=-1)                                # (Bt, Ts)
    scores = s_first + s_inp + b_ref[0, 0]                               # (Bt, Ts)

    # Exact masked_fill(-100000): keep*score + (keep-1)*1e5  (no compare/select needed).
    keep = mask_ref[...]                                                 # (Bt, Ts) in {0, 1}
    scores = scores * keep + (keep - 1.0) * 100000.0

    # --- online softmax over the sequence, accumulating the weighted sum of `pooled` ---
    cur_max = jnp.max(scores, axis=-1, keepdims=True)                    # (Bt, 1)
    m_new = jnp.maximum(m_sc[...], cur_max)                              # (Bt, 1)
    alpha = jnp.exp(m_sc[...] - m_new)                                   # (Bt, 1)
    p = jnp.exp(scores - m_new)                                          # (Bt, Ts)
    l_sc[...] = alpha * l_sc[...] + jnp.sum(p, axis=-1, keepdims=True)   # (Bt, 1)
    acc_sc[...] = alpha * acc_sc[...] + jnp.sum(p[:, :, None] * pooled, axis=1)  # (Bt, D)
    m_sc[...] = m_new

    @pl.when(s_idx == pl.num_programs(1) - 1)
    def _():
        inv_l = pl.reciprocal(l_sc[...], approx=False)                   # EUP path, exact
        out_ref[...] = (acc_sc[...] * inv_l).astype(out_ref.dtype)       # (Bt, D)


def _vmem_capacity_bytes():
    try:
        info = pltpu.get_tpu_info()
        cap = getattr(info, "vmem_capacity_bytes", None)
        if cap:
            return int(cap)
    except Exception:
        pass
    return 64 << 20  # conservative default (v7x-sized)


def attention_pooling(all_layers, attention_mask, layer_weights, att_w, att_b,
                      *, block_b=None, tile_s=None):
    """all_layers: (L, B, S, D) native dtype; attention_mask: (B, S);
    layer_weights: (L - LAYER_START,); att_w: (2D, 1); att_b: (1,). Returns (B, D) f32."""
    L, B, S, D = all_layers.shape
    assert L > LAYER_START
    n_pool = L - LAYER_START
    assert att_w.shape == (2 * D, 1)
    # D that is not a multiple of 128 still compiles (full-dim block) but pads lanes.

    # ---- generation-specific VMEM budget ----
    vmem_cap = _vmem_capacity_bytes()
    if vmem_cap >= (128 << 20):
        vmem_target = 112 << 20                       # v5e / v6e: 128 MiB physical
    else:
        vmem_target = max(vmem_cap - (8 << 20), 32 << 20)   # v7x: leave ~8 MiB headroom

    in_itemsize = jnp.dtype(all_layers.dtype).itemsize

    def step_footprint(bt, ts):
        emb = (n_pool + 1) * bt * ts * D * in_itemsize     # first + pooled layers (native dtype)
        mask_b = bt * ts * 4                               # f32 mask tile
        w_b = 2 * D * 4
        out_b = bt * D * 4
        f32_work = 4 * bt * ts * D * 4                     # pooled f32, tree partials, p*pooled temp
        scratch = 3 * bt * D * 4
        return 2 * (emb + mask_b + w_b + out_b) + f32_work + scratch  # inputs/outputs double-buffered

    # ---- tiling choices ----
    if block_b is None:
        if B % 8 == 0 and B >= 16:
            block_b = 8    # >= 2 blocks on the "parallel" batch axis (keeps both v7x TCs busy)
        else:
            block_b = B    # single block; fine on 1-TC v5e/v6e
            # TODO(synk): pad B to get >= 2 batch blocks on v7x when B < 16.
    assert B % block_b == 0
    assert block_b == B or block_b % 8 == 0

    if tile_s is None:
        tile_s = S                                          # full-dim block is always legal
        if S % 128 == 0:
            tile_s = 128
            for t in range(128, S + 1, 128):                # largest lane-dense tile that fits budget
                if S % t == 0 and step_footprint(block_b, t) <= vmem_target:
                    tile_s = t
    assert S % tile_s == 0
    assert tile_s == S or tile_s % 128 == 0                 # lane-dense 2-D mask/score tiles
    grid = (B // block_b, S // tile_s)

    # ---- host-side prep (tiny) ----
    lw = layer_weights.astype(jnp.float32)
    lw_norm = lw / jnp.sum(lw)                              # fold 1/sum(w) -> no in-kernel divide
    bias = att_b.reshape(1, 1).astype(jnp.float32)
    w_split = att_w.astype(jnp.float32).reshape(2, D)       # row0 -> first, row1 -> inp
    mask_f = attention_mask.astype(jnp.float32)             # (B, S), lane-dense in the kernel

    # Only the layers the kernel reads; embeddings stay in native dtype (no f32 upcast copy).
    first = all_layers[0]                                   # (B, S, D)
    pooled_layers = all_layers[LAYER_START:]                # (n_pool, B, S, D)

    vmem_budget = int(min(max(step_footprint(block_b, tile_s) + (6 << 20), 32 << 20),
                          vmem_target))

    return pl.pallas_call(
        attention_pooling_kernel,
        out_shape=jax.ShapeDtypeStruct((B, D), jnp.float32),
        grid=grid,
        in_specs=[
            pl.BlockSpec(memory_space=pltpu.MemorySpace.SMEM),                       # lw_norm
            pl.BlockSpec(memory_space=pltpu.MemorySpace.SMEM),                       # bias
            pl.BlockSpec((block_b, tile_s, D), lambda b, s: (b, s, 0)),              # first
            pl.BlockSpec((n_pool, block_b, tile_s, D), lambda b, s: (0, b, s, 0)),   # layers[4:]
            pl.BlockSpec((block_b, tile_s), lambda b, s: (b, s)),                    # mask (B, S)
            pl.BlockSpec((2, D), lambda b, s: (0, 0)),                               # split weight
        ],
        out_specs=pl.BlockSpec((block_b, D), lambda b, s: (b, 0)),
        scratch_shapes=[
            pltpu.VMEM((block_b, 1), jnp.float32),   # running max
            pltpu.VMEM((block_b, 1), jnp.float32),   # running denominator
            pltpu.VMEM((block_b, D), jnp.float32),   # weighted-sum accumulator
        ],
        compiler_params=pltpu.CompilerParams(
            dimension_semantics=("parallel", "arbitrary"),
            vmem_limit_bytes=vmem_budget,
        ),
    )(lw_norm, bias, first, pooled_layers, mask_f, w_split)


def reference(all_layers, attention_mask, layer_weights, att_w, att_b):
    x = all_layers.astype(jnp.float32)
    first = x[0]
    lw = layer_weights.astype(jnp.float32)
    pooled = (lw[:, None, None, None] * x[LAYER_START:]).sum(0) / lw.sum()
    cat = jnp.concatenate([first, pooled], axis=-1)                       # (B, S, 2D)
    scores = jnp.einsum("bsk,ko->bso", cat, att_w.astype(jnp.float32),
                        precision=jax.lax.Precision.HIGHEST) + att_b      # (B, S, 1)
    scores = jnp.where(attention_mask[:, :, None] > 0, scores, jnp.float32(-100000.0))
    probs = jax.nn.softmax(scores, axis=1)
    return (probs * pooled).sum(axis=1)                                   # (B, D)


if __name__ == "__main__":
    key = jax.random.PRNGKey(0)
    L, B, S, D = 13, 16, 256, 128  # 12 hidden layers + embedding output; lane-aligned small demo
    k1, k2, k3 = jax.random.split(key, 3)

    # Embeddings in the model's native dtype (bf16) in HBM; kernel upcasts per tile.
    all_layers = jax.random.normal(k1, (L, B, S, D), dtype=jnp.float32).astype(jnp.bfloat16)

    lengths = S - (jnp.arange(B) % 5) * 17
    lengths = lengths.at[-1].set(0)   # one fully-padded row: softmax degenerates to uniform
    attention_mask = (jnp.arange(S)[None, :] < lengths[:, None]).astype(jnp.float32)

    # Deterministic parameters (torch default for WeightedLayerPooling weights is all ones).
    layer_weights = jnp.ones((L - LAYER_START,), dtype=jnp.float32)       # (9,)
    att_w = 0.1 * jax.random.normal(k2, (2 * D, 1), dtype=jnp.float32)    # Linear(2D -> 1) weight^T
    att_b = 0.1 * jax.random.normal(k3, (1,), dtype=jnp.float32)

    # block_b=8, tile_s=128 -> grid (2, 2): exercises the parallel batch axis and the
    # online-softmax accumulation across sequence tiles.
    out = attention_pooling(all_layers, attention_mask, layer_weights, att_w, att_b,
                            block_b=8, tile_s=128)
    out = jax.block_until_ready(out)

    ref = reference(all_layers, attention_mask, layer_weights, att_w, att_b)
    assert out.shape == (B, D)
    assert jnp.allclose(out, ref, atol=1e-3, rtol=1e-3), "kernel mismatch vs reference"

    # TODO(synk): dict plumbing (features['sentence_embedding'] update) and config save/load
    # are host-side Python and intentionally not part of the kernel.
    print("KERNEL_OK")
</pallas_src>

<mosaic_0001>
module attributes {stable_mosaic.version = 11 : i64} {
  func.func @attention_pooling_kernel(%arg0: i32, %arg1: i32, %arg2: memref<9xf32, #tpu.memory_space<smem>>, %arg3: memref<1x1xf32, #tpu.memory_space<smem>>, %arg4: memref<8x128x128xbf16, #tpu.memory_space<vmem>>, %arg5: memref<9x8x128x128xbf16, #tpu.memory_space<vmem>>, %arg6: memref<8x128xf32, #tpu.memory_space<vmem>>, %arg7: memref<2x128xf32, #tpu.memory_space<vmem>>, %arg8: memref<8x128xf32, #tpu.memory_space<vmem>>, %arg9: memref<8x1xf32, #tpu.memory_space<vmem>>, %arg10: memref<8x1xf32, #tpu.memory_space<vmem>>, %arg11: memref<8x128xf32, #tpu.memory_space<vmem>>) attributes {dimension_semantics = [#tpu.dimension_semantics<parallel>, #tpu.dimension_semantics<arbitrary>], iteration_bounds = array<i64: 2, 2>, scalar_prefetch = 0 : i64, scratch_operands = 3 : i64, tpu.core_type = #tpu.core_type<tc>, window_params = [{transform_indices = @transform_0, window_bounds = array<i64: 9>}, {transform_indices = @transform_1, window_bounds = array<i64: 1, 1>}, {transform_indices = @transform_2, window_bounds = array<i64: 8, 128, 128>}, {transform_indices = @transform_3, window_bounds = array<i64: 9, 8, 128, 128>}, {transform_indices = @transform_4, window_bounds = array<i64: 8, 128>}, {pipeline_mode = #tpu.pipeline_mode<synchronous>, transform_indices = @transform_5, window_bounds = array<i64: 2, 128>}, {transform_indices = @transform_6, window_bounds = array<i64: 8, 128>}]} {
    %c0_i32 = arith.constant 0 : i32
    %0 = arith.cmpi eq, %arg1, %c0_i32 : i32
    %1 = arith.extui %0 : i1 to i32
    %c0_i32_0 = arith.constant 0 : i32
    %2 = arith.cmpi ne, %1, %c0_i32_0 : i32
    scf.if %2 {
      %cst_69 = arith.constant 0xFF800000 : f32
      %117 = vector.broadcast %cst_69 : f32 to vector<8x1xf32>
      %c0_70 = arith.constant 0 : index
      %c0_71 = arith.constant 0 : index
      %118 = vector.load %arg9[%c0_70, %c0_71] : memref<8x1xf32, #tpu.memory_space<vmem>>, vector<8x1xf32>
      tpu.vector_store %arg9[%c0_70, %c0_71], %117 {strides = array<i32>} : memref<8x1xf32, #tpu.memory_space<vmem>>, vector<8x1xf32>,
      %cst_72 = arith.constant 0.000000e+00 : f32
      %119 = vector.broadcast %cst_72 : f32 to vector<8x1xf32>
      %c0_73 = arith.constant 0 : index
      %c0_74 = arith.constant 0 : index
      %120 = vector.load %arg10[%c0_73, %c0_74] : memref<8x1xf32, #tpu.memory_space<vmem>>, vector<8x1xf32>
      tpu.vector_store %arg10[%c0_73, %c0_74], %119 {strides = array<i32>} : memref<8x1xf32, #tpu.memory_space<vmem>>, vector<8x1xf32>,
      %cst_75 = arith.constant 0.000000e+00 : f32
      %121 = vector.broadcast %cst_75 : f32 to vector<8x128xf32>
      %c0_76 = arith.constant 0 : index
      %c0_77 = arith.constant 0 : index
      %122 = vector.load %arg11[%c0_76, %c0_77] : memref<8x128xf32, #tpu.memory_space<vmem>>, vector<8x128xf32>
      tpu.vector_store %arg11[%c0_76, %c0_77], %121 {strides = array<i32>} : memref<8x128xf32, #tpu.memory_space<vmem>>, vector<8x128xf32>,
    } else {
    }
    %c0 = arith.constant 0 : index
    %3 = memref.load %arg2[%c0] : memref<9xf32, #tpu.memory_space<smem>>
    %c0_1 = arith.constant 0 : index
    %c0_2 = arith.constant 0 : index
    %c0_3 = arith.constant 0 : index
    %c0_4 = arith.constant 0 : index
    %4 = vector.load %arg5[%c0_1, %c0_2, %c0_3, %c0_4] : memref<9x8x128x128xbf16, #tpu.memory_space<vmem>>, vector<1x8x128x128xbf16>
    %5 = vector.shape_cast %4 : vector<1x8x128x128xbf16> to vector<8x128x128xbf16>
    %6 = arith.extf %5 : vector<8x128x128xbf16> to vector<8x128x128xf32>
    %7 = vector.broadcast %3 : f32 to vector<8x128x128xf32>
    %8 = arith.mulf %7, %6 : vector<8x128x128xf32>
    %c1 = arith.constant 1 : index
    %9 = memref.load %arg2[%c1] : memref<9xf32, #tpu.memory_space<smem>>
    %c1_5 = arith.constant 1 : index
    %c0_6 = arith.constant 0 : index
    %c0_7 = arith.constant 0 : index
    %c0_8 = arith.constant 0 : index
    %10 = vector.load %arg5[%c1_5, %c0_6, %c0_7, %c0_8] : memref<9x8x128x128xbf16, #tpu.memory_space<vmem>>, vector<1x8x128x128xbf16>
    %11 = vector.shape_cast %10 : vector<1x8x128x128xbf16> to vector<8x128x128xbf16>
    %12 = arith.extf %11 : vector<8x128x128xbf16> to vector<8x128x128xf32>
    %13 = vector.broadcast %9 : f32 to vector<8x128x128xf32>
    %14 = arith.mulf %13, %12 : vector<8x128x128xf32>
    %15 = arith.addf %8, %14 : vector<8x128x128xf32>
    %c2 = arith.constant 2 : index
    %16 = memref.load %arg2[%c2] : memref<9xf32, #tpu.memory_space<smem>>
    %c2_9 = arith.constant 2 : index
    %c0_10 = arith.constant 0 : index
    %c0_11 = arith.constant 0 : index
    %c0_12 = arith.constant 0 : index
    %17 = vector.load %arg5[%c2_9, %c0_10, %c0_11, %c0_12] : memref<9x8x128x128xbf16, #tpu.memory_space<vmem>>, vector<1x8x128x128xbf16>
    %18 = vector.shape_cast %17 : vector<1x8x128x128xbf16> to vector<8x128x128xbf16>
    %19 = arith.extf %18 : vector<8x128x128xbf16> to vector<8x128x128xf32>
    %20 = vector.broadcast %16 : f32 to vector<8x128x128xf32>
    %21 = arith.mulf %20, %19 : vector<8x128x128xf32>
    %c3 = arith.constant 3 : index
    %22 = memref.load %arg2[%c3] : memref<9xf32, #tpu.memory_space<smem>>
    %c3_13 = arith.constant 3 : index
    %c0_14 = arith.constant 0 : index
    %c0_15 = arith.constant 0 : index
    %c0_16 = arith.constant 0 : index
    %23 = vector.load %arg5[%c3_13, %c0_14, %c0_15, %c0_16] : memref<9x8x128x128xbf16, #tpu.memory_space<vmem>>, vector<1x8x128x128xbf16>
    %24 = vector.shape_cast %23 : vector<1x8x128x128xbf16> to vector<8x128x128xbf16>
    %25 = arith.extf %24 : vector<8x128x128xbf16> to vector<8x128x128xf32>
    %26 = vector.broadcast %22 : f32 to vector<8x128x128xf32>
    %27 = arith.mulf %26, %25 : vector<8x128x128xf32>
    %28 = arith.addf %21, %27 : vector<8x128x128xf32>
    %29 = arith.addf %15, %28 : vector<8x128x128xf32>
    %c4 = arith.constant 4 : index
    %30 = memref.load %arg2[%c4] : memref<9xf32, #tpu.memory_space<smem>>
    %c4_17 = arith.constant 4 : index
    %c0_18 = arith.constant 0 : index
    %c0_19 = arith.constant 0 : index
    %c0_20 = arith.constant 0 : index
    %31 = vector.load %arg5[%c4_17, %c0_18, %c0_19, %c0_20] : memref<9x8x128x128xbf16, #tpu.memory_space<vmem>>, vector<1x8x128x128xbf16>
    %32 = vector.shape_cast %31 : vector<1x8x128x128xbf16> to vector<8x128x128xbf16>
    %33 = arith.extf %32 : vector<8x128x128xbf16> to vector<8x128x128xf32>
    %34 = vector.broadcast %30 : f32 to vector<8x128x128xf32>
    %35 = arith.mulf %34, %33 : vector<8x128x128xf32>
    %c5 = arith.constant 5 : index
    %36 = memref.load %arg2[%c5] : memref<9xf32, #tpu.memory_space<smem>>
    %c5_21 = arith.constant 5 : index
    %c0_22 = arith.constant 0 : index
    %c0_23 = arith.constant 0 : index
    %c0_24 = arith.constant 0 : index
    %37 = vector.load %arg5[%c5_21, %c0_22, %c0_23, %c0_24] : memref<9x8x128x128xbf16, #tpu.memory_space<vmem>>, vector<1x8x128x128xbf16>
    %38 = vector.shape_cast %37 : vector<1x8x128x128xbf16> to vector<8x128x128xbf16>
    %39 = arith.extf %38 : vector<8x128x128xbf16> to vector<8x128x128xf32>
    %40 = vector.broadcast %36 : f32 to vector<8x128x128xf32>
    %41 = arith.mulf %40, %39 : vector<8x128x128xf32>
    %42 = arith.addf %35, %41 : vector<8x128x128xf32>
    %c6 = arith.constant 6 : index
    %43 = memref.load %arg2[%c6] : memref<9xf32, #tpu.memory_space<smem>>
    %c6_25 = arith.constant 6 : index
    %c0_26 = arith.constant 0 : index
    %c0_27 = arith.constant 0 : index
    %c0_28 = arith.constant 0 : index
    %44 = vector.load %arg5[%c6_25, %c0_26, %c0_27, %c0_28] : memref<9x8x128x128xbf16, #tpu.memory_space<vmem>>, vector<1x8x128x128xbf16>
    %45 = vector.shape_cast %44 : vector<1x8x128x128xbf16> to vector<8x128x128xbf16>
    %46 = arith.extf %45 : vector<8x128x128xbf16> to vector<8x128x128xf32>
    %47 = vector.broadcast %43 : f32 to vector<8x128x128xf32>
    %48 = arith.mulf %47, %46 : vector<8x128x128xf32>
    %c7 = arith.constant 7 : index
    %49 = memref.load %arg2[%c7] : memref<9xf32, #tpu.memory_space<smem>>
    %c7_29 = arith.constant 7 : index
    %c0_30 = arith.constant 0 : index
    %c0_31 = arith.constant 0 : index
    %c0_32 = arith.constant 0 : index
    %50 = vector.load %arg5[%c7_29, %c0_30, %c0_31, %c0_32] : memref<9x8x128x128xbf16, #tpu.memory_space<vmem>>, vector<1x8x128x128xbf16>
    %51 = vector.shape_cast %50 : vector<1x8x128x128xbf16> to vector<8x128x128xbf16>
    %52 = arith.extf %51 : vector<8x128x128xbf16> to vector<8x128x128xf32>
    %53 = vector.broadcast %49 : f32 to vector<8x128x128xf32>
    %54 = arith.mulf %53, %52 : vector<8x128x128xf32>
    %c8 = arith.constant 8 : index
    %55 = memref.load %arg2[%c8] : memref<9xf32, #tpu.memory_space<smem>>
    %c8_33 = arith.constant 8 : index
    %c0_34 = arith.constant 0 : index
    %c0_35 = arith.constant 0 : index
    %c0_36 = arith.constant 0 : index
    %56 = vector.load %arg5[%c8_33, %c0_34, %c0_35, %c0_36] : memref<9x8x128x128xbf16, #tpu.memory_space<vmem>>, vector<1x8x128x128xbf16>
    %57 = vector.shape_cast %56 : vector<1x8x128x128xbf16> to vector<8x128x128xbf16>
    %58 = arith.extf %57 : vector<8x128x128xbf16> to vector<8x128x128xf32>
    %59 = vector.broadcast %55 : f32 to vector<8x128x128xf32>
    %60 = arith.mulf %59, %58 : vector<8x128x128xf32>
    %61 = arith.addf %54, %60 : vector<8x128x128xf32>
    %62 = arith.addf %48, %61 : vector<8x128x128xf32>
    %63 = arith.addf %42, %62 : vector<8x128x128xf32>
    %64 = arith.addf %29, %63 : vector<8x128x128xf32>
    %c0_37 = arith.constant 0 : index
    %c0_38 = arith.constant 0 : index
    %c0_39 = arith.constant 0 : index
    %65 = vector.load %arg4[%c0_37, %c0_38, %c0_39] : memref<8x128x128xbf16, #tpu.memory_space<vmem>>, vector<8x128x128xbf16>
    %66 = arith.extf %65 : vector<8x128x128xbf16> to vector<8x128x128xf32>
    %c0_40 = arith.constant 0 : index
    %c0_41 = arith.constant 0 : index
    %67 = vector.load %arg7[%c0_40, %c0_41] : memref<2x128xf32, #tpu.memory_space<vmem>>, vector<1x128xf32>
    %68 = vector.shape_cast %67 : vector<1x128xf32> to vector<1x1x128xf32>
    %69 = vector.broadcast %68 : vector<1x1x128xf32> to vector<8x128x128xf32>
    %70 = arith.mulf %66, %69 : vector<8x128x128xf32>
    %cst = arith.constant dense<0.000000e+00> : vector<8x128xf32>
    %71 = vector.multi_reduction <add>, %70, %cst [2] : vector<8x128x128xf32> to vector<8x128xf32>
    %c1_42 = arith.constant 1 : index
    %c0_43 = arith.constant 0 : index
    %72 = vector.load %arg7[%c1_42, %c0_43] : memref<2x128xf32, #tpu.memory_space<vmem>>, vector<1x128xf32>
    %73 = vector.shape_cast %72 : vector<1x128xf32> to vector<1x1x128xf32>
    %74 = vector.broadcast %73 : vector<1x1x128xf32> to vector<8x128x128xf32>
    %75 = arith.mulf %64, %74 : vector<8x128x128xf32>
    %cst_44 = arith.constant dense<0.000000e+00> : vector<8x128xf32>
    %76 = vector.multi_reduction <add>, %75, %cst_44 [2] : vector<8x128x128xf32> to vector<8x128xf32>
    %77 = arith.addf %71, %76 : vector<8x128xf32>
    %c0_45 = arith.constant 0 : index
    %c0_46 = arith.constant 0 : index
    %78 = memref.load %arg3[%c0_45, %c0_46] : memref<1x1xf32, #tpu.memory_space<smem>>
    %79 = vector.broadcast %78 : f32 to vector<8x128xf32>
    %80 = arith.addf %77, %79 : vector<8x128xf32>
    %c0_47 = arith.constant 0 : index
    %c0_48 = arith.constant 0 : index
    %81 = vector.load %arg6[%c0_47, %c0_48] : memref<8x128xf32, #tpu.memory_space<vmem>>, vector<8x128xf32>
    %82 = arith.mulf %80, %81 : vector<8x128xf32>
    %cst_49 = arith.constant 1.000000e+00 : f32
    %83 = vector.broadcast %cst_49 : f32 to vector<8x128xf32>
    %84 = arith.subf %81, %83 : vector<8x128xf32>
    %cst_50 = arith.constant 1.000000e+05 : f32
    %85 = vector.broadcast %cst_50 : f32 to vector<8x128xf32>
    %86 = arith.mulf %84, %85 : vector<8x128xf32>
    %87 = arith.addf %82, %86 : vector<8x128xf32>
    %cst_51 = arith.constant dense<0xFF800000> : vector<8xf32>
    %88 = vector.multi_reduction <maximumf>, %87, %cst_51 [1] : vector<8x128xf32> to vector<8xf32>
    %89 = vector.shape_cast %88 : vector<8xf32> to vector<8x1xf32>
    %c0_52 = arith.constant 0 : index
    %c0_53 = arith.constant 0 : index
    %90 = vector.load %arg9[%c0_52, %c0_53] : memref<8x1xf32, #tpu.memory_space<vmem>>, vector<8x1xf32>
    %91 = arith.maximumf %90, %89 : vector<8x1xf32>
    %c0_54 = arith.constant 0 : index
    %c0_55 = arith.constant 0 : index
    %92 = vector.load %arg9[%c0_54, %c0_55] : memref<8x1xf32, #tpu.memory_space<vmem>>, vector<8x1xf32>
    %93 = arith.subf %92, %91 : vector<8x1xf32>
    %94 = math.exp %93 : vector<8x1xf32>
    %95 = vector.broadcast %91 : vector<8x1xf32> to vector<8x128xf32>
    %96 = arith.subf %87, %95 : vector<8x128xf32>
    %97 = math.exp %96 : vector<8x128xf32>
    %c0_56 = arith.constant 0 : index
    %c0_57 = arith.constant 0 : index
    %98 = vector.load %arg10[%c0_56, %c0_57] : memref<8x1xf32, #tpu.memory_space<vmem>>, vector<8x1xf32>
    %99 = arith.mulf %94, %98 : vector<8x1xf32>
    %cst_58 = arith.constant dense<0.000000e+00> : vector<8xf32>
    %100 = vector.multi_reduction <add>, %97, %cst_58 [1] : vector<8x128xf32> to vector<8xf32>
    %101 = vector.shape_cast %100 : vector<8xf32> to vector<8x1xf32>
    %102 = arith.addf %99, %101 : vector<8x1xf32>
    %c0_59 = arith.constant 0 : index
    %c0_60 = arith.constant 0 : index
    %103 = vector.load %arg10[%c0_59, %c0_60] : memref<8x1xf32, #tpu.memory_space<vmem>>, vector<8x1xf32>
    tpu.vector_store %arg10[%c0_59, %c0_60], %102 {strides = array<i32>} : memref<8x1xf32, #tpu.memory_space<vmem>>, vector<8x1xf32>,
    %c0_61 = arith.constant 0 : index
    %c0_62 = arith.constant 0 : index
    %104 = vector.load %arg11[%c0_61, %c0_62] : memref<8x128xf32, #tpu.memory_space<vmem>>, vector<8x128xf32>
    %105 = vector.broadcast %94 : vector<8x1xf32> to vector<8x128xf32>
    %106 = arith.mulf %105, %104 : vector<8x128xf32>
    %107 = vector.shape_cast %97 : vector<8x128xf32> to vector<8x128x1xf32>
    %108 = vector.broadcast %107 : vector<8x128x1xf32> to vector<8x128x128xf32>
    %109 = arith.mulf %108, %64 : vector<8x128x128xf32>
    %cst_63 = arith.constant dense<0.000000e+00> : vector<8x128xf32>
    %110 = vector.multi_reduction <add>, %109, %cst_63 [1] : vector<8x128x128xf32> to vector<8x128xf32>
    %111 = arith.addf %106, %110 : vector<8x128xf32>
    %c0_64 = arith.constant 0 : index
    %c0_65 = arith.constant 0 : index
    %112 = vector.load %arg11[%c0_64, %c0_65] : memref<8x128xf32, #tpu.memory_space<vmem>>, vector<8x128xf32>
    tpu.vector_store %arg11[%c0_64, %c0_65], %111 {strides = array<i32>} : memref<8x128xf32, #tpu.memory_space<vmem>>, vector<8x128xf32>,
    %c0_66 = arith.constant 0 : index
    %c0_67 = arith.constant 0 : index
    %113 = vector.load %arg9[%c0_66, %c0_67] : memref<8x1xf32, #tpu.memory_space<vmem>>, vector<8x1xf32>
    tpu.vector_store %arg9[%c0_66, %c0_67], %91 {strides = array<i32>} : memref<8x1xf32, #tpu.memory_space<vmem>>, vector<8x1xf32>,
    %c1_i32 = arith.constant 1 : i32
    %114 = arith.cmpi eq, %arg1, %c1_i32 : i32
    %115 = arith.extui %114 : i1 to i32
    %c0_i32_68 = arith.constant 0 : i32
    %116 = arith.cmpi ne, %115, %c0_i32_68 : i32
    scf.if %116 {
      %c0_69 = arith.constant 0 : index
      %c0_70 = arith.constant 0 : index
      %117 = vector.load %arg10[%c0_69, %c0_70] : memref<8x1xf32, #tpu.memory_space<vmem>>, vector<8x1xf32>
      %118 = tpu.reciprocal %117 : vector<8x1xf32> -> vector<8x1xf32>
      %c0_71 = arith.constant 0 : index
      %c0_72 = arith.constant 0 : index
      %119 = vector.load %arg11[%c0_71, %c0_72] : memref<8x128xf32, #tpu.memory_space<vmem>>, vector<8x128xf32>
      %120 = vector.broadcast %118 : vector<8x1xf32> to vector<8x128xf32>
      %121 = arith.mulf %119, %120 : vector<8x128xf32>
      %c0_73 = arith.constant 0 : index
      %c0_74 = arith.constant 0 : index
      %122 = vector.load %arg8[%c0_73, %c0_74] : memref<8x128xf32, #tpu.memory_space<vmem>>, vector<8x128xf32>
      tpu.vector_store %arg8[%c0_73, %c0_74], %121 {strides = array<i32>} : memref<8x128xf32, #tpu.memory_space<vmem>>, vector<8x128xf32>,
    } else {
    }
    return
  }
  func.func @transform_0(%arg0: i32, %arg1: i32) -> i32 {
    %c0_i32 = arith.constant 0 : i32
    %c0_i32_0 = arith.constant 0 : i32
    return %c0_i32 : i32
  }
  func.func @transform_1(%arg0: i32, %arg1: i32) -> (i32, i32) {
    %c0_i32 = arith.constant 0 : i32
    %c0_i32_0 = arith.constant 0 : i32
    %c0_i32_1 = arith.constant 0 : i32
    return %c0_i32, %c0_i32_0 : i32, i32
  }
  func.func @transform_2(%arg0: i32, %arg1: i32) -> (i32, i32, i32) {
    %c0_i32 = arith.constant 0 : i32
    %c0_i32_0 = arith.constant 0 : i32
    return %arg0, %arg1, %c0_i32 : i32, i32, i32
  }
  func.func @transform_3(%arg0: i32, %arg1: i32) -> (i32, i32, i32, i32) {
    %c0_i32 = arith.constant 0 : i32
    %c0_i32_0 = arith.constant 0 : i32
    %c0_i32_1 = arith.constant 0 : i32
    return %c0_i32, %arg0, %arg1, %c0_i32_0 : i32, i32, i32, i32
  }
  func.func @transform_4(%arg0: i32, %arg1: i32) -> (i32, i32) {
    %c0_i32 = arith.constant 0 : i32
    return %arg0, %arg1 : i32, i32
  }
  func.func @transform_5(%arg0: i32, %arg1: i32) -> (i32, i32) {
    %c0_i32 = arith.constant 0 : i32
    %c0_i32_0 = arith.constant 0 : i32
    %c0_i32_1 = arith.constant 0 : i32
    return %c0_i32, %c0_i32_0 : i32, i32
  }
  func.func @transform_6(%arg0: i32, %arg1: i32) -> (i32, i32) {
    %c0_i32 = arith.constant 0 : i32
    %c0_i32_0 = arith.constant 0 : i32
    return %arg0, %c0_i32 : i32, i32
  }
}

</mosaic_0001>

<llo_original>
// kernel: tpu_custom_call.1
$region0: #{tpu_custom_call.1}
  #allocation0 [shape = 'u32[]', space=smem, size = 0x4, offset = 0x4, fixed_abs, tag = 'smem constant byte address 0x4 - core index']
  #allocation1 [shape = 'u32[144,128]{1,0:T(1,128)}', space=vmem, size = 0x12000, scoped, tag = 'internal scratch']
  #allocation2 [shape = 'f32[8,1]{1,0:T(8,128)}', space=vmem, size = 0x1000, scoped, tag = 'scratch operand']
  #allocation3 [shape = 'f32[8,1]{1,0:T(8,128)}', space=vmem, size = 0x1000, scoped, tag = 'scratch operand']
  #allocation4 [shape = 'f32[8,128]{1,0:T(8,128)}', space=vmem, size = 0x1000, scoped, tag = 'scratch operand']
  #allocation5 [shape = 'f32[1,1]{1,0:T(1,128)S(6)}', space=smem, size = 0x200, scoped, tag = 'scoped memory for tpu_custom_call.1']
  #allocation17 [shape = 's32[]', space=sflag, size = 0x4, offset = 0, fixed_abs, tag = 'sflag constant byte address 0x0 - dummy sync flag']
  #allocation19 [shape = 's32[]', space=sflag, size = 0x4, offset = 0, fixed_abs, tag = 'sflag constant byte address 0x0 - dummy sync flag']
  %s0 = inlined_call_operand.hbm [shape: f32[9], index: 0, kind: input, shape index: {}]
  %s1 = inlined_call_operand.<no memory space> [shape: f32[1,1], index: 1, kind: input, shape index: {}]
  %s2 = inlined_call_operand.hbm [shape: bf16[16,256,128], index: 2, kind: input, shape index: {}]
  %s3 = inlined_call_operand.hbm [shape: bf16[9,16,256,128], index: 3, kind: input, shape index: {}]
  %s4 = inlined_call_operand.hbm [shape: f32[16,256], index: 4, kind: input, shape index: {}]
  %s5 = inlined_call_operand.hbm [shape: f32[2,128], index: 5, kind: input, shape index: {}]
  %s6 = inlined_call_operand.hbm [shape: f32[16,128], index: 6, kind: output, shape index: {}]
  %s7 = sld [smem:[#allocation0]]
  $region85: #{tpu_custom_call.1} parent=0
    _
  %s9 = ssub.s32 1, %s7
  %s10 = scalar_select 0, %s9, %s7
  %11 = sst [smem:[#allocation5]] %s1
  $region1: #{tpu_custom_call.1} parent=0
    #allocation6 [shape = 'u8[512]{0}', space=smem, size = 0x200, scoped, tag = 'input window, operand 0, single buffered']
    #allocation7 [shape = 's32[2]{0}', space=sflag, size = 0x8, scoped, tag = 'scoped memory for tpu_custom_call.1']
    #allocation8 [shape = 's32[2]{0}', space=sflag, size = 0x8, scoped, tag = 'scoped memory for tpu_custom_call.1']
    #allocation9 [shape = 's32[2]{0}', space=sflag, size = 0x8, scoped, tag = 'scoped memory for tpu_custom_call.1']
    #allocation10 [shape = 'u8[524288]{0}', space=vmem, size = 0x80000, scoped, tag = 'input window, operand 2']
    #allocation11 [shape = 'u8[4718592]{0}', space=vmem, size = 0x480000, scoped, tag = 'input window, operand 3']
    #allocation12 [shape = 's32[2]{0}', space=sflag, size = 0x8, scoped, tag = 'scoped memory for tpu_custom_call.1']
    #allocation13 [shape = 'u8[8192]{0}', space=vmem, size = 0x2000, scoped, tag = 'input window, operand 4']
    #allocation14 [shape = 'u8[1024]{0}', space=vmem, size = 0x400, scoped, tag = 'input window, operand 5, single buffered']
    #allocation15 [shape = 's32[1]{0}', space=sflag, size = 0x4, scoped, tag = 'scoped memory for tpu_custom_call.1']
    #allocation16 [shape = 'u8[8192]{0}', space=vmem, size = 0x2000, scoped, tag = 'output window, operand 0']
    %12 = vsyncpa [#allocation9], 0
    %13 = vsyncpa [#allocation7], 0
    %s14 = scalar_lea.sflag [#allocation7], 1
    %15 = vsyncpa %s14, 0
    %16 = vsyncpa [#allocation12], 0
    %s17 = scalar_lea.sflag [#allocation12], 1
    %18 = vsyncpa %s17, 0
    %19 = vsyncpa [#allocation15], 0
    %20 = vsyncpa [#allocation8], 0
    %s21 = scalar_lea.sflag [#allocation8], 1
    %22 = vsyncpa %s21, 0
    loop: start=0, step=1, limit=6
    $region2: #{tpu_custom_call.1} parent=1 // loop_pre_header
      _
    $region3: #{tpu_custom_call.1} parent=1 // loop_header
      %s24 = sphi 0, %s28
      %p25 = scmp.ge.s32.totalorder %s24, 6
      %s31 = sphi 0, %s43
      %s32 = sphi 0, %s39
      %s33 = sphi 0, %s31
      %s34 = sphi 0, %s32
      %s35 = sphi 0, %s33
      %s36 = sphi 0, %s34
      %s44 = sphi 0, %s44
      %s46 = sphi 0, %s44
      %s47 = sphi 0, %s46
      %s61 = sphi 0, %s47
      %s65 = sphi 0, %s65
      %s67 = sphi 0, %s65
      %s68 = sphi 0, %s67
      %s82 = sphi 0, %s68
      %s90 = sphi 0, %s92
      %s93 = sphi 0, %s90
      %s94 = sphi 0, %s93
      %s110 = sphi 0, %s94
      %s118 = sphi 0, %s120
      %s121 = sphi 0, %s118
      %s122 = sphi 0, %s121
      %s138 = sphi 0, %s122
      %s146 = sphi 0, %s148
      %s149 = sphi 0, %s146
      %s150 = sphi 0, %s149
      %s166 = sphi 0, %s150
      %s170 = sphi 0, %s170
      %s172 = sphi 0, %s170
      %s173 = sphi 0, %s172
      %s187 = sphi 0, %s173
      %s193 = sphi 0, %s195
      %s196 = sphi 0, %s193
      %s197 = sphi 0, %s196
      %s213 = sphi 0, %s197
    $region4: #{tpu_custom_call.1} parent=1 // loop_header_branch
      %27 = sbr.rel (%p25) target = $region8
    $region5: #{tpu_custom_call.1} parent=1 // loop_body
      %s29 = ssub.s32 %s24, 1
      %s30 = ssub.s32 %s24, 2
      %s37 = sadd.s32 1, %s32
      %p38 = scmp.ge.s32.totalorder %s37, 2
      %s39 = scalar_select %p38, 0, %s37
      %s40 = sadd.s32 1, %s31
      %s41 = scalar_select %p38, %s40, %s31
      %p42 = scmp.ge.s32.totalorder %s41, 2
      %s43 = scalar_select %p42, 0, %s41
      %s45 = sadd.s32 %s44, 1
      %p48 = scmp.eq.s32.totalorder %s24, 3
      %p49 = scmp.ne.s32.totalorder %s44, %s46
      %p50 = scmp.eq.s32.totalorder %s24, 0
      %p51 = por %p49, %p50
      %p52 = scmp.ne.s32.totalorder %s44, %s46
      %p53 = scmp.eq.s32.totalorder %s29, 3
      %p54 = por %p52, %p53
      %p55 = scmp.ne.s32.totalorder %s46, %s47
      %p56 = scmp.eq.s32.totalorder %s29, 0
      %p57 = por %p55, %p56
      %p58 = scmp.ne.s32.totalorder %s46, %s47
      %p59 = scmp.eq.s32.totalorder %s30, 3
      %p60 = por %p58, %p59
      %p62 = scmp.ne.s32.totalorder %s47, %s61
      %p63 = scmp.eq.s32.totalorder %s30, 0
      %p64 = por %p62, %p63
      %s66 = sadd.s32 %s65, 1
      %p69 = scmp.eq.s32.totalorder %s24, 3
      %p70 = scmp.ne.s32.totalorder %s65, %s67
      %p71 = scmp.eq.s32.totalorder %s24, 0
      %p72 = por %p70, %p71
      %p73 = scmp.ne.s32.totalorder %s65, %s67
      %p74 = scmp.eq.s32.totalorder %s29, 3
      %p75 = por %p73, %p74
      %p76 = scmp.ne.s32.totalorder %s67, %s68
      %p77 = scmp.eq.s32.totalorder %s29, 0
      %p78 = por %p76, %p77
      %p79 = scmp.ne.s32.totalorder %s67, %s68
      %p80 = scmp.eq.s32.totalorder %s30, 3
      %p81 = por %p79, %p80
      %p83 = scmp.ne.s32.totalorder %s68, %s82
      %p84 = scmp.eq.s32.totalorder %s30, 0
      %p85 = por %p83, %p84
      %s86 = ssub.s32 %s31, %s43
      %s87 = ssub.s32 %s32, %s39
      %s88 = sor.u32 %s86, %s87
      %p89 = scmp.eq.s32.totalorder %s88, 0
      %s91 = sadd.s32 %s90, 1
      %s92 = scalar_select %p89, %s90, %s91
      %p95 = pneg %p89
      %p96 = scmp.eq.s32.totalorder %s24, 3
      %p97 = por %p95, %p96
      %p98 = scmp.ne.s32.totalorder %s90, %s93
      %p99 = scmp.eq.s32.totalorder %s24, 0
      %p100 = por %p98, %p99
      %p101 = scmp.ne.s32.totalorder %s90, %s93
      %p102 = scmp.eq.s32.totalorder %s29, 3
      %p103 = por %p101, %p102
      %p104 = scmp.ne.s32.totalorder %s93, %s94
      %p105 = scmp.eq.s32.totalorder %s29, 0
      %p106 = por %p104, %p105
      %p107 = scmp.ne.s32.totalorder %s93, %s94
      %p108 = scmp.eq.s32.totalorder %s30, 3
      %p109 = por %p107, %p108
      %p111 = scmp.ne.s32.totalorder %s94, %s110
      %p112 = scmp.eq.s32.totalorder %s30, 0
      %p113 = por %p111, %p112
      %s114 = ssub.s32 %s31, %s43
      %s115 = ssub.s32 %s32, %s39
      %s116 = sor.u32 %s114, %s115
      %p117 = scmp.eq.s32.totalorder %s116, 0
      %s119 = sadd.s32 %s118, 1
      %s120 = scalar_select %p117, %s118, %s119
      %p123 = pneg %p117
      %p124 = scmp.eq.s32.totalorder %s24, 3
      %p125 = por %p123, %p124
      %p126 = scmp.ne.s32.totalorder %s118, %s121
      %p127 = scmp.eq.s32.totalorder %s24, 0
      %p128 = por %p126, %p127
      %p129 = scmp.ne.s32.totalorder %s118, %s121
      %p130 = scmp.eq.s32.totalorder %s29, 3
      %p131 = por %p129, %p130
      %p132 = scmp.ne.s32.totalorder %s121, %s122
      %p133 = scmp.eq.s32.totalorder %s29, 0
      %p134 = por %p132, %p133
      %p135 = scmp.ne.s32.totalorder %s121, %s122
      %p136 = scmp.eq.s32.totalorder %s30, 3
      %p137 = por %p135, %p136
      %p139 = scmp.ne.s32.totalorder %s122, %s138
      %p140 = scmp.eq.s32.totalorder %s30, 0
      %p141 = por %p139, %p140
      %s142 = ssub.s32 %s31, %s43
      %s143 = ssub.s32 %s32, %s39
      %s144 = sor.u32 %s142, %s143
      %p145 = scmp.eq.s32.totalorder %s144, 0
      %s147 = sadd.s32 %s146, 1
      %s148 = scalar_select %p145, %s146, %s147
      %p151 = pneg %p145
      %p152 = scmp.eq.s32.totalorder %s24, 3
      %p153 = por %p151, %p152
      %p154 = scmp.ne.s32.totalorder %s146, %s149
      %p155 = scmp.eq.s32.totalorder %s24, 0
      %p156 = por %p154, %p155
      %p157 = scmp.ne.s32.totalorder %s146, %s149
      %p158 = scmp.eq.s32.totalorder %s29, 3
      %p159 = por %p157, %p158
      %p160 = scmp.ne.s32.totalorder %s149, %s150
      %p161 = scmp.eq.s32.totalorder %s29, 0
      %p162 = por %p160, %p161
      %p163 = scmp.ne.s32.totalorder %s149, %s150
      %p164 = scmp.eq.s32.totalorder %s30, 3
      %p165 = por %p163, %p164
      %p167 = scmp.ne.s32.totalorder %s150, %s166
      %p168 = scmp.eq.s32.totalorder %s30, 0
      %p169 = por %p167, %p168
      %s171 = sadd.s32 %s170, 1
      %p174 = scmp.eq.s32.totalorder %s24, 3
      %p175 = scmp.ne.s32.totalorder %s170, %s172
      %p176 = scmp.eq.s32.totalorder %s24, 0
      %p177 = por %p175, %p176
      %p178 = scmp.ne.s32.totalorder %s170, %s172
      %p179 = scmp.eq.s32.totalorder %s29, 3
      %p180 = por %p178, %p179
      %p181 = scmp.ne.s32.totalorder %s172, %s173
      %p182 = scmp.eq.s32.totalorder %s29, 0
      %p183 = por %p181, %p182
      %p184 = scmp.ne.s32.totalorder %s172, %s173
      %p185 = scmp.eq.s32.totalorder %s30, 3
      %p186 = por %p184, %p185
      %p188 = scmp.ne.s32.totalorder %s173, %s187
      %p189 = scmp.eq.s32.totalorder %s30, 0
      %p190 = por %p188, %p189
      %s191 = ssub.s32 %s31, %s43
      %p192 = scmp.eq.s32.totalorder %s191, 0
      %s194 = sadd.s32 %s193, 1
      %s195 = scalar_select %p192, %s193, %s194
      %p198 = pneg %p192
      %p199 = scmp.eq.s32.totalorder %s24, 3
      %p200 = por %p198, %p199
      %p201 = scmp.ne.s32.totalorder %s193, %s196
      %p202 = scmp.eq.s32.totalorder %s24, 0
      %p203 = por %p201, %p202
      %p204 = scmp.ne.s32.totalorder %s193, %s196
      %p205 = scmp.eq.s32.totalorder %s29, 3
      %p206 = por %p204, %p205
      %p207 = scmp.ne.s32.totalorder %s196, %s197
      %p208 = scmp.eq.s32.totalorder %s29, 0
      %p209 = por %p207, %p208
      %p210 = scmp.ne.s32.totalorder %s196, %s197
      %p211 = scmp.eq.s32.totalorder %s30, 3
      %p212 = por %p210, %p211
      %p214 = scmp.ne.s32.totalorder %s197, %s213
      %p215 = scmp.eq.s32.totalorder %s30, 0
      %p216 = por %p214, %p215
      %p217 = scmp.le.s32.totalorder 1, %s24
      %p218 = scmp.lt.s32.totalorder %s24, 5
      %p219 = pnand %p217, %p218
      %p220 = pneg %p219
      // Predicated region
      $region9: #{tpu_custom_call.1} parent=5 // pred_check
        _
      $region10: #{tpu_custom_call.1} parent=5 // pred_check_branch
        %222 = sbr.rel (%p219) target = $region12
      $region11: #{tpu_custom_call.1} parent=5 // pred_region
        %s223 = ssub.s32 %s24, 1
        // Predicated region
        $region13: #{tpu_custom_call.1} parent=11 // pred_check
          %p224 = pneg %p57
        $region14: #{tpu_custom_call.1} parent=11 // pred_check_branch
          %226 = sbr.rel (%p224) target = $region16
        $region15: #{tpu_custom_call.1} parent=11 // pred_region
          %s228 = ssub.s32 16, 16
          %229 = vsyncadd [#allocation9], %s228
          %232 = dma.hbm_to_smem %s0, 16, [#allocation6], [#allocation9]
        $region16: #{tpu_custom_call.1} parent=11 // pred_fallthru
          _
        // Predicated region
        $region17: #{tpu_custom_call.1} parent=11 // pred_check
          %p233 = pneg %p78
        $region18: #{tpu_custom_call.1} parent=11 // pred_check_branch
          %235 = sbr.rel (%p233) target = $region20
        $region19: #{tpu_custom_call.1} parent=11 // pred_region
          _
        $region20: #{tpu_custom_call.1} parent=11 // pred_fallthru
          _
        // Predicated region
        $region21: #{tpu_custom_call.1} parent=11 // pred_check
          %p236 = pneg %p183
        $region22: #{tpu_custom_call.1} parent=11 // pred_check_branch
          %238 = sbr.rel (%p236) target = $region24
        $region23: #{tpu_custom_call.1} parent=11 // pred_region
          %s240 = ssub.s32 32, 32
          %241 = vsyncadd [#allocation15], %s240
          %s243 = sshll.u32 [#allocation14], 4
          %s244 = int_to_ptr.vmem [resolvable:$true] %s243
          %246 = dma.hbm_to_vmem [thread:$0]  %s5, 32, %s244, [#allocation15]
        $region24: #{tpu_custom_call.1} parent=11 // pred_fallthru
          _
      $region12: #{tpu_custom_call.1} parent=5 // pred_fallthru
        _
      %p247 = scmp.lt.s32.totalorder %s24, 4
      // Predicated region
      $region25: #{tpu_custom_call.1} parent=5 // pred_check
        %p248 = pneg %p247
      $region26: #{tpu_custom_call.1} parent=5 // pred_check_branch
        %250 = sbr.rel (%p248) target = $region28
      $region27: #{tpu_custom_call.1} parent=5 // pred_region
        // Predicated region
        $region29: #{tpu_custom_call.1} parent=27 // pred_check
          %p251 = pneg %p100
        $region30: #{tpu_custom_call.1} parent=27 // pred_check_branch
          %253 = sbr.rel (%p251) target = $region32
        $region31: #{tpu_custom_call.1} parent=27 // pred_region
          #allocation18 [shape = 'u32[6]{0}', space=smem, size = 0x18, scoped, tag = 'DMA stride descriptor']
          %s254 = sand.u32 %s90, 1
          %s255 = scalar_lea.sflag [#allocation7], %s254
          %s256 = sand.u32 %s90, 1
          %s257 = smul.addr %s256, 512
          %s258 = scalar_lea.vmem [#allocation10], %s257
          %s259 = smul.u32 8, %s31
          %s260 = smul.u32 16, %s32
          %s262 = ssub.s32 8192, 8192
          %263 = vsyncadd %s255, %s262
          %s264 = smul.addr %s259, 32
          %s265 = sadd.s32 %s260, %s264
          %s266 = smul.addr %s265, 64
          %s267 = scalar_lea.hbm %s2, %s266
          %s269 = sshll.u32 1, 14
          %s270 = sxor.u32 4294967295, %s269
          %s272 = sld [smem:[#allocation0]]
          %s273 = sadd.s32 2, %s272
          %s275 = sshll.u32 7, 26
          %s276 = sxor.u32 4294967295, %s275
          %s277 = sand.u32 0, %s276
          %s278 = sshll.u32 %s273, 26
          %s279 = sor.u32 %s277, %s278
          %s280 = sshll.u32 %s258, 4
          %s281 = int_to_ptr.vmem [resolvable:$true] %s280
          %287 = sst [smem:[#allocation18]] 2048
          %s288 = scalar_lea.smem [#allocation18], 1
          %289 = sst [smem:[%s288]] 1024
          %s290 = scalar_lea.smem [#allocation18], 2
          %291 = sst [smem:[%s290]] 16
          %s292 = scalar_lea.smem [#allocation18], 3
          %293 = sst [smem:[%s292]] 64
          %s294 = scalar_lea.smem [#allocation18], 4
          %295 = sst [smem:[%s294]] 64
          %s296 = scalar_lea.smem [#allocation18], 5
          %297 = sst [smem:[%s296]] 4
          %299 = dma.general %s267, 8192, %s281, %s255, 131072, [#allocation18], %s279, 0
        $region32: #{tpu_custom_call.1} parent=27 // pred_fallthru
          _
        // Predicated region
        $region33: #{tpu_custom_call.1} parent=27 // pred_check
          %p300 = pneg %p128
        $region34: #{tpu_custom_call.1} parent=27 // pred_check_branch
          %302 = sbr.rel (%p300) target = $region36
        $region35: #{tpu_custom_call.1} parent=27 // pred_region
          #allocation20 [shape = 'u32[9]{0}', space=smem, size = 0x24, scoped, tag = 'DMA stride descriptor']
          %s303 = sand.u32 %s24, 1
          %s304 = scalar_lea.sflag [#allocation12], %s303
          %s305 = sand.u32 %s118, 1
          %s306 = smul.addr %s305, 4608
          %s307 = scalar_lea.vmem [#allocation11], %s306
          %s308 = smul.u32 8, %s31
          %s309 = smul.u32 16, %s32
          %s311 = ssub.s32 73728, 73728
          %312 = vsyncadd %s304, %s311
          %s313 = smul.addr %s308, 32
          %s314 = sadd.s32 %s309, %s313
          %s315 = smul.addr %s314, 64
          %s316 = scalar_lea.hbm %s3, %s315
          %s318 = sshll.u32 1, 14
          %s319 = sxor.u32 4294967295, %s318
          %s321 = sld [smem:[#allocation0]]
          %s322 = sadd.s32 2, %s321
          %s324 = sshll.u32 7, 26
          %s325 = sxor.u32 4294967295, %s324
          %s326 = sand.u32 0, %s325
          %s327 = sshll.u32 %s322, 26
          %s328 = sor.u32 %s326, %s327
          %s329 = sshll.u32 %s307, 4
          %s330 = int_to_ptr.vmem [resolvable:$true] %s329
          %338 = sst [smem:[#allocation20]] 32768
          %s339 = scalar_lea.smem [#allocation20], 1
          %340 = sst [smem:[%s339]] 8192
          %s341 = scalar_lea.smem [#allocation20], 2
          %342 = sst [smem:[%s341]] 8
          %s343 = scalar_lea.smem [#allocation20], 3
          %344 = sst [smem:[%s343]] 2048
          %s345 = scalar_lea.smem [#allocation20], 4
          %346 = sst [smem:[%s345]] 1024
          %s347 = scalar_lea.smem [#allocation20], 5
          %348 = sst [smem:[%s347]] 16
          %s349 = scalar_lea.smem [#allocation20], 6
          %350 = sst [smem:[%s349]] 64
          %s351 = scalar_lea.smem [#allocation20], 7
          %352 = sst [smem:[%s351]] 64
          %s353 = scalar_lea.smem [#allocation20], 8
          %354 = sst [smem:[%s353]] 4
          %356 = dma.general %s316, 73728, %s330, %s304, 131072, [#allocation20], %s328, 0
        $region36: #{tpu_custom_call.1} parent=27 // pred_fallthru
          _
        // Predicated region
        $region37: #{tpu_custom_call.1} parent=27 // pred_check
          %p357 = pneg %p156
        $region38: #{tpu_custom_call.1} parent=27 // pred_check_branch
          %359 = sbr.rel (%p357) target = $region40
        $region39: #{tpu_custom_call.1} parent=27 // pred_region
          %s360 = sand.u32 %s24, 1
          %s361 = scalar_lea.sflag [#allocation12], %s360
          %s362 = sand.u32 %s146, 1
          %s363 = smul.addr %s362, 8
          %s364 = scalar_lea.vmem [#allocation13], %s363
          %s366 = ssub.s32 128, 128
          %367 = vsyncadd %s361, %s366
          %s368 = smul.addr %s31, 2
          %s369 = sadd.s32 %s32, %s368
          %s370 = smul.addr %s369, 128
          %s371 = scalar_lea.hbm %s4, %s370
          %s373 = sshll.u32 %s364, 4
          %s374 = int_to_ptr.vmem [resolvable:$true] %s373
          %376 = dma.hbm_to_vmem [thread:$0]  %s371, 128, %s374, %s361
        $region40: #{tpu_custom_call.1} parent=27 // pred_fallthru
          _
      $region28: #{tpu_custom_call.1} parent=5 // pred_fallthru
        _
      %p377 = scmp.le.s32.totalorder 1, %s24
      %p378 = scmp.lt.s32.totalorder %s24, 5
      %p379 = pnand %p377, %p378
      %p380 = pneg %p379
      // Predicated region
      $region41: #{tpu_custom_call.1} parent=5 // pred_check
        _
      $region42: #{tpu_custom_call.1} parent=5 // pred_check_branch
        %382 = sbr.rel (%p379) target = $region44
      $region43: #{tpu_custom_call.1} parent=5 // pred_region
        %s383 = ssub.s32 %s24, 1
        // Predicated region
        $region45: #{tpu_custom_call.1} parent=43 // pred_check
          %p384 = pneg %p57
        $region46: #{tpu_custom_call.1} parent=43 // pred_check_branch
          %386 = sbr.rel (%p384) target = $region48
        $region47: #{tpu_custom_call.1} parent=43 // pred_region
          %387 = dma.done [#allocation9], 16
        $region48: #{tpu_custom_call.1} parent=43 // pred_fallthru
          _
        %s388 = sand.u32 %s93, 1
        %s389 = scalar_lea.sflag [#allocation7], %s388
        %s390 = sand.u32 %s93, 1
        %s391 = smul.addr %s390, 512
        %s392 = scalar_lea.vmem [#allocation10], %s391
        // Predicated region
        $region49: #{tpu_custom_call.1} parent=43 // pred_check
          %p393 = pneg %p106
        $region50: #{tpu_custom_call.1} parent=43 // pred_check_branch
          %395 = sbr.rel (%p393) target = $region52
        $region51: #{tpu_custom_call.1} parent=43 // pred_region
          %396 = dma.done %s389, 8192
        $region52: #{tpu_custom_call.1} parent=43 // pred_fallthru
          _
        %s397 = sand.u32 %s29, 1
        %s398 = scalar_lea.sflag [#allocation12], %s397
        %s399 = sand.u32 %s121, 1
        %s400 = smul.addr %s399, 4608
        %s401 = scalar_lea.vmem [#allocation11], %s400
        // Predicated region
        $region53: #{tpu_custom_call.1} parent=43 // pred_check
          %p402 = pneg %p134
        $region54: #{tpu_custom_call.1} parent=43 // pred_check_branch
          %404 = sbr.rel (%p402) target = $region56
        $region55: #{tpu_custom_call.1} parent=43 // pred_region
          %405 = dma.done %s398, 73728
        $region56: #{tpu_custom_call.1} parent=43 // pred_fallthru
          _
        %s406 = sand.u32 %s29, 1
        %s407 = scalar_lea.sflag [#allocation12], %s406
        %s408 = sand.u32 %s149, 1
        %s409 = smul.addr %s408, 8
        %s410 = scalar_lea.vmem [#allocation13], %s409
        // Predicated region
        $region57: #{tpu_custom_call.1} parent=43 // pred_check
          %p411 = pneg %p162
        $region58: #{tpu_custom_call.1} parent=43 // pred_check_branch
          %413 = sbr.rel (%p411) target = $region60
        $region59: #{tpu_custom_call.1} parent=43 // pred_region
          %414 = dma.done %s407, 128
        $region60: #{tpu_custom_call.1} parent=43 // pred_fallthru
          _
        // Predicated region
        $region61: #{tpu_custom_call.1} parent=43 // pred_check
          %p415 = pneg %p183
        $region62: #{tpu_custom_call.1} parent=43 // pred_check_branch
          %417 = sbr.rel (%p415) target = $region64
        $region63: #{tpu_custom_call.1} parent=43 // pred_region
          %418 = dma.done [#allocation15], 32
        $region64: #{tpu_custom_call.1} parent=43 // pred_fallthru
          _
        %419 = sfence
        %p420 = pneg %p57
        %p421 = pneg %p54
        %p422 = pneg %p78
        %p423 = pneg %p75
        %s424 = sand.u32 %s93, 1
        %s425 = scalar_lea.sflag [#allocation7], %s424
        %s426 = sand.u32 %s93, 1
        %s427 = smul.addr %s426, 512
        %s428 = scalar_lea.vmem [#allocation10], %s427
        %p429 = pneg %p106
        %p430 = pneg %p103
        %s431 = sand.u32 %s29, 1
        %s432 = scalar_lea.sflag [#allocation12], %s431
        %s433 = sand.u32 %s121, 1
        %s434 = smul.addr %s433, 4608
        %s435 = scalar_lea.vmem [#allocation11], %s434
        %p436 = pneg %p134
        %p437 = pneg %p131
        %s438 = sand.u32 %s29, 1
        %s439 = scalar_lea.sflag [#allocation12], %s438
        %s440 = sand.u32 %s149, 1
        %s441 = smul.addr %s440, 8
        %s442 = scalar_lea.vmem [#allocation13], %s441
        %p443 = pneg %p162
        %p444 = pneg %p159
        %p445 = pneg %p183
        %p446 = pneg %p180
        %p447 = pneg %p209
        %p448 = pneg %p206
        %s449 = sand.u32 %s196, 1
        %s450 = scalar_lea.sflag [#allocation8], %s449
        %s451 = sand.u32 %s196, 1
        %s452 = smul.addr %s451, 8
        %s453 = scalar_lea.vmem [#allocation16], %s452
        %s454 = smul.u32 8, %s33
        %s455 = smul.u32 16, %s34
        %s456 = smul.u32 8, %s33
        %s457 = smul.u32 16, %s34
        %p458 = scmp.eq.s32.totalorder %s34, 0
        // Predicated region
        $region65: #{tpu_custom_call.1} parent=43 // pred_check
          %p459 = pneg %p458
        $region66: #{tpu_custom_call.1} parent=43 // pred_check_branch
          %461 = sbr.rel (%p459) target = $region68
        $region67: #{tpu_custom_call.1} parent=43 // pred_region
          %vm462 = vcmask 7168
          %463 = vst.msk [vmem:[#allocation2] sm:$0xff] %vm462, -inf
          %464 = vst.msk [vmem:[#allocation3] sm:$0xff] %vm462, 0.0
          %465 = vst [vmem:[#allocation4] sm:$0xff] 0.0
        $region68: #{tpu_custom_call.1} parent=43 // pred_fallthru
          _
        %s466 = sld [smem:[#allocation6]]
        %v467 = vld [vmem:[%s401] sm:$0xf]
        %v468 = vld [vmem:[%s401 + $0x4] sm:$0xf]
        %v469 = vld [vmem:[%s401 + $0x8] sm:$0xf]
        %v470 = vld [vmem:[%s401 + $0xc] sm:$0xf]
        %v471 = vld [vmem:[%s401 + $0x10] sm:$0xf]
        %v472 = vld [vmem:[%s401 + $0x14] sm:$0xf]
        %v473 = vld [vmem:[%s401 + $0x18] sm:$0xf]
        %v474 = vld [vmem:[%s401 + $0x1c] sm:$0xf]
        %v475 = vld [vmem:[%s401 + $0x20] sm:$0xf]
        %v476 = vld [vmem:[%s401 + $0x24] sm:$0xf]
        %v477 = vld [vmem:[%s401 + $0x28] sm:$0xf]
        %v478 = vld [vmem:[%s401 + $0x2c] sm:$0xf]
        %v479 = vld [vmem:[%s401 + $0x30] sm:$0xf]
        %v480 = vld [vmem:[%s401 + $0x34] sm:$0xf]
        %v481 = vld [vmem:[%s401 + $0x38] sm:$0xf]
        %v482 = vld [vmem:[%s401 + $0x3c] sm:$0xf]
        %v483 = vld [vmem:[%s401 + $0x40] sm:$0xf]
        %v484 = vld [vmem:[%s401 + $0x44] sm:$0xf]
        %v485 = vld [vmem:[%s401 + $0x48] sm:$0xf]
        %v486 = vld [vmem:[%s401 + $0x4c] sm:$0xf]
        %v487 = vld [vmem:[%s401 + $0x50] sm:$0xf]
        %v488 = vld [vmem:[%s401 + $0x54] sm:$0xf]
        %v489 = vld [vmem:[%s401 + $0x58] sm:$0xf]
        %v490 = vld [vmem:[%s401 + $0x5c] sm:$0xf]
        %v491 = vld [vmem:[%s401 + $0x60] sm:$0xf]
        %v492 = vld [vmem:[%s401 + $0x64] sm:$0xf]
        %v493 = vld [vmem:[%s401 + $0x68] sm:$0xf]
        %v494 = vld [vmem:[%s401 + $0x6c] sm:$0xf]
        %v495 = vld [vmem:[%s401 + $0x70] sm:$0xf]
        %v496 = vld [vmem:[%s401 + $0x74] sm:$0xf]
        %v497 = vld [vmem:[%s401 + $0x78] sm:$0xf]
        %v498 = vld [vmem:[%s401 + $0x7c] sm:$0xf]
        %v499 = vld [vmem:[%s401 + $0x80] sm:$0xf]
        %v500 = vld [vmem:[%s401 + $0x84] sm:$0xf]
        %v501 = vld [vmem:[%s401 + $0x88] sm:$0xf]
        %v502 = vld [vmem:[%s401 + $0x8c] sm:$0xf]
        %v503 = vld [vmem:[%s401 + $0x90] sm:$0xf]
        %v504 = vld [vmem:[%s401 + $0x94] sm:$0xf]
        %v505 = vld [vmem:[%s401 + $0x98] sm:$0xf]
        %v506 = vld [vmem:[%s401 + $0x9c] sm:$0xf]
        %v507 = vld [vmem:[%s401 + $0xa0] sm:$0xf]
        %v508 = vld [vmem:[%s401 + $0xa4] sm:$0xf]
        %v509 = vld [vmem:[%s401 + $0xa8] sm:$0xf]
        %v510 = vld [vmem:[%s401 + $0xac] sm:$0xf]
        %v511 = vld [vmem:[%s401 + $0xb0] sm:$0xf]
        %v512 = vld [vmem:[%s401 + $0xb4] sm:$0xf]
        %v513 = vld [vmem:[%s401 + $0xb8] sm:$0xf]
        %v514 = vld [vmem:[%s401 + $0xbc] sm:$0xf]
        %v515 = vld [vmem:[%s401 + $0xc0] sm:$0xf]
        %v516 = vld [vmem:[%s401 + $0xc4] sm:$0xf]
        %v517 = vld [vmem:[%s401 + $0xc8] sm:$0xf]
        %v518 = vld [vmem:[%s401 + $0xcc] sm:$0xf]
        %v519 = vld [vmem:[%s401 + $0xd0] sm:$0xf]
        %v520 = vld [vmem:[%s401 + $0xd4] sm:$0xf]
        %v521 = vld [vmem:[%s401 + $0xd8] sm:$0xf]
        %v522 = vld [vmem:[%s401 + $0xdc] sm:$0xf]
        %v523 = vld [vmem:[%s401 + $0xe0] sm:$0xf]
        %v524 = vld [vmem:[%s401 + $0xe4] sm:$0xf]
        %v525 = vld [vmem:[%s401 + $0xe8] sm:$0xf]
        %v526 = vld [vmem:[%s401 + $0xec] sm:$0xf]
        %v527 = vld [vmem:[%s401 + $0xf0] sm:$0xf]
        %v528 = vld [vmem:[%s401 + $0xf4] sm:$0xf]
        %v529 = vld [vmem:[%s401 + $0xf8] sm:$0xf]
        %v530 = vld [vmem:[%s401 + $0xfc] sm:$0xf]
        %v531 = vld [vmem:[%s401 + $0x100] sm:$0xf]
        %v532 = vld [vmem:[%s401 + $0x104] sm:$0xf]
        %v533 = vld [vmem:[%s401 + $0x108] sm:$0xf]
        %v534 = vld [vmem:[%s401 + $0x10c] sm:$0xf]
        %v535 = vld [vmem:[%s401 + $0x110] sm:$0xf]
        %v536 = vld [vmem:[%s401 + $0x114] sm:$0xf]
        %v537 = vld [vmem:[%s401 + $0x118] sm:$0xf]
        %v538 = vld [vmem:[%s401 + $0x11c] sm:$0xf]
        %v539 = vld [vmem:[%s401 + $0x120] sm:$0xf]
        %v540 = vld [vmem:[%s401 + $0x124] sm:$0xf]
        %v541 = vld [vmem:[%s401 + $0x128] sm:$0xf]
        %v542 = vld [vmem:[%s401 + $0x12c] sm:$0xf]
        %v543 = vld [vmem:[%s401 + $0x130] sm:$0xf]
        %v544 = vld [vmem:[%s401 + $0x134] sm:$0xf]
        %v545 = vld [vmem:[%s401 + $0x138] sm:$0xf]
        %v546 = vld [vmem:[%s401 + $0x13c] sm:$0xf]
        %v547 = vld [vmem:[%s401 + $0x140] sm:$0xf]
        %v548 = vld [vmem:[%s401 + $0x144] sm:$0xf]
        %v549 = vld [vmem:[%s401 + $0x148] sm:$0xf]
        %v550 = vld [vmem:[%s401 + $0x14c] sm:$0xf]
        %v551 = vld [vmem:[%s401 + $0x150] sm:$0xf]
        %v552 = vld [vmem:[%s401 + $0x154] sm:$0xf]
        %v553 = vld [vmem:[%s401 + $0x158] sm:$0xf]
        %v554 = vld [vmem:[%s401 + $0x15c] sm:$0xf]
        %v555 = vld [vmem:[%s401 + $0x160] sm:$0xf]
        %v556 = vld [vmem:[%s401 + $0x164] sm:$0xf]
        %v557 = vld [vmem:[%s401 + $0x168] sm:$0xf]
        %v558 = vld [vmem:[%s401 + $0x16c] sm:$0xf]
        %v559 = vld [vmem:[%s401 + $0x170] sm:$0xf]
        %v560 = vld [vmem:[%s401 + $0x174] sm:$0xf]
        %v561 = vld [vmem:[%s401 + $0x178] sm:$0xf]
        %v562 = vld [vmem:[%s401 + $0x17c] sm:$0xf]
        %v563 = vld [vmem:[%s401 + $0x180] sm:$0xf]
        %v564 = vld [vmem:[%s401 + $0x184] sm:$0xf]
        %v565 = vld [vmem:[%s401 + $0x188] sm:$0xf]
        %v566 = vld [vmem:[%s401 + $0x18c] sm:$0xf]
        %v567 = vld [vmem:[%s401 + $0x190] sm:$0xf]
        %v568 = vld [vmem:[%s401 + $0x194] sm:$0xf]
        %v569 = vld [vmem:[%s401 + $0x198] sm:$0xf]
        %v570 = vld [vmem:[%s401 + $0x19c] sm:$0xf]
        %v571 = vld [vmem:[%s401 + $0x1a0] sm:$0xf]
        %v572 = vld [vmem:[%s401 + $0x1a4] sm:$0xf]
        %v573 = vld [vmem:[%s401 + $0x1a8] sm:$0xf]
        %v574 = vld [vmem:[%s401 + $0x1ac] sm:$0xf]
        %v575 = vld [vmem:[%s401 + $0x1b0] sm:$0xf]
        %v576 = vld [vmem:[%s401 + $0x1b4] sm:$0xf]
        %v577 = vld [vmem:[%s401 + $0x1b8] sm:$0xf]
        %v578 = vld [vmem:[%s401 + $0x1bc] sm:$0xf]
        %v579 = vld [vmem:[%s401 + $0x1c0] sm:$0xf]
        %v580 = vld [vmem:[%s401 + $0x1c4] sm:$0xf]
        %v581 = vld [vmem:[%s401 + $0x1c8] sm:$0xf]
        %v582 = vld [vmem:[%s401 + $0x1cc] sm:$0xf]
        %v583 = vld [vmem:[%s401 + $0x1d0] sm:$0xf]
        %v584 = vld [vmem:[%s401 + $0x1d4] sm:$0xf]
        %v585 = vld [vmem:[%s401 + $0x1d8] sm:$0xf]
        %v586 = vld [vmem:[%s401 + $0x1dc] sm:$0xf]
        %v587 = vld [vmem:[%s401 + $0x1e0] sm:$0xf]
        %v588 = vld [vmem:[%s401 + $0x1e4] sm:$0xf]
        %v589 = vld [vmem:[%s401 + $0x1e8] sm:$0xf]
        %v590 = vld [vmem:[%s401 + $0x1ec] sm:$0xf]
        %v591 = vld [vmem:[%s401 + $0x1f0] sm:$0xf]
        %v592 = vld [vmem:[%s401 + $0x1f4] sm:$0xf]
        %v593 = vld [vmem:[%s401 + $0x1f8] sm:$0xf]
        %v594 = vld [vmem:[%s401 + $0x1fc] sm:$0xf]
        %v595 = vunpack.c.l.bf16 %v467
        %v596 = vunpack.c.l.bf16 %v468
        %v597 = vunpack.c.l.bf16 %v469
        %v598 = vunpack.c.l.bf16 %v470
        %v599 = vunpack.c.l.bf16 %v471
        %v600 = vunpack.c.l.bf16 %v472
        %v601 = vunpack.c.l.bf16 %v473
        %v602 = vunpack.c.l.bf16 %v474
        %v603 = vunpack.c.l.bf16 %v475
        %v604 = vunpack.c.l.bf16 %v476
        %v605 = vunpack.c.l.bf16 %v477
        %v606 = vunpack.c.l.bf16 %v478
        %v607 = vunpack.c.l.bf16 %v479
        %v608 = vunpack.c.l.bf16 %v480
        %v609 = vunpack.c.l.bf16 %v481
        %v610 = vunpack.c.l.bf16 %v482
        %v611 = vunpack.c.l.bf16 %v483
        %v612 = vunpack.c.l.bf16 %v484
        %v613 = vunpack.c.l.bf16 %v485
        %v614 = vunpack.c.l.bf16 %v486
        %v615 = vunpack.c.l.bf16 %v487
        %v616 = vunpack.c.l.bf16 %v488
        %v617 = vunpack.c.l.bf16 %v489
        %v618 = vunpack.c.l.bf16 %v490
        %v619 = vunpack.c.l.bf16 %v491
        %v620 = vunpack.c.l.bf16 %v492
        %v621 = vunpack.c.l.bf16 %v493
        %v622 = vunpack.c.l.bf16 %v494
        %v623 = vunpack.c.l.bf16 %v495
        %v624 = vunpack.c.l.bf16 %v496
        %v625 = vunpack.c.l.bf16 %v497
        %v626 = vunpack.c.l.bf16 %v498
        %v627 = vunpack.c.l.bf16 %v499
        %v628 = vunpack.c.l.bf16 %v500
        %v629 = vunpack.c.l.bf16 %v501
        %v630 = vunpack.c.l.bf16 %v502
        %v631 = vunpack.c.l.bf16 %v503
        %v632 = vunpack.c.l.bf16 %v504
        %v633 = vunpack.c.l.bf16 %v505
        %v634 = vunpack.c.l.bf16 %v506
        %v635 = vunpack.c.l.bf16 %v507
        %v636 = vunpack.c.l.bf16 %v508
        %v637 = vunpack.c.l.bf16 %v509
        %v638 = vunpack.c.l.bf16 %v510
        %v639 = vunpack.c.l.bf16 %v511
        %v640 = vunpack.c.l.bf16 %v512
        %v641 = vunpack.c.l.bf16 %v513
        %v642 = vunpack.c.l.bf16 %v514
        %v643 = vunpack.c.l.bf16 %v515
        %v644 = vunpack.c.l.bf16 %v516
        %v645 = vunpack.c.l.bf16 %v517
        %v646 = vunpack.c.l.bf16 %v518
        %v647 = vunpack.c.l.bf16 %v519
        %v648 = vunpack.c.l.bf16 %v520
        %v649 = vunpack.c.l.bf16 %v521
        %v650 = vunpack.c.l.bf16 %v522
        %v651 = vunpack.c.l.bf16 %v523
        %v652 = vunpack.c.l.bf16 %v524
        %v653 = vunpack.c.l.bf16 %v525
        %v654 = vunpack.c.l.bf16 %v526
        %v655 = vunpack.c.l.bf16 %v527
        %v656 = vunpack.c.l.bf16 %v528
        %v657 = vunpack.c.l.bf16 %v529
        %v658 = vunpack.c.l.bf16 %v530
        %v659 = vunpack.c.l.bf16 %v531
        %v660 = vunpack.c.l.bf16 %v532
        %v661 = vunpack.c.l.bf16 %v533
        %v662 = vunpack.c.l.bf16 %v534
        %v663 = vunpack.c.l.bf16 %v535
        %v664 = vunpack.c.l.bf16 %v536
        %v665 = vunpack.c.l.bf16 %v537
        %v666 = vunpack.c.l.bf16 %v538
        %v667 = vunpack.c.l.bf16 %v539
        %v668 = vunpack.c.l.bf16 %v540
        %v669 = vunpack.c.l.bf16 %v541
        %v670 = vunpack.c.l.bf16 %v542
        %v671 = vunpack.c.l.bf16 %v543
        %v672 = vunpack.c.l.bf16 %v544
        %v673 = vunpack.c.l.bf16 %v545
        %v674 = vunpack.c.l.bf16 %v546
        %v675 = vunpack.c.l.bf16 %v547
        %v676 = vunpack.c.l.bf16 %v548
        %v677 = vunpack.c.l.bf16 %v549
        %v678 = vunpack.c.l.bf16 %v550
        %v679 = vunpack.c.l.bf16 %v551
        %v680 = vunpack.c.l.bf16 %v552
        %v681 = vunpack.c.l.bf16 %v553
        %v682 = vunpack.c.l.bf16 %v554
        %v683 = vunpack.c.l.bf16 %v555
        %v684 = vunpack.c.l.bf16 %v556
        %v685 = vunpack.c.l.bf16 %v557
        %v686 = vunpack.c.l.bf16 %v558
        %v687 = vunpack.c.l.bf16 %v559
        %v688 = vunpack.c.l.bf16 %v560
        %v689 = vunpack.c.l.bf16 %v561
        %v690 = vunpack.c.l.bf16 %v562
        %v691 = vunpack.c.l.bf16 %v563
        %v692 = vunpack.c.l.bf16 %v564
        %v693 = vunpack.c.l.bf16 %v565
        %v694 = vunpack.c.l.bf16 %v566
        %v695 = vunpack.c.l.bf16 %v567
        %v696 = vunpack.c.l.bf16 %v568
        %v697 = vunpack.c.l.bf16 %v569
        %v698 = vunpack.c.l.bf16 %v570
        %v699 = vunpack.c.l.bf16 %v571
        %v700 = vunpack.c.l.bf16 %v572
        %v701 = vunpack.c.l.bf16 %v573
        %v702 = vunpack.c.l.bf16 %v574
        %v703 = vunpack.c.l.bf16 %v575
        %v704 = vunpack.c.l.bf16 %v576
        %v705 = vunpack.c.l.bf16 %v577
        %v706 = vunpack.c.l.bf16 %v578
        %v707 = vunpack.c.l.bf16 %v579
        %v708 = vunpack.c.l.bf16 %v580
        %v709 = vunpack.c.l.bf16 %v581
        %v710 = vunpack.c.l.bf16 %v582
        %v711 = vunpack.c.l.bf16 %v583
        %v712 = vunpack.c.l.bf16 %v584
        %v713 = vunpack.c.l.bf16 %v585
        %v714 = vunpack.c.l.bf16 %v586
        %v715 = vunpack.c.l.bf16 %v587
        %v716 = vunpack.c.l.bf16 %v588
        %v717 = vunpack.c.l.bf16 %v589
        %v718 = vunpack.c.l.bf16 %v590
        %v719 = vunpack.c.l.bf16 %v591
        %v720 = vunpack.c.l.bf16 %v592
        %v721 = vunpack.c.l.bf16 %v593
        %v722 = vunpack.c.l.bf16 %v594
        %v723 = vstv %s466
        %v724 = vmul.f32 %v723, %v595
        %v725 = vmul.f32 %v723, %v596
        %v726 = vmul.f32 %v723, %v597
        %v727 = vmul.f32 %v723, %v598
        %v728 = vmul.f32 %v723, %v599
        %v729 = vmul.f32 %v723, %v600
        %v730 = vmul.f32 %v723, %v601
        %v731 = vmul.f32 %v723, %v602
        %v732 = vmul.f32 %v723, %v603
        %v733 = vmul.f32 %v723, %v604
        %v734 = vmul.f32 %v723, %v605
        %v735 = vmul.f32 %v723, %v606
        %v736 = vmul.f32 %v723, %v607
        %v737 = vmul.f32 %v723, %v608
        %v738 = vmul.f32 %v723, %v609
        %v739 = vmul.f32 %v723, %v610
        %v740 = vmul.f32 %v723, %v611
        %v741 = vmul.f32 %v723, %v612
        %v742 = vmul.f32 %v723, %v613
        %v743 = vmul.f32 %v723, %v614
        %v744 = vmul.f32 %v723, %v615
        %v745 = vmul.f32 %v723, %v616
        %v746 = vmul.f32 %v723, %v617
        %v747 = vmul.f32 %v723, %v618
        %v748 = vmul.f32 %v723, %v619
        %v749 = vmul.f32 %v723, %v620
        %v750 = vmul.f32 %v723, %v621
        %v751 = vmul.f32 %v723, %v622
        %v752 = vmul.f32 %v723, %v623
        %v753 = vmul.f32 %v723, %v624
        %v754 = vmul.f32 %v723, %v625
        %v755 = vmul.f32 %v723, %v626
        %v756 = vmul.f32 %v723, %v627
        %v757 = vmul.f32 %v723, %v628
        %v758 = vmul.f32 %v723, %v629
        %v759 = vmul.f32 %v723, %v630
        %v760 = vmul.f32 %v723, %v631
        %v761 = vmul.f32 %v723, %v632
        %v762 = vmul.f32 %v723, %v633
        %v763 = vmul.f32 %v723, %v634
        %v764 = vmul.f32 %v723, %v635
        %v765 = vmul.f32 %v723, %v636
        %v766 = vmul.f32 %v723, %v637
        %v767 = vmul.f32 %v723, %v638
        %v768 = vmul.f32 %v723, %v639
        %v769 = vmul.f32 %v723, %v640
        %v770 = vmul.f32 %v723, %v641
        %v771 = vmul.f32 %v723, %v642
        %v772 = vmul.f32 %v723, %v643
        %v773 = vmul.f32 %v723, %v644
        %v774 = vmul.f32 %v723, %v645
        %v775 = vmul.f32 %v723, %v646
        %v776 = vmul.f32 %v723, %v647
        %v777 = vmul.f32 %v723, %v648
        %v778 = vmul.f32 %v723, %v649
        %v779 = vmul.f32 %v723, %v650
        %v780 = vmul.f32 %v723, %v651
        %v781 = vmul.f32 %v723, %v652
        %v782 = vmul.f32 %v723, %v653
        %v783 = vmul.f32 %v723, %v654
        %v784 = vmul.f32 %v723, %v655
        %v785 = vmul.f32 %v723, %v656
        %v786 = vmul.f32 %v723, %v657
        %v787 = vmul.f32 %v723, %v658
        %v788 = vmul.f32 %v723, %v659
        %v789 = vmul.f32 %v723, %v660
        %v790 = vmul.f32 %v723, %v661
        %v791 = vmul.f32 %v723, %v662
        %v792 = vmul.f32 %v723, %v663
        %v793 = vmul.f32 %v723, %v664
        %v794 = vmul.f32 %v723, %v665
        %v795 = vmul.f32 %v723, %v666
        %v796 = vmul.f32 %v723, %v667
        %v797 = vmul.f32 %v723, %v668
        %v798 = vmul.f32 %v723, %v669
        %v799 = vmul.f32 %v723, %v670
        %v800 = vmul.f32 %v723, %v671
        %v801 = vmul.f32 %v723, %v672
        %v802 = vmul.f32 %v723, %v673
        %v803 = vmul.f32 %v723, %v674
        %v804 = vmul.f32 %v723, %v675
        %v805 = vmul.f32 %v723, %v676
        %v806 = vmul.f32 %v723, %v677
        %v807 = vmul.f32 %v723, %v678
        %v808 = vmul.f32 %v723, %v679
        %v809 = vmul.f32 %v723, %v680
        %v810 = vmul.f32 %v723, %v681
        %v811 = vmul.f32 %v723, %v682
        %v812 = vmul.f32 %v723, %v683
        %v813 = vmul.f32 %v723, %v684
        %v814 = vmul.f32 %v723, %v685
        %v815 = vmul.f32 %v723, %v686
        %v816 = vmul.f32 %v723, %v687
        %v817 = vmul.f32 %v723, %v688
        %v818 = vmul.f32 %v723, %v689
        %v819 = vmul.f32 %v723, %v690
        %v820 = vmul.f32 %v723, %v691
        %v821 = vmul.f32 %v723, %v692
        %v822 = vmul.f32 %v723, %v693
        %v823 = vmul.f32 %v723, %v694
        %v824 = vmul.f32 %v723, %v695
        %v825 = vmul.f32 %v723, %v696
        %v826 = vmul.f32 %v723, %v697
        %v827 = vmul.f32 %v723, %v698
        %v828 = vmul.f32 %v723, %v699
        %v829 = vmul.f32 %v723, %v700
        %v830 = vmul.f32 %v723, %v701
        %v831 = vmul.f32 %v723, %v702
        %v832 = vmul.f32 %v723, %v703
        %v833 = vmul.f32 %v723, %v704
        %v834 = vmul.f32 %v723, %v705
        %v835 = vmul.f32 %v723, %v706
        %v836 = vmul.f32 %v723, %v707
        %v837 = vmul.f32 %v723, %v708
        %v838 = vmul.f32 %v723, %v709
        %v839 = vmul.f32 %v723, %v710
        %v840 = vmul.f32 %v723, %v711
        %v841 = vmul.f32 %v723, %v712
        %v842 = vmul.f32 %v723, %v713
        %v843 = vmul.f32 %v723, %v714
        %v844 = vmul.f32 %v723, %v715
        %v845 = vmul.f32 %v723, %v716
        %v846 = vmul.f32 %v723, %v717
        %v847 = vmul.f32 %v723, %v718
        %v848 = vmul.f32 %v723, %v719
        %v849 = vmul.f32 %v723, %v720
        %v850 = vmul.f32 %v723, %v721
        %v851 = vmul.f32 %v723, %v722
        %s852 = sld [smem:[#allocation6 + $0x1]]
        %s853 = scalar_lea.vmem %s401, 512 [#allocation11]
        %v854 = vld [vmem:[%s853] sm:$0xf]
        %v855 = vld [vmem:[%s853 + $0x4] sm:$0xf]
        %v856 = vld [vmem:[%s853 + $0x8] sm:$0xf]
        %v857 = vld [vmem:[%s853 + $0xc] sm:$0xf]
        %v858 = vld [vmem:[%s853 + $0x10] sm:$0xf]
        %v859 = vld [vmem:[%s853 + $0x14] sm:$0xf]
        %v860 = vld [vmem:[%s853 + $0x18] sm:$0xf]
        %v861 = vld [vmem:[%s853 + $0x1c] sm:$0xf]
        %v862 = vld [vmem:[%s853 + $0x20] sm:$0xf]
        %v863 = vld [vmem:[%s853 + $0x24] sm:$0xf]
        %v864 = vld [vmem:[%s853 + $0x28] sm:$0xf]
        %v865 = vld [vmem:[%s853 + $0x2c] sm:$0xf]
        %v866 = vld [vmem:[%s853 + $0x30] sm:$0xf]
        %v867 = vld [vmem:[%s853 + $0x34] sm:$0xf]
        %v868 = vld [vmem:[%s853 + $0x38] sm:$0xf]
        %v869 = vld [vmem:[%s853 + $0x3c] sm:$0xf]
        %v870 = vld [vmem:[%s853 + $0x40] sm:$0xf]
        %v871 = vld [vmem:[%s853 + $0x44] sm:$0xf]
        %v872 = vld [vmem:[%s853 + $0x48] sm:$0xf]
        %v873 = vld [vmem:[%s853 + $0x4c] sm:$0xf]
        %v874 = vld [vmem:[%s853 + $0x50] sm:$0xf]
        %v875 = vld [vmem:[%s853 + $0x54] sm:$0xf]
        %v876 = vld [vmem:[%s853 + $0x58] sm:$0xf]
        %v877 = vld [vmem:[%s853 + $0x5c] sm:$0xf]
        %v878 = vld [vmem:[%s853 + $0x60] sm:$0xf]
        %v879 = vld [vmem:[%s853 + $0x64] sm:$0xf]
        %v880 = vld [vmem:[%s853 + $0x68] sm:$0xf]
        %v881 = vld [vmem:[%s853 + $0x6c] sm:$0xf]
        %v882 = vld [vmem:[%s853 + $0x70] sm:$0xf]
        %v883 = vld [vmem:[%s853 + $0x74] sm:$0xf]
        %v884 = vld [vmem:[%s853 + $0x78] sm:$0xf]
        %v885 = vld [vmem:[%s853 + $0x7c] sm:$0xf]
        %v886 = vld [vmem:[%s853 + $0x80] sm:$0xf]
        %v887 = vld [vmem:[%s853 + $0x84] sm:$0xf]
        %v888 = vld [vmem:[%s853 + $0x88] sm:$0xf]
        %v889 = vld [vmem:[%s853 + $0x8c] sm:$0xf]
        %v890 = vld [vmem:[%s853 + $0x90] sm:$0xf]
        %v891 = vld [vmem:[%s853 + $0x94] sm:$0xf]
        %v892 = vld [vmem:[%s853 + $0x98] sm:$0xf]
        %v893 = vld [vmem:[%s853 + $0x9c] sm:$0xf]
        %v894 = vld [vmem:[%s853 + $0xa0] sm:$0xf]
        %v895 = vld [vmem:[%s853 + $0xa4] sm:$0xf]
        %v896 = vld [vmem:[%s853 + $0xa8] sm:$0xf]
        %v897 = vld [vmem:[%s853 + $0xac] sm:$0xf]
        %v898 = vld [vmem:[%s853 + $0xb0] sm:$0xf]
        %v899 = vld [vmem:[%s853 + $0xb4] sm:$0xf]
        %v900 = vld [vmem:[%s853 + $0xb8] sm:$0xf]
        %v901 = vld [vmem:[%s853 + $0xbc] sm:$0xf]
        %v902 = vld [vmem:[%s853 + $0xc0] sm:$0xf]
        %v903 = vld [vmem:[%s853 + $0xc4] sm:$0xf]
        %v904 = vld [vmem:[%s853 + $0xc8] sm:$0xf]
        %v905 = vld [vmem:[%s853 + $0xcc] sm:$0xf]
        %v906 = vld [vmem:[%s853 + $0xd0] sm:$0xf]
        %v907 = vld [vmem:[%s853 + $0xd4] sm:$0xf]
        %v908 = vld [vmem:[%s853 + $0xd8] sm:$0xf]
        %v909 = vld [vmem:[%s853 + $0xdc] sm:$0xf]
        %v910 = vld [vmem:[%s853 + $0xe0] sm:$0xf]
        %v911 = vld [vmem:[%s853 + $0xe4] sm:$0xf]
        %v912 = vld [vmem:[%s853 + $0xe8] sm:$0xf]
        %v913 = vld [vmem:[%s853 + $0xec] sm:$0xf]
        %v914 = vld [vmem:[%s853 + $0xf0] sm:$0xf]
        %v915 = vld [vmem:[%s853 + $0xf4] sm:$0xf]
        %v916 = vld [vmem:[%s853 + $0xf8] sm:$0xf]
        %v917 = vld [vmem:[%s853 + $0xfc] sm:$0xf]
        %v918 = vld [vmem:[%s853 + $0x100] sm:$0xf]
        %v919 = vld [vmem:[%s853 + $0x104] sm:$0xf]
        %v920 = vld [vmem:[%s853 + $0x108] sm:$0xf]
        %v921 = vld [vmem:[%s853 + $0x10c] sm:$0xf]
        %v922 = vld [vmem:[%s853 + $0x110] sm:$0xf]
        %v923 = vld [vmem:[%s853 + $0x114] sm:$0xf]
        %v924 = vld [vmem:[%s853 + $0x118] sm:$0xf]
        %v925 = vld [vmem:[%s853 + $0x11c] sm:$0xf]
        %v926 = vld [vmem:[%s853 + $0x120] sm:$0xf]
        %v927 = vld [vmem:[%s853 + $0x124] sm:$0xf]
        %v928 = vld [vmem:[%s853 + $0x128] sm:$0xf]
        %v929 = vld [vmem:[%s853 + $0x12c] sm:$0xf]
        %v930 = vld [vmem:[%s853 + $0x130] sm:$0xf]
        %v931 = vld [vmem:[%s853 + $0x134] sm:$0xf]
        %v932 = vld [vmem:[%s853 + $0x138] sm:$0xf]
        %v933 = vld [vmem:[%s853 + $0x13c] sm:$0xf]
        %v934 = vld [vmem:[%s853 + $0x140] sm:$0xf]
        %v935 = vld [vmem:[%s853 + $0x144] sm:$0xf]
        %v936 = vld [vmem:[%s853 + $0x148] sm:$0xf]
        %v937 = vld [vmem:[%s853 + $0x14c] sm:$0xf]
        %v938 = vld [vmem:[%s853 + $0x150] sm:$0xf]
        %v939 = vld [vmem:[%s853 + $0x154] sm:$0xf]
        %v940 = vld [vmem:[%s853 + $0x158] sm:$0xf]
        %v941 = vld [vmem:[%s853 + $0x15c] sm:$0xf]
        %v942 = vld [vmem:[%s853 + $0x160] sm:$0xf]
        %v943 = vld [vmem:[%s853 + $0x164] sm:$0xf]
        %v944 = vld [vmem:[%s853 + $0x168] sm:$0xf]
        %v945 = vld [vmem:[%s853 + $0x16c] sm:$0xf]
        %v946 = vld [vmem:[%s853 + $0x170] sm:$0xf]
        %v947 = vld [vmem:[%s853 + $0x174] sm:$0xf]
        %v948 = vld [vmem:[%s853 + $0x178] sm:$0xf]
        %v949 = vld [vmem:[%s853 + $0x17c] sm:$0xf]
        %v950 = vld [vmem:[%s853 + $0x180] sm:$0xf]
        %v951 = vld [vmem:[%s853 + $0x184] sm:$0xf]
        %v952 = vld [vmem:[%s853 + $0x188] sm:$0xf]
        %v953 = vld [vmem:[%s853 + $0x18c] sm:$0xf]
        %v954 = vld [vmem:[%s853 + $0x190] sm:$0xf]
        %v955 = vld [vmem:[%s853 + $0x194] sm:$0xf]
        %v956 = vld [vmem:[%s853 + $0x198] sm:$0xf]
        %v957 = vld [vmem:[%s853 + $0x19c] sm:$0xf]
        %v958 = vld [vmem:[%s853 + $0x1a0] sm:$0xf]
        %v959 = vld [vmem:[%s853 + $0x1a4] sm:$0xf]
        %v960 = vld [vmem:[%s853 + $0x1a8] sm:$0xf]
        %v961 = vld [vmem:[%s853 + $0x1ac] sm:$0xf]
        %v962 = vld [vmem:[%s853 + $0x1b0] sm:$0xf]
        %v963 = vld [vmem:[%s853 + $0x1b4] sm:$0xf]
        %v964 = vld [vmem:[%s853 + $0x1b8] sm:$0xf]
        %v965 = vld [vmem:[%s853 + $0x1bc] sm:$0xf]
        %v966 = vld [vmem:[%s853 + $0x1c0] sm:$0xf]
        %v967 = vld [vmem:[%s853 + $0x1c4] sm:$0xf]
        %v968 = vld [vmem:[%s853 + $0x1c8] sm:$0xf]
        %v969 = vld [vmem:[%s853 + $0x1cc] sm:$0xf]
        %v970 = vld [vmem:[%s853 + $0x1d0] sm:$0xf]
        %v971 = vld [vmem:[%s853 + $0x1d4] sm:$0xf]
        %v972 = vld [vmem:[%s853 + $0x1d8] sm:$0xf]
        %v973 = vld [vmem:[%s853 + $0x1dc] sm:$0xf]
        %v974 = vld [vmem:[%s853 + $0x1e0] sm:$0xf]
        %v975 = vld [vmem:[%s853 + $0x1e4] sm:$0xf]
        %v976 = vld [vmem:[%s853 + $0x1e8] sm:$0xf]
        %v977 = vld [vmem:[%s853 + $0x1ec] sm:$0xf]
        %v978 = vld [vmem:[%s853 + $0x1f0] sm:$0xf]
        %v979 = vld [vmem:[%s853 + $0x1f4] sm:$0xf]
        %v980 = vld [vmem:[%s853 + $0x1f8] sm:$0xf]
        %v981 = vld [vmem:[%s853 + $0x1fc] sm:$0xf]
        %v982 = vunpack.c.l.bf16 %v854
        %v983 = vunpack.c.l.bf16 %v855
        %v984 = vunpack.c.l.bf16 %v856
        %v985 = vunpack.c.l.bf16 %v857
        %v986 = vunpack.c.l.bf16 %v858
        %v987 = vunpack.c.l.bf16 %v859
        %v988 = vunpack.c.l.bf16 %v860
        %v989 = vunpack.c.l.bf16 %v861
        %v990 = vunpack.c.l.bf16 %v862
        %v991 = vunpack.c.l.bf16 %v863
        %v992 = vunpack.c.l.bf16 %v864
        %v993 = vunpack.c.l.bf16 %v865
        %v994 = vunpack.c.l.bf16 %v866
        %v995 = vunpack.c.l.bf16 %v867
        %v996 = vunpack.c.l.bf16 %v868
        %v997 = vunpack.c.l.bf16 %v869
        %v998 = vunpack.c.l.bf16 %v870
        %v999 = vunpack.c.l.bf16 %v871
        %v1000 = vunpack.c.l.bf16 %v872
        %v1001 = vunpack.c.l.bf16 %v873
        %v1002 = vunpack.c.l.bf16 %v874
        %v1003 = vunpack.c.l.bf16 %v875
        %v1004 = vunpack.c.l.bf16 %v876
        %v1005 = vunpack.c.l.bf16 %v877
        %v1006 = vunpack.c.l.bf16 %v878
        %v1007 = vunpack.c.l.bf16 %v879
        %v1008 = vunpack.c.l.bf16 %v880
        %v1009 = vunpack.c.l.bf16 %v881
        %v1010 = vunpack.c.l.bf16 %v882
        %v1011 = vunpack.c.l.bf16 %v883
        %v1012 = vunpack.c.l.bf16 %v884
        %v1013 = vunpack.c.l.bf16 %v885
        %v1014 = vunpack.c.l.bf16 %v886
        %v1015 = vunpack.c.l.bf16 %v887
        %v1016 = vunpack.c.l.bf16 %v888
        %v1017 = vunpack.c.l.bf16 %v889
        %v1018 = vunpack.c.l.bf16 %v890
        %v1019 = vunpack.c.l.bf16 %v891
        %v1020 = vunpack.c.l.bf16 %v892
        %v1021 = vunpack.c.l.bf16 %v893
        %v1022 = vunpack.c.l.bf16 %v894
        %v1023 = vunpack.c.l.bf16 %v895
        %v1024 = vunpack.c.l.bf16 %v896
        %v1025 = vunpack.c.l.bf16 %v897
        %v1026 = vunpack.c.l.bf16 %v898
        %v1027 = vunpack.c.l.bf16 %v899
        %v1028 = vunpack.c.l.bf16 %v900
        %v1029 = vunpack.c.l.bf16 %v901
        %v1030 = vunpack.c.l.bf16 %v902
        %v1031 = vunpack.c.l.bf16 %v903
        %v1032 = vunpack.c.l.bf16 %v904
        %v1033 = vunpack.c.l.bf16 %v905
        %v1034 = vunpack.c.l.bf16 %v906
        %v1035 = vunpack.c.l.bf16 %v907
        %v1036 = vunpack.c.l.bf16 %v908
        %v1037 = vunpack.c.l.bf16 %v909
        %v1038 = vunpack.c.l.bf16 %v910
        %v1039 = vunpack.c.l.bf16 %v911
        %v1040 = vunpack.c.l.bf16 %v912
        %v1041 = vunpack.c.l.bf16 %v913
        %v1042 = vunpack.c.l.bf16 %v914
        %v1043 = vunpack.c.l.bf16 %v915
        %v1044 = vunpack.c.l.bf16 %v916
        %v1045 = vunpack.c.l.bf16 %v917
        %v1046 = vunpack.c.l.bf16 %v918
        %v1047 = vunpack.c.l.bf16 %v919
        %v1048 = vunpack.c.l.bf16 %v920
        %v1049 = vunpack.c.l.bf16 %v921
        %v1050 = vunpack.c.l.bf16 %v922
        %v1051 = vunpack.c.l.bf16 %v923
        %v1052 = vunpack.c.l.bf16 %v924
        %v1053 = vunpack.c.l.bf16 %v925
        %v1054 = vunpack.c.l.bf16 %v926
        %v1055 = vunpack.c.l.bf16 %v927
        %v1056 = vunpack.c.l.bf16 %v928
        %v1057 = vunpack.c.l.bf16 %v929
        %v1058 = vunpack.c.l.bf16 %v930
        %v1059 = vunpack.c.l.bf16 %v931
        %v1060 = vunpack.c.l.bf16 %v932
        %v1061 = vunpack.c.l.bf16 %v933
        %v1062 = vunpack.c.l.bf16 %v934
        %v1063 = vunpack.c.l.bf16 %v935
        %v1064 = vunpack.c.l.bf16 %v936
        %v1065 = vunpack.c.l.bf16 %v937
        %v1066 = vunpack.c.l.bf16 %v938
        %v1067 = vunpack.c.l.bf16 %v939
        %v1068 = vunpack.c.l.bf16 %v940
        %v1069 = vunpack.c.l.bf16 %v941
        %v1070 = vunpack.c.l.bf16 %v942
        %v1071 = vunpack.c.l.bf16 %v943
        %v1072 = vunpack.c.l.bf16 %v944
        %v1073 = vunpack.c.l.bf16 %v945
        %v1074 = vunpack.c.l.bf16 %v946
        %v1075 = vunpack.c.l.bf16 %v947
        %v1076 = vunpack.c.l.bf16 %v948
        %v1077 = vunpack.c.l.bf16 %v949
        %v1078 = vunpack.c.l.bf16 %v950
        %v1079 = vunpack.c.l.bf16 %v951
        %v1080 = vunpack.c.l.bf16 %v952
        %v1081 = vunpack.c.l.bf16 %v953
        %v1082 = vunpack.c.l.bf16 %v954
        %v1083 = vunpack.c.l.bf16 %v955
        %v1084 = vunpack.c.l.bf16 %v956
        %v1085 = vunpack.c.l.bf16 %v957
        %v1086 = vunpack.c.l.bf16 %v958
        %v1087 = vunpack.c.l.bf16 %v959
        %v1088 = vunpack.c.l.bf16 %v960
        %v1089 = vunpack.c.l.bf16 %v961
        %v1090 = vunpack.c.l.bf16 %v962
        %v1091 = vunpack.c.l.bf16 %v963
        %v1092 = vunpack.c.l.bf16 %v964
        %v1093 = vunpack.c.l.bf16 %v965
        %v1094 = vunpack.c.l.bf16 %v966
        %v1095 = vunpack.c.l.bf16 %v967
        %v1096 = vunpack.c.l.bf16 %v968
        %v1097 = vunpack.c.l.bf16 %v969
        %v1098 = vunpack.c.l.bf16 %v970
        %v1099 = vunpack.c.l.bf16 %v971
        %v1100 = vunpack.c.l.bf16 %v972
        %v1101 = vunpack.c.l.bf16 %v973
        %v1102 = vunpack.c.l.bf16 %v974
        %v1103 = vunpack.c.l.bf16 %v975
        %v1104 = vunpack.c.l.bf16 %v976
        %v1105 = vunpack.c.l.bf16 %v977
        %v1106 = vunpack.c.l.bf16 %v978
        %v1107 = vunpack.c.l.bf16 %v979
        %v1108 = vunpack.c.l.bf16 %v980
        %v1109 = vunpack.c.l.bf16 %v981
        %v1110 = vstv %s852
        %v1111 = vmul.f32 %v1110, %v982
        %v1112 = vmul.f32 %v1110, %v983
        %v1113 = vmul.f32 %v1110, %v984
        %v1114 = vmul.f32 %v1110, %v985
        %v1115 = vmul.f32 %v1110, %v986
        %v1116 = vmul.f32 %v1110, %v987
        %v1117 = vmul.f32 %v1110, %v988
        %v1118 = vmul.f32 %v1110, %v989
        %v1119 = vmul.f32 %v1110, %v990
        %v1120 = vmul.f32 %v1110, %v991
        %v1121 = vmul.f32 %v1110, %v992
        %v1122 = vmul.f32 %v1110, %v993
        %v1123 = vmul.f32 %v1110, %v994
        %v1124 = vmul.f32 %v1110, %v995
        %v1125 = vmul.f32 %v1110, %v996
        %v1126 = vmul.f32 %v1110, %v997
        %v1127 = vmul.f32 %v1110, %v998
        %v1128 = vmul.f32 %v1110, %v999
        %v1129 = vmul.f32 %v1110, %v1000
        %v1130 = vmul.f32 %v1110, %v1001
        %v1131 = vmul.f32 %v1110, %v1002
        %v1132 = vmul.f32 %v1110, %v1003
        %v1133 = vmul.f32 %v1110, %v1004
        %v1134 = vmul.f32 %v1110, %v1005
        %v1135 = vmul.f32 %v1110, %v1006
        %v1136 = vmul.f32 %v1110, %v1007
        %v1137 = vmul.f32 %v1110, %v1008
        %v1138 = vmul.f32 %v1110, %v1009
        %v1139 = vmul.f32 %v1110, %v1010
        %v1140 = vmul.f32 %v1110, %v1011
        %v1141 = vmul.f32 %v1110, %v1012
        %v1142 = vmul.f32 %v1110, %v1013
        %v1143 = vmul.f32 %v1110, %v1014
        %v1144 = vmul.f32 %v1110, %v1015
        %v1145 = vmul.f32 %v1110, %v1016
        %v1146 = vmul.f32 %v1110, %v1017
        %v1147 = vmul.f32 %v1110, %v1018
        %v1148 = vmul.f32 %v1110, %v1019
        %v1149 = vmul.f32 %v1110, %v1020
        %v1150 = vmul.f32 %v1110, %v1021
        %v1151 = vmul.f32 %v1110, %v1022
        %v1152 = vmul.f32 %v1110, %v1023
        %v1153 = vmul.f32 %v1110, %v1024
        %v1154 = vmul.f32 %v1110, %v1025
        %v1155 = vmul.f32 %v1110, %v1026
        %v1156 = vmul.f32 %v1110, %v1027
        %v1157 = vmul.f32 %v1110, %v1028
        %v1158 = vmul.f32 %v1110, %v1029
        %v1159 = vmul.f32 %v1110, %v1030
        %v1160 = vmul.f32 %v1110, %v1031
        %v1161 = vmul.f32 %v1110, %v1032
        %v1162 = vmul.f32 %v1110, %v1033
        %v1163 = vmul.f32 %v1110, %v1034
        %v1164 = vmul.f32 %v1110, %v1035
        %v1165 = vmul.f32 %v1110, %v1036
        %v1166 = vmul.f32 %v1110, %v1037
        %v1167 = vmul.f32 %v1110, %v1038
        %v1168 = vmul.f32 %v1110, %v1039
        %v1169 = vmul.f32 %v1110, %v1040
        %v1170 = vmul.f32 %v1110, %v1041
        %v1171 = vmul.f32 %v1110, %v1042
        %v1172 = vmul.f32 %v1110, %v1043
        %v1173 = vmul.f32 %v1110, %v1044
        %v1174 = vmul.f32 %v1110, %v1045
        %v1175 = vmul.f32 %v1110, %v1046
        %v1176 = vmul.f32 %v1110, %v1047
        %v1177 = vmul.f32 %v1110, %v1048
        %v1178 = vmul.f32 %v1110, %v1049
        %v1179 = vmul.f32 %v1110, %v1050
        %v1180 = vmul.f32 %v1110, %v1051
        %v1181 = vmul.f32 %v1110, %v1052
        %v1182 = vmul.f32 %v1110, %v1053
        %v1183 = vmul.f32 %v1110, %v1054
        %v1184 = vmul.f32 %v1110, %v1055
        %v1185 = vmul.f32 %v1110, %v1056
        %v1186 = vmul.f32 %v1110, %v1057
        %v1187 = vmul.f32 %v1110, %v1058
        %v1188 = vmul.f32 %v1110, %v1059
        %v1189 = vmul.f32 %v1110, %v1060
        %v1190 = vmul.f32 %v1110, %v1061
        %v1191 = vmul.f32 %v1110, %v1062
        %v1192 = vmul.f32 %v1110, %v1063
        %v1193 = vmul.f32 %v1110, %v1064
        %v1194 = vmul.f32 %v1110, %v1065
        %v1195 = vmul.f32 %v1110, %v1066
        %v1196 = vmul.f32 %v1110, %v1067
        %v1197 = vmul.f32 %v1110, %v1068
        %v1198 = vmul.f32 %v1110, %v1069
        %v1199 = vmul.f32 %v1110, %v1070
        %v1200 = vmul.f32 %v1110, %v1071
        %v1201 = vmul.f32 %v1110, %v1072
        %v1202 = vmul.f32 %v1110, %v1073
        %v1203 = vmul.f32 %v1110, %v1074
        %v1204 = vmul.f32 %v1110, %v1075
        %v1205 = vmul.f32 %v1110, %v1076
        %v1206 = vmul.f32 %v1110, %v1077
        %v1207 = vmul.f32 %v1110, %v1078
        %v1208 = vmul.f32 %v1110, %v1079
        %v1209 = vmul.f32 %v1110, %v1080
        %v1210 = vmul.f32 %v1110, %v1081
        %v1211 = vmul.f32 %v1110, %v1082
        %v1212 = vmul.f32 %v1110, %v1083
        %v1213 = vmul.f32 %v1110, %v1084
        %v1214 = vmul.f32 %v1110, %v1085
        %v1215 = vmul.f32 %v1110, %v1086
        %v1216 = vmul.f32 %v1110, %v1087
        %v1217 = vmul.f32 %v1110, %v1088
        %v1218 = vmul.f32 %v1110, %v1089
        %v1219 = vmul.f32 %v1110, %v1090
        %v1220 = vmul.f32 %v1110, %v1091
        %v1221 = vmul.f32 %v1110, %v1092
        %v1222 = vmul.f32 %v1110, %v1093
        %v1223 = vmul.f32 %v1110, %v1094
        %v1224 = vmul.f32 %v1110, %v1095
        %v1225 = vmul.f32 %v1110, %v1096
        %v1226 = vmul.f32 %v1110, %v1097
        %v1227 = vmul.f32 %v1110, %v1098
        %v1228 = vmul.f32 %v1110, %v1099
        %v1229 = vmul.f32 %v1110, %v1100
        %v1230 = vmul.f32 %v1110, %v1101
        %v1231 = vmul.f32 %v1110, %v1102
        %v1232 = vmul.f32 %v1110, %v1103
        %v1233 = vmul.f32 %v1110, %v1104
        %v1234 = vmul.f32 %v1110, %v1105
        %v1235 = vmul.f32 %v1110, %v1106
        %v1236 = vmul.f32 %v1110, %v1107
        %v1237 = vmul.f32 %v1110, %v1108
        %v1238 = vmul.f32 %v1110, %v1109
        %v1239 = vadd.f32 %v724, %v1111
        %v1240 = vadd.f32 %v725, %v1112
        %v1241 = vadd.f32 %v726, %v1113
        %v1242 = vadd.f32 %v727, %v1114
        %v1243 = vadd.f32 %v728, %v1115
        %v1244 = vadd.f32 %v729, %v1116
        %v1245 = vadd.f32 %v730, %v1117
        %v1246 = vadd.f32 %v731, %v1118
        %v1247 = vadd.f32 %v732, %v1119
        %v1248 = vadd.f32 %v733, %v1120
        %v1249 = vadd.f32 %v734, %v1121
        %v1250 = vadd.f32 %v735, %v1122
        %v1251 = vadd.f32 %v736, %v1123
        %v1252 = vadd.f32 %v737, %v1124
        %v1253 = vadd.f32 %v738, %v1125
        %v1254 = vadd.f32 %v739, %v1126
        %v1255 = vadd.f32 %v740, %v1127
        %v1256 = vadd.f32 %v741, %v1128
        %v1257 = vadd.f32 %v742, %v1129
        %v1258 = vadd.f32 %v743, %v1130
        %v1259 = vadd.f32 %v744, %v1131
        %v1260 = vadd.f32 %v745, %v1132
        %v1261 = vadd.f32 %v746, %v1133
        %v1262 = vadd.f32 %v747, %v1134
        %v1263 = vadd.f32 %v748, %v1135
        %v1264 = vadd.f32 %v749, %v1136
        %v1265 = vadd.f32 %v750, %v1137
        %v1266 = vadd.f32 %v751, %v1138
        %v1267 = vadd.f32 %v752, %v1139
        %v1268 = vadd.f32 %v753, %v1140
        %v1269 = vadd.f32 %v754, %v1141
        %v1270 = vadd.f32 %v755, %v1142
        %v1271 = vadd.f32 %v756, %v1143
        %v1272 = vadd.f32 %v757, %v1144
        %v1273 = vadd.f32 %v758, %v1145
        %v1274 = vadd.f32 %v759, %v1146
        %v1275 = vadd.f32 %v760, %v1147
        %v1276 = vadd.f32 %v761, %v1148
        %v1277 = vadd.f32 %v762, %v1149
        %v1278 = vadd.f32 %v763, %v1150
        %v1279 = vadd.f32 %v764, %v1151
        %v1280 = vadd.f32 %v765, %v1152
        %v1281 = vadd.f32 %v766, %v1153
        %v1282 = vadd.f32 %v767, %v1154
        %v1283 = vadd.f32 %v768, %v1155
        %v1284 = vadd.f32 %v769, %v1156
        %v1285 = vadd.f32 %v770, %v1157
        %v1286 = vadd.f32 %v771, %v1158
        %v1287 = vadd.f32 %v772, %v1159
        %v1288 = vadd.f32 %v773, %v1160
        %v1289 = vadd.f32 %v774, %v1161
        %v1290 = vadd.f32 %v775, %v1162
        %v1291 = vadd.f32 %v776, %v1163
        %v1292 = vadd.f32 %v777, %v1164
        %v1293 = vadd.f32 %v778, %v1165
        %v1294 = vadd.f32 %v779, %v1166
        %v1295 = vadd.f32 %v780, %v1167
        %v1296 = vadd.f32 %v781, %v1168
        %v1297 = vadd.f32 %v782, %v1169
        %v1298 = vadd.f32 %v783, %v1170
        %v1299 = vadd.f32 %v784, %v1171
        %v1300 = vadd.f32 %v785, %v1172
        %v1301 = vadd.f32 %v786, %v1173
        %v1302 = vadd.f32 %v787, %v1174
        %v1303 = vadd.f32 %v788, %v1175
        %v1304 = vadd.f32 %v789, %v1176
        %v1305 = vadd.f32 %v790, %v1177
        %v1306 = vadd.f32 %v791, %v1178
        %v1307 = vadd.f32 %v792, %v1179
        %v1308 = vadd.f32 %v793, %v1180
        %v1309 = vadd.f32 %v794, %v1181
        %v1310 = vadd.f32 %v795, %v1182
        %v1311 = vadd.f32 %v796, %v1183
        %v1312 = vadd.f32 %v797, %v1184
        %v1313 = vadd.f32 %v798, %v1185
        %v1314 = vadd.f32 %v799, %v1186
        %v1315 = vadd.f32 %v800, %v1187
        %v1316 = vadd.f32 %v801, %v1188
        %v1317 = vadd.f32 %v802, %v1189
        %v1318 = vadd.f32 %v803, %v1190
        %v1319 = vadd.f32 %v804, %v1191
        %v1320 = vadd.f32 %v805, %v1192
        %v1321 = vadd.f32 %v806, %v1193
        %v1322 = vadd.f32 %v807, %v1194
        %v1323 = vadd.f32 %v808, %v1195
        %v1324 = vadd.f32 %v809, %v1196
        %v1325 = vadd.f32 %v810, %v1197
        %v1326 = vadd.f32 %v811, %v1198
        %v1327 = vadd.f32 %v812, %v1199
        %v1328 = vadd.f32 %v813, %v1200
        %v1329 = vadd.f32 %v814, %v1201
        %v1330 = vadd.f32 %v815, %v1202
        %v1331 = vadd.f32 %v816, %v1203
        %v1332 = vadd.f32 %v817, %v1204
        %v1333 = vadd.f32 %v818, %v1205
        %v1334 = vadd.f32 %v819, %v1206
        %v1335 = vadd.f32 %v820, %v1207
        %v1336 = vadd.f32 %v821, %v1208
        %v1337 = vadd.f32 %v822, %v1209
        %v1338 = vadd.f32 %v823, %v1210
        %v1339 = vadd.f32 %v824, %v1211
        %v1340 = vadd.f32 %v825, %v1212
        %v1341 = vadd.f32 %v826, %v1213
        %v1342 = vadd.f32 %v827, %v1214
        %v1343 = vadd.f32 %v828, %v1215
        %v1344 = vadd.f32 %v829, %v1216
        %v1345 = vadd.f32 %v830, %v1217
        %v1346 = vadd.f32 %v831, %v1218
        %v1347 = vadd.f32 %v832, %v1219
        %v1348 = vadd.f32 %v833, %v1220
        %v1349 = vadd.f32 %v834, %v1221
        %v1350 = vadd.f32 %v835, %v1222
        %v1351 = vadd.f32 %v836, %v1223
        %v1352 = vadd.f32 %v837, %v1224
        %v1353 = vadd.f32 %v838, %v1225
        %v1354 = vadd.f32 %v839, %v1226
        %v1355 = vadd.f32 %v840, %v1227
        %v1356 = vadd.f32 %v841, %v1228
        %v1357 = vadd.f32 %v842, %v1229
        %v1358 = vadd.f32 %v843, %v1230
        %v1359 = vadd.f32 %v844, %v1231
        %v1360 = vadd.f32 %v845, %v1232
        %v1361 = vadd.f32 %v846, %v1233
        %v1362 = vadd.f32 %v847, %v1234
        %v1363 = vadd.f32 %v848, %v1235
        %v1364 = vadd.f32 %v849, %v1236
        %v1365 = vadd.f32 %v850, %v1237
        %v1366 = vadd.f32 %v851, %v1238
        %s1367 = sld [smem:[#allocation6 + $0x2]]
        %s1368 = scalar_lea.vmem %s401, 1024 [#allocation11]
        %v1369 = vld [vmem:[%s1368] sm:$0xf]
        %v1370 = vld [vmem:[%s1368 + $0x4] sm:$0xf]
        %v1371 = vld [vmem:[%s1368 + $0x8] sm:$0xf]
        %v1372 = vld [vmem:[%s1368 + $0xc] sm:$0xf]
        %v1373 = vld [vmem:[%s1368 + $0x10] sm:$0xf]
        %v1374 = vld [vmem:[%s1368 + $0x14] sm:$0xf]
        %v1375 = vld [vmem:[%s1368 + $0x18] sm:$0xf]
        %v1376 = vld [vmem:[%s1368 + $0x1c] sm:$0xf]
        %v1377 = vld [vmem:[%s1368 + $0x20] sm:$0xf]
        %v1378 = vld [vmem:[%s1368 + $0x24] sm:$0xf]
        %v1379 = vld [vmem:[%s1368 + $0x28] sm:$0xf]
        %v1380 = vld [vmem:[%s1368 + $0x2c] sm:$0xf]
        %v1381 = vld [vmem:[%s1368 + $0x30] sm:$0xf]
        %v1382 = vld [vmem:[%s1368 + $0x34] sm:$0xf]
        %v1383 = vld [vmem:[%s1368 + $0x38] sm:$0xf]
        %v1384 = vld [vmem:[%s1368 + $0x3c] sm:$0xf]
        %v1385 = vld [vmem:[%s1368 + $0x40] sm:$0xf]
        %v1386 = vld [vmem:[%s1368 + $0x44] sm:$0xf]
        %v1387 = vld [vmem:[%s1368 + $0x48] sm:$0xf]
        %v1388 = vld [vmem:[%s1368 + $0x4c] sm:$0xf]
        %v1389 = vld [vmem:[%s1368 + $0x50] sm:$0xf]
        %v1390 = vld [vmem:[%s1368 + $0x54] sm:$0xf]
        %v1391 = vld [vmem:[%s1368 + $0x58] sm:$0xf]
        %v1392 = vld [vmem:[%s1368 + $0x5c] sm:$0xf]
        %v1393 = vld [vmem:[%s1368 + $0x60] sm:$0xf]
        %v1394 = vld [vmem:[%s1368 + $0x64] sm:$0xf]
        %v1395 = vld [vmem:[%s1368 + $0x68] sm:$0xf]
        %v1396 = vld [vmem:[%s1368 + $0x6c] sm:$0xf]
        %v1397 = vld [vmem:[%s1368 + $0x70] sm:$0xf]
        %v1398 = vld [vmem:[%s1368 + $0x74] sm:$0xf]
        %v1399 = vld [vmem:[%s1368 + $0x78] sm:$0xf]
        %v1400 = vld [vmem:[%s1368 + $0x7c] sm:$0xf]
        %v1401 = vld [vmem:[%s1368 + $0x80] sm:$0xf]
        %v1402 = vld [vmem:[%s1368 + $0x84] sm:$0xf]
        %v1403 = vld [vmem:[%s1368 + $0x88] sm:$0xf]
        %v1404 = vld [vmem:[%s1368 + $0x8c] sm:$0xf]
        %v1405 = vld [vmem:[%s1368 + $0x90] sm:$0xf]
        %v1406 = vld [vmem:[%s1368 + $0x94] sm:$0xf]
        %v1407 = vld [vmem:[%s1368 + $0x98] sm:$0xf]
        %v1408 = vld [vmem:[%s1368 + $0x9c] sm:$0xf]
        %v1409 = vld [vmem:[%s1368 + $0xa0] sm:$0xf]
        %v1410 = vld [vmem:[%s1368 + $0xa4] sm:$0xf]
        %v1411 = vld [vmem:[%s1368 + $0xa8] sm:$0xf]
        %v1412 = vld [vmem:[%s1368 + $0xac] sm:$0xf]
        %v1413 = vld [vmem:[%s1368 + $0xb0] sm:$0xf]
        %v1414 = vld [vmem:[%s1368 + $0xb4] sm:$0xf]
        %v1415 = vld [vmem:[%s1368 + $0xb8] sm:$0xf]
        %v1416 = vld [vmem:[%s1368 + $0xbc] sm:$0xf]
        %v1417 = vld [vmem:[%s1368 + $0xc0] sm:$0xf]
        %v1418 = vld [vmem:[%s1368 + $0xc4] sm:$0xf]
        %v1419 = vld [vmem:[%s1368 + $0xc8] sm:$0xf]
        %v1420 = vld [vmem:[%s1368 + $0xcc] sm:$0xf]
        %v1421 = vld [vmem:[%s1368 + $0xd0] sm:$0xf]
        %v1422 = vld [vmem:[%s1368 + $0xd4] sm:$0xf]
        %v1423 = vld [vmem:[%s1368 + $0xd8] sm:$0xf]
        %v1424 = vld [vmem:[%s1368 + $0xdc] sm:$0xf]
        %v1425 = vld [vmem:[%s1368 + $0xe0] sm:$0xf]
        %v1426 = vld [vmem:[%s1368 + $0xe4] sm:$0xf]
        %v1427 = vld [vmem:[%s1368 + $0xe8] sm:$0xf]
        %v1428 = vld [vmem:[%s1368 + $0xec] sm:$0xf]
        %v1429 = vld [vmem:[%s1368 + $0xf0] sm:$0xf]
        %v1430 = vld [vmem:[%s1368 + $0xf4] sm:$0xf]
        %v1431 = vld [vmem:[%s1368 + $0xf8] sm:$0xf]
        %v1432 = vld [vmem:[%s1368 + $0xfc] sm:$0xf]
        %v1433 = vld [vmem:[%s1368 + $0x100] sm:$0xf]
        %v1434 = vld [vmem:[%s1368 + $0x104] sm:$0xf]
        %v1435 = vld [vmem:[%s1368 + $0x108] sm:$0xf]
        %v1436 = vld [vmem:[%s1368 + $0x10c] sm:$0xf]
        %v1437 = vld [vmem:[%s1368 + $0x110] sm:$0xf]
        %v1438 = vld [vmem:[%s1368 + $0x114] sm:$0xf]
        %v1439 = vld [vmem:[%s1368 + $0x118] sm:$0xf]
        %v1440 = vld [vmem:[%s1368 + $0x11c] sm:$0xf]
        %v1441 = vld [vmem:[%s1368 + $0x120] sm:$0xf]
        %v1442 = vld [vmem:[%s1368 + $0x124] sm:$0xf]
        %v1443 = vld [vmem:[%s1368 + $0x128] sm:$0xf]
        %v1444 = vld [vmem:[%s1368 + $0x12c] sm:$0xf]
        %v1445 = vld [vmem:[%s1368 + $0x130] sm:$0xf]
        %v1446 = vld [vmem:[%s1368 + $0x134] sm:$0xf]
        %v1447 = vld [vmem:[%s1368 + $0x138] sm:$0xf]
        %v1448 = vld [vmem:[%s1368 + $0x13c] sm:$0xf]
        %v1449 = vld [vmem:[%s1368 + $0x140] sm:$0xf]
        %v1450 = vld [vmem:[%s1368 + $0x144] sm:$0xf]
        %v1451 = vld [vmem:[%s1368 + $0x148] sm:$0xf]
        %v1452 = vld [vmem:[%s1368 + $0x14c] sm:$0xf]
        %v1453 = vld [vmem:[%s1368 + $0x150] sm:$0xf]
        %v1454 = vld [vmem:[%s1368 + $0x154] sm:$0xf]
        %v1455 = vld [vmem:[%s1368 + $0x158] sm:$0xf]
        %v1456 = vld [vmem:[%s1368 + $0x15c] sm:$0xf]
        %v1457 = vld [vmem:[%s1368 + $0x160] sm:$0xf]
        %v1458 = vld [vmem:[%s1368 + $0x164] sm:$0xf]
        %v1459 = vld [vmem:[%s1368 + $0x168] sm:$0xf]
        %v1460 = vld [vmem:[%s1368 + $0x16c] sm:$0xf]
        %v1461 = vld [vmem:[%s1368 + $0x170] sm:$0xf]
        %v1462 = vld [vmem:[%s1368 + $0x174] sm:$0xf]
        %v1463 = vld [vmem:[%s1368 + $0x178] sm:$0xf]
        %v1464 = vld [vmem:[%s1368 + $0x17c] sm:$0xf]
        %v1465 = vld [vmem:[%s1368 + $0x180] sm:$0xf]
        %v1466 = vld [vmem:[%s1368 + $0x184] sm:$0xf]
        %v1467 = vld [vmem:[%s1368 + $0x188] sm:$0xf]
        %v1468 = vld [vmem:[%s1368 + $0x18c] sm:$0xf]
        %v1469 = vld [vmem:[%s1368 + $0x190] sm:$0xf]
        %v1470 = vld [vmem:[%s1368 + $0x194] sm:$0xf]
        %v1471 = vld [vmem:[%s1368 + $0x198] sm:$0xf]
        %v1472 = vld [vmem:[%s1368 + $0x19c] sm:$0xf]
        %v1473 = vld [vmem:[%s1368 + $0x1a0] sm:$0xf]
        %v1474 = vld [vmem:[%s1368 + $0x1a4] sm:$0xf]
        %v1475 = vld [vmem:[%s1368 + $0x1a8] sm:$0xf]
        %v1476 = vld [vmem:[%s1368 + $0x1ac] sm:$0xf]
        %v1477 = vld [vmem:[%s1368 + $0x1b0] sm:$0xf]
        %v1478 = vld [vmem:[%s1368 + $0x1b4] sm:$0xf]
        %v1479 = vld [vmem:[%s1368 + $0x1b8] sm:$0xf]
        %v1480 = vld [vmem:[%s1368 + $0x1bc] sm:$0xf]
        %v1481 = vld [vmem:[%s1368 + $0x1c0] sm:$0xf]
        %v1482 = vld [vmem:[%s1368 + $0x1c4] sm:$0xf]
        %v1483 = vld [vmem:[%s1368 + $0x1c8] sm:$0xf]
        %v1484 = vld [vmem:[%s1368 + $0x1cc] sm:$0xf]
        %v1485 = vld [vmem:[%s1368 + $0x1d0] sm:$0xf]
        %v1486 = vld [vmem:[%s1368 + $0x1d4] sm:$0xf]
        %v1487 = vld [vmem:[%s1368 + $0x1d8] sm:$0xf]
        %v1488 = vld [vmem:[%s1368 + $0x1dc] sm:$0xf]
        %v1489 = vld [vmem:[%s1368 + $0x1e0] sm:$0xf]
        %v1490 = vld [vmem:[%s1368 + $0x1e4] sm:$0xf]
        %v1491 = vld [vmem:[%s1368 + $0x1e8] sm:$0xf]
        %v1492 = vld [vmem:[%s1368 + $0x1ec] sm:$0xf]
        %v1493 = vld [vmem:[%s1368 + $0x1f0] sm:$0xf]
        %v1494 = vld [vmem:[%s1368 + $0x1f4] sm:$0xf]
        %v1495 = vld [vmem:[%s1368 + $0x1f8] sm:$0xf]
        %v1496 = vld [vmem:[%s1368 + $0x1fc] sm:$0xf]
        %v1497 = vunpack.c.l.bf16 %v1369
        %v1498 = vunpack.c.l.bf16 %v1370
        %v1499 = vunpack.c.l.bf16 %v1371
        %v1500 = vunpack.c.l.bf16 %v1372
        %v1501 = vunpack.c.l.bf16 %v1373
        %v1502 = vunpack.c.l.bf16 %v1374
        %v1503 = vunpack.c.l.bf16 %v1375
        %v1504 = vunpack.c.l.bf16 %v1376
        %v1505 = vunpack.c.l.bf16 %v1377
        %v1506 = vunpack.c.l.bf16 %v1378
        %v1507 = vunpack.c.l.bf16 %v1379
        %v1508 = vunpack.c.l.bf16 %v1380
        %v1509 = vunpack.c.l.bf16 %v1381
        %v1510 = vunpack.c.l.bf16 %v1382
        %v1511 = vunpack.c.l.bf16 %v1383
        %v1512 = vunpack.c.l.bf16 %v1384
        %v1513 = vunpack.c.l.bf16 %v1385
        %v1514 = vunpack.c.l.bf16 %v1386
        %v1515 = vunpack.c.l.bf16 %v1387
        %v1516 = vunpack.c.l.bf16 %v1388
        %v1517 = vunpack.c.l.bf16 %v1389
        %v1518 = vunpack.c.l.bf16 %v1390
        %v1519 = vunpack.c.l.bf16 %v1391
        %v1520 = vunpack.c.l.bf16 %v1392
        %v1521 = vunpack.c.l.bf16 %v1393
        %v1522 = vunpack.c.l.bf16 %v1394
        %v1523 = vunpack.c.l.bf16 %v1395
        %v1524 = vunpack.c.l.bf16 %v1396
        %v1525 = vunpack.c.l.bf16 %v1397
        %v1526 = vunpack.c.l.bf16 %v1398
        %v1527 = vunpack.c.l.bf16 %v1399
        %v1528 = vunpack.c.l.bf16 %v1400
        %v1529 = vunpack.c.l.bf16 %v1401
        %v1530 = vunpack.c.l.bf16 %v1402
        %v1531 = vunpack.c.l.bf16 %v1403
        %v1532 = vunpack.c.l.bf16 %v1404
        %v1533 = vunpack.c.l.bf16 %v1405
        %v1534 = vunpack.c.l.bf16 %v1406
        %v1535 = vunpack.c.l.bf16 %v1407
        %v1536 = vunpack.c.l.bf16 %v1408
        %v1537 = vunpack.c.l.bf16 %v1409
        %v1538 = vunpack.c.l.bf16 %v1410
        %v1539 = vunpack.c.l.bf16 %v1411
        %v1540 = vunpack.c.l.bf16 %v1412
        %v1541 = vunpack.c.l.bf16 %v1413
        %v1542 = vunpack.c.l.bf16 %v1414
        %v1543 = vunpack.c.l.bf16 %v1415
        %v1544 = vunpack.c.l.bf16 %v1416
        %v1545 = vunpack.c.l.bf16 %v1417
        %v1546 = vunpack.c.l.bf16 %v1418
        %v1547 = vunpack.c.l.bf16 %v1419
        %v1548 = vunpack.c.l.bf16 %v1420
        %v1549 = vunpack.c.l.bf16 %v1421
        %v1550 = vunpack.c.l.bf16 %v1422
        %v1551 = vunpack.c.l.bf16 %v1423
        %v1552 = vunpack.c.l.bf16 %v1424
        %v1553 = vunpack.c.l.bf16 %v1425
        %v1554 = vunpack.c.l.bf16 %v1426
        %v1555 = vunpack.c.l.bf16 %v1427
        %v1556 = vunpack.c.l.bf16 %v1428
        %v1557 = vunpack.c.l.bf16 %v1429
        %v1558 = vunpack.c.l.bf16 %v1430
        %v1559 = vunpack.c.l.bf16 %v1431
        %v1560 = vunpack.c.l.bf16 %v1432
        %v1561 = vunpack.c.l.bf16 %v1433
        %v1562 = vunpack.c.l.bf16 %v1434
        %v1563 = vunpack.c.l.bf16 %v1435
        %v1564 = vunpack.c.l.bf16 %v1436
        %v1565 = vunpack.c.l.bf16 %v1437
        %v1566 = vunpack.c.l.bf16 %v1438
        %v1567 = vunpack.c.l.bf16 %v1439
        %v1568 = vunpack.c.l.bf16 %v1440
        %v1569 = vunpack.c.l.bf16 %v1441
        %v1570 = vunpack.c.l.bf16 %v1442
        %v1571 = vunpack.c.l.bf16 %v1443
        %v1572 = vunpack.c.l.bf16 %v1444
        %v1573 = vunpack.c.l.bf16 %v1445
        %v1574 = vunpack.c.l.bf16 %v1446
        %v1575 = vunpack.c.l.bf16 %v1447
        %v1576 = vunpack.c.l.bf16 %v1448
        %v1577 = vunpack.c.l.bf16 %v1449
        %v1578 = vunpack.c.l.bf16 %v1450
        %v1579 = vunpack.c.l.bf16 %v1451
        %v1580 = vunpack.c.l.bf16 %v1452
        %v1581 = vunpack.c.l.bf16 %v1453
        %v1582 = vunpack.c.l.bf16 %v1454
        %v1583 = vunpack.c.l.bf16 %v1455
        %v1584 = vunpack.c.l.bf16 %v1456
        %v1585 = vunpack.c.l.bf16 %v1457
        %v1586 = vunpack.c.l.bf16 %v1458
        %v1587 = vunpack.c.l.bf16 %v1459
        %v1588 = vunpack.c.l.bf16 %v1460
        %v1589 = vunpack.c.l.bf16 %v1461
        %v1590 = vunpack.c.l.bf16 %v1462
        %v1591 = vunpack.c.l.bf16 %v1463
        %v1592 = vunpack.c.l.bf16 %v1464
        %v1593 = vunpack.c.l.bf16 %v1465
        %v1594 = vunpack.c.l.bf16 %v1466
        %v1595 = vunpack.c.l.bf16 %v1467
        %v1596 = vunpack.c.l.bf16 %v1468
        %v1597 = vunpack.c.l.bf16 %v1469
        %v1598 = vunpack.c.l.bf16 %v1470
        %v1599 = vunpack.c.l.bf16 %v1471
        %v1600 = vunpack.c.l.bf16 %v1472
        %v1601 = vunpack.c.l.bf16 %v1473
        %v1602 = vunpack.c.l.bf16 %v1474
        %v1603 = vunpack.c.l.bf16 %v1475
        %v1604 = vunpack.c.l.bf16 %v1476
        %v1605 = vunpack.c.l.bf16 %v1477
        %v1606 = vunpack.c.l.bf16 %v1478
        %v1607 = vunpack.c.l.bf16 %v1479
        %v1608 = vunpack.c.l.bf16 %v1480
        %v1609 = vunpack.c.l.bf16 %v1481
        %v1610 = vunpack.c.l.bf16 %v1482
        %v1611 = vunpack.c.l.bf16 %v1483
        %v1612 = vunpack.c.l.bf16 %v1484
        %v1613 = vunpack.c.l.bf16 %v1485
        %v1614 = vunpack.c.l.bf16 %v1486
        %v1615 = vunpack.c.l.bf16 %v1487
        %v1616 = vunpack.c.l.bf16 %v1488
        %v1617 = vunpack.c.l.bf16 %v1489
        %v1618 = vunpack.c.l.bf16 %v1490
        %v1619 = vunpack.c.l.bf16 %v1491
        %v1620 = vunpack.c.l.bf16 %v1492
        %v1621 = vunpack.c.l.bf16 %v1493
        %v1622 = vunpack.c.l.bf16 %v1494
        %v1623 = vunpack.c.l.bf16 %v1495
        %v1624 = vunpack.c.l.bf16 %v1496
        %v1625 = vstv %s1367
        %v1626 = vmul.f32 %v1625, %v1497
        %v1627 = vmul.f32 %v1625, %v1498
        %v1628 = vmul.f32 %v1625, %v1499
        %v1629 = vmul.f32 %v1625, %v1500
        %v1630 = vmul.f32 %v1625, %v1501
        %v1631 = vmul.f32 %v1625, %v1502
        %v1632 = vmul.f32 %v1625, %v1503
        %v1633 = vmul.f32 %v1625, %v1504
        %v1634 = vmul.f32 %v1625, %v1505
        %v1635 = vmul.f32 %v1625, %v1506
        %v1636 = vmul.f32 %v1625, %v1507
        %v1637 = vmul.f32 %v1625, %v1508
        %v1638 = vmul.f32 %v1625, %v1509
        %v1639 = vmul.f32 %v1625, %v1510
        %v1640 = vmul.f32 %v1625, %v1511
        %v1641 = vmul.f32 %v1625, %v1512
        %v1642 = vmul.f32 %v1625, %v1513
        %v1643 = vmul.f32 %v1625, %v1514
        %v1644 = vmul.f32 %v1625, %v1515
        %v1645 = vmul.f32 %v1625, %v1516
        %v1646 = vmul.f32 %v1625, %v1517
        %v1647 = vmul.f32 %v1625, %v1518
        %v1648 = vmul.f32 %v1625, %v1519
        %v1649 = vmul.f32 %v1625, %v1520
        %v1650 = vmul.f32 %v1625, %v1521
        %v1651 = vmul.f32 %v1625, %v1522
        %v1652 = vmul.f32 %v1625, %v1523
        %v1653 = vmul.f32 %v1625, %v1524
        %v1654 = vmul.f32 %v1625, %v1525
        %v1655 = vmul.f32 %v1625, %v1526
        %v1656 = vmul.f32 %v1625, %v1527
        %v1657 = vmul.f32 %v1625, %v1528
        %v1658 = vmul.f32 %v1625, %v1529
        %v1659 = vmul.f32 %v1625, %v1530
        %v1660 = vmul.f32 %v1625, %v1531
        %v1661 = vmul.f32 %v1625, %v1532
        %v1662 = vmul.f32 %v1625, %v1533
        %v1663 = vmul.f32 %v1625, %v1534
        %v1664 = vmul.f32 %v1625, %v1535
        %v1665 = vmul.f32 %v1625, %v1536
        %v1666 = vmul.f32 %v1625, %v1537
        %v1667 = vmul.f32 %v1625, %v1538
        %v1668 = vmul.f32 %v1625, %v1539
        %v1669 = vmul.f32 %v1625, %v1540
        %v1670 = vmul.f32 %v1625, %v1541
        %v1671 = vmul.f32 %v1625, %v1542
        %v1672 = vmul.f32 %v1625, %v1543
        %v1673 = vmul.f32 %v1625, %v1544
        %v1674 = vmul.f32 %v1625, %v1545
        %v1675 = vmul.f32 %v1625, %v1546
        %v1676 = vmul.f32 %v1625, %v1547
        %v1677 = vmul.f32 %v1625, %v1548
        %v1678 = vmul.f32 %v1625, %v1549
        %v1679 = vmul.f32 %v1625, %v1550
        %v1680 = vmul.f32 %v1625, %v1551
        %v1681 = vmul.f32 %v1625, %v1552
        %v1682 = vmul.f32 %v1625, %v1553
        %v1683 = vmul.f32 %v1625, %v1554
        %v1684 = vmul.f32 %v1625, %v1555
        %v1685 = vmul.f32 %v1625, %v1556
        %v1686 = vmul.f32 %v1625, %v1557
        %v1687 = vmul.f32 %v1625, %v1558
        %v1688 = vmul.f32 %v1625, %v1559
        %v1689 = vmul.f32 %v1625, %v1560
        %v1690 = vmul.f32 %v1625, %v1561
        %v1691 = vmul.f32 %v1625, %v1562
        %v1692 = vmul.f32 %v1625, %v1563
        %v1693 = vmul.f32 %v1625, %v1564
        %v1694 = vmul.f32 %v1625, %v1565
        %v1695 = vmul.f32 %v1625, %v1566
        %v1696 = vmul.f32 %v1625, %v1567
        %v1697 = vmul.f32 %v1625, %v1568
        %v1698 = vmul.f32 %v1625, %v1569
        %v1699 = vmul.f32 %v1625, %v1570
        %v1700 = vmul.f32 %v1625, %v1571
        %v1701 = vmul.f32 %v1625, %v1572
        %v1702 = vmul.f32 %v1625, %v1573
        %v1703 = vmul.f32 %v1625, %v1574
        %v1704 = vmul.f32 %v1625, %v1575
        %v1705 = vmul.f32 %v1625, %v1576
        %v1706 = vmul.f32 %v1625, %v1577
        %v1707 = vmul.f32 %v1625, %v1578
        %v1708 = vmul.f32 %v1625, %v1579
        %v1709 = vmul.f32 %v1625, %v1580
        %v1710 = vmul.f32 %v1625, %v1581
        %v1711 = vmul.f32 %v1625, %v1582
        %v1712 = vmul.f32 %v1625, %v1583
        %v1713 = vmul.f32 %v1625, %v1584
        %v1714 = vmul.f32 %v1625, %v1585
        %v1715 = vmul.f32 %v1625, %v1586
        %v1716 = vmul.f32 %v1625, %v1587
        %v1717 = vmul.f32 %v1625, %v1588
        %v1718 = vmul.f32 %v1625, %v1589
        %v1719 = vmul.f32 %v1625, %v1590
        %v1720 = vmul.f32 %v1625, %v1591
        %v1721 = vmul.f32 %v1625, %v1592
        %v1722 = vmul.f32 %v1625, %v1593
        %v1723 = vmul.f32 %v1625, %v1594
        %v1724 = vmul.f32 %v1625, %v1595
        %v1725 = vmul.f32 %v1625, %v1596
        %v1726 = vmul.f32 %v1625, %v1597
        %v1727 = vmul.f32 %v1625, %v1598
        %v1728 = vmul.f32 %v1625, %v1599
        %v1729 = vmul.f32 %v1625, %v1600
        %v1730 = vmul.f32 %v1625, %v1601
        %v1731 = vmul.f32 %v1625, %v1602
        %v1732 = vmul.f32 %v1625, %v1603
        %v1733 = vmul.f32 %v1625, %v1604
        %v1734 = vmul.f32 %v1625, %v1605
        %v1735 = vmul.f32 %v1625, %v1606
        %v1736 = vmul.f32 %v1625, %v1607
        %v1737 = vmul.f32 %v1625, %v1608
        %v1738 = vmul.f32 %v1625, %v1609
        %v1739 = vmul.f32 %v1625, %v1610
        %v1740 = vmul.f32 %v1625, %v1611
        %v1741 = vmul.f32 %v1625, %v1612
        %v1742 = vmul.f32 %v1625, %v1613
        %v1743 = vmul.f32 %v1625, %v1614
        %v1744 = vmul.f32 %v1625, %v1615
        %v1745 = vmul.f32 %v1625, %v1616
        %v1746 = vmul.f32 %v1625, %v1617
        %v1747 = vmul.f32 %v1625, %v1618
        %v1748 = vmul.f32 %v1625, %v1619
        %v1749 = vmul.f32 %v1625, %v1620
        %v1750 = vmul.f32 %v1625, %v1621
        %v1751 = vmul.f32 %v1625, %v1622
        %v1752 = vmul.f32 %v1625, %v1623
        %v1753 = vmul.f32 %v1625, %v1624
        %s1754 = sld [smem:[#allocation6 + $0x3]]
        %s1755 = scalar_lea.vmem %s401, 1536 [#allocation11]
        %v1756 = vld [vmem:[%s1755] sm:$0xf]
        %v1757 = vld [vmem:[%s1755 + $0x4] sm:$0xf]
        %v1758 = vld [vmem:[%s1755 + $0x8] sm:$0xf]
        %v1759 = vld [vmem:[%s1755 + $0xc] sm:$0xf]
        %v1760 = vld [vmem:[%s1755 + $0x10] sm:$0xf]
        %v1761 = vld [vmem:[%s1755 + $0x14] sm:$0xf]
        %v1762 = vld [vmem:[%s1755 + $0x18] sm:$0xf]
        %v1763 = vld [vmem:[%s1755 + $0x1c] sm:$0xf]
        %v1764 = vld [vmem:[%s1755 + $0x20] sm:$0xf]
        %v1765 = vld [vmem:[%s1755 + $0x24] sm:$0xf]
        %v1766 = vld [vmem:[%s1755 + $0x28] sm:$0xf]
        %v1767 = vld [vmem:[%s1755 + $0x2c] sm:$0xf]
        %v1768 = vld [vmem:[%s1755 + $0x30] sm:$0xf]
        %v1769 = vld [vmem:[%s1755 + $0x34] sm:$0xf]
        %v1770 = vld [vmem:[%s1755 + $0x38] sm:$0xf]
        %v1771 = vld [vmem:[%s1755 + $0x3c] sm:$0xf]
        %v1772 = vld [vmem:[%s1755 + $0x40] sm:$0xf]
        %v1773 = vld [vmem:[%s1755 + $0x44] sm:$0xf]
        %v1774 = vld [vmem:[%s1755 + $0x48] sm:$0xf]
        %v1775 = vld [vmem:[%s1755 + $0x4c] sm:$0xf]
        %v1776 = vld [vmem:[%s1755 + $0x50] sm:$0xf]
        %v1777 = vld [vmem:[%s1755 + $0x54] sm:$0xf]
        %v1778 = vld [vmem:[%s1755 + $0x58] sm:$0xf]
        %v1779 = vld [vmem:[%s1755 + $0x5c] sm:$0xf]
        %v1780 = vld [vmem:[%s1755 + $0x60] sm:$0xf]
        %v1781 = vld [vmem:[%s1755 + $0x64] sm:$0xf]
        %v1782 = vld [vmem:[%s1755 + $0x68] sm:$0xf]
        %v1783 = vld [vmem:[%s1755 + $0x6c] sm:$0xf]
        %v1784 = vld [vmem:[%s1755 + $0x70] sm:$0xf]
        %v1785 = vld [vmem:[%s1755 + $0x74] sm:$0xf]
        %v1786 = vld [vmem:[%s1755 + $0x78] sm:$0xf]
        %v1787 = vld [vmem:[%s1755 + $0x7c] sm:$0xf]
        %v1788 = vld [vmem:[%s1755 + $0x80] sm:$0xf]
        %v1789 = vld [vmem:[%s1755 + $0x84] sm:$0xf]
        %v1790 = vld [vmem:[%s1755 + $0x88] sm:$0xf]
        %v1791 = vld [vmem:[%s1755 + $0x8c] sm:$0xf]
        %v1792 = vld [vmem:[%s1755 + $0x90] sm:$0xf]
        %v1793 = vld [vmem:[%s1755 + $0x94] sm:$0xf]
        %v1794 = vld [vmem:[%s1755 + $0x98] sm:$0xf]
        %v1795 = vld [vmem:[%s1755 + $0x9c] sm:$0xf]
        %v1796 = vld [vmem:[%s1755 + $0xa0] sm:$0xf]
        %v1797 = vld [vmem:[%s1755 + $0xa4] sm:$0xf]
        %v1798 = vld [vmem:[%s1755 + $0xa8] sm:$0xf]
        %v1799 = vld [vmem:[%s1755 + $0xac] sm:$0xf]
        %v1800 = vld [vmem:[%s1755 + $0xb0] sm:$0xf]
        %v1801 = vld [vmem:[%s1755 + $0xb4] sm:$0xf]
        %v1802 = vld [vmem:[%s1755 + $0xb8] sm:$0xf]
        %v1803 = vld [vmem:[%s1755 + $0xbc] sm:$0xf]
        %v1804 = vld [vmem:[%s1755 + $0xc0] sm:$0xf]
        %v1805 = vld [vmem:[%s1755 + $0xc4] sm:$0xf]
        %v1806 = vld [vmem:[%s1755 + $0xc8] sm:$0xf]
        %v1807 = vld [vmem:[%s1755 + $0xcc] sm:$0xf]
        %v1808 = vld [vmem:[%s1755 + $0xd0] sm:$0xf]
        %v1809 = vld [vmem:[%s1755 + $0xd4] sm:$0xf]
        %v1810 = vld [vmem:[%s1755 + $0xd8] sm:$0xf]
        %v1811 = vld [vmem:[%s1755 + $0xdc] sm:$0xf]
        %v1812 = vld [vmem:[%s1755 + $0xe0] sm:$0xf]
        %v1813 = vld [vmem:[%s1755 + $0xe4] sm:$0xf]
        %v1814 = vld [vmem:[%s1755 + $0xe8] sm:$0xf]
        %v1815 = vld [vmem:[%s1755 + $0xec] sm:$0xf]
        %v1816 = vld [vmem:[%s1755 + $0xf0] sm:$0xf]
        %v1817 = vld [vmem:[%s1755 + $0xf4] sm:$0xf]
        %v1818 = vld [vmem:[%s1755 + $0xf8] sm:$0xf]
        %v1819 = vld [vmem:[%s1755 + $0xfc] sm:$0xf]
        %v1820 = vld [vmem:[%s1755 + $0x100] sm:$0xf]
        %v1821 = vld [vmem:[%s1755 + $0x104] sm:$0xf]
        %v1822 = vld [vmem:[%s1755 + $0x108] sm:$0xf]
        %v1823 = vld [vmem:[%s1755 + $0x10c] sm:$0xf]
        %v1824 = vld [vmem:[%s1755 + $0x110] sm:$0xf]
        %v1825 = vld [vmem:[%s1755 + $0x114] sm:$0xf]
        %v1826 = vld [vmem:[%s1755 + $0x118] sm:$0xf]
        %v1827 = vld [vmem:[%s1755 + $0x11c] sm:$0xf]
        %v1828 = vld [vmem:[%s1755 + $0x120] sm:$0xf]
        %v1829 = vld [vmem:[%s1755 + $0x124] sm:$0xf]
        %v1830 = vld [vmem:[%s1755 + $0x128] sm:$0xf]
        %v1831 = vld [vmem:[%s1755 + $0x12c] sm:$0xf]
        %v1832 = vld [vmem:[%s1755 + $0x130] sm:$0xf]
        %v1833 = vld [vmem:[%s1755 + $0x134] sm:$0xf]
        %v1834 = vld [vmem:[%s1755 + $0x138] sm:$0xf]
        %v1835 = vld [vmem:[%s1755 + $0x13c] sm:$0xf]
        %v1836 = vld [vmem:[%s1755 + $0x140] sm:$0xf]
        %v1837 = vld [vmem:[%s1755 + $0x144] sm:$0xf]
        %v1838 = vld [vmem:[%s1755 + $0x148] sm:$0xf]
        %v1839 = vld [vmem:[%s1755 + $0x14c] sm:$0xf]
        %v1840 = vld [vmem:[%s1755 + $0x150] sm:$0xf]
        %v1841 = vld [vmem:[%s1755 + $0x154] sm:$0xf]
        %v1842 = vld [vmem:[%s1755 + $0x158] sm:$0xf]
        %v1843 = vld [vmem:[%s1755 + $0x15c] sm:$0xf]
        %v1844 = vld [vmem:[%s1755 + $0x160] sm:$0xf]
        %v1845 = vld [vmem:[%s1755 + $0x164] sm:$0xf]
        %v1846 = vld [vmem:[%s1755 + $0x168] sm:$0xf]
        %v1847 = vld [vmem:[%s1755 + $0x16c] sm:$0xf]
        %v1848 = vld [vmem:[%s1755 + $0x170] sm:$0xf]
        %v1849 = vld [vmem:[%s1755 + $0x174] sm:$0xf]
        %v1850 = vld [vmem:[%s1755 + $0x178] sm:$0xf]
        %v1851 = vld [vmem:[%s1755 + $0x17c] sm:$0xf]
        %v1852 = vld [vmem:[%s1755 + $0x180] sm:$0xf]
        %v1853 = vld [vmem:[%s1755 + $0x184] sm:$0xf]
        %v1854 = vld [vmem:[%s1755 + $0x188] sm:$0xf]
        %v1855 = vld [vmem:[%s1755 + $0x18c] sm:$0xf]
        %v1856 = vld [vmem:[%s1755 + $0x190] sm:$0xf]
        %v1857 = vld [vmem:[%s1755 + $0x194] sm:$0xf]
        %v1858 = vld [vmem:[%s1755 + $0x198] sm:$0xf]
        %v1859 = vld [vmem:[%s1755 + $0x19c] sm:$0xf]
        %v1860 = vld [vmem:[%s1755 + $0x1a0] sm:$0xf]
        %v1861 = vld [vmem:[%s1755 + $0x1a4] sm:$0xf]
        %v1862 = vld [vmem:[%s1755 + $0x1a8] sm:$0xf]
        %v1863 = vld [vmem:[%s1755 + $0x1ac] sm:$0xf]
        %v1864 = vld [vmem:[%s1755 + $0x1b0] sm:$0xf]
        %v1865 = vld [vmem:[%s1755 + $0x1b4] sm:$0xf]
        %v1866 = vld [vmem:[%s1755 + $0x1b8] sm:$0xf]
        %v1867 = vld [vmem:[%s1755 + $0x1bc] sm:$0xf]
        %v1868 = vld [vmem:[%s1755 + $0x1c0] sm:$0xf]
        %v1869 = vld [vmem:[%s1755 + $0x1c4] sm:$0xf]
        %v1870 = vld [vmem:[%s1755 + $0x1c8] sm:$0xf]
        %v1871 = vld [vmem:[%s1755 + $0x1cc] sm:$0xf]
        %v1872 = vld [vmem:[%s1755 + $0x1d0] sm:$0xf]
        %v1873 = vld [vmem:[%s1755 + $0x1d4] sm:$0xf]
        %v1874 = vld [vmem:[%s1755 + $0x1d8] sm:$0xf]
        %v1875 = vld [vmem:[%s1755 + $0x1dc] sm:$0xf]
        %v1876 = vld [vmem:[%s1755 + $0x1e0] sm:$0xf]
        %v1877 = vld [vmem:[%s1755 + $0x1e4] sm:$0xf]
        %v1878 = vld [vmem:[%s1755 + $0x1e8] sm:$0xf]
        %v1879 = vld [vmem:[%s1755 + $0x1ec] sm:$0xf]
        %v1880 = vld [vmem:[%s1755 + $0x1f0] sm:$0xf]
        %v1881 = vld [vmem:[%s1755 + $0x1f4] sm:$0xf]
        %v1882 = vld [vmem:[%s1755 + $0x1f8] sm:$0xf]
        %v1883 = vld [vmem:[%s1755 + $0x1fc] sm:$0xf]
        %v1884 = vunpack.c.l.bf16 %v1756
        %v1885 = vunpack.c.l.bf16 %v1757
        %v1886 = vunpack.c.l.bf16 %v1758
        %v1887 = vunpack.c.l.bf16 %v1759
        %v1888 = vunpack.c.l.bf16 %v1760
        %v1889 = vunpack.c.l.bf16 %v1761
        %v1890 = vunpack.c.l.bf16 %v1762
        %v1891 = vunpack.c.l.bf16 %v1763
        %v1892 = vunpack.c.l.bf16 %v1764
        %v1893 = vunpack.c.l.bf16 %v1765
        %v1894 = vunpack.c.l.bf16 %v1766
        %v1895 = vunpack.c.l.bf16 %v1767
        %v1896 = vunpack.c.l.bf16 %v1768
        %v1897 = vunpack.c.l.bf16 %v1769
        %v1898 = vunpack.c.l.bf16 %v1770
        %v1899 = vunpack.c.l.bf16 %v1771
        %v1900 = vunpack.c.l.bf16 %v1772
        %v1901 = vunpack.c.l.bf16 %v1773
        %v1902 = vunpack.c.l.bf16 %v1774
        %v1903 = vunpack.c.l.bf16 %v1775
        %v1904 = vunpack.c.l.bf16 %v1776
        %v1905 = vunpack.c.l.bf16 %v1777
        %v1906 = vunpack.c.l.bf16 %v1778
        %v1907 = vunpack.c.l.bf16 %v1779
        %v1908 = vunpack.c.l.bf16 %v1780
        %v1909 = vunpack.c.l.bf16 %v1781
        %v1910 = vunpack.c.l.bf16 %v1782
        %v1911 = vunpack.c.l.bf16 %v1783
        %v1912 = vunpack.c.l.bf16 %v1784
        %v1913 = vunpack.c.l.bf16 %v1785
        %v1914 = vunpack.c.l.bf16 %v1786
        %v1915 = vunpack.c.l.bf16 %v1787
        %v1916 = vunpack.c.l.bf16 %v1788
        %v1917 = vunpack.c.l.bf16 %v1789
        %v1918 = vunpack.c.l.bf16 %v1790
        %v1919 = vunpack.c.l.bf16 %v1791
        %v1920 = vunpack.c.l.bf16 %v1792
        %v1921 = vunpack.c.l.bf16 %v1793
        %v1922 = vunpack.c.l.bf16 %v1794
        %v1923 = vunpack.c.l.bf16 %v1795
        %v1924 = vunpack.c.l.bf16 %v1796
        %v1925 = vunpack.c.l.bf16 %v1797
        %v1926 = vunpack.c.l.bf16 %v1798
        %v1927 = vunpack.c.l.bf16 %v1799
        %v1928 = vunpack.c.l.bf16 %v1800
        %v1929 = vunpack.c.l.bf16 %v1801
        %v1930 = vunpack.c.l.bf16 %v1802
        %v1931 = vunpack.c.l.bf16 %v1803
        %v1932 = vunpack.c.l.bf16 %v1804
        %v1933 = vunpack.c.l.bf16 %v1805
        %v1934 = vunpack.c.l.bf16 %v1806
        %v1935 = vunpack.c.l.bf16 %v1807
        %v1936 = vunpack.c.l.bf16 %v1808
        %v1937 = vunpack.c.l.bf16 %v1809
        %v1938 = vunpack.c.l.bf16 %v1810
        %v1939 = vunpack.c.l.bf16 %v1811
        %v1940 = vunpack.c.l.bf16 %v1812
        %v1941 = vunpack.c.l.bf16 %v1813
        %v1942 = vunpack.c.l.bf16 %v1814
        %v1943 = vunpack.c.l.bf16 %v1815
        %v1944 = vunpack.c.l.bf16 %v1816
        %v1945 = vunpack.c.l.bf16 %v1817
        %v1946 = vunpack.c.l.bf16 %v1818
        %v1947 = vunpack.c.l.bf16 %v1819
        %v1948 = vunpack.c.l.bf16 %v1820
        %v1949 = vunpack.c.l.bf16 %v1821
        %v1950 = vunpack.c.l.bf16 %v1822
        %v1951 = vunpack.c.l.bf16 %v1823
        %v1952 = vunpack.c.l.bf16 %v1824
        %v1953 = vunpack.c.l.bf16 %v1825
        %v1954 = vunpack.c.l.bf16 %v1826
        %v1955 = vunpack.c.l.bf16 %v1827
        %v1956 = vunpack.c.l.bf16 %v1828
        %v1957 = vunpack.c.l.bf16 %v1829
        %v1958 = vunpack.c.l.bf16 %v1830
        %v1959 = vunpack.c.l.bf16 %v1831
        %v1960 = vunpack.c.l.bf16 %v1832
        %v1961 = vunpack.c.l.bf16 %v1833
        %v1962 = vunpack.c.l.bf16 %v1834
        %v1963 = vunpack.c.l.bf16 %v1835
        %v1964 = vunpack.c.l.bf16 %v1836
        %v1965 = vunpack.c.l.bf16 %v1837
        %v1966 = vunpack.c.l.bf16 %v1838
        %v1967 = vunpack.c.l.bf16 %v1839
        %v1968 = vunpack.c.l.bf16 %v1840
        %v1969 = vunpack.c.l.bf16 %v1841
        %v1970 = vunpack.c.l.bf16 %v1842
        %v1971 = vunpack.c.l.bf16 %v1843
        %v1972 = vunpack.c.l.bf16 %v1844
        %v1973 = vunpack.c.l.bf16 %v1845
        %v1974 = vunpack.c.l.bf16 %v1846
        %v1975 = vunpack.c.l.bf16 %v1847
        %v1976 = vunpack.c.l.bf16 %v1848
        %v1977 = vunpack.c.l.bf16 %v1849
        %v1978 = vunpack.c.l.bf16 %v1850
        %v1979 = vunpack.c.l.bf16 %v1851
        %v1980 = vunpack.c.l.bf16 %v1852
        %v1981 = vunpack.c.l.bf16 %v1853
        %v1982 = vunpack.c.l.bf16 %v1854
        %v1983 = vunpack.c.l.bf16 %v1855
        %v1984 = vunpack.c.l.bf16 %v1856
        %v1985 = vunpack.c.l.bf16 %v1857
        %v1986 = vunpack.c.l.bf16 %v1858
        %v1987 = vunpack.c.l.bf16 %v1859
        %v1988 = vunpack.c.l.bf16 %v1860
        %v1989 = vunpack.c.l.bf16 %v1861
        %v1990 = vunpack.c.l.bf16 %v1862
        %v1991 = vunpack.c.l.bf16 %v1863
        %v1992 = vunpack.c.l.bf16 %v1864
        %v1993 = vunpack.c.l.bf16 %v1865
        %v1994 = vunpack.c.l.bf16 %v1866
        %v1995 = vunpack.c.l.bf16 %v1867
        %v1996 = vunpack.c.l.bf16 %v1868
        %v1997 = vunpack.c.l.bf16 %v1869
        %v1998 = vunpack.c.l.bf16 %v1870
        %v1999 = vunpack.c.l.bf16 %v1871
        %v2000 = vunpack.c.l.bf16 %v1872
        %v2001 = vunpack.c.l.bf16 %v1873
        %v2002 = vunpack.c.l.bf16 %v1874
        %v2003 = vunpack.c.l.bf16 %v1875
        %v2004 = vunpack.c.l.bf16 %v1876
        %v2005 = vunpack.c.l.bf16 %v1877
        %v2006 = vunpack.c.l.bf16 %v1878
        %v2007 = vunpack.c.l.bf16 %v1879
        %v2008 = vunpack.c.l.bf16 %v1880
        %v2009 = vunpack.c.l.bf16 %v1881
        %v2010 = vunpack.c.l.bf16 %v1882
        %v2011 = vunpack.c.l.bf16 %v1883
        %v2012 = vstv %s1754
        %v2013 = vmul.f32 %v2012, %v1884
        %v2014 = vmul.f32 %v2012, %v1885
        %v2015 = vmul.f32 %v2012, %v1886
        %v2016 = vmul.f32 %v2012, %v1887
        %v2017 = vmul.f32 %v2012, %v1888
        %v2018 = vmul.f32 %v2012, %v1889
        %v2019 = vmul.f32 %v2012, %v1890
        %v2020 = vmul.f32 %v2012, %v1891
        %v2021 = vmul.f32 %v2012, %v1892
        %v2022 = vmul.f32 %v2012, %v1893
        %v2023 = vmul.f32 %v2012, %v1894
        %v2024 = vmul.f32 %v2012, %v1895
        %v2025 = vmul.f32 %v2012, %v1896
        %v2026 = vmul.f32 %v2012, %v1897
        %v2027 = vmul.f32 %v2012, %v1898
        %v2028 = vmul.f32 %v2012, %v1899
        %v2029 = vmul.f32 %v2012, %v1900
        %v2030 = vmul.f32 %v2012, %v1901
        %v2031 = vmul.f32 %v2012, %v1902
        %v2032 = vmul.f32 %v2012, %v1903
        %v2033 = vmul.f32 %v2012, %v1904
        %v2034 = vmul.f32 %v2012, %v1905
        %v2035 = vmul.f32 %v2012, %v1906
        %v2036 = vmul.f32 %v2012, %v1907
        %v2037 = vmul.f32 %v2012, %v1908
        %v2038 = vmul.f32 %v2012, %v1909
        %v2039 = vmul.f32 %v2012, %v1910
        %v2040 = vmul.f32 %v2012, %v1911
        %v2041 = vmul.f32 %v2012, %v1912
        %v2042 = vmul.f32 %v2012, %v1913
        %v2043 = vmul.f32 %v2012, %v1914
        %v2044 = vmul.f32 %v2012, %v1915
        %v2045 = vmul.f32 %v2012, %v1916
        %v2046 = vmul.f32 %v2012, %v1917
        %v2047 = vmul.f32 %v2012, %v1918
        %v2048 = vmul.f32 %v2012, %v1919
        %v2049 = vmul.f32 %v2012, %v1920
        %v2050 = vmul.f32 %v2012, %v1921
        %v2051 = vmul.f32 %v2012, %v1922
        %v2052 = vmul.f32 %v2012, %v1923
        %v2053 = vmul.f32 %v2012, %v1924
        %v2054 = vmul.f32 %v2012, %v1925
        %v2055 = vmul.f32 %v2012, %v1926
        %v2056 = vmul.f32 %v2012, %v1927
        %v2057 = vmul.f32 %v2012, %v1928
        %v2058 = vmul.f32 %v2012, %v1929
        %v2059 = vmul.f32 %v2012, %v1930
        %v2060 = vmul.f32 %v2012, %v1931
        %v2061 = vmul.f32 %v2012, %v1932
        %v2062 = vmul.f32 %v2012, %v1933
        %v2063 = vmul.f32 %v2012, %v1934
        %v2064 = vmul.f32 %v2012, %v1935
        %v2065 = vmul.f32 %v2012, %v1936
        %v2066 = vmul.f32 %v2012, %v1937
        %v2067 = vmul.f32 %v2012, %v1938
        %v2068 = vmul.f32 %v2012, %v1939
        %v2069 = vmul.f32 %v2012, %v1940
        %v2070 = vmul.f32 %v2012, %v1941
        %v2071 = vmul.f32 %v2012, %v1942
        %v2072 = vmul.f32 %v2012, %v1943
        %v2073 = vmul.f32 %v2012, %v1944
        %v2074 = vmul.f32 %v2012, %v1945
        %v2075 = vmul.f32 %v2012, %v1946
        %v2076 = vmul.f32 %v2012, %v1947
        %v2077 = vmul.f32 %v2012, %v1948
        %v2078 = vmul.f32 %v2012, %v1949
        %v2079 = vmul.f32 %v2012, %v1950
        %v2080 = vmul.f32 %v2012, %v1951
        %v2081 = vmul.f32 %v2012, %v1952
        %v2082 = vmul.f32 %v2012, %v1953
        %v2083 = vmul.f32 %v2012, %v1954
        %v2084 = vmul.f32 %v2012, %v1955
        %v2085 = vmul.f32 %v2012, %v1956
        %v2086 = vmul.f32 %v2012, %v1957
        %v2087 = vmul.f32 %v2012, %v1958
        %v2088 = vmul.f32 %v2012, %v1959
        %v2089 = vmul.f32 %v2012, %v1960
        %v2090 = vmul.f32 %v2012, %v1961
        %v2091 = vmul.f32 %v2012, %v1962
        %v2092 = vmul.f32 %v2012, %v1963
        %v2093 = vmul.f32 %v2012, %v1964
        %v2094 = vmul.f32 %v2012, %v1965
        %v2095 = vmul.f32 %v2012, %v1966
        %v2096 = vmul.f32 %v2012, %v1967
        %v2097 = vmul.f32 %v2012, %v1968
        %v2098 = vmul.f32 %v2012, %v1969
        %v2099 = vmul.f32 %v2012, %v1970
        %v2100 = vmul.f32 %v2012, %v1971
        %v2101 = vmul.f32 %v2012, %v1972
        %v2102 = vmul.f32 %v2012, %v1973
        %v2103 = vmul.f32 %v2012, %v1974
        %v2104 = vmul.f32 %v2012, %v1975
        %v2105 = vmul.f32 %v2012, %v1976
        %v2106 = vmul.f32 %v2012, %v1977
        %v2107 = vmul.f32 %v2012, %v1978
        %v2108 = vmul.f32 %v2012, %v1979
        %v2109 = vmul.f32 %v2012, %v1980
        %v2110 = vmul.f32 %v2012, %v1981
        %v2111 = vmul.f32 %v2012, %v1982
        %v2112 = vmul.f32 %v2012, %v1983
        %v2113 = vmul.f32 %v2012, %v1984
        %v2114 = vmul.f32 %v2012, %v1985
        %v2115 = vmul.f32 %v2012, %v1986
        %v2116 = vmul.f32 %v2012, %v1987
        %v2117 = vmul.f32 %v2012, %v1988
        %v2118 = vmul.f32 %v2012, %v1989
        %v2119 = vmul.f32 %v2012, %v1990
        %v2120 = vmul.f32 %v2012, %v1991
        %v2121 = vmul.f32 %v2012, %v1992
        %v2122 = vmul.f32 %v2012, %v1993
        %v2123 = vmul.f32 %v2012, %v1994
        %v2124 = vmul.f32 %v2012, %v1995
        %v2125 = vmul.f32 %v2012, %v1996
        %v2126 = vmul.f32 %v2012, %v1997
        %v2127 = vmul.f32 %v2012, %v1998
        %v2128 = vmul.f32 %v2012, %v1999
        %v2129 = vmul.f32 %v2012, %v2000
        %v2130 = vmul.f32 %v2012, %v2001
        %v2131 = vmul.f32 %v2012, %v2002
        %v2132 = vmul.f32 %v2012, %v2003
        %v2133 = vmul.f32 %v2012, %v2004
        %v2134 = vmul.f32 %v2012, %v2005
        %v2135 = vmul.f32 %v2012, %v2006
        %v2136 = vmul.f32 %v2012, %v2007
        %v2137 = vmul.f32 %v2012, %v2008
        %v2138 = vmul.f32 %v2012, %v2009
        %v2139 = vmul.f32 %v2012, %v2010
        %v2140 = vmul.f32 %v2012, %v2011
        %v2141 = vadd.f32 %v1626, %v2013
        %v2142 = vadd.f32 %v1627, %v2014
        %v2143 = vadd.f32 %v1628, %v2015
        %v2144 = vadd.f32 %v1629, %v2016
        %v2145 = vadd.f32 %v1630, %v2017
        %v2146 = vadd.f32 %v1631, %v2018
        %v2147 = vadd.f32 %v1632, %v2019
        %v2148 = vadd.f32 %v1633, %v2020
        %v2149 = vadd.f32 %v1634, %v2021
        %v2150 = vadd.f32 %v1635, %v2022
        %v2151 = vadd.f32 %v1636, %v2023
        %v2152 = vadd.f32 %v1637, %v2024
        %v2153 = vadd.f32 %v1638, %v2025
        %v2154 = vadd.f32 %v1639, %v2026
        %v2155 = vadd.f32 %v1640, %v2027
        %v2156 = vadd.f32 %v1641, %v2028
        %v2157 = vadd.f32 %v1642, %v2029
        %v2158 = vadd.f32 %v1643, %v2030
        %v2159 = vadd.f32 %v1644, %v2031
        %v2160 = vadd.f32 %v1645, %v2032
        %v2161 = vadd.f32 %v1646, %v2033
        %v2162 = vadd.f32 %v1647, %v2034
        %v2163 = vadd.f32 %v1648, %v2035
        %v2164 = vadd.f32 %v1649, %v2036
        %v2165 = vadd.f32 %v1650, %v2037
        %v2166 = vadd.f32 %v1651, %v2038
        %v2167 = vadd.f32 %v1652, %v2039
        %v2168 = vadd.f32 %v1653, %v2040
        %v2169 = vadd.f32 %v1654, %v2041
        %v2170 = vadd.f32 %v1655, %v2042
        %v2171 = vadd.f32 %v1656, %v2043
        %v2172 = vadd.f32 %v1657, %v2044
        %v2173 = vadd.f32 %v1658, %v2045
        %v2174 = vadd.f32 %v1659, %v2046
        %v2175 = vadd.f32 %v1660, %v2047
        %v2176 = vadd.f32 %v1661, %v2048
        %v2177 = vadd.f32 %v1662, %v2049
        %v2178 = vadd.f32 %v1663, %v2050
        %v2179 = vadd.f32 %v1664, %v2051
        %v2180 = vadd.f32 %v1665, %v2052
        %v2181 = vadd.f32 %v1666, %v2053
        %v2182 = vadd.f32 %v1667, %v2054
        %v2183 = vadd.f32 %v1668, %v2055
        %v2184 = vadd.f32 %v1669, %v2056
        %v2185 = vadd.f32 %v1670, %v2057
        %v2186 = vadd.f32 %v1671, %v2058
        %v2187 = vadd.f32 %v1672, %v2059
        %v2188 = vadd.f32 %v1673, %v2060
        %v2189 = vadd.f32 %v1674, %v2061
        %v2190 = vadd.f32 %v1675, %v2062
        %v2191 = vadd.f32 %v1676, %v2063
        %v2192 = vadd.f32 %v1677, %v2064
        %v2193 = vadd.f32 %v1678, %v2065
        %v2194 = vadd.f32 %v1679, %v2066
        %v2195 = vadd.f32 %v1680, %v2067
        %v2196 = vadd.f32 %v1681, %v2068
        %v2197 = vadd.f32 %v1682, %v2069
        %v2198 = vadd.f32 %v1683, %v2070
        %v2199 = vadd.f32 %v1684, %v2071
        %v2200 = vadd.f32 %v1685, %v2072
        %v2201 = vadd.f32 %v1686, %v2073
        %v2202 = vadd.f32 %v1687, %v2074
        %v2203 = vadd.f32 %v1688, %v2075
        %v2204 = vadd.f32 %v1689, %v2076
        %v2205 = vadd.f32 %v1690, %v2077
        %v2206 = vadd.f32 %v1691, %v2078
        %v2207 = vadd.f32 %v1692, %v2079
        %v2208 = vadd.f32 %v1693, %v2080
        %v2209 = vadd.f32 %v1694, %v2081
        %v2210 = vadd.f32 %v1695, %v2082
        %v2211 = vadd.f32 %v1696, %v2083
        %v2212 = vadd.f32 %v1697, %v2084
        %v2213 = vadd.f32 %v1698, %v2085
        %v2214 = vadd.f32 %v1699, %v2086
        %v2215 = vadd.f32 %v1700, %v2087
        %v2216 = vadd.f32 %v1701, %v2088
        %v2217 = vadd.f32 %v1702, %v2089
        %v2218 = vadd.f32 %v1703, %v2090
        %v2219 = vadd.f32 %v1704, %v2091
        %v2220 = vadd.f32 %v1705, %v2092
        %v2221 = vadd.f32 %v1706, %v2093
        %v2222 = vadd.f32 %v1707, %v2094
        %v2223 = vadd.f32 %v1708, %v2095
        %v2224 = vadd.f32 %v1709, %v2096
        %v2225 = vadd.f32 %v1710, %v2097
        %v2226 = vadd.f32 %v1711, %v2098
        %v2227 = vadd.f32 %v1712, %v2099
        %v2228 = vadd.f32 %v1713, %v2100
        %v2229 = vadd.f32 %v1714, %v2101
        %v2230 = vadd.f32 %v1715, %v2102
        %v2231 = vadd.f32 %v1716, %v2103
        %v2232 = vadd.f32 %v1717, %v2104
        %v2233 = vadd.f32 %v1718, %v2105
        %v2234 = vadd.f32 %v1719, %v2106
        %v2235 = vadd.f32 %v1720, %v2107
        %v2236 = vadd.f32 %v1721, %v2108
        %v2237 = vadd.f32 %v1722, %v2109
        %v2238 = vadd.f32 %v1723, %v2110
        %v2239 = vadd.f32 %v1724, %v2111
        %v2240 = vadd.f32 %v1725, %v2112
        %v2241 = vadd.f32 %v1726, %v2113
        %v2242 = vadd.f32 %v1727, %v2114
        %v2243 = vadd.f32 %v1728, %v2115
        %v2244 = vadd.f32 %v1729, %v2116
        %v2245 = vadd.f32 %v1730, %v2117
        %v2246 = vadd.f32 %v1731, %v2118
        %v2247 = vadd.f32 %v1732, %v2119
        %v2248 = vadd.f32 %v1733, %v2120
        %v2249 = vadd.f32 %v1734, %v2121
        %v2250 = vadd.f32 %v1735, %v2122
        %v2251 = vadd.f32 %v1736, %v2123
        %v2252 = vadd.f32 %v1737, %v2124
        %v2253 = vadd.f32 %v1738, %v2125
        %v2254 = vadd.f32 %v1739, %v2126
        %v2255 = vadd.f32 %v1740, %v2127
        %v2256 = vadd.f32 %v1741, %v2128
        %v2257 = vadd.f32 %v1742, %v2129
        %v2258 = vadd.f32 %v1743, %v2130
        %v2259 = vadd.f32 %v1744, %v2131
        %v2260 = vadd.f32 %v1745, %v2132
        %v2261 = vadd.f32 %v1746, %v2133
        %v2262 = vadd.f32 %v1747, %v2134
        %v2263 = vadd.f32 %v1748, %v2135
        %v2264 = vadd.f32 %v1749, %v2136
        %v2265 = vadd.f32 %v1750, %v2137
        %v2266 = vadd.f32 %v1751, %v2138
        %v2267 = vadd.f32 %v1752, %v2139
        %v2268 = vadd.f32 %v1753, %v2140
        %v2269 = vadd.f32 %v1239, %v2141
        %v2270 = vadd.f32 %v1240, %v2142
        %v2271 = vadd.f32 %v1241, %v2143
        %v2272 = vadd.f32 %v1242, %v2144
        %v2273 = vadd.f32 %v1243, %v2145
        %v2274 = vadd.f32 %v1244, %v2146
        %v2275 = vadd.f32 %v1245, %v2147
        %v2276 = vadd.f32 %v1246, %v2148
        %v2277 = vadd.f32 %v1247, %v2149
        %v2278 = vadd.f32 %v1248, %v2150
        %v2279 = vadd.f32 %v1249, %v2151
        %v2280 = vadd.f32 %v1250, %v2152
        %v2281 = vadd.f32 %v1251, %v2153
        %v2282 = vadd.f32 %v1252, %v2154
        %v2283 = vadd.f32 %v1253, %v2155
        %v2284 = vadd.f32 %v1254, %v2156
        %v2285 = vadd.f32 %v1255, %v2157
        %v2286 = vadd.f32 %v1256, %v2158
        %v2287 = vadd.f32 %v1257, %v2159
        %v2288 = vadd.f32 %v1258, %v2160
        %v2289 = vadd.f32 %v1259, %v2161
        %v2290 = vadd.f32 %v1260, %v2162
        %v2291 = vadd.f32 %v1261, %v2163
        %v2292 = vadd.f32 %v1262, %v2164
        %v2293 = vadd.f32 %v1263, %v2165
        %v2294 = vadd.f32 %v1264, %v2166
        %v2295 = vadd.f32 %v1265, %v2167
        %v2296 = vadd.f32 %v1266, %v2168
        %v2297 = vadd.f32 %v1267, %v2169
        %v2298 = vadd.f32 %v1268, %v2170
        %v2299 = vadd.f32 %v1269, %v2171
        %v2300 = vadd.f32 %v1270, %v2172
        %v2301 = vadd.f32 %v1271, %v2173
        %v2302 = vadd.f32 %v1272, %v2174
        %v2303 = vadd.f32 %v1273, %v2175
        %v2304 = vadd.f32 %v1274, %v2176
        %v2305 = vadd.f32 %v1275, %v2177
        %v2306 = vadd.f32 %v1276, %v2178
        %v2307 = vadd.f32 %v1277, %v2179
        %v2308 = vadd.f32 %v1278, %v2180
        %v2309 = vadd.f32 %v1279, %v2181
        %v2310 = vadd.f32 %v1280, %v2182
        %v2311 = vadd.f32 %v1281, %v2183
        %v2312 = vadd.f32 %v1282, %v2184
        %v2313 = vadd.f32 %v1283, %v2185
        %v2314 = vadd.f32 %v1284, %v2186
        %v2315 = vadd.f32 %v1285, %v2187
        %v2316 = vadd.f32 %v1286, %v2188
        %v2317 = vadd.f32 %v1287, %v2189
        %v2318 = vadd.f32 %v1288, %v2190
        %v2319 = vadd.f32 %v1289, %v2191
        %v2320 = vadd.f32 %v1290, %v2192
        %v2321 = vadd.f32 %v1291, %v2193
        %v2322 = vadd.f32 %v1292, %v2194
        %v2323 = vadd.f32 %v1293, %v2195
        %v2324 = vadd.f32 %v1294, %v2196
        %v2325 = vadd.f32 %v1295, %v2197
        %v2326 = vadd.f32 %v1296, %v2198
        %v2327 = vadd.f32 %v1297, %v2199
        %v2328 = vadd.f32 %v1298, %v2200
        %v2329 = vadd.f32 %v1299, %v2201
        %v2330 = vadd.f32 %v1300, %v2202
        %v2331 = vadd.f32 %v1301, %v2203
        %v2332 = vadd.f32 %v1302, %v2204
        %v2333 = vadd.f32 %v1303, %v2205
        %v2334 = vadd.f32 %v1304, %v2206
        %v2335 = vadd.f32 %v1305, %v2207
        %v2336 = vadd.f32 %v1306, %v2208
        %v2337 = vadd.f32 %v1307, %v2209
        %v2338 = vadd.f32 %v1308, %v2210
        %v2339 = vadd.f32 %v1309, %v2211
        %v2340 = vadd.f32 %v1310, %v2212
        %v2341 = vadd.f32 %v1311, %v2213
        %v2342 = vadd.f32 %v1312, %v2214
        %v2343 = vadd.f32 %v1313, %v2215
        %v2344 = vadd.f32 %v1314, %v2216
        %v2345 = vadd.f32 %v1315, %v2217
        %v2346 = vadd.f32 %v1316, %v2218
        %v2347 = vadd.f32 %v1317, %v2219
        %v2348 = vadd.f32 %v1318, %v2220
        %v2349 = vadd.f32 %v1319, %v2221
        %v2350 = vadd.f32 %v1320, %v2222
        %v2351 = vadd.f32 %v1321, %v2223
        %v2352 = vadd.f32 %v1322, %v2224
        %v2353 = vadd.f32 %v1323, %v2225
        %v2354 = vadd.f32 %v1324, %v2226
        %v2355 = vadd.f32 %v1325, %v2227
        %v2356 = vadd.f32 %v1326, %v2228
        %v2357 = vadd.f32 %v1327, %v2229
        %v2358 = vadd.f32 %v1328, %v2230
        %v2359 = vadd.f32 %v1329, %v2231
        %v2360 = vadd.f32 %v1330, %v2232
        %v2361 = vadd.f32 %v1331, %v2233
        %v2362 = vadd.f32 %v1332, %v2234
        %v2363 = vadd.f32 %v1333, %v2235
        %v2364 = vadd.f32 %v1334, %v2236
        %v2365 = vadd.f32 %v1335, %v2237
        %v2366 = vadd.f32 %v1336, %v2238
        %v2367 = vadd.f32 %v1337, %v2239
        %v2368 = vadd.f32 %v1338, %v2240
        %v2369 = vadd.f32 %v1339, %v2241
        %v2370 = vadd.f32 %v1340, %v2242
        %v2371 = vadd.f32 %v1341, %v2243
        %v2372 = vadd.f32 %v1342, %v2244
        %v2373 = vadd.f32 %v1343, %v2245
        %v2374 = vadd.f32 %v1344, %v2246
        %v2375 = vadd.f32 %v1345, %v2247
        %v2376 = vadd.f32 %v1346, %v2248
        %v2377 = vadd.f32 %v1347, %v2249
        %v2378 = vadd.f32 %v1348, %v2250
        %v2379 = vadd.f32 %v1349, %v2251
        %v2380 = vadd.f32 %v1350, %v2252
        %v2381 = vadd.f32 %v1351, %v2253
        %v2382 = vadd.f32 %v1352, %v2254
        %v2383 = vadd.f32 %v1353, %v2255
        %v2384 = vadd.f32 %v1354, %v2256
        %v2385 = vadd.f32 %v1355, %v2257
        %v2386 = vadd.f32 %v1356, %v2258
        %v2387 = vadd.f32 %v1357, %v2259
        %v2388 = vadd.f32 %v1358, %v2260
        %v2389 = vadd.f32 %v1359, %v2261
        %v2390 = vadd.f32 %v1360, %v2262
        %v2391 = vadd.f32 %v1361, %v2263
        %v2392 = vadd.f32 %v1362, %v2264
        %v2393 = vadd.f32 %v1363, %v2265
        %v2394 = vadd.f32 %v1364, %v2266
        %v2395 = vadd.f32 %v1365, %v2267
        %v2396 = vadd.f32 %v1366, %v2268
        %s2397 = sld [smem:[#allocation6 + $0x4]]
        %s2398 = scalar_lea.vmem %s401, 2048 [#allocation11]
        %v2399 = vld [vmem:[%s2398] sm:$0xf]
        %v2400 = vld [vmem:[%s2398 + $0x4] sm:$0xf]
        %v2401 = vld [vmem:[%s2398 + $0x8] sm:$0xf]
        %v2402 = vld [vmem:[%s2398 + $0xc] sm:$0xf]
        %v2403 = vld [vmem:[%s2398 + $0x10] sm:$0xf]
        %v2404 = vld [vmem:[%s2398 + $0x14] sm:$0xf]
        %v2405 = vld [vmem:[%s2398 + $0x18] sm:$0xf]
        %v2406 = vld [vmem:[%s2398 + $0x1c] sm:$0xf]
        %v2407 = vld [vmem:[%s2398 + $0x20] sm:$0xf]
        %v2408 = vld [vmem:[%s2398 + $0x24] sm:$0xf]
        %v2409 = vld [vmem:[%s2398 + $0x28] sm:$0xf]
        %v2410 = vld [vmem:[%s2398 + $0x2c] sm:$0xf]
        %v2411 = vld [vmem:[%s2398 + $0x30] sm:$0xf]
        %v2412 = vld [vmem:[%s2398 + $0x34] sm:$0xf]
        %v2413 = vld [vmem:[%s2398 + $0x38] sm:$0xf]
        %v2414 = vld [vmem:[%s2398 + $0x3c] sm:$0xf]
        %v2415 = vld [vmem:[%s2398 + $0x40] sm:$0xf]
        %v2416 = vld [vmem:[%s2398 + $0x44] sm:$0xf]
        %v2417 = vld [vmem:[%s2398 + $0x48] sm:$0xf]
        %v2418 = vld [vmem:[%s2398 + $0x4c] sm:$0xf]
        %v2419 = vld [vmem:[%s2398 + $0x50] sm:$0xf]
        %v2420 = vld [vmem:[%s2398 + $0x54] sm:$0xf]
        %v2421 = vld [vmem:[%s2398 + $0x58] sm:$0xf]
        %v2422 = vld [vmem:[%s2398 + $0x5c] sm:$0xf]
        %v2423 = vld [vmem:[%s2398 + $0x60] sm:$0xf]
        %v2424 = vld [vmem:[%s2398 + $0x64] sm:$0xf]
        %v2425 = vld [vmem:[%s2398 + $0x68] sm:$0xf]
        %v2426 = vld [vmem:[%s2398 + $0x6c] sm:$0xf]
        %v2427 = vld [vmem:[%s2398 + $0x70] sm:$0xf]
        %v2428 = vld [vmem:[%s2398 + $0x74] sm:$0xf]
        %v2429 = vld [vmem:[%s2398 + $0x78] sm:$0xf]
        %v2430 = vld [vmem:[%s2398 + $0x7c] sm:$0xf]
        %v2431 = vld [vmem:[%s2398 + $0x80] sm:$0xf]
        %v2432 = vld [vmem:[%s2398 + $0x84] sm:$0xf]
        %v2433 = vld [vmem:[%s2398 + $0x88] sm:$0xf]
        %v2434 = vld [vmem:[%s2398 + $0x8c] sm:$0xf]
        %v2435 = vld [vmem:[%s2398 + $0x90] sm:$0xf]
        %v2436 = vld [vmem:[%s2398 + $0x94] sm:$0xf]
        %v2437 = vld [vmem:[%s2398 + $0x98] sm:$0xf]
        %v2438 = vld [vmem:[%s2398 + $0x9c] sm:$0xf]
        %v2439 = vld [vmem:[%s2398 + $0xa0] sm:$0xf]
        %v2440 = vld [vmem:[%s2398 + $0xa4] sm:$0xf]
        %v2441 = vld [vmem:[%s2398 + $0xa8] sm:$0xf]
        %v2442 = vld [vmem:[%s2398 + $0xac] sm:$0xf]
        %v2443 = vld [vmem:[%s2398 + $0xb0] sm:$0xf]
        %v2444 = vld [vmem:[%s2398 + $0xb4] sm:$0xf]
        %v2445 = vld [vmem:[%s2398 + $0xb8] sm:$0xf]
        %v2446 = vld [vmem:[%s2398 + $0xbc] sm:$0xf]
        %v2447 = vld [vmem:[%s2398 + $0xc0] sm:$0xf]
        %v2448 = vld [vmem:[%s2398 + $0xc4] sm:$0xf]
        %v2449 = vld [vmem:[%s2398 + $0xc8] sm:$0xf]
        %v2450 = vld [vmem:[%s2398 + $0xcc] sm:$0xf]
        %v2451 = vld [vmem:[%s2398 + $0xd0] sm:$0xf]
        %v2452 = vld [vmem:[%s2398 + $0xd4] sm:$0xf]
        %v2453 = vld [vmem:[%s2398 + $0xd8] sm:$0xf]
        %v2454 = vld [vmem:[%s2398 + $0xdc] sm:$0xf]
        %v2455 = vld [vmem:[%s2398 + $0xe0] sm:$0xf]
        %v2456 = vld [vmem:[%s2398 + $0xe4] sm:$0xf]
        %v2457 = vld [vmem:[%s2398 + $0xe8] sm:$0xf]
        %v2458 = vld [vmem:[%s2398 + $0xec] sm:$0xf]
        %v2459 = vld [vmem:[%s2398 + $0xf0] sm:$0xf]
        %v2460 = vld [vmem:[%s2398 + $0xf4] sm:$0xf]
        %v2461 = vld [vmem:[%s2398 + $0xf8] sm:$0xf]
        %v2462 = vld [vmem:[%s2398 + $0xfc] sm:$0xf]
        %v2463 = vld [vmem:[%s2398 + $0x100] sm:$0xf]
        %v2464 = vld [vmem:[%s2398 + $0x104] sm:$0xf]
        %v2465 = vld [vmem:[%s2398 + $0x108] sm:$0xf]
        %v2466 = vld [vmem:[%s2398 + $0x10c] sm:$0xf]
        %v2467 = vld [vmem:[%s2398 + $0x110] sm:$0xf]
        %v2468 = vld [vmem:[%s2398 + $0x114] sm:$0xf]
        %v2469 = vld [vmem:[%s2398 + $0x118] sm:$0xf]
        %v2470 = vld [vmem:[%s2398 + $0x11c] sm:$0xf]
        %v2471 = vld [vmem:[%s2398 + $0x120] sm:$0xf]
        %v2472 = vld [vmem:[%s2398 + $0x124] sm:$0xf]
        %v2473 = vld [vmem:[%s2398 + $0x128] sm:$0xf]
        %v2474 = vld [vmem:[%s2398 + $0x12c] sm:$0xf]
        %v2475 = vld [vmem:[%s2398 + $0x130] sm:$0xf]
        %v2476 = vld [vmem:[%s2398 + $0x134] sm:$0xf]
        %v2477 = vld [vmem:[%s2398 + $0x138] sm:$0xf]
        %v2478 = vld [vmem:[%s2398 + $0x13c] sm:$0xf]
        %v2479 = vld [vmem:[%s2398 + $0x140] sm:$0xf]
        %v2480 = vld [vmem:[%s2398 + $0x144] sm:$0xf]
        %v2481 = vld [vmem:[%s2398 + $0x148] sm:$0xf]
        %v2482 = vld [vmem:[%s2398 + $0x14c] sm:$0xf]
        %v2483 = vld [vmem:[%s2398 + $0x150] sm:$0xf]
        %v2484 = vld [vmem:[%s2398 + $0x154] sm:$0xf]
        %v2485 = vld [vmem:[%s2398 + $0x158] sm:$0xf]
        %v2486 = vld [vmem:[%s2398 + $0x15c] sm:$0xf]
        %v2487 = vld [vmem:[%s2398 + $0x160] sm:$0xf]
        %v2488 = vld [vmem:[%s2398 + $0x164] sm:$0xf]
        %v2489 = vld [vmem:[%s2398 + $0x168] sm:$0xf]
        %v2490 = vld [vmem:[%s2398 + $0x16c] sm:$0xf]
        %v2491 = vld [vmem:[%s2398 + $0x170] sm:$0xf]
        %v2492 = vld [vmem:[%s2398 + $0x174] sm:$0xf]
        %v2493 = vld [vmem:[%s2398 + $0x178] sm:$0xf]
        %v2494 = vld [vmem:[%s2398 + $0x17c] sm:$0xf]
        %v2495 = vld [vmem:[%s2398 + $0x180] sm:$0xf]
        %v2496 = vld [vmem:[%s2398 + $0x184] sm:$0xf]
        %v2497 = vld [vmem:[%s2398 + $0x188] sm:$0xf]
        %v2498 = vld [vmem:[%s2398 + $0x18c] sm:$0xf]
        %v2499 = vld [vmem:[%s2398 + $0x190] sm:$0xf]
        %v2500 = vld [vmem:[%s2398 + $0x194] sm:$0xf]
        %v2501 = vld [vmem:[%s2398 + $0x198] sm:$0xf]
        %v2502 = vld [vmem:[%s2398 + $0x19c] sm:$0xf]
        %v2503 = vld [vmem:[%s2398 + $0x1a0] sm:$0xf]
        %v2504 = vld [vmem:[%s2398 + $0x1a4] sm:$0xf]
        %v2505 = vld [vmem:[%s2398 + $0x1a8] sm:$0xf]
        %v2506 = vld [vmem:[%s2398 + $0x1ac] sm:$0xf]
        %v2507 = vld [vmem:[%s2398 + $0x1b0] sm:$0xf]
        %v2508 = vld [vmem:[%s2398 + $0x1b4] sm:$0xf]
        %v2509 = vld [vmem:[%s2398 + $0x1b8] sm:$0xf]
        %v2510 = vld [vmem:[%s2398 + $0x1bc] sm:$0xf]
        %v2511 = vld [vmem:[%s2398 + $0x1c0] sm:$0xf]
        %v2512 = vld [vmem:[%s2398 + $0x1c4] sm:$0xf]
        %v2513 = vld [vmem:[%s2398 + $0x1c8] sm:$0xf]
        %v2514 = vld [vmem:[%s2398 + $0x1cc] sm:$0xf]
        %v2515 = vld [vmem:[%s2398 + $0x1d0] sm:$0xf]
        %v2516 = vld [vmem:[%s2398 + $0x1d4] sm:$0xf]
        %v2517 = vld [vmem:[%s2398 + $0x1d8] sm:$0xf]
        %v2518 = vld [vmem:[%s2398 + $0x1dc] sm:$0xf]
        %v2519 = vld [vmem:[%s2398 + $0x1e0] sm:$0xf]
        %v2520 = vld [vmem:[%s2398 + $0x1e4] sm:$0xf]
        %v2521 = vld [vmem:[%s2398 + $0x1e8] sm:$0xf]
        %v2522 = vld [vmem:[%s2398 + $0x1ec] sm:$0xf]
        %v2523 = vld [vmem:[%s2398 + $0x1f0] sm:$0xf]
        %v2524 = vld [vmem:[%s2398 + $0x1f4] sm:$0xf]
        %v2525 = vld [vmem:[%s2398 + $0x1f8] sm:$0xf]
        %v2526 = vld [vmem:[%s2398 + $0x1fc] sm:$0xf]
        %v2527 = vunpack.c.l.bf16 %v2399
        %v2528 = vunpack.c.l.bf16 %v2400
        %v2529 = vunpack.c.l.bf16 %v2401
        %v2530 = vunpack.c.l.bf16 %v2402
        %v2531 = vunpack.c.l.bf16 %v2403
        %v2532 = vunpack.c.l.bf16 %v2404
        %v2533 = vunpack.c.l.bf16 %v2405
        %v2534 = vunpack.c.l.bf16 %v2406
        %v2535 = vunpack.c.l.bf16 %v2407
        %v2536 = vunpack.c.l.bf16 %v2408
        %v2537 = vunpack.c.l.bf16 %v2409
        %v2538 = vunpack.c.l.bf16 %v2410
        %v2539 = vunpack.c.l.bf16 %v2411
        %v2540 = vunpack.c.l.bf16 %v2412
        %v2541 = vunpack.c.l.bf16 %v2413
        %v2542 = vunpack.c.l.bf16 %v2414
        %v2543 = vunpack.c.l.bf16 %v2415
        %v2544 = vunpack.c.l.bf16 %v2416
        %v2545 = vunpack.c.l.bf16 %v2417
        %v2546 = vunpack.c.l.bf16 %v2418
        %v2547 = vunpack.c.l.bf16 %v2419
        %v2548 = vunpack.c.l.bf16 %v2420
        %v2549 = vunpack.c.l.bf16 %v2421
        %v2550 = vunpack.c.l.bf16 %v2422
        %v2551 = vunpack.c.l.bf16 %v2423
        %v2552 = vunpack.c.l.bf16 %v2424
        %v2553 = vunpack.c.l.bf16 %v2425
        %v2554 = vunpack.c.l.bf16 %v2426
        %v2555 = vunpack.c.l.bf16 %v2427
        %v2556 = vunpack.c.l.bf16 %v2428
        %v2557 = vunpack.c.l.bf16 %v2429
        %v2558 = vunpack.c.l.bf16 %v2430
        %v2559 = vunpack.c.l.bf16 %v2431
        %v2560 = vunpack.c.l.bf16 %v2432
        %v2561 = vunpack.c.l.bf16 %v2433
        %v2562 = vunpack.c.l.bf16 %v2434
        %v2563 = vunpack.c.l.bf16 %v2435
        %v2564 = vunpack.c.l.bf16 %v2436
        %v2565 = vunpack.c.l.bf16 %v2437
        %v2566 = vunpack.c.l.bf16 %v2438
        %v2567 = vunpack.c.l.bf16 %v2439
        %v2568 = vunpack.c.l.bf16 %v2440
        %v2569 = vunpack.c.l.bf16 %v2441
        %v2570 = vunpack.c.l.bf16 %v2442
        %v2571 = vunpack.c.l.bf16 %v2443
        %v2572 = vunpack.c.l.bf16 %v2444
        %v2573 = vunpack.c.l.bf16 %v2445
        %v2574 = vunpack.c.l.bf16 %v2446
        %v2575 = vunpack.c.l.bf16 %v2447
        %v2576 = vunpack.c.l.bf16 %v2448
        %v2577 = vunpack.c.l.bf16 %v2449
        %v2578 = vunpack.c.l.bf16 %v2450
        %v2579 = vunpack.c.l.bf16 %v2451
        %v2580 = vunpack.c.l.bf16 %v2452
        %v2581 = vunpack.c.l.bf16 %v2453
        %v2582 = vunpack.c.l.bf16 %v2454
        %v2583 = vunpack.c.l.bf16 %v2455
        %v2584 = vunpack.c.l.bf16 %v2456
        %v2585 = vunpack.c.l.bf16 %v2457
        %v2586 = vunpack.c.l.bf16 %v2458
        %v2587 = vunpack.c.l.bf16 %v2459
        %v2588 = vunpack.c.l.bf16 %v2460
        %v2589 = vunpack.c.l.bf16 %v2461
        %v2590 = vunpack.c.l.bf16 %v2462
        %v2591 = vunpack.c.l.bf16 %v2463
        %v2592 = vunpack.c.l.bf16 %v2464
        %v2593 = vunpack.c.l.bf16 %v2465
        %v2594 = vunpack.c.l.bf16 %v2466
        %v2595 = vunpack.c.l.bf16 %v2467
        %v2596 = vunpack.c.l.bf16 %v2468
        %v2597 = vunpack.c.l.bf16 %v2469
        %v2598 = vunpack.c.l.bf16 %v2470
        %v2599 = vunpack.c.l.bf16 %v2471
        %v2600 = vunpack.c.l.bf16 %v2472
        %v2601 = vunpack.c.l.bf16 %v2473
        %v2602 = vunpack.c.l.bf16 %v2474
        %v2603 = vunpack.c.l.bf16 %v2475
        %v2604 = vunpack.c.l.bf16 %v2476
        %v2605 = vunpack.c.l.bf16 %v2477
        %v2606 = vunpack.c.l.bf16 %v2478
        %v2607 = vunpack.c.l.bf16 %v2479
        %v2608 = vunpack.c.l.bf16 %v2480
        %v2609 = vunpack.c.l.bf16 %v2481
        %v2610 = vunpack.c.l.bf16 %v2482
        %v2611 = vunpack.c.l.bf16 %v2483
        %v2612 = vunpack.c.l.bf16 %v2484
        %v2613 = vunpack.c.l.bf16 %v2485
        %v2614 = vunpack.c.l.bf16 %v2486
        %v2615 = vunpack.c.l.bf16 %v2487
        %v2616 = vunpack.c.l.bf16 %v2488
        %v2617 = vunpack.c.l.bf16 %v2489
        %v2618 = vunpack.c.l.bf16 %v2490
        %v2619 = vunpack.c.l.bf16 %v2491
        %v2620 = vunpack.c.l.bf16 %v2492
        %v2621 = vunpack.c.l.bf16 %v2493
        %v2622 = vunpack.c.l.bf16 %v2494
        %v2623 = vunpack.c.l.bf16 %v2495
        %v2624 = vunpack.c.l.bf16 %v2496
        %v2625 = vunpack.c.l.bf16 %v2497
        %v2626 = vunpack.c.l.bf16 %v2498
        %v2627 = vunpack.c.l.bf16 %v2499
        %v2628 = vunpack.c.l.bf16 %v2500
        %v2629 = vunpack.c.l.bf16 %v2501
        %v2630 = vunpack.c.l.bf16 %v2502
        %v2631 = vunpack.c.l.bf16 %v2503
        %v2632 = vunpack.c.l.bf16 %v2504
        %v2633 = vunpack.c.l.bf16 %v2505
        %v2634 = vunpack.c.l.bf16 %v2506
        %v2635 = vunpack.c.l.bf16 %v2507
        %v2636 = vunpack.c.l.bf16 %v2508
        %v2637 = vunpack.c.l.bf16 %v2509
        %v2638 = vunpack.c.l.bf16 %v2510
        %v2639 = vunpack.c.l.bf16 %v2511
        %v2640 = vunpack.c.l.bf16 %v2512
        %v2641 = vunpack.c.l.bf16 %v2513
        %v2642 = vunpack.c.l.bf16 %v2514
        %v2643 = vunpack.c.l.bf16 %v2515
        %v2644 = vunpack.c.l.bf16 %v2516
        %v2645 = vunpack.c.l.bf16 %v2517
        %v2646 = vunpack.c.l.bf16 %v2518
        %v2647 = vunpack.c.l.bf16 %v2519
        %v2648 = vunpack.c.l.bf16 %v2520
        %v2649 = vunpack.c.l.bf16 %v2521
        %v2650 = vunpack.c.l.bf16 %v2522
        %v2651 = vunpack.c.l.bf16 %v2523
        %v2652 = vunpack.c.l.bf16 %v2524
        %v2653 = vunpack.c.l.bf16 %v2525
        %v2654 = vunpack.c.l.bf16 %v2526
        %v2655 = vstv %s2397
        %v2656 = vmul.f32 %v2655, %v2527
        %v2657 = vmul.f32 %v2655, %v2528
        %v2658 = vmul.f32 %v2655, %v2529
        %v2659 = vmul.f32 %v2655, %v2530
        %v2660 = vmul.f32 %v2655, %v2531
        %v2661 = vmul.f32 %v2655, %v2532
        %v2662 = vmul.f32 %v2655, %v2533
        %v2663 = vmul.f32 %v2655, %v2534
        %v2664 = vmul.f32 %v2655, %v2535
        %v2665 = vmul.f32 %v2655, %v2536
        %v2666 = vmul.f32 %v2655, %v2537
        %v2667 = vmul.f32 %v2655, %v2538
        %v2668 = vmul.f32 %v2655, %v2539
        %v2669 = vmul.f32 %v2655, %v2540
        %v2670 = vmul.f32 %v2655, %v2541
        %v2671 = vmul.f32 %v2655, %v2542
        %v2672 = vmul.f32 %v2655, %v2543
        %v2673 = vmul.f32 %v2655, %v2544
        %v2674 = vmul.f32 %v2655, %v2545
        %v2675 = vmul.f32 %v2655, %v2546
        %v2676 = vmul.f32 %v2655, %v2547
        %v2677 = vmul.f32 %v2655, %v2548
        %v2678 = vmul.f32 %v2655, %v2549
        %v2679 = vmul.f32 %v2655, %v2550
        %v2680 = vmul.f32 %v2655, %v2551
        %v2681 = vmul.f32 %v2655, %v2552
        %v2682 = vmul.f32 %v2655, %v2553
        %v2683 = vmul.f32 %v2655, %v2554
        %v2684 = vmul.f32 %v2655, %v2555
        %v2685 = vmul.f32 %v2655, %v2556
        %v2686 = vmul.f32 %v2655, %v2557
        %v2687 = vmul.f32 %v2655, %v2558
        %v2688 = vmul.f32 %v2655, %v2559
        %v2689 = vmul.f32 %v2655, %v2560
        %v2690 = vmul.f32 %v2655, %v2561
        %v2691 = vmul.f32 %v2655, %v2562
        %v2692 = vmul.f32 %v2655, %v2563
        %v2693 = vmul.f32 %v2655, %v2564
        %v2694 = vmul.f32 %v2655, %v2565
        %v2695 = vmul.f32 %v2655, %v2566
        %v2696 = vmul.f32 %v2655, %v2567
        %v2697 = vmul.f32 %v2655, %v2568
        %v2698 = vmul.f32 %v2655, %v2569
        %v2699 = vmul.f32 %v2655, %v2570
        %v2700 = vmul.f32 %v2655, %v2571
        %v2701 = vmul.f32 %v2655, %v2572
        %v2702 = vmul.f32 %v2655, %v2573
        %v2703 = vmul.f32 %v2655, %v2574
        %v2704 = vmul.f32 %v2655, %v2575
        %v2705 = vmul.f32 %v2655, %v2576
        %v2706 = vmul.f32 %v2655, %v2577
        %v2707 = vmul.f32 %v2655, %v2578
        %v2708 = vmul.f32 %v2655, %v2579
        %v2709 = vmul.f32 %v2655, %v2580
        %v2710 = vmul.f32 %v2655, %v2581
        %v2711 = vmul.f32 %v2655, %v2582
        %v2712 = vmul.f32 %v2655, %v2583
        %v2713 = vmul.f32 %v2655, %v2584
        %v2714 = vmul.f32 %v2655, %v2585
        %v2715 = vmul.f32 %v2655, %v2586
        %v2716 = vmul.f32 %v2655, %v2587
        %v2717 = vmul.f32 %v2655, %v2588
        %v2718 = vmul.f32 %v2655, %v2589
        %v2719 = vmul.f32 %v2655, %v2590
        %v2720 = vmul.f32 %v2655, %v2591
        %v2721 = vmul.f32 %v2655, %v2592
        %v2722 = vmul.f32 %v2655, %v2593
        %v2723 = vmul.f32 %v2655, %v2594
        %v2724 = vmul.f32 %v2655, %v2595
        %v2725 = vmul.f32 %v2655, %v2596
        %v2726 = vmul.f32 %v2655, %v2597
        %v2727 = vmul.f32 %v2655, %v2598
        %v2728 = vmul.f32 %v2655, %v2599
        %v2729 = vmul.f32 %v2655, %v2600
        %v2730 = vmul.f32 %v2655, %v2601
        %v2731 = vmul.f32 %v2655, %v2602
        %v2732 = vmul.f32 %v2655, %v2603
        %v2733 = vmul.f32 %v2655, %v2604
        %v2734 = vmul.f32 %v2655, %v2605
        %v2735 = vmul.f32 %v2655, %v2606
        %v2736 = vmul.f32 %v2655, %v2607
        %v2737 = vmul.f32 %v2655, %v2608
        %v2738 = vmul.f32 %v2655, %v2609
        %v2739 = vmul.f32 %v2655, %v2610
        %v2740 = vmul.f32 %v2655, %v2611
        %v2741 = vmul.f32 %v2655, %v2612
        %v2742 = vmul.f32 %v2655, %v2613
        %v2743 = vmul.f32 %v2655, %v2614
        %v2744 = vmul.f32 %v2655, %v2615
        %v2745 = vmul.f32 %v2655, %v2616
        %v2746 = vmul.f32 %v2655, %v2617
        %v2747 = vmul.f32 %v2655, %v2618
        %v2748 = vmul.f32 %v2655, %v2619
        %v2749 = vmul.f32 %v2655, %v2620
        %v2750 = vmul.f32 %v2655, %v2621
        %v2751 = vmul.f32 %v2655, %v2622
        %v2752 = vmul.f32 %v2655, %v2623
        %v2753 = vmul.f32 %v2655, %v2624
        %v2754 = vmul.f32 %v2655, %v2625
        %v2755 = vmul.f32 %v2655, %v2626
        %v2756 = vmul.f32 %v2655, %v2627
        %v2757 = vmul.f32 %v2655, %v2628
        %v2758 = vmul.f32 %v2655, %v2629
        %v2759 = vmul.f32 %v2655, %v2630
        %v2760 = vmul.f32 %v2655, %v2631
        %v2761 = vmul.f32 %v2655, %v2632
        %v2762 = vmul.f32 %v2655, %v2633
        %v2763 = vmul.f32 %v2655, %v2634
        %v2764 = vmul.f32 %v2655, %v2635
        %v2765 = vmul.f32 %v2655, %v2636
        %v2766 = vmul.f32 %v2655, %v2637
        %v2767 = vmul.f32 %v2655, %v2638
        %v2768 = vmul.f32 %v2655, %v2639
        %v2769 = vmul.f32 %v2655, %v2640
        %v2770 = vmul.f32 %v2655, %v2641
        %v2771 = vmul.f32 %v2655, %v2642
        %v2772 = vmul.f32 %v2655, %v2643
        %v2773 = vmul.f32 %v2655, %v2644
        %v2774 = vmul.f32 %v2655, %v2645
        %v2775 = vmul.f32 %v2655, %v2646
        %v2776 = vmul.f32 %v2655, %v2647
        %v2777 = vmul.f32 %v2655, %v2648
        %v2778 = vmul.f32 %v2655, %v2649
        %v2779 = vmul.f32 %v2655, %v2650
        %v2780 = vmul.f32 %v2655, %v2651
        %v2781 = vmul.f32 %v2655, %v2652
        %v2782 = vmul.f32 %v2655, %v2653
        %v2783 = vmul.f32 %v2655, %v2654
        %s2784 = sld [smem:[#allocation6 + $0x5]]
        %s2785 = scalar_lea.vmem %s401, 2560 [#allocation11]
        %v2786 = vld [vmem:[%s2785] sm:$0xf]
        %v2787 = vld [vmem:[%s2785 + $0x4] sm:$0xf]
        %v2788 = vld [vmem:[%s2785 + $0x8] sm:$0xf]
        %v2789 = vld [vmem:[%s2785 + $0xc] sm:$0xf]
        %v2790 = vld [vmem:[%s2785 + $0x10] sm:$0xf]
        %v2791 = vld [vmem:[%s2785 + $0x14] sm:$0xf]
        %v2792 = vld [vmem:[%s2785 + $0x18] sm:$0xf]
        %v2793 = vld [vmem:[%s2785 + $0x1c] sm:$0xf]
        %v2794 = vld [vmem:[%s2785 + $0x20] sm:$0xf]
        %v2795 = vld [vmem:[%s2785 + $0x24] sm:$0xf]
        %v2796 = vld [vmem:[%s2785 + $0x28] sm:$0xf]
        %v2797 = vld [vmem:[%s2785 + $0x2c] sm:$0xf]
        %v2798 = vld [vmem:[%s2785 + $0x30] sm:$0xf]
        %v2799 = vld [vmem:[%s2785 + $0x34] sm:$0xf]
        %v2800 = vld [vmem:[%s2785 + $0x38] sm:$0xf]
        %v2801 = vld [vmem:[%s2785 + $0x3c] sm:$0xf]
        %v2802 = vld [vmem:[%s2785 + $0x40] sm:$0xf]
        %v2803 = vld [vmem:[%s2785 + $0x44] sm:$0xf]
        %v2804 = vld [vmem:[%s2785 + $0x48] sm:$0xf]
        %v2805 = vld [vmem:[%s2785 + $0x4c] sm:$0xf]
        %v2806 = vld [vmem:[%s2785 + $0x50] sm:$0xf]
        %v2807 = vld [vmem:[%s2785 + $0x54] sm:$0xf]
        %v2808 = vld [vmem:[%s2785 + $0x58] sm:$0xf]
        %v2809 = vld [vmem:[%s2785 + $0x5c] sm:$0xf]
        %v2810 = vld [vmem:[%s2785 + $0x60] sm:$0xf]
        %v2811 = vld [vmem:[%s2785 + $0x64] sm:$0xf]
        %v2812 = vld [vmem:[%s2785 + $0x68] sm:$0xf]
        %v2813 = vld [vmem:[%s2785 + $0x6c] sm:$0xf]
        %v2814 = vld [vmem:[%s2785 + $0x70] sm:$0xf]
        %v2815 = vld [vmem:[%s2785 + $0x74] sm:$0xf]
        %v2816 = vld [vmem:[%s2785 + $0x78] sm:$0xf]
        %v2817 = vld [vmem:[%s2785 + $0x7c] sm:$0xf]
        %v2818 = vld [vmem:[%s2785 + $0x80] sm:$0xf]
        %v2819 = vld [vmem:[%s2785 + $0x84] sm:$0xf]
        %v2820 = vld [vmem:[%s2785 + $0x88] sm:$0xf]
        %v2821 = vld [vmem:[%s2785 + $0x8c] sm:$0xf]
        %v2822 = vld [vmem:[%s2785 + $0x90] sm:$0xf]
        %v2823 = vld [vmem:[%s2785 + $0x94] sm:$0xf]
        %v2824 = vld [vmem:[%s2785 + $0x98] sm:$0xf]
        %v2825 = vld [vmem:[%s2785 + $0x9c] sm:$0xf]
        %v2826 = vld [vmem:[%s2785 + $0xa0] sm:$0xf]
        %v2827 = vld [vmem:[%s2785 + $0xa4] sm:$0xf]
        %v2828 = vld [vmem:[%s2785 + $0xa8] sm:$0xf]
        %v2829 = vld [vmem:[%s2785 + $0xac] sm:$0xf]
        %v2830 = vld [vmem:[%s2785 + $0xb0] sm:$0xf]
        %v2831 = vld [vmem:[%s2785 + $0xb4] sm:$0xf]
        %v2832 = vld [vmem:[%s2785 + $0xb8] sm:$0xf]
        %v2833 = vld [vmem:[%s2785 + $0xbc] sm:$0xf]
        %v2834 = vld [vmem:[%s2785 + $0xc0] sm:$0xf]
        %v2835 = vld [vmem:[%s2785 + $0xc4] sm:$0xf]
        %v2836 = vld [vmem:[%s2785 + $0xc8] sm:$0xf]
        %v2837 = vld [vmem:[%s2785 + $0xcc] sm:$0xf]
        %v2838 = vld [vmem:[%s2785 + $0xd0] sm:$0xf]
        %v2839 = vld [vmem:[%s2785 + $0xd4] sm:$0xf]
        %v2840 = vld [vmem:[%s2785 + $0xd8] sm:$0xf]
        %v2841 = vld [vmem:[%s2785 + $0xdc] sm:$0xf]
        %v2842 = vld [vmem:[%s2785 + $0xe0] sm:$0xf]
        %v2843 = vld [vmem:[%s2785 + $0xe4] sm:$0xf]
        %v2844 = vld [vmem:[%s2785 + $0xe8] sm:$0xf]
        %v2845 = vld [vmem:[%s2785 + $0xec] sm:$0xf]
        %v2846 = vld [vmem:[%s2785 + $0xf0] sm:$0xf]
        %v2847 = vld [vmem:[%s2785 + $0xf4] sm:$0xf]
        %v2848 = vld [vmem:[%s2785 + $0xf8] sm:$0xf]
        %v2849 = vld [vmem:[%s2785 + $0xfc] sm:$0xf]
        %v2850 = vld [vmem:[%s2785 + $0x100] sm:$0xf]
        %v2851 = vld [vmem:[%s2785 + $0x104] sm:$0xf]
        %v2852 = vld [vmem:[%s2785 + $0x108] sm:$0xf]
        %v2853 = vld [vmem:[%s2785 + $0x10c] sm:$0xf]
        %v2854 = vld [vmem:[%s2785 + $0x110] sm:$0xf]
        %v2855 = vld [vmem:[%s2785 + $0x114] sm:$0xf]
        %v2856 = vld [vmem:[%s2785 + $0x118] sm:$0xf]
        %v2857 = vld [vmem:[%s2785 + $0x11c] sm:$0xf]
        %v2858 = vld [vmem:[%s2785 + $0x120] sm:$0xf]
        %v2859 = vld [vmem:[%s2785 + $0x124] sm:$0xf]
        %v2860 = vld [vmem:[%s2785 + $0x128] sm:$0xf]
        %v2861 = vld [vmem:[%s2785 + $0x12c] sm:$0xf]
        %v2862 = vld [vmem:[%s2785 + $0x130] sm:$0xf]
        %v2863 = vld [vmem:[%s2785 + $0x134] sm:$0xf]
        %v2864 = vld [vmem:[%s2785 + $0x138] sm:$0xf]
        %v2865 = vld [vmem:[%s2785 + $0x13c] sm:$0xf]
        %v2866 = vld [vmem:[%s2785 + $0x140] sm:$0xf]
        %v2867 = vld [vmem:[%s2785 + $0x144] sm:$0xf]
        %v2868 = vld [vmem:[%s2785 + $0x148] sm:$0xf]
        %v2869 = vld [vmem:[%s2785 + $0x14c] sm:$0xf]
        %v2870 = vld [vmem:[%s2785 + $0x150] sm:$0xf]
        %v2871 = vld [vmem:[%s2785 + $0x154] sm:$0xf]
        %v2872 = vld [vmem:[%s2785 + $0x158] sm:$0xf]
        %v2873 = vld [vmem:[%s2785 + $0x15c] sm:$0xf]
        %v2874 = vld [vmem:[%s2785 + $0x160] sm:$0xf]
        %v2875 = vld [vmem:[%s2785 + $0x164] sm:$0xf]
        %v2876 = vld [vmem:[%s2785 + $0x168] sm:$0xf]
        %v2877 = vld [vmem:[%s2785 + $0x16c] sm:$0xf]
        %v2878 = vld [vmem:[%s2785 + $0x170] sm:$0xf]
        %v2879 = vld [vmem:[%s2785 + $0x174] sm:$0xf]
        %v2880 = vld [vmem:[%s2785 + $0x178] sm:$0xf]
        %v2881 = vld [vmem:[%s2785 + $0x17c] sm:$0xf]
        %v2882 = vld [vmem:[%s2785 + $0x180] sm:$0xf]
        %v2883 = vld [vmem:[%s2785 + $0x184] sm:$0xf]
        %v2884 = vld [vmem:[%s2785 + $0x188] sm:$0xf]
        %v2885 = vld [vmem:[%s2785 + $0x18c] sm:$0xf]
        %v2886 = vld [vmem:[%s2785 + $0x190] sm:$0xf]
        %v2887 = vld [vmem:[%s2785 + $0x194] sm:$0xf]
        %v2888 = vld [vmem:[%s2785 + $0x198] sm:$0xf]
        %v2889 = vld [vmem:[%s2785 + $0x19c] sm:$0xf]
        %v2890 = vld [vmem:[%s2785 + $0x1a0] sm:$0xf]
        %v2891 = vld [vmem:[%s2785 + $0x1a4] sm:$0xf]
        %v2892 = vld [vmem:[%s2785 + $0x1a8] sm:$0xf]
        %v2893 = vld [vmem:[%s2785 + $0x1ac] sm:$0xf]
        %v2894 = vld [vmem:[%s2785 + $0x1b0] sm:$0xf]
        %v2895 = vld [vmem:[%s2785 + $0x1b4] sm:$0xf]
        %v2896 = vld [vmem:[%s2785 + $0x1b8] sm:$0xf]
        %v2897 = vld [vmem:[%s2785 + $0x1bc] sm:$0xf]
        %v2898 = vld [vmem:[%s2785 + $0x1c0] sm:$0xf]
        %v2899 = vld [vmem:[%s2785 + $0x1c4] sm:$0xf]
        %v2900 = vld [vmem:[%s2785 + $0x1c8] sm:$0xf]
        %v2901 = vld [vmem:[%s2785 + $0x1cc] sm:$0xf]
        %v2902 = vld [vmem:[%s2785 + $0x1d0] sm:$0xf]
        %v2903 = vld [vmem:[%s2785 + $0x1d4] sm:$0xf]
        %v2904 = vld [vmem:[%s2785 + $0x1d8] sm:$0xf]
        %v2905 = vld [vmem:[%s2785 + $0x1dc] sm:$0xf]
        %v2906 = vld [vmem:[%s2785 + $0x1e0] sm:$0xf]
        %v2907 = vld [vmem:[%s2785 + $0x1e4] sm:$0xf]
        %v2908 = vld [vmem:[%s2785 + $0x1e8] sm:$0xf]
        %v2909 = vld [vmem:[%s2785 + $0x1ec] sm:$0xf]
        %v2910 = vld [vmem:[%s2785 + $0x1f0] sm:$0xf]
        %v2911 = vld [vmem:[%s2785 + $0x1f4] sm:$0xf]
        %v2912 = vld [vmem:[%s2785 + $0x1f8] sm:$0xf]
        %v2913 = vld [vmem:[%s2785 + $0x1fc] sm:$0xf]
        %v2914 = vunpack.c.l.bf16 %v2786
        %v2915 = vunpack.c.l.bf16 %v2787
        %v2916 = vunpack.c.l.bf16 %v2788
        %v2917 = vunpack.c.l.bf16 %v2789
        %v2918 = vunpack.c.l.bf16 %v2790
        %v2919 = vunpack.c.l.bf16 %v2791
        %v2920 = vunpack.c.l.bf16 %v2792
        %v2921 = vunpack.c.l.bf16 %v2793
        %v2922 = vunpack.c.l.bf16 %v2794
        %v2923 = vunpack.c.l.bf16 %v2795
        %v2924 = vunpack.c.l.bf16 %v2796
        %v2925 = vunpack.c.l.bf16 %v2797
        %v2926 = vunpack.c.l.bf16 %v2798
        %v2927 = vunpack.c.l.bf16 %v2799
        %v2928 = vunpack.c.l.bf16 %v2800
        %v2929 = vunpack.c.l.bf16 %v2801
        %v2930 = vunpack.c.l.bf16 %v2802
        %v2931 = vunpack.c.l.bf16 %v2803
        %v2932 = vunpack.c.l.bf16 %v2804
        %v2933 = vunpack.c.l.bf16 %v2805
        %v2934 = vunpack.c.l.bf16 %v2806
        %v2935 = vunpack.c.l.bf16 %v2807
        %v2936 = vunpack.c.l.bf16 %v2808
        %v2937 = vunpack.c.l.bf16 %v2809
        %v2938 = vunpack.c.l.bf16 %v2810
        %v2939 = vunpack.c.l.bf16 %v2811
        %v2940 = vunpack.c.l.bf16 %v2812
        %v2941 = vunpack.c.l.bf16 %v2813
        %v2942 = vunpack.c.l.bf16 %v2814
        %v2943 = vunpack.c.l.bf16 %v2815
        %v2944 = vunpack.c.l.bf16 %v2816
        %v2945 = vunpack.c.l.bf16 %v2817
        %v2946 = vunpack.c.l.bf16 %v2818
        %v2947 = vunpack.c.l.bf16 %v2819
        %v2948 = vunpack.c.l.bf16 %v2820
        %v2949 = vunpack.c.l.bf16 %v2821
        %v2950 = vunpack.c.l.bf16 %v2822
        %v2951 = vunpack.c.l.bf16 %v2823
        %v2952 = vunpack.c.l.bf16 %v2824
        %v2953 = vunpack.c.l.bf16 %v2825
        %v2954 = vunpack.c.l.bf16 %v2826
        %v2955 = vunpack.c.l.bf16 %v2827
        %v2956 = vunpack.c.l.bf16 %v2828
        %v2957 = vunpack.c.l.bf16 %v2829
        %v2958 = vunpack.c.l.bf16 %v2830
        %v2959 = vunpack.c.l.bf16 %v2831
        %v2960 = vunpack.c.l.bf16 %v2832
        %v2961 = vunpack.c.l.bf16 %v2833
        %v2962 = vunpack.c.l.bf16 %v2834
        %v2963 = vunpack.c.l.bf16 %v2835
        %v2964 = vunpack.c.l.bf16 %v2836
        %v2965 = vunpack.c.l.bf16 %v2837
        %v2966 = vunpack.c.l.bf16 %v2838
        %v2967 = vunpack.c.l.bf16 %v2839
        %v2968 = vunpack.c.l.bf16 %v2840
        %v2969 = vunpack.c.l.bf16 %v2841
        %v2970 = vunpack.c.l.bf16 %v2842
        %v2971 = vunpack.c.l.bf16 %v2843
        %v2972 = vunpack.c.l.bf16 %v2844
        %v2973 = vunpack.c.l.bf16 %v2845
        %v2974 = vunpack.c.l.bf16 %v2846
        %v2975 = vunpack.c.l.bf16 %v2847
        %v2976 = vunpack.c.l.bf16 %v2848
        %v2977 = vunpack.c.l.bf16 %v2849
        %v2978 = vunpack.c.l.bf16 %v2850
        %v2979 = vunpack.c.l.bf16 %v2851
        %v2980 = vunpack.c.l.bf16 %v2852
        %v2981 = vunpack.c.l.bf16 %v2853
        %v2982 = vunpack.c.l.bf16 %v2854
        %v2983 = vunpack.c.l.bf16 %v2855
        %v2984 = vunpack.c.l.bf16 %v2856
        %v2985 = vunpack.c.l.bf16 %v2857
        %v2986 = vunpack.c.l.bf16 %v2858
        %v2987 = vunpack.c.l.bf16 %v2859
        %v2988 = vunpack.c.l.bf16 %v2860
        %v2989 = vunpack.c.l.bf16 %v2861
        %v2990 = vunpack.c.l.bf16 %v2862
        %v2991 = vunpack.c.l.bf16 %v2863
        %v2992 = vunpack.c.l.bf16 %v2864
        %v2993 = vunpack.c.l.bf16 %v2865
        %v2994 = vunpack.c.l.bf16 %v2866
        %v2995 = vunpack.c.l.bf16 %v2867
        %v2996 = vunpack.c.l.bf16 %v2868
        %v2997 = vunpack.c.l.bf16 %v2869
        %v2998 = vunpack.c.l.bf16 %v2870
        %v2999 = vunpack.c.l.bf16 %v2871
        %v3000 = vunpack.c.l.bf16 %v2872
        %v3001 = vunpack.c.l.bf16 %v2873
        %v3002 = vunpack.c.l.bf16 %v2874
        %v3003 = vunpack.c.l.bf16 %v2875
        %v3004 = vunpack.c.l.bf16 %v2876
        %v3005 = vunpack.c.l.bf16 %v2877
        %v3006 = vunpack.c.l.bf16 %v2878
        %v3007 = vunpack.c.l.bf16 %v2879
        %v3008 = vunpack.c.l.bf16 %v2880
        %v3009 = vunpack.c.l.bf16 %v2881
        %v3010 = vunpack.c.l.bf16 %v2882
        %v3011 = vunpack.c.l.bf16 %v2883
        %v3012 = vunpack.c.l.bf16 %v2884
        %v3013 = vunpack.c.l.bf16 %v2885
        %v3014 = vunpack.c.l.bf16 %v2886
        %v3015 = vunpack.c.l.bf16 %v2887
        %v3016 = vunpack.c.l.bf16 %v2888
        %v3017 = vunpack.c.l.bf16 %v2889
        %v3018 = vunpack.c.l.bf16 %v2890
        %v3019 = vunpack.c.l.bf16 %v2891
        %v3020 = vunpack.c.l.bf16 %v2892
        %v3021 = vunpack.c.l.bf16 %v2893
        %v3022 = vunpack.c.l.bf16 %v2894
        %v3023 = vunpack.c.l.bf16 %v2895
        %v3024 = vunpack.c.l.bf16 %v2896
        %v3025 = vunpack.c.l.bf16 %v2897
        %v3026 = vunpack.c.l.bf16 %v2898
        %v3027 = vunpack.c.l.bf16 %v2899
        %v3028 = vunpack.c.l.bf16 %v2900
        %v3029 = vunpack.c.l.bf16 %v2901
        %v3030 = vunpack.c.l.bf16 %v2902
        %v3031 = vunpack.c.l.bf16 %v2903
        %v3032 = vunpack.c.l.bf16 %v2904
        %v3033 = vunpack.c.l.bf16 %v2905
        %v3034 = vunpack.c.l.bf16 %v2906
        %v3035 = vunpack.c.l.bf16 %v2907
        %v3036 = vunpack.c.l.bf16 %v2908
        %v3037 = vunpack.c.l.bf16 %v2909
        %v3038 = vunpack.c.l.bf16 %v2910
        %v3039 = vunpack.c.l.bf16 %v2911
        %v3040 = vunpack.c.l.bf16 %v2912
        %v3041 = vunpack.c.l.bf16 %v2913
        %v3042 = vstv %s2784
        %v3043 = vmul.f32 %v3042, %v2914
        %v3044 = vmul.f32 %v3042, %v2915
        %v3045 = vmul.f32 %v3042, %v2916
        %v3046 = vmul.f32 %v3042, %v2917
        %v3047 = vmul.f32 %v3042, %v2918
        %v3048 = vmul.f32 %v3042, %v2919
        %v3049 = vmul.f32 %v3042, %v2920
        %v3050 = vmul.f32 %v3042, %v2921
        %v3051 = vmul.f32 %v3042, %v2922
        %v3052 = vmul.f32 %v3042, %v2923
        %v3053 = vmul.f32 %v3042, %v2924
        %v3054 = vmul.f32 %v3042, %v2925
        %v3055 = vmul.f32 %v3042, %v2926
        %v3056 = vmul.f32 %v3042, %v2927
        %v3057 = vmul.f32 %v3042, %v2928
        %v3058 = vmul.f32 %v3042, %v2929
        %v3059 = vmul.f32 %v3042, %v2930
        %v3060 = vmul.f32 %v3042, %v2931
        %v3061 = vmul.f32 %v3042, %v2932
        %v3062 = vmul.f32 %v3042, %v2933
        %v3063 = vmul.f32 %v3042, %v2934
        %v3064 = vmul.f32 %v3042, %v2935
        %v3065 = vmul.f32 %v3042, %v2936
        %v3066 = vmul.f32 %v3042, %v2937
        %v3067 = vmul.f32 %v3042, %v2938
        %v3068 = vmul.f32 %v3042, %v2939
        %v3069 = vmul.f32 %v3042, %v2940
        %v3070 = vmul.f32 %v3042, %v2941
        %v3071 = vmul.f32 %v3042, %v2942
        %v3072 = vmul.f32 %v3042, %v2943
        %v3073 = vmul.f32 %v3042, %v2944
        %v3074 = vmul.f32 %v3042, %v2945
        %v3075 = vmul.f32 %v3042, %v2946
        %v3076 = vmul.f32 %v3042, %v2947
        %v3077 = vmul.f32 %v3042, %v2948
        %v3078 = vmul.f32 %v3042, %v2949
        %v3079 = vmul.f32 %v3042, %v2950
        %v3080 = vmul.f32 %v3042, %v2951
        %v3081 = vmul.f32 %v3042, %v2952
        %v3082 = vmul.f32 %v3042, %v2953
        %v3083 = vmul.f32 %v3042, %v2954
        %v3084 = vmul.f32 %v3042, %v2955
        %v3085 = vmul.f32 %v3042, %v2956
        %v3086 = vmul.f32 %v3042, %v2957
        %v3087 = vmul.f32 %v3042, %v2958
        %v3088 = vmul.f32 %v3042, %v2959
        %v3089 = vmul.f32 %v3042, %v2960
        %v3090 = vmul.f32 %v3042, %v2961
        %v3091 = vmul.f32 %v3042, %v2962
        %v3092 = vmul.f32 %v3042, %v2963
        %v3093 = vmul.f32 %v3042, %v2964
        %v3094 = vmul.f32 %v3042, %v2965
        %v3095 = vmul.f32 %v3042, %v2966
        %v3096 = vmul.f32 %v3042, %v2967
        %v3097 = vmul.f32 %v3042, %v2968
        %v3098 = vmul.f32 %v3042, %v2969
        %v3099 = vmul.f32 %v3042, %v2970
        %v3100 = vmul.f32 %v3042, %v2971
        %v3101 = vmul.f32 %v3042, %v2972
        %v3102 = vmul.f32 %v3042, %v2973
        %v3103 = vmul.f32 %v3042, %v2974
        %v3104 = vmul.f32 %v3042, %v2975
        %v3105 = vmul.f32 %v3042, %v2976
        %v3106 = vmul.f32 %v3042, %v2977
        %v3107 = vmul.f32 %v3042, %v2978
        %v3108 = vmul.f32 %v3042, %v2979
        %v3109 = vmul.f32 %v3042, %v2980
        %v3110 = vmul.f32 %v3042, %v2981
        %v3111 = vmul.f32 %v3042, %v2982
        %v3112 = vmul.f32 %v3042, %v2983
        %v3113 = vmul.f32 %v3042, %v2984
        %v3114 = vmul.f32 %v3042, %v2985
        %v3115 = vmul.f32 %v3042, %v2986
        %v3116 = vmul.f32 %v3042, %v2987
        %v3117 = vmul.f32 %v3042, %v2988
        %v3118 = vmul.f32 %v3042, %v2989
        %v3119 = vmul.f32 %v3042, %v2990
        %v3120 = vmul.f32 %v3042, %v2991
        %v3121 = vmul.f32 %v3042, %v2992
        %v3122 = vmul.f32 %v3042, %v2993
        %v3123 = vmul.f32 %v3042, %v2994
        %v3124 = vmul.f32 %v3042, %v2995
        %v3125 = vmul.f32 %v3042, %v2996
        %v3126 = vmul.f32 %v3042, %v2997
        %v3127 = vmul.f32 %v3042, %v2998
        %v3128 = vmul.f32 %v3042, %v2999
        %v3129 = vmul.f32 %v3042, %v3000
        %v3130 = vmul.f32 %v3042, %v3001
        %v3131 = vmul.f32 %v3042, %v3002
        %v3132 = vmul.f32 %v3042, %v3003
        %v3133 = vmul.f32 %v3042, %v3004
        %v3134 = vmul.f32 %v3042, %v3005
        %v3135 = vmul.f32 %v3042, %v3006
        %v3136 = vmul.f32 %v3042, %v3007
        %v3137 = vmul.f32 %v3042, %v3008
        %v3138 = vmul.f32 %v3042, %v3009
        %v3139 = vmul.f32 %v3042, %v3010
        %v3140 = vmul.f32 %v3042, %v3011
        %v3141 = vmul.f32 %v3042, %v3012
        %v3142 = vmul.f32 %v3042, %v3013
        %v3143 = vmul.f32 %v3042, %v3014
        %v3144 = vmul.f32 %v3042, %v3015
        %v3145 = vmul.f32 %v3042, %v3016
        %v3146 = vmul.f32 %v3042, %v3017
        %v3147 = vmul.f32 %v3042, %v3018
        %v3148 = vmul.f32 %v3042, %v3019
        %v3149 = vmul.f32 %v3042, %v3020
        %v3150 = vmul.f32 %v3042, %v3021
        %v3151 = vmul.f32 %v3042, %v3022
        %v3152 = vmul.f32 %v3042, %v3023
        %v3153 = vmul.f32 %v3042, %v3024
        %v3154 = vmul.f32 %v3042, %v3025
        %v3155 = vmul.f32 %v3042, %v3026
        %v3156 = vmul.f32 %v3042, %v3027
        %v3157 = vmul.f32 %v3042, %v3028
        %v3158 = vmul.f32 %v3042, %v3029
        %v3159 = vmul.f32 %v3042, %v3030
        %v3160 = vmul.f32 %v3042, %v3031
        %v3161 = vmul.f32 %v3042, %v3032
        %v3162 = vmul.f32 %v3042, %v3033
        %v3163 = vmul.f32 %v3042, %v3034
        %v3164 = vmul.f32 %v3042, %v3035
        %v3165 = vmul.f32 %v3042, %v3036
        %v3166 = vmul.f32 %v3042, %v3037
        %v3167 = vmul.f32 %v3042, %v3038
        %v3168 = vmul.f32 %v3042, %v3039
        %v3169 = vmul.f32 %v3042, %v3040
        %v3170 = vmul.f32 %v3042, %v3041
        %v3171 = vadd.f32 %v2656, %v3043
        %v3172 = vadd.f32 %v2657, %v3044
        %v3173 = vadd.f32 %v2658, %v3045
        %v3174 = vadd.f32 %v2659, %v3046
        %v3175 = vadd.f32 %v2660, %v3047
        %v3176 = vadd.f32 %v2661, %v3048
        %v3177 = vadd.f32 %v2662, %v3049
        %v3178 = vadd.f32 %v2663, %v3050
        %v3179 = vadd.f32 %v2664, %v3051
        %v3180 = vadd.f32 %v2665, %v3052
        %v3181 = vadd.f32 %v2666, %v3053
        %v3182 = vadd.f32 %v2667, %v3054
        %v3183 = vadd.f32 %v2668, %v3055
        %v3184 = vadd.f32 %v2669, %v3056
        %v3185 = vadd.f32 %v2670, %v3057
        %v3186 = vadd.f32 %v2671, %v3058
        %v3187 = vadd.f32 %v2672, %v3059
        %v3188 = vadd.f32 %v2673, %v3060
        %v3189 = vadd.f32 %v2674, %v3061
        %v3190 = vadd.f32 %v2675, %v3062
        %v3191 = vadd.f32 %v2676, %v3063
        %v3192 = vadd.f32 %v2677, %v3064
        %v3193 = vadd.f32 %v2678, %v3065
        %v3194 = vadd.f32 %v2679, %v3066
        %v3195 = vadd.f32 %v2680, %v3067
        %v3196 = vadd.f32 %v2681, %v3068
        %v3197 = vadd.f32 %v2682, %v3069
        %v3198 = vadd.f32 %v2683, %v3070
        %v3199 = vadd.f32 %v2684, %v3071
        %v3200 = vadd.f32 %v2685, %v3072
        %v3201 = vadd.f32 %v2686, %v3073
        %v3202 = vadd.f32 %v2687, %v3074
        %v3203 = vadd.f32 %v2688, %v3075
        %v3204 = vadd.f32 %v2689, %v3076
        %v3205 = vadd.f32 %v2690, %v3077
        %v3206 = vadd.f32 %v2691, %v3078
        %v3207 = vadd.f32 %v2692, %v3079
        %v3208 = vadd.f32 %v2693, %v3080
        %v3209 = vadd.f32 %v2694, %v3081
        %v3210 = vadd.f32 %v2695, %v3082
        %v3211 = vadd.f32 %v2696, %v3083
        %v3212 = vadd.f32 %v2697, %v3084
        %v3213 = vadd.f32 %v2698, %v3085
        %v3214 = vadd.f32 %v2699, %v3086
        %v3215 = vadd.f32 %v2700, %v3087
        %v3216 = vadd.f32 %v2701, %v3088
        %v3217 = vadd.f32 %v2702, %v3089
        %v3218 = vadd.f32 %v2703, %v3090
        %v3219 = vadd.f32 %v2704, %v3091
        %v3220 = vadd.f32 %v2705, %v3092
        %v3221 = vadd.f32 %v2706, %v3093
        %v3222 = vadd.f32 %v2707, %v3094
        %v3223 = vadd.f32 %v2708, %v3095
        %v3224 = vadd.f32 %v2709, %v3096
        %v3225 = vadd.f32 %v2710, %v3097
        %v3226 = vadd.f32 %v2711, %v3098
        %v3227 = vadd.f32 %v2712, %v3099
        %v3228 = vadd.f32 %v2713, %v3100
        %v3229 = vadd.f32 %v2714, %v3101
        %v3230 = vadd.f32 %v2715, %v3102
        %v3231 = vadd.f32 %v2716, %v3103
        %v3232 = vadd.f32 %v2717, %v3104
        %v3233 = vadd.f32 %v2718, %v3105
        %v3234 = vadd.f32 %v2719, %v3106
        %v3235 = vadd.f32 %v2720, %v3107
        %v3236 = vadd.f32 %v2721, %v3108
        %v3237 = vadd.f32 %v2722, %v3109
        %v3238 = vadd.f32 %v2723, %v3110
        %v3239 = vadd.f32 %v2724, %v3111
        %v3240 = vadd.f32 %v2725, %v3112
        %v3241 = vadd.f32 %v2726, %v3113
        %v3242 = vadd.f32 %v2727, %v3114
        %v3243 = vadd.f32 %v2728, %v3115
        %v3244 = vadd.f32 %v2729, %v3116
        %v3245 = vadd.f32 %v2730, %v3117
        %v3246 = vadd.f32 %v2731, %v3118
        %v3247 = vadd.f32 %v2732, %v3119
        %v3248 = vadd.f32 %v2733, %v3120
        %v3249 = vadd.f32 %v2734, %v3121
        %v3250 = vadd.f32 %v2735, %v3122
        %v3251 = vadd.f32 %v2736, %v3123
        %v3252 = vadd.f32 %v2737, %v3124
        %v3253 = vadd.f32 %v2738, %v3125
        %v3254 = vadd.f32 %v2739, %v3126
        %v3255 = vadd.f32 %v2740, %v3127
        %v3256 = vadd.f32 %v2741, %v3128
        %v3257 = vadd.f32 %v2742, %v3129
        %v3258 = vadd.f32 %v2743, %v3130
        %v3259 = vadd.f32 %v2744, %v3131
        %v3260 = vadd.f32 %v2745, %v3132
        %v3261 = vadd.f32 %v2746, %v3133
        %v3262 = vadd.f32 %v2747, %v3134
        %v3263 = vadd.f32 %v2748, %v3135
        %v3264 = vadd.f32 %v2749, %v3136
        %v3265 = vadd.f32 %v2750, %v3137
        %v3266 = vadd.f32 %v2751, %v3138
        %v3267 = vadd.f32 %v2752, %v3139
        %v3268 = vadd.f32 %v2753, %v3140
        %v3269 = vadd.f32 %v2754, %v3141
        %v3270 = vadd.f32 %v2755, %v3142
        %v3271 = vadd.f32 %v2756, %v3143
        %v3272 = vadd.f32 %v2757, %v3144
        %v3273 = vadd.f32 %v2758, %v3145
        %v3274 = vadd.f32 %v2759, %v3146
        %v3275 = vadd.f32 %v2760, %v3147
        %v3276 = vadd.f32 %v2761, %v3148
        %v3277 = vadd.f32 %v2762, %v3149
        %v3278 = vadd.f32 %v2763, %v3150
        %v3279 = vadd.f32 %v2764, %v3151
        %v3280 = vadd.f32 %v2765, %v3152
        %v3281 = vadd.f32 %v2766, %v3153
        %v3282 = vadd.f32 %v2767, %v3154
        %v3283 = vadd.f32 %v2768, %v3155
        %v3284 = vadd.f32 %v2769, %v3156
        %v3285 = vadd.f32 %v2770, %v3157
        %v3286 = vadd.f32 %v2771, %v3158
        %v3287 = vadd.f32 %v2772, %v3159
        %v3288 = vadd.f32 %v2773, %v3160
        %v3289 = vadd.f32 %v2774, %v3161
        %v3290 = vadd.f32 %v2775, %v3162
        %v3291 = vadd.f32 %v2776, %v3163
        %v3292 = vadd.f32 %v2777, %v3164
        %v3293 = vadd.f32 %v2778, %v3165
        %v3294 = vadd.f32 %v2779, %v3166
        %v3295 = vadd.f32 %v2780, %v3167
        %v3296 = vadd.f32 %v2781, %v3168
        %v3297 = vadd.f32 %v2782, %v3169
        %v3298 = vadd.f32 %v2783, %v3170
        %s3299 = sld [smem:[#allocation6 + $0x6]]
        %s3300 = scalar_lea.vmem %s401, 3072 [#allocation11]
        %v3301 = vld [vmem:[%s3300] sm:$0xf]
        %v3302 = vld [vmem:[%s3300 + $0x4] sm:$0xf]
        %v3303 = vld [vmem:[%s3300 + $0x8] sm:$0xf]
        %v3304 = vld [vmem:[%s3300 + $0xc] sm:$0xf]
        %v3305 = vld [vmem:[%s3300 + $0x10] sm:$0xf]
        %v3306 = vld [vmem:[%s3300 + $0x14] sm:$0xf]
        %v3307 = vld [vmem:[%s3300 + $0x18] sm:$0xf]
        %v3308 = vld [vmem:[%s3300 + $0x1c] sm:$0xf]
        %v3309 = vld [vmem:[%s3300 + $0x20] sm:$0xf]
        %v3310 = vld [vmem:[%s3300 + $0x24] sm:$0xf]
        %v3311 = vld [vmem:[%s3300 + $0x28] sm:$0xf]
        %v3312 = vld [vmem:[%s3300 + $0x2c] sm:$0xf]
        %v3313 = vld [vmem:[%s3300 + $0x30] sm:$0xf]
        %v3314 = vld [vmem:[%s3300 + $0x34] sm:$0xf]
        %v3315 = vld [vmem:[%s3300 + $0x38] sm:$0xf]
        %v3316 = vld [vmem:[%s3300 + $0x3c] sm:$0xf]
        %v3317 = vld [vmem:[%s3300 + $0x40] sm:$0xf]
        %v3318 = vld [vmem:[%s3300 + $0x44] sm:$0xf]
        %v3319 = vld [vmem:[%s3300 + $0x48] sm:$0xf]
        %v3320 = vld [vmem:[%s3300 + $0x4c] sm:$0xf]
        %v3321 = vld [vmem:[%s3300 + $0x50] sm:$0xf]
        %v3322 = vld [vmem:[%s3300 + $0x54] sm:$0xf]
        %v3323 = vld [vmem:[%s3300 + $0x58] sm:$0xf]
        %v3324 = vld [vmem:[%s3300 + $0x5c] sm:$0xf]
        %v3325 = vld [vmem:[%s3300 + $0x60] sm:$0xf]
        %v3326 = vld [vmem:[%s3300 + $0x64] sm:$0xf]
        %v3327 = vld [vmem:[%s3300 + $0x68] sm:$0xf]
        %v3328 = vld [vmem:[%s3300 + $0x6c] sm:$0xf]
        %v3329 = vld [vmem:[%s3300 + $0x70] sm:$0xf]
        %v3330 = vld [vmem:[%s3300 + $0x74] sm:$0xf]
        %v3331 = vld [vmem:[%s3300 + $0x78] sm:$0xf]
        %v3332 = vld [vmem:[%s3300 + $0x7c] sm:$0xf]
        %v3333 = vld [vmem:[%s3300 + $0x80] sm:$0xf]
        %v3334 = vld [vmem:[%s3300 + $0x84] sm:$0xf]
        %v3335 = vld [vmem:[%s3300 + $0x88] sm:$0xf]
        %v3336 = vld [vmem:[%s3300 + $0x8c] sm:$0xf]
        %v3337 = vld [vmem:[%s3300 + $0x90] sm:$0xf]
        %v3338 = vld [vmem:[%s3300 + $0x94] sm:$0xf]
        %v3339 = vld [vmem:[%s3300 + $0x98] sm:$0xf]
        %v3340 = vld [vmem:[%s3300 + $0x9c] sm:$0xf]
        %v3341 = vld [vmem:[%s3300 + $0xa0] sm:$0xf]
        %v3342 = vld [vmem:[%s3300 + $0xa4] sm:$0xf]
        %v3343 = vld [vmem:[%s3300 + $0xa8] sm:$0xf]
        %v3344 = vld [vmem:[%s3300 + $0xac] sm:$0xf]
        %v3345 = vld [vmem:[%s3300 + $0xb0] sm:$0xf]
        %v3346 = vld [vmem:[%s3300 + $0xb4] sm:$0xf]
        %v3347 = vld [vmem:[%s3300 + $0xb8] sm:$0xf]
        %v3348 = vld [vmem:[%s3300 + $0xbc] sm:$0xf]
        %v3349 = vld [vmem:[%s3300 + $0xc0] sm:$0xf]
        %v3350 = vld [vmem:[%s3300 + $0xc4] sm:$0xf]
        %v3351 = vld [vmem:[%s3300 + $0xc8] sm:$0xf]
        %v3352 = vld [vmem:[%s3300 + $0xcc] sm:$0xf]
        %v3353 = vld [vmem:[%s3300 + $0xd0] sm:$0xf]
        %v3354 = vld [vmem:[%s3300 + $0xd4] sm:$0xf]
        %v3355 = vld [vmem:[%s3300 + $0xd8] sm:$0xf]
        %v3356 = vld [vmem:[%s3300 + $0xdc] sm:$0xf]
        %v3357 = vld [vmem:[%s3300 + $0xe0] sm:$0xf]
        %v3358 = vld [vmem:[%s3300 + $0xe4] sm:$0xf]
        %v3359 = vld [vmem:[%s3300 + $0xe8] sm:$0xf]
        %v3360 = vld [vmem:[%s3300 + $0xec] sm:$0xf]
        %v3361 = vld [vmem:[%s3300 + $0xf0] sm:$0xf]
        %v3362 = vld [vmem:[%s3300 + $0xf4] sm:$0xf]
        %v3363 = vld [vmem:[%s3300 + $0xf8] sm:$0xf]
        %v3364 = vld [vmem:[%s3300 + $0xfc] sm:$0xf]
        %v3365 = vld [vmem:[%s3300 + $0x100] sm:$0xf]
        %v3366 = vld [vmem:[%s3300 + $0x104] sm:$0xf]
        %v3367 = vld [vmem:[%s3300 + $0x108] sm:$0xf]
        %v3368 = vld [vmem:[%s3300 + $0x10c] sm:$0xf]
        %v3369 = vld [vmem:[%s3300 + $0x110] sm:$0xf]
        %v3370 = vld [vmem:[%s3300 + $0x114] sm:$0xf]
        %v3371 = vld [vmem:[%s3300 + $0x118] sm:$0xf]
        %v3372 = vld [vmem:[%s3300 + $0x11c] sm:$0xf]
        %v3373 = vld [vmem:[%s3300 + $0x120] sm:$0xf]
        %v3374 = vld [vmem:[%s3300 + $0x124] sm:$0xf]
        %v3375 = vld [vmem:[%s3300 + $0x128] sm:$0xf]
        %v3376 = vld [vmem:[%s3300 + $0x12c] sm:$0xf]
        %v3377 = vld [vmem:[%s3300 + $0x130] sm:$0xf]
        %v3378 = vld [vmem:[%s3300 + $0x134] sm:$0xf]
        %v3379 = vld [vmem:[%s3300 + $0x138] sm:$0xf]
        %v3380 = vld [vmem:[%s3300 + $0x13c] sm:$0xf]
        %v3381 = vld [vmem:[%s3300 + $0x140] sm:$0xf]
        %v3382 = vld [vmem:[%s3300 + $0x144] sm:$0xf]
        %v3383 = vld [vmem:[%s3300 + $0x148] sm:$0xf]
        %v3384 = vld [vmem:[%s3300 + $0x14c] sm:$0xf]
        %v3385 = vld [vmem:[%s3300 + $0x150] sm:$0xf]
        %v3386 = vld [vmem:[%s3300 + $0x154] sm:$0xf]
        %v3387 = vld [vmem:[%s3300 + $0x158] sm:$0xf]
        %v3388 = vld [vmem:[%s3300 + $0x15c] sm:$0xf]
        %v3389 = vld [vmem:[%s3300 + $0x160] sm:$0xf]
        %v3390 = vld [vmem:[%s3300 + $0x164] sm:$0xf]
        %v3391 = vld [vmem:[%s3300 + $0x168] sm:$0xf]
        %v3392 = vld [vmem:[%s3300 + $0x16c] sm:$0xf]
        %v3393 = vld [vmem:[%s3300 + $0x170] sm:$0xf]
        %v3394 = vld [vmem:[%s3300 + $0x174] sm:$0xf]
        %v3395 = vld [vmem:[%s3300 + $0x178] sm:$0xf]
        %v3396 = vld [vmem:[%s3300 + $0x17c] sm:$0xf]
        %v3397 = vld [vmem:[%s3300 + $0x180] sm:$0xf]
        %v3398 = vld [vmem:[%s3300 + $0x184] sm:$0xf]
        %v3399 = vld [vmem:[%s3300 + $0x188] sm:$0xf]
        %v3400 = vld [vmem:[%s3300 + $0x18c] sm:$0xf]
        %v3401 = vld [vmem:[%s3300 + $0x190] sm:$0xf]
        %v3402 = vld [vmem:[%s3300 + $0x194] sm:$0xf]
        %v3403 = vld [vmem:[%s3300 + $0x198] sm:$0xf]
        %v3404 = vld [vmem:[%s3300 + $0x19c] sm:$0xf]
        %v3405 = vld [vmem:[%s3300 + $0x1a0] sm:$0xf]
        %v3406 = vld [vmem:[%s3300 + $0x1a4] sm:$0xf]
        %v3407 = vld [vmem:[%s3300 + $0x1a8] sm:$0xf]
        %v3408 = vld [vmem:[%s3300 + $0x1ac] sm:$0xf]
        %v3409 = vld [vmem:[%s3300 + $0x1b0] sm:$0xf]
        %v3410 = vld [vmem:[%s3300 + $0x1b4] sm:$0xf]
        %v3411 = vld [vmem:[%s3300 + $0x1b8] sm:$0xf]
        %v3412 = vld [vmem:[%s3300 + $0x1bc] sm:$0xf]
        %v3413 = vld [vmem:[%s3300 + $0x1c0] sm:$0xf]
        %v3414 = vld [vmem:[%s3300 + $0x1c4] sm:$0xf]
        %v3415 = vld [vmem:[%s3300 + $0x1c8] sm:$0xf]
        %v3416 = vld [vmem:[%s3300 + $0x1cc] sm:$0xf]
        %v3417 = vld [vmem:[%s3300 + $0x1d0] sm:$0xf]
        %v3418 = vld [vmem:[%s3300 + $0x1d4] sm:$0xf]
        %v3419 = vld [vmem:[%s3300 + $0x1d8] sm:$0xf]
        %v3420 = vld [vmem:[%s3300 + $0x1dc] sm:$0xf]
        %v3421 = vld [vmem:[%s3300 + $0x1e0] sm:$0xf]
        %v3422 = vld [vmem:[%s3300 + $0x1e4] sm:$0xf]
        %v3423 = vld [vmem:[%s3300 + $0x1e8] sm:$0xf]
        %v3424 = vld [vmem:[%s3300 + $0x1ec] sm:$0xf]
        %v3425 = vld [vmem:[%s3300 + $0x1f0] sm:$0xf]
        %v3426 = vld [vmem:[%s3300 + $0x1f4] sm:$0xf]
        %v3427 = vld [vmem:[%s3300 + $0x1f8] sm:$0xf]
        %v3428 = vld [vmem:[%s3300 + $0x1fc] sm:$0xf]
        %v3429 = vunpack.c.l.bf16 %v3301
        %v3430 = vunpack.c.l.bf16 %v3302
        %v3431 = vunpack.c.l.bf16 %v3303
        %v3432 = vunpack.c.l.bf16 %v3304
        %v3433 = vunpack.c.l.bf16 %v3305
        %v3434 = vunpack.c.l.bf16 %v3306
        %v3435 = vunpack.c.l.bf16 %v3307
        %v3436 = vunpack.c.l.bf16 %v3308
        %v3437 = vunpack.c.l.bf16 %v3309
        %v3438 = vunpack.c.l.bf16 %v3310
        %v3439 = vunpack.c.l.bf16 %v3311
        %v3440 = vunpack.c.l.bf16 %v3312
        %v3441 = vunpack.c.l.bf16 %v3313
        %v3442 = vunpack.c.l.bf16 %v3314
        %v3443 = vunpack.c.l.bf16 %v3315
        %v3444 = vunpack.c.l.bf16 %v3316
        %v3445 = vunpack.c.l.bf16 %v3317
        %v3446 = vunpack.c.l.bf16 %v3318
        %v3447 = vunpack.c.l.bf16 %v3319
        %v3448 = vunpack.c.l.bf16 %v3320
        %v3449 = vunpack.c.l.bf16 %v3321
        %v3450 = vunpack.c.l.bf16 %v3322
        %v3451 = vunpack.c.l.bf16 %v3323
        %v3452 = vunpack.c.l.bf16 %v3324
        %v3453 = vunpack.c.l.bf16 %v3325
        %v3454 = vunpack.c.l.bf16 %v3326
        %v3455 = vunpack.c.l.bf16 %v3327
        %v3456 = vunpack.c.l.bf16 %v3328
        %v3457 = vunpack.c.l.bf16 %v3329
        %v3458 = vunpack.c.l.bf16 %v3330
        %v3459 = vunpack.c.l.bf16 %v3331
        %v3460 = vunpack.c.l.bf16 %v3332
        %v3461 = vunpack.c.l.bf16 %v3333
        %v3462 = vunpack.c.l.bf16 %v3334
        %v3463 = vunpack.c.l.bf16 %v3335
        %v3464 = vunpack.c.l.bf16 %v3336
        %v3465 = vunpack.c.l.bf16 %v3337
        %v3466 = vunpack.c.l.bf16 %v3338
        %v3467 = vunpack.c.l.bf16 %v3339
        %v3468 = vunpack.c.l.bf16 %v3340
        %v3469 = vunpack.c.l.bf16 %v3341
        %v3470 = vunpack.c.l.bf16 %v3342
        %v3471 = vunpack.c.l.bf16 %v3343
        %v3472 = vunpack.c.l.bf16 %v3344
        %v3473 = vunpack.c.l.bf16 %v3345
        %v3474 = vunpack.c.l.bf16 %v3346
        %v3475 = vunpack.c.l.bf16 %v3347
        %v3476 = vunpack.c.l.bf16 %v3348
        %v3477 = vunpack.c.l.bf16 %v3349
        %v3478 = vunpack.c.l.bf16 %v3350
        %v3479 = vunpack.c.l.bf16 %v3351
        %v3480 = vunpack.c.l.bf16 %v3352
        %v3481 = vunpack.c.l.bf16 %v3353
        %v3482 = vunpack.c.l.bf16 %v3354
        %v3483 = vunpack.c.l.bf16 %v3355
        %v3484 = vunpack.c.l.bf16 %v3356
        %v3485 = vunpack.c.l.bf16 %v3357
        %v3486 = vunpack.c.l.bf16 %v3358
        %v3487 = vunpack.c.l.bf16 %v3359
        %v3488 = vunpack.c.l.bf16 %v3360
        %v3489 = vunpack.c.l.bf16 %v3361
        %v3490 = vunpack.c.l.bf16 %v3362
        %v3491 = vunpack.c.l.bf16 %v3363
        %v3492 = vunpack.c.l.bf16 %v3364
        %v3493 = vunpack.c.l.bf16 %v3365
        %v3494 = vunpack.c.l.bf16 %v3366
        %v3495 = vunpack.c.l.bf16 %v3367
        %v3496 = vunpack.c.l.bf16 %v3368
        %v3497 = vunpack.c.l.bf16 %v3369
        %v3498 = vunpack.c.l.bf16 %v3370
        %v3499 = vunpack.c.l.bf16 %v3371
        %v3500 = vunpack.c.l.bf16 %v3372
        %v3501 = vunpack.c.l.bf16 %v3373
        %v3502 = vunpack.c.l.bf16 %v3374
        %v3503 = vunpack.c.l.bf16 %v3375
        %v3504 = vunpack.c.l.bf16 %v3376
        %v3505 = vunpack.c.l.bf16 %v3377
        %v3506 = vunpack.c.l.bf16 %v3378
        %v3507 = vunpack.c.l.bf16 %v3379
        %v3508 = vunpack.c.l.bf16 %v3380
        %v3509 = vunpack.c.l.bf16 %v3381
        %v3510 = vunpack.c.l.bf16 %v3382
        %v3511 = vunpack.c.l.bf16 %v3383
        %v3512 = vunpack.c.l.bf16 %v3384
        %v3513 = vunpack.c.l.bf16 %v3385
        %v3514 = vunpack.c.l.bf16 %v3386
        %v3515 = vunpack.c.l.bf16 %v3387
        %v3516 = vunpack.c.l.bf16 %v3388
        %v3517 = vunpack.c.l.bf16 %v3389
        %v3518 = vunpack.c.l.bf16 %v3390
        %v3519 = vunpack.c.l.bf16 %v3391
        %v3520 = vunpack.c.l.bf16 %v3392
        %v3521 = vunpack.c.l.bf16 %v3393
        %v3522 = vunpack.c.l.bf16 %v3394
        %v3523 = vunpack.c.l.bf16 %v3395
        %v3524 = vunpack.c.l.bf16 %v3396
        %v3525 = vunpack.c.l.bf16 %v3397
        %v3526 = vunpack.c.l.bf16 %v3398
        %v3527 = vunpack.c.l.bf16 %v3399
        %v3528 = vunpack.c.l.bf16 %v3400
        %v3529 = vunpack.c.l.bf16 %v3401
        %v3530 = vunpack.c.l.bf16 %v3402
        %v3531 = vunpack.c.l.bf16 %v3403
        %v3532 = vunpack.c.l.bf16 %v3404
        %v3533 = vunpack.c.l.bf16 %v3405
        %v3534 = vunpack.c.l.bf16 %v3406
        %v3535 = vunpack.c.l.bf16 %v3407
        %v3536 = vunpack.c.l.bf16 %v3408
        %v3537 = vunpack.c.l.bf16 %v3409
        %v3538 = vunpack.c.l.bf16 %v3410
        %v3539 = vunpack.c.l.bf16 %v3411
        %v3540 = vunpack.c.l.bf16 %v3412
        %v3541 = vunpack.c.l.bf16 %v3413
        %v3542 = vunpack.c.l.bf16 %v3414
        %v3543 = vunpack.c.l.bf16 %v3415
        %v3544 = vunpack.c.l.bf16 %v3416
        %v3545 = vunpack.c.l.bf16 %v3417
        %v3546 = vunpack.c.l.bf16 %v3418
        %v3547 = vunpack.c.l.bf16 %v3419
        %v3548 = vunpack.c.l.bf16 %v3420
        %v3549 = vunpack.c.l.bf16 %v3421
        %v3550 = vunpack.c.l.bf16 %v3422
        %v3551 = vunpack.c.l.bf16 %v3423
        %v3552 = vunpack.c.l.bf16 %v3424
        %v3553 = vunpack.c.l.bf16 %v3425
        %v3554 = vunpack.c.l.bf16 %v3426
        %v3555 = vunpack.c.l.bf16 %v3427
        %v3556 = vunpack.c.l.bf16 %v3428
        %v3557 = vstv %s3299
        %v3558 = vmul.f32 %v3557, %v3429
        %v3559 = vmul.f32 %v3557, %v3430
        %v3560 = vmul.f32 %v3557, %v3431
        %v3561 = vmul.f32 %v3557, %v3432
        %v3562 = vmul.f32 %v3557, %v3433
        %v3563 = vmul.f32 %v3557, %v3434
        %v3564 = vmul.f32 %v3557, %v3435
        %v3565 = vmul.f32 %v3557, %v3436
        %v3566 = vmul.f32 %v3557, %v3437
        %v3567 = vmul.f32 %v3557, %v3438
        %v3568 = vmul.f32 %v3557, %v3439
        %v3569 = vmul.f32 %v3557, %v3440
        %v3570 = vmul.f32 %v3557, %v3441
        %v3571 = vmul.f32 %v3557, %v3442
        %v3572 = vmul.f32 %v3557, %v3443
        %v3573 = vmul.f32 %v3557, %v3444
        %v3574 = vmul.f32 %v3557, %v3445
        %v3575 = vmul.f32 %v3557, %v3446
        %v3576 = vmul.f32 %v3557, %v3447
        %v3577 = vmul.f32 %v3557, %v3448
        %v3578 = vmul.f32 %v3557, %v3449
        %v3579 = vmul.f32 %v3557, %v3450
        %v3580 = vmul.f32 %v3557, %v3451
        %v3581 = vmul.f32 %v3557, %v3452
        %v3582 = vmul.f32 %v3557, %v3453
        %v3583 = vmul.f32 %v3557, %v3454
        %v3584 = vmul.f32 %v3557, %v3455
        %v3585 = vmul.f32 %v3557, %v3456
        %v3586 = vmul.f32 %v3557, %v3457
        %v3587 = vmul.f32 %v3557, %v3458
        %v3588 = vmul.f32 %v3557, %v3459
        %v3589 = vmul.f32 %v3557, %v3460
        %v3590 = vmul.f32 %v3557, %v3461
        %v3591 = vmul.f32 %v3557, %v3462
        %v3592 = vmul.f32 %v3557, %v3463
        %v3593 = vmul.f32 %v3557, %v3464
        %v3594 = vmul.f32 %v3557, %v3465
        %v3595 = vmul.f32 %v3557, %v3466
        %v3596 = vmul.f32 %v3557, %v3467
        %v3597 = vmul.f32 %v3557, %v3468
        %v3598 = vmul.f32 %v3557, %v3469
        %v3599 = vmul.f32 %v3557, %v3470
        %v3600 = vmul.f32 %v3557, %v3471
        %v3601 = vmul.f32 %v3557, %v3472
        %v3602 = vmul.f32 %v3557, %v3473
        %v3603 = vmul.f32 %v3557, %v3474
        %v3604 = vmul.f32 %v3557, %v3475
        %v3605 = vmul.f32 %v3557, %v3476
        %v3606 = vmul.f32 %v3557, %v3477
        %v3607 = vmul.f32 %v3557, %v3478
        %v3608 = vmul.f32 %v3557, %v3479
        %v3609 = vmul.f32 %v3557, %v3480
        %v3610 = vmul.f32 %v3557, %v3481
        %v3611 = vmul.f32 %v3557, %v3482
        %v3612 = vmul.f32 %v3557, %v3483
        %v3613 = vmul.f32 %v3557, %v3484
        %v3614 = vmul.f32 %v3557, %v3485
        %v3615 = vmul.f32 %v3557, %v3486
        %v3616 = vmul.f32 %v3557, %v3487
        %v3617 = vmul.f32 %v3557, %v3488
        %v3618 = vmul.f32 %v3557, %v3489
        %v3619 = vmul.f32 %v3557, %v3490
        %v3620 = vmul.f32 %v3557, %v3491
        %v3621 = vmul.f32 %v3557, %v3492
        %v3622 = vmul.f32 %v3557, %v3493
        %v3623 = vmul.f32 %v3557, %v3494
        %v3624 = vmul.f32 %v3557, %v3495
        %v3625 = vmul.f32 %v3557, %v3496
        %v3626 = vmul.f32 %v3557, %v3497
        %v3627 = vmul.f32 %v3557, %v3498
        %v3628 = vmul.f32 %v3557, %v3499
        %v3629 = vmul.f32 %v3557, %v3500
        %v3630 = vmul.f32 %v3557, %v3501
        %v3631 = vmul.f32 %v3557, %v3502
        %v3632 = vmul.f32 %v3557, %v3503
        %v3633 = vmul.f32 %v3557, %v3504
        %v3634 = vmul.f32 %v3557, %v3505
        %v3635 = vmul.f32 %v3557, %v3506
        %v3636 = vmul.f32 %v3557, %v3507
        %v3637 = vmul.f32 %v3557, %v3508
        %v3638 = vmul.f32 %v3557, %v3509
        %v3639 = vmul.f32 %v3557, %v3510
        %v3640 = vmul.f32 %v3557, %v3511
        %v3641 = vmul.f32 %v3557, %v3512
        %v3642 = vmul.f32 %v3557, %v3513
        %v3643 = vmul.f32 %v3557, %v3514
        %v3644 = vmul.f32 %v3557, %v3515
        %v3645 = vmul.f32 %v3557, %v3516
        %v3646 = vmul.f32 %v3557, %v3517
        %v3647 = vmul.f32 %v3557, %v3518
        %v3648 = vmul.f32 %v3557, %v3519
        %v3649 = vmul.f32 %v3557, %v3520
        %v3650 = vmul.f32 %v3557, %v3521
        %v3651 = vmul.f32 %v3557, %v3522
        %v3652 = vmul.f32 %v3557, %v3523
        %v3653 = vmul.f32 %v3557, %v3524
        %v3654 = vmul.f32 %v3557, %v3525
        %v3655 = vmul.f32 %v3557, %v3526
        %v3656 = vmul.f32 %v3557, %v3527
        %v3657 = vmul.f32 %v3557, %v3528
        %v3658 = vmul.f32 %v3557, %v3529
        %v3659 = vmul.f32 %v3557, %v3530
        %v3660 = vmul.f32 %v3557, %v3531
        %v3661 = vmul.f32 %v3557, %v3532
        %v3662 = vmul.f32 %v3557, %v3533
        %v3663 = vmul.f32 %v3557, %v3534
        %v3664 = vmul.f32 %v3557, %v3535
        %v3665 = vmul.f32 %v3557, %v3536
        %v3666 = vmul.f32 %v3557, %v3537
        %v3667 = vmul.f32 %v3557, %v3538
        %v3668 = vmul.f32 %v3557, %v3539
        %v3669 = vmul.f32 %v3557, %v3540
        %v3670 = vmul.f32 %v3557, %v3541
        %v3671 = vmul.f32 %v3557, %v3542
        %v3672 = vmul.f32 %v3557, %v3543
        %v3673 = vmul.f32 %v3557, %v3544
        %v3674 = vmul.f32 %v3557, %v3545
        %v3675 = vmul.f32 %v3557, %v3546
        %v3676 = vmul.f32 %v3557, %v3547
        %v3677 = vmul.f32 %v3557, %v3548
        %v3678 = vmul.f32 %v3557, %v3549
        %v3679 = vmul.f32 %v3557, %v3550
        %v3680 = vmul.f32 %v3557, %v3551
        %v3681 = vmul.f32 %v3557, %v3552
        %v3682 = vmul.f32 %v3557, %v3553
        %v3683 = vmul.f32 %v3557, %v3554
        %v3684 = vmul.f32 %v3557, %v3555
        %v3685 = vmul.f32 %v3557, %v3556
        %s3686 = sld [smem:[#allocation6 + $0x7]]
        %s3687 = scalar_lea.vmem %s401, 3584 [#allocation11]
        %v3688 = vld [vmem:[%s3687] sm:$0xf]
        %v3689 = vld [vmem:[%s3687 + $0x4] sm:$0xf]
        %v3690 = vld [vmem:[%s3687 + $0x8] sm:$0xf]
        %v3691 = vld [vmem:[%s3687 + $0xc] sm:$0xf]
        %v3692 = vld [vmem:[%s3687 + $0x10] sm:$0xf]
        %v3693 = vld [vmem:[%s3687 + $0x14] sm:$0xf]
        %v3694 = vld [vmem:[%s3687 + $0x18] sm:$0xf]
        %v3695 = vld [vmem:[%s3687 + $0x1c] sm:$0xf]
        %v3696 = vld [vmem:[%s3687 + $0x20] sm:$0xf]
        %v3697 = vld [vmem:[%s3687 + $0x24] sm:$0xf]
        %v3698 = vld [vmem:[%s3687 + $0x28] sm:$0xf]
        %v3699 = vld [vmem:[%s3687 + $0x2c] sm:$0xf]
        %v3700 = vld [vmem:[%s3687 + $0x30] sm:$0xf]
        %v3701 = vld [vmem:[%s3687 + $0x34] sm:$0xf]
        %v3702 = vld [vmem:[%s3687 + $0x38] sm:$0xf]
        %v3703 = vld [vmem:[%s3687 + $0x3c] sm:$0xf]
        %v3704 = vld [vmem:[%s3687 + $0x40] sm:$0xf]
        %v3705 = vld [vmem:[%s3687 + $0x44] sm:$0xf]
        %v3706 = vld [vmem:[%s3687 + $0x48] sm:$0xf]
        %v3707 = vld [vmem:[%s3687 + $0x4c] sm:$0xf]
        %v3708 = vld [vmem:[%s3687 + $0x50] sm:$0xf]
        %v3709 = vld [vmem:[%s3687 + $0x54] sm:$0xf]
        %v3710 = vld [vmem:[%s3687 + $0x58] sm:$0xf]
        %v3711 = vld [vmem:[%s3687 + $0x5c] sm:$0xf]
        %v3712 = vld [vmem:[%s3687 + $0x60] sm:$0xf]
        %v3713 = vld [vmem:[%s3687 + $0x64] sm:$0xf]
        %v3714 = vld [vmem:[%s3687 + $0x68] sm:$0xf]
        %v3715 = vld [vmem:[%s3687 + $0x6c] sm:$0xf]
        %v3716 = vld [vmem:[%s3687 + $0x70] sm:$0xf]
        %v3717 = vld [vmem:[%s3687 + $0x74] sm:$0xf]
        %v3718 = vld [vmem:[%s3687 + $0x78] sm:$0xf]
        %v3719 = vld [vmem:[%s3687 + $0x7c] sm:$0xf]
        %v3720 = vld [vmem:[%s3687 + $0x80] sm:$0xf]
        %v3721 = vld [vmem:[%s3687 + $0x84] sm:$0xf]
        %v3722 = vld [vmem:[%s3687 + $0x88] sm:$0xf]
        %v3723 = vld [vmem:[%s3687 + $0x8c] sm:$0xf]
        %v3724 = vld [vmem:[%s3687 + $0x90] sm:$0xf]
        %v3725 = vld [vmem:[%s3687 + $0x94] sm:$0xf]
        %v3726 = vld [vmem:[%s3687 + $0x98] sm:$0xf]
        %v3727 = vld [vmem:[%s3687 + $0x9c] sm:$0xf]
        %v3728 = vld [vmem:[%s3687 + $0xa0] sm:$0xf]
        %v3729 = vld [vmem:[%s3687 + $0xa4] sm:$0xf]
        %v3730 = vld [vmem:[%s3687 + $0xa8] sm:$0xf]
        %v3731 = vld [vmem:[%s3687 + $0xac] sm:$0xf]
        %v3732 = vld [vmem:[%s3687 + $0xb0] sm:$0xf]
        %v3733 = vld [vmem:[%s3687 + $0xb4] sm:$0xf]
        %v3734 = vld [vmem:[%s3687 + $0xb8] sm:$0xf]
        %v3735 = vld [vmem:[%s3687 + $0xbc] sm:$0xf]
        %v3736 = vld [vmem:[%s3687 + $0xc0] sm:$0xf]
        %v3737 = vld [vmem:[%s3687 + $0xc4] sm:$0xf]
        %v3738 = vld [vmem:[%s3687 + $0xc8] sm:$0xf]
        %v3739 = vld [vmem:[%s3687 + $0xcc] sm:$0xf]
        %v3740 = vld [vmem:[%s3687 + $0xd0] sm:$0xf]
        %v3741 = vld [vmem:[%s3687 + $0xd4] sm:$0xf]
        %v3742 = vld [vmem:[%s3687 + $0xd8] sm:$0xf]
        %v3743 = vld [vmem:[%s3687 + $0xdc] sm:$0xf]
        %v3744 = vld [vmem:[%s3687 + $0xe0] sm:$0xf]
        %v3745 = vld [vmem:[%s3687 + $0xe4] sm:$0xf]
        %v3746 = vld [vmem:[%s3687 + $0xe8] sm:$0xf]
        %v3747 = vld [vmem:[%s3687 + $0xec] sm:$0xf]
        %v3748 = vld [vmem:[%s3687 + $0xf0] sm:$0xf]
        %v3749 = vld [vmem:[%s3687 + $0xf4] sm:$0xf]
        %v3750 = vld [vmem:[%s3687 + $0xf8] sm:$0xf]
        %v3751 = vld [vmem:[%s3687 + $0xfc] sm:$0xf]
        %v3752 = vld [vmem:[%s3687 + $0x100] sm:$0xf]
        %v3753 = vld [vmem:[%s3687 + $0x104] sm:$0xf]
        %v3754 = vld [vmem:[%s3687 + $0x108] sm:$0xf]
        %v3755 = vld [vmem:[%s3687 + $0x10c] sm:$0xf]
        %v3756 = vld [vmem:[%s3687 + $0x110] sm:$0xf]
        %v3757 = vld [vmem:[%s3687 + $0x114] sm:$0xf]
        %v3758 = vld [vmem:[%s3687 + $0x118] sm:$0xf]
        %v3759 = vld [vmem:[%s3687 + $0x11c] sm:$0xf]
        %v3760 = vld [vmem:[%s3687 + $0x120] sm:$0xf]
        %v3761 = vld [vmem:[%s3687 + $0x124] sm:$0xf]
        %v3762 = vld [vmem:[%s3687 + $0x128] sm:$0xf]
        %v3763 = vld [vmem:[%s3687 + $0x12c] sm:$0xf]
        %v3764 = vld [vmem:[%s3687 + $0x130] sm:$0xf]
        %v3765 = vld [vmem:[%s3687 + $0x134] sm:$0xf]
        %v3766 = vld [vmem:[%s3687 + $0x138] sm:$0xf]
        %v3767 = vld [vmem:[%s3687 + $0x13c] sm:$0xf]
        %v3768 = vld [vmem:[%s3687 + $0x140] sm:$0xf]
        %v3769 = vld [vmem:[%s3687 + $0x144] sm:$0xf]
        %v3770 = vld [vmem:[%s3687 + $0x148] sm:$0xf]
        %v3771 = vld [vmem:[%s3687 + $0x14c] sm:$0xf]
        %v3772 = vld [vmem:[%s3687 + $0x150] sm:$0xf]
        %v3773 = vld [vmem:[%s3687 + $0x154] sm:$0xf]
        %v3774 = vld [vmem:[%s3687 + $0x158] sm:$0xf]
        %v3775 = vld [vmem:[%s3687 + $0x15c] sm:$0xf]
        %v3776 = vld [vmem:[%s3687 + $0x160] sm:$0xf]
        %v3777 = vld [vmem:[%s3687 + $0x164] sm:$0xf]
        %v3778 = vld [vmem:[%s3687 + $0x168] sm:$0xf]
        %v3779 = vld [vmem:[%s3687 + $0x16c] sm:$0xf]
        %v3780 = vld [vmem:[%s3687 + $0x170] sm:$0xf]
        %v3781 = vld [vmem:[%s3687 + $0x174] sm:$0xf]
        %v3782 = vld [vmem:[%s3687 + $0x178] sm:$0xf]
        %v3783 = vld [vmem:[%s3687 + $0x17c] sm:$0xf]
        %v3784 = vld [vmem:[%s3687 + $0x180] sm:$0xf]
        %v3785 = vld [vmem:[%s3687 + $0x184] sm:$0xf]
        %v3786 = vld [vmem:[%s3687 + $0x188] sm:$0xf]
        %v3787 = vld [vmem:[%s3687 + $0x18c] sm:$0xf]
        %v3788 = vld [vmem:[%s3687 + $0x190] sm:$0xf]
        %v3789 = vld [vmem:[%s3687 + $0x194] sm:$0xf]
        %v3790 = vld [vmem:[%s3687 + $0x198] sm:$0xf]
        %v3791 = vld [vmem:[%s3687 + $0x19c] sm:$0xf]
        %v3792 = vld [vmem:[%s3687 + $0x1a0] sm:$0xf]
        %v3793 = vld [vmem:[%s3687 + $0x1a4] sm:$0xf]
        %v3794 = vld [vmem:[%s3687 + $0x1a8] sm:$0xf]
        %v3795 = vld [vmem:[%s3687 + $0x1ac] sm:$0xf]
        %v3796 = vld [vmem:[%s3687 + $0x1b0] sm:$0xf]
        %v3797 = vld [vmem:[%s3687 + $0x1b4] sm:$0xf]
        %v3798 = vld [vmem:[%s3687 + $0x1b8] sm:$0xf]
        %v3799 = vld [vmem:[%s3687 + $0x1bc] sm:$0xf]
        %v3800 = vld [vmem:[%s3687 + $0x1c0] sm:$0xf]
        %v3801 = vld [vmem:[%s3687 + $0x1c4] sm:$0xf]
        %v3802 = vld [vmem:[%s3687 + $0x1c8] sm:$0xf]
        %v3803 = vld [vmem:[%s3687 + $0x1cc] sm:$0xf]
        %v3804 = vld [vmem:[%s3687 + $0x1d0] sm:$0xf]
        %v3805 = vld [vmem:[%s3687 + $0x1d4] sm:$0xf]
        %v3806 = vld [vmem:[%s3687 + $0x1d8] sm:$0xf]
        %v3807 = vld [vmem:[%s3687 + $0x1dc] sm:$0xf]
        %v3808 = vld [vmem:[%s3687 + $0x1e0] sm:$0xf]
        %v3809 = vld [vmem:[%s3687 + $0x1e4] sm:$0xf]
        %v3810 = vld [vmem:[%s3687 + $0x1e8] sm:$0xf]
        %v3811 = vld [vmem:[%s3687 + $0x1ec] sm:$0xf]
        %v3812 = vld [vmem:[%s3687 + $0x1f0] sm:$0xf]
        %v3813 = vld [vmem:[%s3687 + $0x1f4] sm:$0xf]
        %v3814 = vld [vmem:[%s3687 + $0x1f8] sm:$0xf]
        %v3815 = vld [vmem:[%s3687 + $0x1fc] sm:$0xf]
        %v3816 = vunpack.c.l.bf16 %v3688
        %v3817 = vunpack.c.l.bf16 %v3689
        %v3818 = vunpack.c.l.bf16 %v3690
        %v3819 = vunpack.c.l.bf16 %v3691
        %v3820 = vunpack.c.l.bf16 %v3692
        %v3821 = vunpack.c.l.bf16 %v3693
        %v3822 = vunpack.c.l.bf16 %v3694
        %v3823 = vunpack.c.l.bf16 %v3695
        %v3824 = vunpack.c.l.bf16 %v3696
        %v3825 = vunpack.c.l.bf16 %v3697
        %v3826 = vunpack.c.l.bf16 %v3698
        %v3827 = vunpack.c.l.bf16 %v3699
        %v3828 = vunpack.c.l.bf16 %v3700
        %v3829 = vunpack.c.l.bf16 %v3701
        %v3830 = vunpack.c.l.bf16 %v3702
        %v3831 = vunpack.c.l.bf16 %v3703
        %v3832 = vunpack.c.l.bf16 %v3704
        %v3833 = vunpack.c.l.bf16 %v3705
        %v3834 = vunpack.c.l.bf16 %v3706
        %v3835 = vunpack.c.l.bf16 %v3707
        %v3836 = vunpack.c.l.bf16 %v3708
        %v3837 = vunpack.c.l.bf16 %v3709
        %v3838 = vunpack.c.l.bf16 %v3710
        %v3839 = vunpack.c.l.bf16 %v3711
        %v3840 = vunpack.c.l.bf16 %v3712
        %v3841 = vunpack.c.l.bf16 %v3713
        %v3842 = vunpack.c.l.bf16 %v3714
        %v3843 = vunpack.c.l.bf16 %v3715
        %v3844 = vunpack.c.l.bf16 %v3716
        %v3845 = vunpack.c.l.bf16 %v3717
        %v3846 = vunpack.c.l.bf16 %v3718
        %v3847 = vunpack.c.l.bf16 %v3719
        %v3848 = vunpack.c.l.bf16 %v3720
        %v3849 = vunpack.c.l.bf16 %v3721
        %v3850 = vunpack.c.l.bf16 %v3722
        %v3851 = vunpack.c.l.bf16 %v3723
        %v3852 = vunpack.c.l.bf16 %v3724
        %v3853 = vunpack.c.l.bf16 %v3725
        %v3854 = vunpack.c.l.bf16 %v3726
        %v3855 = vunpack.c.l.bf16 %v3727
        %v3856 = vunpack.c.l.bf16 %v3728
        %v3857 = vunpack.c.l.bf16 %v3729
        %v3858 = vunpack.c.l.bf16 %v3730
        %v3859 = vunpack.c.l.bf16 %v3731
        %v3860 = vunpack.c.l.bf16 %v3732
        %v3861 = vunpack.c.l.bf16 %v3733
        %v3862 = vunpack.c.l.bf16 %v3734
        %v3863 = vunpack.c.l.bf16 %v3735
        %v3864 = vunpack.c.l.bf16 %v3736
        %v3865 = vunpack.c.l.bf16 %v3737
        %v3866 = vunpack.c.l.bf16 %v3738
        %v3867 = vunpack.c.l.bf16 %v3739
        %v3868 = vunpack.c.l.bf16 %v3740
        %v3869 = vunpack.c.l.bf16 %v3741
        %v3870 = vunpack.c.l.bf16 %v3742
        %v3871 = vunpack.c.l.bf16 %v3743
        %v3872 = vunpack.c.l.bf16 %v3744
        %v3873 = vunpack.c.l.bf16 %v3745
        %v3874 = vunpack.c.l.bf16 %v3746
        %v3875 = vunpack.c.l.bf16 %v3747
        %v3876 = vunpack.c.l.bf16 %v3748
        %v3877 = vunpack.c.l.bf16 %v3749
        %v3878 = vunpack.c.l.bf16 %v3750
        %v3879 = vunpack.c.l.bf16 %v3751
        %v3880 = vunpack.c.l.bf16 %v3752
        %v3881 = vunpack.c.l.bf16 %v3753
        %v3882 = vunpack.c.l.bf16 %v3754
        %v3883 = vunpack.c.l.bf16 %v3755
        %v3884 = vunpack.c.l.bf16 %v3756
        %v3885 = vunpack.c.l.bf16 %v3757
        %v3886 = vunpack.c.l.bf16 %v3758
        %v3887 = vunpack.c.l.bf16 %v3759
        %v3888 = vunpack.c.l.bf16 %v3760
        %v3889 = vunpack.c.l.bf16 %v3761
        %v3890 = vunpack.c.l.bf16 %v3762
        %v3891 = vunpack.c.l.bf16 %v3763
        %v3892 = vunpack.c.l.bf16 %v3764
        %v3893 = vunpack.c.l.bf16 %v3765
        %v3894 = vunpack.c.l.bf16 %v3766
        %v3895 = vunpack.c.l.bf16 %v3767
        %v3896 = vunpack.c.l.bf16 %v3768
        %v3897 = vunpack.c.l.bf16 %v3769
        %v3898 = vunpack.c.l.bf16 %v3770
        %v3899 = vunpack.c.l.bf16 %v3771
        %v3900 = vunpack.c.l.bf16 %v3772
        %v3901 = vunpack.c.l.bf16 %v3773
        %v3902 = vunpack.c.l.bf16 %v3774
        %v3903 = vunpack.c.l.bf16 %v3775
        %v3904 = vunpack.c.l.bf16 %v3776
        %v3905 = vunpack.c.l.bf16 %v3777
        %v3906 = vunpack.c.l.bf16 %v3778
        %v3907 = vunpack.c.l.bf16 %v3779
        %v3908 = vunpack.c.l.bf16 %v3780
        %v3909 = vunpack.c.l.bf16 %v3781
        %v3910 = vunpack.c.l.bf16 %v3782
        %v3911 = vunpack.c.l.bf16 %v3783
        %v3912 = vunpack.c.l.bf16 %v3784
        %v3913 = vunpack.c.l.bf16 %v3785
        %v3914 = vunpack.c.l.bf16 %v3786
        %v3915 = vunpack.c.l.bf16 %v3787
        %v3916 = vunpack.c.l.bf16 %v3788
        %v3917 = vunpack.c.l.bf16 %v3789
        %v3918 = vunpack.c.l.bf16 %v3790
        %v3919 = vunpack.c.l.bf16 %v3791
        %v3920 = vunpack.c.l.bf16 %v3792
        %v3921 = vunpack.c.l.bf16 %v3793
        %v3922 = vunpack.c.l.bf16 %v3794
        %v3923 = vunpack.c.l.bf16 %v3795
        %v3924 = vunpack.c.l.bf16 %v3796
        %v3925 = vunpack.c.l.bf16 %v3797
        %v3926 = vunpack.c.l.bf16 %v3798
        %v3927 = vunpack.c.l.bf16 %v3799
        %v3928 = vunpack.c.l.bf16 %v3800
        %v3929 = vunpack.c.l.bf16 %v3801
        %v3930 = vunpack.c.l.bf16 %v3802
        %v3931 = vunpack.c.l.bf16 %v3803
        %v3932 = vunpack.c.l.bf16 %v3804
        %v3933 = vunpack.c.l.bf16 %v3805
        %v3934 = vunpack.c.l.bf16 %v3806
        %v3935 = vunpack.c.l.bf16 %v3807
        %v3936 = vunpack.c.l.bf16 %v3808
        %v3937 = vunpack.c.l.bf16 %v3809
        %v3938 = vunpack.c.l.bf16 %v3810
        %v3939 = vunpack.c.l.bf16 %v3811
        %v3940 = vunpack.c.l.bf16 %v3812
        %v3941 = vunpack.c.l.bf16 %v3813
        %v3942 = vunpack.c.l.bf16 %v3814
        %v3943 = vunpack.c.l.bf16 %v3815
        %v3944 = vstv %s3686
        %v3945 = vmul.f32 %v3944, %v3816
        %v3946 = vmul.f32 %v3944, %v3817
        %v3947 = vmul.f32 %v3944, %v3818
        %v3948 = vmul.f32 %v3944, %v3819
        %v3949 = vmul.f32 %v3944, %v3820
        %v3950 = vmul.f32 %v3944, %v3821
        %v3951 = vmul.f32 %v3944, %v3822
        %v3952 = vmul.f32 %v3944, %v3823
        %v3953 = vmul.f32 %v3944, %v3824
        %v3954 = vmul.f32 %v3944, %v3825
        %v3955 = vmul.f32 %v3944, %v3826
        %v3956 = vmul.f32 %v3944, %v3827
        %v3957 = vmul.f32 %v3944, %v3828
        %v3958 = vmul.f32 %v3944, %v3829
        %v3959 = vmul.f32 %v3944, %v3830
        %v3960 = vmul.f32 %v3944, %v3831
        %v3961 = vmul.f32 %v3944, %v3832
        %v3962 = vmul.f32 %v3944, %v3833
        %v3963 = vmul.f32 %v3944, %v3834
        %v3964 = vmul.f32 %v3944, %v3835
        %v3965 = vmul.f32 %v3944, %v3836
        %v3966 = vmul.f32 %v3944, %v3837
        %v3967 = vmul.f32 %v3944, %v3838
        %v3968 = vmul.f32 %v3944, %v3839
        %v3969 = vmul.f32 %v3944, %v3840
        %v3970 = vmul.f32 %v3944, %v3841
        %v3971 = vmul.f32 %v3944, %v3842
        %v3972 = vmul.f32 %v3944, %v3843
        %v3973 = vmul.f32 %v3944, %v3844
        %v3974 = vmul.f32 %v3944, %v3845
        %v3975 = vmul.f32 %v3944, %v3846
        %v3976 = vmul.f32 %v3944, %v3847
        %v3977 = vmul.f32 %v3944, %v3848
        %v3978 = vmul.f32 %v3944, %v3849
        %v3979 = vmul.f32 %v3944, %v3850
        %v3980 = vmul.f32 %v3944, %v3851
        %v3981 = vmul.f32 %v3944, %v3852
        %v3982 = vmul.f32 %v3944, %v3853
        %v3983 = vmul.f32 %v3944, %v3854
        %v3984 = vmul.f32 %v3944, %v3855
        %v3985 = vmul.f32 %v3944, %v3856
        %v3986 = vmul.f32 %v3944, %v3857
        %v3987 = vmul.f32 %v3944, %v3858
        %v3988 = vmul.f32 %v3944, %v3859
        %v3989 = vmul.f32 %v3944, %v3860
        %v3990 = vmul.f32 %v3944, %v3861
        %v3991 = vmul.f32 %v3944, %v3862
        %v3992 = vmul.f32 %v3944, %v3863
        %v3993 = vmul.f32 %v3944, %v3864
        %v3994 = vmul.f32 %v3944, %v3865
        %v3995 = vmul.f32 %v3944, %v3866
        %v3996 = vmul.f32 %v3944, %v3867
        %v3997 = vmul.f32 %v3944, %v3868
        %v3998 = vmul.f32 %v3944, %v3869
        %v3999 = vmul.f32 %v3944, %v3870
        %v4000 = vmul.f32 %v3944, %v3871
        %v4001 = vmul.f32 %v3944, %v3872
        %v4002 = vmul.f32 %v3944, %v3873
        %v4003 = vmul.f32 %v3944, %v3874
        %v4004 = vmul.f32 %v3944, %v3875
        %v4005 = vmul.f32 %v3944, %v3876
        %v4006 = vmul.f32 %v3944, %v3877
        %v4007 = vmul.f32 %v3944, %v3878
        %v4008 = vmul.f32 %v3944, %v3879
        %v4009 = vmul.f32 %v3944, %v3880
        %v4010 = vmul.f32 %v3944, %v3881
        %v4011 = vmul.f32 %v3944, %v3882
        %v4012 = vmul.f32 %v3944, %v3883
        %v4013 = vmul.f32 %v3944, %v3884
        %v4014 = vmul.f32 %v3944, %v3885
        %v4015 = vmul.f32 %v3944, %v3886
        %v4016 = vmul.f32 %v3944, %v3887
        %v4017 = vmul.f32 %v3944, %v3888
        %v4018 = vmul.f32 %v3944, %v3889
        %v4019 = vmul.f32 %v3944, %v3890
        %v4020 = vmul.f32 %v3944, %v3891
        %v4021 = vmul.f32 %v3944, %v3892
        %v4022 = vmul.f32 %v3944, %v3893
        %v4023 = vmul.f32 %v3944, %v3894
        %v4024 = vmul.f32 %v3944, %v3895
        %v4025 = vmul.f32 %v3944, %v3896
        %v4026 = vmul.f32 %v3944, %v3897
        %v4027 = vmul.f32 %v3944, %v3898
        %v4028 = vmul.f32 %v3944, %v3899
        %v4029 = vmul.f32 %v3944, %v3900
        %v4030 = vmul.f32 %v3944, %v3901
        %v4031 = vmul.f32 %v3944, %v3902
        %v4032 = vmul.f32 %v3944, %v3903
        %v4033 = vmul.f32 %v3944, %v3904
        %v4034 = vmul.f32 %v3944, %v3905
        %v4035 = vmul.f32 %v3944, %v3906
        %v4036 = vmul.f32 %v3944, %v3907
        %v4037 = vmul.f32 %v3944, %v3908
        %v4038 = vmul.f32 %v3944, %v3909
        %v4039 = vmul.f32 %v3944, %v3910
        %v4040 = vmul.f32 %v3944, %v3911
        %v4041 = vmul.f32 %v3944, %v3912
        %v4042 = vmul.f32 %v3944, %v3913
        %v4043 = vmul.f32 %v3944, %v3914
        %v4044 = vmul.f32 %v3944, %v3915
        %v4045 = vmul.f32 %v3944, %v3916
        %v4046 = vmul.f32 %v3944, %v3917
        %v4047 = vmul.f32 %v3944, %v3918
        %v4048 = vmul.f32 %v3944, %v3919
        %v4049 = vmul.f32 %v3944, %v3920
        %v4050 = vmul.f32 %v3944, %v3921
        %v4051 = vmul.f32 %v3944, %v3922
        %v4052 = vmul.f32 %v3944, %v3923
        %v4053 = vmul.f32 %v3944, %v3924
        %v4054 = vmul.f32 %v3944, %v3925
        %v4055 = vmul.f32 %v3944, %v3926
        %v4056 = vmul.f32 %v3944, %v3927
        %v4057 = vmul.f32 %v3944, %v3928
        %v4058 = vmul.f32 %v3944, %v3929
        %v4059 = vmul.f32 %v3944, %v3930
        %v4060 = vmul.f32 %v3944, %v3931
        %v4061 = vmul.f32 %v3944, %v3932
        %v4062 = vmul.f32 %v3944, %v3933
        %v4063 = vmul.f32 %v3944, %v3934
        %v4064 = vmul.f32 %v3944, %v3935
        %v4065 = vmul.f32 %v3944, %v3936
        %v4066 = vmul.f32 %v3944, %v3937
        %v4067 = vmul.f32 %v3944, %v3938
        %v4068 = vmul.f32 %v3944, %v3939
        %v4069 = vmul.f32 %v3944, %v3940
        %v4070 = vmul.f32 %v3944, %v3941
        %v4071 = vmul.f32 %v3944, %v3942
        %v4072 = vmul.f32 %v3944, %v3943
        %s4073 = sld [smem:[#allocation6 + $0x8]]
        %s4074 = scalar_lea.vmem %s401, 4096 [#allocation11]
        %v4075 = vld [vmem:[%s4074] sm:$0xf]
        %v4076 = vld [vmem:[%s4074 + $0x4] sm:$0xf]
        %v4077 = vld [vmem:[%s4074 + $0x8] sm:$0xf]
        %v4078 = vld [vmem:[%s4074 + $0xc] sm:$0xf]
        %v4079 = vld [vmem:[%s4074 + $0x10] sm:$0xf]
        %v4080 = vld [vmem:[%s4074 + $0x14] sm:$0xf]
        %v4081 = vld [vmem:[%s4074 + $0x18] sm:$0xf]
        %v4082 = vld [vmem:[%s4074 + $0x1c] sm:$0xf]
        %v4083 = vld [vmem:[%s4074 + $0x20] sm:$0xf]
        %v4084 = vld [vmem:[%s4074 + $0x24] sm:$0xf]
        %v4085 = vld [vmem:[%s4074 + $0x28] sm:$0xf]
        %v4086 = vld [vmem:[%s4074 + $0x2c] sm:$0xf]
        %v4087 = vld [vmem:[%s4074 + $0x30] sm:$0xf]
        %v4088 = vld [vmem:[%s4074 + $0x34] sm:$0xf]
        %v4089 = vld [vmem:[%s4074 + $0x38] sm:$0xf]
        %v4090 = vld [vmem:[%s4074 + $0x3c] sm:$0xf]
        %v4091 = vld [vmem:[%s4074 + $0x40] sm:$0xf]
        %v4092 = vld [vmem:[%s4074 + $0x44] sm:$0xf]
        %v4093 = vld [vmem:[%s4074 + $0x48] sm:$0xf]
        %v4094 = vld [vmem:[%s4074 + $0x4c] sm:$0xf]
        %v4095 = vld [vmem:[%s4074 + $0x50] sm:$0xf]
        %v4096 = vld [vmem:[%s4074 + $0x54] sm:$0xf]
        %v4097 = vld [vmem:[%s4074 + $0x58] sm:$0xf]
        %v4098 = vld [vmem:[%s4074 + $0x5c] sm:$0xf]
        %v4099 = vld [vmem:[%s4074 + $0x60] sm:$0xf]
        %v4100 = vld [vmem:[%s4074 + $0x64] sm:$0xf]
        %v4101 = vld [vmem:[%s4074 + $0x68] sm:$0xf]
        %v4102 = vld [vmem:[%s4074 + $0x6c] sm:$0xf]
        %v4103 = vld [vmem:[%s4074 + $0x70] sm:$0xf]
        %v4104 = vld [vmem:[%s4074 + $0x74] sm:$0xf]
        %v4105 = vld [vmem:[%s4074 + $0x78] sm:$0xf]
        %v4106 = vld [vmem:[%s4074 + $0x7c] sm:$0xf]
        %v4107 = vld [vmem:[%s4074 + $0x80] sm:$0xf]
        %v4108 = vld [vmem:[%s4074 + $0x84] sm:$0xf]
        %v4109 = vld [vmem:[%s4074 + $0x88] sm:$0xf]
        %v4110 = vld [vmem:[%s4074 + $0x8c] sm:$0xf]
        %v4111 = vld [vmem:[%s4074 + $0x90] sm:$0xf]
        %v4112 = vld [vmem:[%s4074 + $0x94] sm:$0xf]
        %v4113 = vld [vmem:[%s4074 + $0x98] sm:$0xf]
        %v4114 = vld [vmem:[%s4074 + $0x9c] sm:$0xf]
        %v4115 = vld [vmem:[%s4074 + $0xa0] sm:$0xf]
        %v4116 = vld [vmem:[%s4074 + $0xa4] sm:$0xf]
        %v4117 = vld [vmem:[%s4074 + $0xa8] sm:$0xf]
        %v4118 = vld [vmem:[%s4074 + $0xac] sm:$0xf]
        %v4119 = vld [vmem:[%s4074 + $0xb0] sm:$0xf]
        %v4120 = vld [vmem:[%s4074 + $0xb4] sm:$0xf]
        %v4121 = vld [vmem:[%s4074 + $0xb8] sm:$0xf]
        %v4122 = vld [vmem:[%s4074 + $0xbc] sm:$0xf]
        %v4123 = vld [vmem:[%s4074 + $0xc0] sm:$0xf]
        %v4124 = vld [vmem:[%s4074 + $0xc4] sm:$0xf]
        %v4125 = vld [vmem:[%s4074 + $0xc8] sm:$0xf]
        %v4126 = vld [vmem:[%s4074 + $0xcc] sm:$0xf]
        %v4127 = vld [vmem:[%s4074 + $0xd0] sm:$0xf]
        %v4128 = vld [vmem:[%s4074 + $0xd4] sm:$0xf]
        %v4129 = vld [vmem:[%s4074 + $0xd8] sm:$0xf]
        %v4130 = vld [vmem:[%s4074 + $0xdc] sm:$0xf]
        %v4131 = vld [vmem:[%s4074 + $0xe0] sm:$0xf]
        %v4132 = vld [vmem:[%s4074 + $0xe4] sm:$0xf]
        %v4133 = vld [vmem:[%s4074 + $0xe8] sm:$0xf]
        %v4134 = vld [vmem:[%s4074 + $0xec] sm:$0xf]
        %v4135 = vld [vmem:[%s4074 + $0xf0] sm:$0xf]
        %v4136 = vld [vmem:[%s4074 + $0xf4] sm:$0xf]
        %v4137 = vld [vmem:[%s4074 + $0xf8] sm:$0xf]
        %v4138 = vld [vmem:[%s4074 + $0xfc] sm:$0xf]
        %v4139 = vld [vmem:[%s4074 + $0x100] sm:$0xf]
        %v4140 = vld [vmem:[%s4074 + $0x104] sm:$0xf]
        %v4141 = vld [vmem:[%s4074 + $0x108] sm:$0xf]
        %v4142 = vld [vmem:[%s4074 + $0x10c] sm:$0xf]
        %v4143 = vld [vmem:[%s4074 + $0x110] sm:$0xf]
        %v4144 = vld [vmem:[%s4074 + $0x114] sm:$0xf]
        %v4145 = vld [vmem:[%s4074 + $0x118] sm:$0xf]
        %v4146 = vld [vmem:[%s4074 + $0x11c] sm:$0xf]
        %v4147 = vld [vmem:[%s4074 + $0x120] sm:$0xf]
        %v4148 = vld [vmem:[%s4074 + $0x124] sm:$0xf]
        %v4149 = vld [vmem:[%s4074 + $0x128] sm:$0xf]
        %v4150 = vld [vmem:[%s4074 + $0x12c] sm:$0xf]
        %v4151 = vld [vmem:[%s4074 + $0x130] sm:$0xf]
        %v4152 = vld [vmem:[%s4074 + $0x134] sm:$0xf]
        %v4153 = vld [vmem:[%s4074 + $0x138] sm:$0xf]
        %v4154 = vld [vmem:[%s4074 + $0x13c] sm:$0xf]
        %v4155 = vld [vmem:[%s4074 + $0x140] sm:$0xf]
        %v4156 = vld [vmem:[%s4074 + $0x144] sm:$0xf]
        %v4157 = vld [vmem:[%s4074 + $0x148] sm:$0xf]
        %v4158 = vld [vmem:[%s4074 + $0x14c] sm:$0xf]
        %v4159 = vld [vmem:[%s4074 + $0x150] sm:$0xf]
        %v4160 = vld [vmem:[%s4074 + $0x154] sm:$0xf]
        %v4161 = vld [vmem:[%s4074 + $0x158] sm:$0xf]
        %v4162 = vld [vmem:[%s4074 + $0x15c] sm:$0xf]
        %v4163 = vld [vmem:[%s4074 + $0x160] sm:$0xf]
        %v4164 = vld [vmem:[%s4074 + $0x164] sm:$0xf]
        %v4165 = vld [vmem:[%s4074 + $0x168] sm:$0xf]
        %v4166 = vld [vmem:[%s4074 + $0x16c] sm:$0xf]
        %v4167 = vld [vmem:[%s4074 + $0x170] sm:$0xf]
        %v4168 = vld [vmem:[%s4074 + $0x174] sm:$0xf]
        %v4169 = vld [vmem:[%s4074 + $0x178] sm:$0xf]
        %v4170 = vld [vmem:[%s4074 + $0x17c] sm:$0xf]
        %v4171 = vld [vmem:[%s4074 + $0x180] sm:$0xf]
        %v4172 = vld [vmem:[%s4074 + $0x184] sm:$0xf]
        %v4173 = vld [vmem:[%s4074 + $0x188] sm:$0xf]
        %v4174 = vld [vmem:[%s4074 + $0x18c] sm:$0xf]
        %v4175 = vld [vmem:[%s4074 + $0x190] sm:$0xf]
        %v4176 = vld [vmem:[%s4074 + $0x194] sm:$0xf]
        %v4177 = vld [vmem:[%s4074 + $0x198] sm:$0xf]
        %v4178 = vld [vmem:[%s4074 + $0x19c] sm:$0xf]
        %v4179 = vld [vmem:[%s4074 + $0x1a0] sm:$0xf]
        %v4180 = vld [vmem:[%s4074 + $0x1a4] sm:$0xf]
        %v4181 = vld [vmem:[%s4074 + $0x1a8] sm:$0xf]
        %v4182 = vld [vmem:[%s4074 + $0x1ac] sm:$0xf]
        %v4183 = vld [vmem:[%s4074 + $0x1b0] sm:$0xf]
        %v4184 = vld [vmem:[%s4074 + $0x1b4] sm:$0xf]
        %v4185 = vld [vmem:[%s4074 + $0x1b8] sm:$0xf]
        %v4186 = vld [vmem:[%s4074 + $0x1bc] sm:$0xf]
        %v4187 = vld [vmem:[%s4074 + $0x1c0] sm:$0xf]
        %v4188 = vld [vmem:[%s4074 + $0x1c4] sm:$0xf]
        %v4189 = vld [vmem:[%s4074 + $0x1c8] sm:$0xf]
        %v4190 = vld [vmem:[%s4074 + $0x1cc] sm:$0xf]
        %v4191 = vld [vmem:[%s4074 + $0x1d0] sm:$0xf]
        %v4192 = vld [vmem:[%s4074 + $0x1d4] sm:$0xf]
        %v4193 = vld [vmem:[%s4074 + $0x1d8] sm:$0xf]
        %v4194 = vld [vmem:[%s4074 + $0x1dc] sm:$0xf]
        %v4195 = vld [vmem:[%s4074 + $0x1e0] sm:$0xf]
        %v4196 = vld [vmem:[%s4074 + $0x1e4] sm:$0xf]
        %v4197 = vld [vmem:[%s4074 + $0x1e8] sm:$0xf]
        %v4198 = vld [vmem:[%s4074 + $0x1ec] sm:$0xf]
        %v4199 = vld [vmem:[%s4074 + $0x1f0] sm:$0xf]
        %v4200 = vld [vmem:[%s4074 + $0x1f4] sm:$0xf]
        %v4201 = vld [vmem:[%s4074 + $0x1f8] sm:$0xf]
        %v4202 = vld [vmem:[%s4074 + $0x1fc] sm:$0xf]
        %v4203 = vunpack.c.l.bf16 %v4075
        %v4204 = vunpack.c.l.bf16 %v4076
        %v4205 = vunpack.c.l.bf16 %v4077
        %v4206 = vunpack.c.l.bf16 %v4078
        %v4207 = vunpack.c.l.bf16 %v4079
        %v4208 = vunpack.c.l.bf16 %v4080
        %v4209 = vunpack.c.l.bf16 %v4081
        %v4210 = vunpack.c.l.bf16 %v4082
        %v4211 = vunpack.c.l.bf16 %v4083
        %v4212 = vunpack.c.l.bf16 %v4084
        %v4213 = vunpack.c.l.bf16 %v4085
        %v4214 = vunpack.c.l.bf16 %v4086
        %v4215 = vunpack.c.l.bf16 %v4087
        %v4216 = vunpack.c.l.bf16 %v4088
        %v4217 = vunpack.c.l.bf16 %v4089
        %v4218 = vunpack.c.l.bf16 %v4090
        %v4219 = vunpack.c.l.bf16 %v4091
        %v4220 = vunpack.c.l.bf16 %v4092
        %v4221 = vunpack.c.l.bf16 %v4093
        %v4222 = vunpack.c.l.bf16 %v4094
        %v4223 = vunpack.c.l.bf16 %v4095
        %v4224 = vunpack.c.l.bf16 %v4096
        %v4225 = vunpack.c.l.bf16 %v4097
        %v4226 = vunpack.c.l.bf16 %v4098
        %v4227 = vunpack.c.l.bf16 %v4099
        %v4228 = vunpack.c.l.bf16 %v4100
        %v4229 = vunpack.c.l.bf16 %v4101
        %v4230 = vunpack.c.l.bf16 %v4102
        %v4231 = vunpack.c.l.bf16 %v4103
        %v4232 = vunpack.c.l.bf16 %v4104
        %v4233 = vunpack.c.l.bf16 %v4105
        %v4234 = vunpack.c.l.bf16 %v4106
        %v4235 = vunpack.c.l.bf16 %v4107
        %v4236 = vunpack.c.l.bf16 %v4108
        %v4237 = vunpack.c.l.bf16 %v4109
        %v4238 = vunpack.c.l.bf16 %v4110
        %v4239 = vunpack.c.l.bf16 %v4111
        %v4240 = vunpack.c.l.bf16 %v4112
        %v4241 = vunpack.c.l.bf16 %v4113
        %v4242 = vunpack.c.l.bf16 %v4114
        %v4243 = vunpack.c.l.bf16 %v4115
        %v4244 = vunpack.c.l.bf16 %v4116
        %v4245 = vunpack.c.l.bf16 %v4117
        %v4246 = vunpack.c.l.bf16 %v4118
        %v4247 = vunpack.c.l.bf16 %v4119
        %v4248 = vunpack.c.l.bf16 %v4120
        %v4249 = vunpack.c.l.bf16 %v4121
        %v4250 = vunpack.c.l.bf16 %v4122
        %v4251 = vunpack.c.l.bf16 %v4123
        %v4252 = vunpack.c.l.bf16 %v4124
        %v4253 = vunpack.c.l.bf16 %v4125
        %v4254 = vunpack.c.l.bf16 %v4126
        %v4255 = vunpack.c.l.bf16 %v4127
        %v4256 = vunpack.c.l.bf16 %v4128
        %v4257 = vunpack.c.l.bf16 %v4129
        %v4258 = vunpack.c.l.bf16 %v4130
        %v4259 = vunpack.c.l.bf16 %v4131
        %v4260 = vunpack.c.l.bf16 %v4132
        %v4261 = vunpack.c.l.bf16 %v4133
        %v4262 = vunpack.c.l.bf16 %v4134
        %v4263 = vunpack.c.l.bf16 %v4135
        %v4264 = vunpack.c.l.bf16 %v4136
        %v4265 = vunpack.c.l.bf16 %v4137
        %v4266 = vunpack.c.l.bf16 %v4138
        %v4267 = vunpack.c.l.bf16 %v4139
        %v4268 = vunpack.c.l.bf16 %v4140
        %v4269 = vunpack.c.l.bf16 %v4141
        %v4270 = vunpack.c.l.bf16 %v4142
        %v4271 = vunpack.c.l.bf16 %v4143
        %v4272 = vunpack.c.l.bf16 %v4144
        %v4273 = vunpack.c.l.bf16 %v4145
        %v4274 = vunpack.c.l.bf16 %v4146
        %v4275 = vunpack.c.l.bf16 %v4147
        %v4276 = vunpack.c.l.bf16 %v4148
        %v4277 = vunpack.c.l.bf16 %v4149
        %v4278 = vunpack.c.l.bf16 %v4150
        %v4279 = vunpack.c.l.bf16 %v4151
        %v4280 = vunpack.c.l.bf16 %v4152
        %v4281 = vunpack.c.l.bf16 %v4153
        %v4282 = vunpack.c.l.bf16 %v4154
        %v4283 = vunpack.c.l.bf16 %v4155
        %v4284 = vunpack.c.l.bf16 %v4156
        %v4285 = vunpack.c.l.bf16 %v4157
        %v4286 = vunpack.c.l.bf16 %v4158
        %v4287 = vunpack.c.l.bf16 %v4159
        %v4288 = vunpack.c.l.bf16 %v4160
        %v4289 = vunpack.c.l.bf16 %v4161
        %v4290 = vunpack.c.l.bf16 %v4162
        %v4291 = vunpack.c.l.bf16 %v4163
        %v4292 = vunpack.c.l.bf16 %v4164
        %v4293 = vunpack.c.l.bf16 %v4165
        %v4294 = vunpack.c.l.bf16 %v4166
        %v4295 = vunpack.c.l.bf16 %v4167
        %v4296 = vunpack.c.l.bf16 %v4168
        %v4297 = vunpack.c.l.bf16 %v4169
        %v4298 = vunpack.c.l.bf16 %v4170
        %v4299 = vunpack.c.l.bf16 %v4171
        %v4300 = vunpack.c.l.bf16 %v4172
        %v4301 = vunpack.c.l.bf16 %v4173
        %v4302 = vunpack.c.l.bf16 %v4174
        %v4303 = vunpack.c.l.bf16 %v4175
        %v4304 = vunpack.c.l.bf16 %v4176
        %v4305 = vunpack.c.l.bf16 %v4177
        %v4306 = vunpack.c.l.bf16 %v4178
        %v4307 = vunpack.c.l.bf16 %v4179
        %v4308 = vunpack.c.l.bf16 %v4180
        %v4309 = vunpack.c.l.bf16 %v4181
        %v4310 = vunpack.c.l.bf16 %v4182
        %v4311 = vunpack.c.l.bf16 %v4183
        %v4312 = vunpack.c.l.bf16 %v4184
        %v4313 = vunpack.c.l.bf16 %v4185
        %v4314 = vunpack.c.l.bf16 %v4186
        %v4315 = vunpack.c.l.bf16 %v4187
        %v4316 = vunpack.c.l.bf16 %v4188
        %v4317 = vunpack.c.l.bf16 %v4189
        %v4318 = vunpack.c.l.bf16 %v4190
        %v4319 = vunpack.c.l.bf16 %v4191
        %v4320 = vunpack.c.l.bf16 %v4192
        %v4321 = vunpack.c.l.bf16 %v4193
        %v4322 = vunpack.c.l.bf16 %v4194
        %v4323 = vunpack.c.l.bf16 %v4195
        %v4324 = vunpack.c.l.bf16 %v4196
        %v4325 = vunpack.c.l.bf16 %v4197
        %v4326 = vunpack.c.l.bf16 %v4198
        %v4327 = vunpack.c.l.bf16 %v4199
        %v4328 = vunpack.c.l.bf16 %v4200
        %v4329 = vunpack.c.l.bf16 %v4201
        %v4330 = vunpack.c.l.bf16 %v4202
        %v4331 = vstv %s4073
        %v4332 = vmul.f32 %v4331, %v4203
        %v4333 = vmul.f32 %v4331, %v4204
        %v4334 = vmul.f32 %v4331, %v4205
        %v4335 = vmul.f32 %v4331, %v4206
        %v4336 = vmul.f32 %v4331, %v4207
        %v4337 = vmul.f32 %v4331, %v4208
        %v4338 = vmul.f32 %v4331, %v4209
        %v4339 = vmul.f32 %v4331, %v4210
        %v4340 = vmul.f32 %v4331, %v4211
        %v4341 = vmul.f32 %v4331, %v4212
        %v4342 = vmul.f32 %v4331, %v4213
        %v4343 = vmul.f32 %v4331, %v4214
        %v4344 = vmul.f32 %v4331, %v4215
        %v4345 = vmul.f32 %v4331, %v4216
        %v4346 = vmul.f32 %v4331, %v4217
        %v4347 = vmul.f32 %v4331, %v4218
        %v4348 = vmul.f32 %v4331, %v4219
        %v4349 = vmul.f32 %v4331, %v4220
        %v4350 = vmul.f32 %v4331, %v4221
        %v4351 = vmul.f32 %v4331, %v4222
        %v4352 = vmul.f32 %v4331, %v4223
        %v4353 = vmul.f32 %v4331, %v4224
        %v4354 = vmul.f32 %v4331, %v4225
        %v4355 = vmul.f32 %v4331, %v4226
        %v4356 = vmul.f32 %v4331, %v4227
        %v4357 = vmul.f32 %v4331, %v4228
        %v4358 = vmul.f32 %v4331, %v4229
        %v4359 = vmul.f32 %v4331, %v4230
        %v4360 = vmul.f32 %v4331, %v4231
        %v4361 = vmul.f32 %v4331, %v4232
        %v4362 = vmul.f32 %v4331, %v4233
        %v4363 = vmul.f32 %v4331, %v4234
        %v4364 = vmul.f32 %v4331, %v4235
        %v4365 = vmul.f32 %v4331, %v4236
        %v4366 = vmul.f32 %v4331, %v4237
        %v4367 = vmul.f32 %v4331, %v4238
        %v4368 = vmul.f32 %v4331, %v4239
        %v4369 = vmul.f32 %v4331, %v4240
        %v4370 = vmul.f32 %v4331, %v4241
        %v4371 = vmul.f32 %v4331, %v4242
        %v4372 = vmul.f32 %v4331, %v4243
        %v4373 = vmul.f32 %v4331, %v4244
        %v4374 = vmul.f32 %v4331, %v4245
        %v4375 = vmul.f32 %v4331, %v4246
        %v4376 = vmul.f32 %v4331, %v4247
        %v4377 = vmul.f32 %v4331, %v4248
        %v4378 = vmul.f32 %v4331, %v4249
        %v4379 = vmul.f32 %v4331, %v4250
        %v4380 = vmul.f32 %v4331, %v4251
        %v4381 = vmul.f32 %v4331, %v4252
        %v4382 = vmul.f32 %v4331, %v4253
        %v4383 = vmul.f32 %v4331, %v4254
        %v4384 = vmul.f32 %v4331, %v4255
        %v4385 = vmul.f32 %v4331, %v4256
        %v4386 = vmul.f32 %v4331, %v4257
        %v4387 = vmul.f32 %v4331, %v4258
        %v4388 = vmul.f32 %v4331, %v4259
        %v4389 = vmul.f32 %v4331, %v4260
        %v4390 = vmul.f32 %v4331, %v4261
        %v4391 = vmul.f32 %v4331, %v4262
        %v4392 = vmul.f32 %v4331, %v4263
        %v4393 = vmul.f32 %v4331, %v4264
        %v4394 = vmul.f32 %v4331, %v4265
        %v4395 = vmul.f32 %v4331, %v4266
        %v4396 = vmul.f32 %v4331, %v4267
        %v4397 = vmul.f32 %v4331, %v4268
        %v4398 = vmul.f32 %v4331, %v4269
        %v4399 = vmul.f32 %v4331, %v4270
        %v4400 = vmul.f32 %v4331, %v4271
        %v4401 = vmul.f32 %v4331, %v4272
        %v4402 = vmul.f32 %v4331, %v4273
        %v4403 = vmul.f32 %v4331, %v4274
        %v4404 = vmul.f32 %v4331, %v4275
        %v4405 = vmul.f32 %v4331, %v4276
        %v4406 = vmul.f32 %v4331, %v4277
        %v4407 = vmul.f32 %v4331, %v4278
        %v4408 = vmul.f32 %v4331, %v4279
        %v4409 = vmul.f32 %v4331, %v4280
        %v4410 = vmul.f32 %v4331, %v4281
        %v4411 = vmul.f32 %v4331, %v4282
        %v4412 = vmul.f32 %v4331, %v4283
        %v4413 = vmul.f32 %v4331, %v4284
        %v4414 = vmul.f32 %v4331, %v4285
        %v4415 = vmul.f32 %v4331, %v4286
        %v4416 = vmul.f32 %v4331, %v4287
        %v4417 = vmul.f32 %v4331, %v4288
        %v4418 = vmul.f32 %v4331, %v4289
        %v4419 = vmul.f32 %v4331, %v4290
        %v4420 = vmul.f32 %v4331, %v4291
        %v4421 = vmul.f32 %v4331, %v4292
        %v4422 = vmul.f32 %v4331, %v4293
        %v4423 = vmul.f32 %v4331, %v4294
        %v4424 = vmul.f32 %v4331, %v4295
        %v4425 = vmul.f32 %v4331, %v4296
        %v4426 = vmul.f32 %v4331, %v4297
        %v4427 = vmul.f32 %v4331, %v4298
        %v4428 = vmul.f32 %v4331, %v4299
        %v4429 = vmul.f32 %v4331, %v4300
        %v4430 = vmul.f32 %v4331, %v4301
        %v4431 = vmul.f32 %v4331, %v4302
        %v4432 = vmul.f32 %v4331, %v4303
        %v4433 = vmul.f32 %v4331, %v4304
        %v4434 = vmul.f32 %v4331, %v4305
        %v4435 = vmul.f32 %v4331, %v4306
        %v4436 = vmul.f32 %v4331, %v4307
        %v4437 = vmul.f32 %v4331, %v4308
        %v4438 = vmul.f32 %v4331, %v4309
        %v4439 = vmul.f32 %v4331, %v4310
        %v4440 = vmul.f32 %v4331, %v4311
        %v4441 = vmul.f32 %v4331, %v4312
        %v4442 = vmul.f32 %v4331, %v4313
        %v4443 = vmul.f32 %v4331, %v4314
        %v4444 = vmul.f32 %v4331, %v4315
        %v4445 = vmul.f32 %v4331, %v4316
        %v4446 = vmul.f32 %v4331, %v4317
        %v4447 = vmul.f32 %v4331, %v4318
        %v4448 = vmul.f32 %v4331, %v4319
        %v4449 = vmul.f32 %v4331, %v4320
        %v4450 = vmul.f32 %v4331, %v4321
        %v4451 = vmul.f32 %v4331, %v4322
        %v4452 = vmul.f32 %v4331, %v4323
        %v4453 = vmul.f32 %v4331, %v4324
        %v4454 = vmul.f32 %v4331, %v4325
        %v4455 = vmul.f32 %v4331, %v4326
        %v4456 = vmul.f32 %v4331, %v4327
        %v4457 = vmul.f32 %v4331, %v4328
        %v4458 = vmul.f32 %v4331, %v4329
        %v4459 = vmul.f32 %v4331, %v4330
        %v4460 = vadd.f32 %v3945, %v4332
        %v4461 = vadd.f32 %v3946, %v4333
        %v4462 = vadd.f32 %v3947, %v4334
        %v4463 = vadd.f32 %v3948, %v4335
        %v4464 = vadd.f32 %v3949, %v4336
        %v4465 = vadd.f32 %v3950, %v4337
        %v4466 = vadd.f32 %v3951, %v4338
        %v4467 = vadd.f32 %v3952, %v4339
        %v4468 = vadd.f32 %v3953, %v4340
        %v4469 = vadd.f32 %v3954, %v4341
        %v4470 = vadd.f32 %v3955, %v4342
        %v4471 = vadd.f32 %v3956, %v4343
        %v4472 = vadd.f32 %v3957, %v4344
        %v4473 = vadd.f32 %v3958, %v4345
        %v4474 = vadd.f32 %v3959, %v4346
        %v4475 = vadd.f32 %v3960, %v4347
        %v4476 = vadd.f32 %v3961, %v4348
        %v4477 = vadd.f32 %v3962, %v4349
        %v4478 = vadd.f32 %v3963, %v4350
        %v4479 = vadd.f32 %v3964, %v4351
        %v4480 = vadd.f32 %v3965, %v4352
        %v4481 = vadd.f32 %v3966, %v4353
        %v4482 = vadd.f32 %v3967, %v4354
        %v4483 = vadd.f32 %v3968, %v4355
        %v4484 = vadd.f32 %v3969, %v4356
        %v4485 = vadd.f32 %v3970, %v4357
        %v4486 = vadd.f32 %v3971, %v4358
        %v4487 = vadd.f32 %v3972, %v4359
        %v4488 = vadd.f32 %v3973, %v4360
        %v4489 = vadd.f32 %v3974, %v4361
        %v4490 = vadd.f32 %v3975, %v4362
        %v4491 = vadd.f32 %v3976, %v4363
        %v4492 = vadd.f32 %v3977, %v4364
        %v4493 = vadd.f32 %v3978, %v4365
        %v4494 = vadd.f32 %v3979, %v4366
        %v4495 = vadd.f32 %v3980, %v4367
        %v4496 = vadd.f32 %v3981, %v4368
        %v4497 = vadd.f32 %v3982, %v4369
        %v4498 = vadd.f32 %v3983, %v4370
        %v4499 = vadd.f32 %v3984, %v4371
        %v4500 = vadd.f32 %v3985, %v4372
        %v4501 = vadd.f32 %v3986, %v4373
        %v4502 = vadd.f32 %v3987, %v4374
        %v4503 = vadd.f32 %v3988, %v4375
        %v4504 = vadd.f32 %v3989, %v4376
        %v4505 = vadd.f32 %v3990, %v4377
        %v4506 = vadd.f32 %v3991, %v4378
        %v4507 = vadd.f32 %v3992, %v4379
        %v4508 = vadd.f32 %v3993, %v4380
        %v4509 = vadd.f32 %v3994, %v4381
        %v4510 = vadd.f32 %v3995, %v4382
        %v4511 = vadd.f32 %v3996, %v4383
        %v4512 = vadd.f32 %v3997, %v4384
        %v4513 = vadd.f32 %v3998, %v4385
        %v4514 = vadd.f32 %v3999, %v4386
        %v4515 = vadd.f32 %v4000, %v4387
        %v4516 = vadd.f32 %v4001, %v4388
        %v4517 = vadd.f32 %v4002, %v4389
        %v4518 = vadd.f32 %v4003, %v4390
        %v4519 = vadd.f32 %v4004, %v4391
        %v4520 = vadd.f32 %v4005, %v4392
        %v4521 = vadd.f32 %v4006, %v4393
        %v4522 = vadd.f32 %v4007, %v4394
        %v4523 = vadd.f32 %v4008, %v4395
        %v4524 = vadd.f32 %v4009, %v4396
        %v4525 = vadd.f32 %v4010, %v4397
        %v4526 = vadd.f32 %v4011, %v4398
        %v4527 = vadd.f32 %v4012, %v4399
        %v4528 = vadd.f32 %v4013, %v4400
        %v4529 = vadd.f32 %v4014, %v4401
        %v4530 = vadd.f32 %v4015, %v4402
        %v4531 = vadd.f32 %v4016, %v4403
        %v4532 = vadd.f32 %v4017, %v4404
        %v4533 = vadd.f32 %v4018, %v4405
        %v4534 = vadd.f32 %v4019, %v4406
        %v4535 = vadd.f32 %v4020, %v4407
        %v4536 = vadd.f32 %v4021, %v4408
        %v4537 = vadd.f32 %v4022, %v4409
        %v4538 = vadd.f32 %v4023, %v4410
        %v4539 = vadd.f32 %v4024, %v4411
        %v4540 = vadd.f32 %v4025, %v4412
        %v4541 = vadd.f32 %v4026, %v4413
        %v4542 = vadd.f32 %v4027, %v4414
        %v4543 = vadd.f32 %v4028, %v4415
        %v4544 = vadd.f32 %v4029, %v4416
        %v4545 = vadd.f32 %v4030, %v4417
        %v4546 = vadd.f32 %v4031, %v4418
        %v4547 = vadd.f32 %v4032, %v4419
        %v4548 = vadd.f32 %v4033, %v4420
        %v4549 = vadd.f32 %v4034, %v4421
        %v4550 = vadd.f32 %v4035, %v4422
        %v4551 = vadd.f32 %v4036, %v4423
        %v4552 = vadd.f32 %v4037, %v4424
        %v4553 = vadd.f32 %v4038, %v4425
        %v4554 = vadd.f32 %v4039, %v4426
        %v4555 = vadd.f32 %v4040, %v4427
        %v4556 = vadd.f32 %v4041, %v4428
        %v4557 = vadd.f32 %v4042, %v4429
        %v4558 = vadd.f32 %v4043, %v4430
        %v4559 = vadd.f32 %v4044, %v4431
        %v4560 = vadd.f32 %v4045, %v4432
        %v4561 = vadd.f32 %v4046, %v4433
        %v4562 = vadd.f32 %v4047, %v4434
        %v4563 = vadd.f32 %v4048, %v4435
        %v4564 = vadd.f32 %v4049, %v4436
        %v4565 = vadd.f32 %v4050, %v4437
        %v4566 = vadd.f32 %v4051, %v4438
        %v4567 = vadd.f32 %v4052, %v4439
        %v4568 = vadd.f32 %v4053, %v4440
        %v4569 = vadd.f32 %v4054, %v4441
        %v4570 = vadd.f32 %v4055, %v4442
        %v4571 = vadd.f32 %v4056, %v4443
        %v4572 = vadd.f32 %v4057, %v4444
        %v4573 = vadd.f32 %v4058, %v4445
        %v4574 = vadd.f32 %v4059, %v4446
        %v4575 = vadd.f32 %v4060, %v4447
        %v4576 = vadd.f32 %v4061, %v4448
        %v4577 = vadd.f32 %v4062, %v4449
        %v4578 = vadd.f32 %v4063, %v4450
        %v4579 = vadd.f32 %v4064, %v4451
        %v4580 = vadd.f32 %v4065, %v4452
        %v4581 = vadd.f32 %v4066, %v4453
        %v4582 = vadd.f32 %v4067, %v4454
        %v4583 = vadd.f32 %v4068, %v4455
        %v4584 = vadd.f32 %v4069, %v4456
        %v4585 = vadd.f32 %v4070, %v4457
        %v4586 = vadd.f32 %v4071, %v4458
        %v4587 = vadd.f32 %v4072, %v4459
        %v4588 = vadd.f32 %v3558, %v4460
        %v4589 = vadd.f32 %v3559, %v4461
        %v4590 = vadd.f32 %v3560, %v4462
        %v4591 = vadd.f32 %v3561, %v4463
        %v4592 = vadd.f32 %v3562, %v4464
        %v4593 = vadd.f32 %v3563, %v4465
        %v4594 = vadd.f32 %v3564, %v4466
        %v4595 = vadd.f32 %v3565, %v4467
        %v4596 = vadd.f32 %v3566, %v4468
        %v4597 = vadd.f32 %v3567, %v4469
        %v4598 = vadd.f32 %v3568, %v4470
        %v4599 = vadd.f32 %v3569, %v4471
        %v4600 = vadd.f32 %v3570, %v4472
        %v4601 = vadd.f32 %v3571, %v4473
        %v4602 = vadd.f32 %v3572, %v4474
        %v4603 = vadd.f32 %v3573, %v4475
        %v4604 = vadd.f32 %v3574, %v4476
        %v4605 = vadd.f32 %v3575, %v4477
        %v4606 = vadd.f32 %v3576, %v4478
        %v4607 = vadd.f32 %v3577, %v4479
        %v4608 = vadd.f32 %v3578, %v4480
        %v4609 = vadd.f32 %v3579, %v4481
        %v4610 = vadd.f32 %v3580, %v4482
        %v4611 = vadd.f32 %v3581, %v4483
        %v4612 = vadd.f32 %v3582, %v4484
        %v4613 = vadd.f32 %v3583, %v4485
        %v4614 = vadd.f32 %v3584, %v4486
        %v4615 = vadd.f32 %v3585, %v4487
        %v4616 = vadd.f32 %v3586, %v4488
        %v4617 = vadd.f32 %v3587, %v4489
        %v4618 = vadd.f32 %v3588, %v4490
        %v4619 = vadd.f32 %v3589, %v4491
        %v4620 = vadd.f32 %v3590, %v4492
        %v4621 = vadd.f32 %v3591, %v4493
        %v4622 = vadd.f32 %v3592, %v4494
        %v4623 = vadd.f32 %v3593, %v4495
        %v4624 = vadd.f32 %v3594, %v4496
        %v4625 = vadd.f32 %v3595, %v4497
        %v4626 = vadd.f32 %v3596, %v4498
        %v4627 = vadd.f32 %v3597, %v4499
        %v4628 = vadd.f32 %v3598, %v4500
        %v4629 = vadd.f32 %v3599, %v4501
        %v4630 = vadd.f32 %v3600, %v4502
        %v4631 = vadd.f32 %v3601, %v4503
        %v4632 = vadd.f32 %v3602, %v4504
        %v4633 = vadd.f32 %v3603, %v4505
        %v4634 = vadd.f32 %v3604, %v4506
        %v4635 = vadd.f32 %v3605, %v4507
        %v4636 = vadd.f32 %v3606, %v4508
        %v4637 = vadd.f32 %v3607, %v4509
        %v4638 = vadd.f32 %v3608, %v4510
        %v4639 = vadd.f32 %v3609, %v4511
        %v4640 = vadd.f32 %v3610, %v4512
        %v4641 = vadd.f32 %v3611, %v4513
        %v4642 = vadd.f32 %v3612, %v4514
        %v4643 = vadd.f32 %v3613, %v4515
        %v4644 = vadd.f32 %v3614, %v4516
        %v4645 = vadd.f32 %v3615, %v4517
        %v4646 = vadd.f32 %v3616, %v4518
        %v4647 = vadd.f32 %v3617, %v4519
        %v4648 = vadd.f32 %v3618, %v4520
        %v4649 = vadd.f32 %v3619, %v4521
        %v4650 = vadd.f32 %v3620, %v4522
        %v4651 = vadd.f32 %v3621, %v4523
        %v4652 = vadd.f32 %v3622, %v4524
        %v4653 = vadd.f32 %v3623, %v4525
        %v4654 = vadd.f32 %v3624, %v4526
        %v4655 = vadd.f32 %v3625, %v4527
        %v4656 = vadd.f32 %v3626, %v4528
        %v4657 = vadd.f32 %v3627, %v4529
        %v4658 = vadd.f32 %v3628, %v4530
        %v4659 = vadd.f32 %v3629, %v4531
        %v4660 = vadd.f32 %v3630, %v4532
        %v4661 = vadd.f32 %v3631, %v4533
        %v4662 = vadd.f32 %v3632, %v4534
        %v4663 = vadd.f32 %v3633, %v4535
        %v4664 = vadd.f32 %v3634, %v4536
        %v4665 = vadd.f32 %v3635, %v4537
        %v4666 = vadd.f32 %v3636, %v4538
        %v4667 = vadd.f32 %v3637, %v4539
        %v4668 = vadd.f32 %v3638, %v4540
        %v4669 = vadd.f32 %v3639, %v4541
        %v4670 = vadd.f32 %v3640, %v4542
        %v4671 = vadd.f32 %v3641, %v4543
        %v4672 = vadd.f32 %v3642, %v4544
        %v4673 = vadd.f32 %v3643, %v4545
        %v4674 = vadd.f32 %v3644, %v4546
        %v4675 = vadd.f32 %v3645, %v4547
        %v4676 = vadd.f32 %v3646, %v4548
        %v4677 = vadd.f32 %v3647, %v4549
        %v4678 = vadd.f32 %v3648, %v4550
        %v4679 = vadd.f32 %v3649, %v4551
        %v4680 = vadd.f32 %v3650, %v4552
        %v4681 = vadd.f32 %v3651, %v4553
        %v4682 = vadd.f32 %v3652, %v4554
        %v4683 = vadd.f32 %v3653, %v4555
        %v4684 = vadd.f32 %v3654, %v4556
        %v4685 = vadd.f32 %v3655, %v4557
        %v4686 = vadd.f32 %v3656, %v4558
        %v4687 = vadd.f32 %v3657, %v4559
        %v4688 = vadd.f32 %v3658, %v4560
        %v4689 = vadd.f32 %v3659, %v4561
        %v4690 = vadd.f32 %v3660, %v4562
        %v4691 = vadd.f32 %v3661, %v4563
        %v4692 = vadd.f32 %v3662, %v4564
        %v4693 = vadd.f32 %v3663, %v4565
        %v4694 = vadd.f32 %v3664, %v4566
        %v4695 = vadd.f32 %v3665, %v4567
        %v4696 = vadd.f32 %v3666, %v4568
        %v4697 = vadd.f32 %v3667, %v4569
        %v4698 = vadd.f32 %v3668, %v4570
        %v4699 = vadd.f32 %v3669, %v4571
        %v4700 = vadd.f32 %v3670, %v4572
        %v4701 = vadd.f32 %v3671, %v4573
        %v4702 = vadd.f32 %v3672, %v4574
        %v4703 = vadd.f32 %v3673, %v4575
        %v4704 = vadd.f32 %v3674, %v4576
        %v4705 = vadd.f32 %v3675, %v4577
        %v4706 = vadd.f32 %v3676, %v4578
        %v4707 = vadd.f32 %v3677, %v4579
        %v4708 = vadd.f32 %v3678, %v4580
        %v4709 = vadd.f32 %v3679, %v4581
        %v4710 = vadd.f32 %v3680, %v4582
        %v4711 = vadd.f32 %v3681, %v4583
        %v4712 = vadd.f32 %v3682, %v4584
        %v4713 = vadd.f32 %v3683, %v4585
        %v4714 = vadd.f32 %v3684, %v4586
        %v4715 = vadd.f32 %v3685, %v4587
        %v4716 = vadd.f32 %v3171, %v4588
        %v4717 = vadd.f32 %v3172, %v4589
        %v4718 = vadd.f32 %v3173, %v4590
        %v4719 = vadd.f32 %v3174, %v4591
        %v4720 = vadd.f32 %v3175, %v4592
        %v4721 = vadd.f32 %v3176, %v4593
        %v4722 = vadd.f32 %v3177, %v4594
        %v4723 = vadd.f32 %v3178, %v4595
        %v4724 = vadd.f32 %v3179, %v4596
        %v4725 = vadd.f32 %v3180, %v4597
        %v4726 = vadd.f32 %v3181, %v4598
        %v4727 = vadd.f32 %v3182, %v4599
        %v4728 = vadd.f32 %v3183, %v4600
        %v4729 = vadd.f32 %v3184, %v4601
        %v4730 = vadd.f32 %v3185, %v4602
        %v4731 = vadd.f32 %v3186, %v4603
        %v4732 = vadd.f32 %v3187, %v4604
        %v4733 = vadd.f32 %v3188, %v4605
        %v4734 = vadd.f32 %v3189, %v4606
        %v4735 = vadd.f32 %v3190, %v4607
        %v4736 = vadd.f32 %v3191, %v4608
        %v4737 = vadd.f32 %v3192, %v4609
        %v4738 = vadd.f32 %v3193, %v4610
        %v4739 = vadd.f32 %v3194, %v4611
        %v4740 = vadd.f32 %v3195, %v4612
        %v4741 = vadd.f32 %v3196, %v4613
        %v4742 = vadd.f32 %v3197, %v4614
        %v4743 = vadd.f32 %v3198, %v4615
        %v4744 = vadd.f32 %v3199, %v4616
        %v4745 = vadd.f32 %v3200, %v4617
        %v4746 = vadd.f32 %v3201, %v4618
        %v4747 = vadd.f32 %v3202, %v4619
        %v4748 = vadd.f32 %v3203, %v4620
        %v4749 = vadd.f32 %v3204, %v4621
        %v4750 = vadd.f32 %v3205, %v4622
        %v4751 = vadd.f32 %v3206, %v4623
        %v4752 = vadd.f32 %v3207, %v4624
        %v4753 = vadd.f32 %v3208, %v4625
        %v4754 = vadd.f32 %v3209, %v4626
        %v4755 = vadd.f32 %v3210, %v4627
        %v4756 = vadd.f32 %v3211, %v4628
        %v4757 = vadd.f32 %v3212, %v4629
        %v4758 = vadd.f32 %v3213, %v4630
        %v4759 = vadd.f32 %v3214, %v4631
        %v4760 = vadd.f32 %v3215, %v4632
        %v4761 = vadd.f32 %v3216, %v4633
        %v4762 = vadd.f32 %v3217, %v4634
        %v4763 = vadd.f32 %v3218, %v4635
        %v4764 = vadd.f32 %v3219, %v4636
        %v4765 = vadd.f32 %v3220, %v4637
        %v4766 = vadd.f32 %v3221, %v4638
        %v4767 = vadd.f32 %v3222, %v4639
        %v4768 = vadd.f32 %v3223, %v4640
        %v4769 = vadd.f32 %v3224, %v4641
        %v4770 = vadd.f32 %v3225, %v4642
        %v4771 = vadd.f32 %v3226, %v4643
        %v4772 = vadd.f32 %v3227, %v4644
        %v4773 = vadd.f32 %v3228, %v4645
        %v4774 = vadd.f32 %v3229, %v4646
        %v4775 = vadd.f32 %v3230, %v4647
        %v4776 = vadd.f32 %v3231, %v4648
        %v4777 = vadd.f32 %v3232, %v4649
        %v4778 = vadd.f32 %v3233, %v4650
        %v4779 = vadd.f32 %v3234, %v4651
        %v4780 = vadd.f32 %v3235, %v4652
        %v4781 = vadd.f32 %v3236, %v4653
        %v4782 = vadd.f32 %v3237, %v4654
        %v4783 = vadd.f32 %v3238, %v4655
        %v4784 = vadd.f32 %v3239, %v4656
        %v4785 = vadd.f32 %v3240, %v4657
        %v4786 = vadd.f32 %v3241, %v4658
        %v4787 = vadd.f32 %v3242, %v4659
        %v4788 = vadd.f32 %v3243, %v4660
        %v4789 = vadd.f32 %v3244, %v4661
        %v4790 = vadd.f32 %v3245, %v4662
        %v4791 = vadd.f32 %v3246, %v4663
        %v4792 = vadd.f32 %v3247, %v4664
        %v4793 = vadd.f32 %v3248, %v4665
        %v4794 = vadd.f32 %v3249, %v4666
        %v4795 = vadd.f32 %v3250, %v4667
        %v4796 = vadd.f32 %v3251, %v4668
        %v4797 = vadd.f32 %v3252, %v4669
        %v4798 = vadd.f32 %v3253, %v4670
        %v4799 = vadd.f32 %v3254, %v4671
        %v4800 = vadd.f32 %v3255, %v4672
        %v4801 = vadd.f32 %v3256, %v4673
        %v4802 = vadd.f32 %v3257, %v4674
        %v4803 = vadd.f32 %v3258, %v4675
        %v4804 = vadd.f32 %v3259, %v4676
        %v4805 = vadd.f32 %v3260, %v4677
        %v4806 = vadd.f32 %v3261, %v4678
        %v4807 = vadd.f32 %v3262, %v4679
        %v4808 = vadd.f32 %v3263, %v4680
        %v4809 = vadd.f32 %v3264, %v4681
        %v4810 = vadd.f32 %v3265, %v4682
        %v4811 = vadd.f32 %v3266, %v4683
        %v4812 = vadd.f32 %v3267, %v4684
        %v4813 = vadd.f32 %v3268, %v4685
        %v4814 = vadd.f32 %v3269, %v4686
        %v4815 = vadd.f32 %v3270, %v4687
        %v4816 = vadd.f32 %v3271, %v4688
        %v4817 = vadd.f32 %v3272, %v4689
        %v4818 = vadd.f32 %v3273, %v4690
        %v4819 = vadd.f32 %v3274, %v4691
        %v4820 = vadd.f32 %v3275, %v4692
        %v4821 = vadd.f32 %v3276, %v4693
        %v4822 = vadd.f32 %v3277, %v4694
        %v4823 = vadd.f32 %v3278, %v4695
        %v4824 = vadd.f32 %v3279, %v4696
        %v4825 = vadd.f32 %v3280, %v4697
        %v4826 = vadd.f32 %v3281, %v4698
        %v4827 = vadd.f32 %v3282, %v4699
        %v4828 = vadd.f32 %v3283, %v4700
        %v4829 = vadd.f32 %v3284, %v4701
        %v4830 = vadd.f32 %v3285, %v4702
        %v4831 = vadd.f32 %v3286, %v4703
        %v4832 = vadd.f32 %v3287, %v4704
        %v4833 = vadd.f32 %v3288, %v4705
        %v4834 = vadd.f32 %v3289, %v4706
        %v4835 = vadd.f32 %v3290, %v4707
        %v4836 = vadd.f32 %v3291, %v4708
        %v4837 = vadd.f32 %v3292, %v4709
        %v4838 = vadd.f32 %v3293, %v4710
        %v4839 = vadd.f32 %v3294, %v4711
        %v4840 = vadd.f32 %v3295, %v4712
        %v4841 = vadd.f32 %v3296, %v4713
        %v4842 = vadd.f32 %v3297, %v4714
        %v4843 = vadd.f32 %v3298, %v4715
        %v4844 = vadd.f32 %v2269, %v4716
        %v4845 = vadd.f32 %v2270, %v4717
        %v4846 = vadd.f32 %v2271, %v4718
        %v4847 = vadd.f32 %v2272, %v4719
        %v4848 = vadd.f32 %v2273, %v4720
        %v4849 = vadd.f32 %v2274, %v4721
        %v4850 = vadd.f32 %v2275, %v4722
        %v4851 = vadd.f32 %v2276, %v4723
        %v4852 = vadd.f32 %v2277, %v4724
        %v4853 = vadd.f32 %v2278, %v4725
        %v4854 = vadd.f32 %v2279, %v4726
        %v4855 = vadd.f32 %v2280, %v4727
        %v4856 = vadd.f32 %v2281, %v4728
        %v4857 = vadd.f32 %v2282, %v4729
        %v4858 = vadd.f32 %v2283, %v4730
        %v4859 = vadd.f32 %v2284, %v4731
        %v4860 = vadd.f32 %v2285, %v4732
        %v4861 = vadd.f32 %v2286, %v4733
        %v4862 = vadd.f32 %v2287, %v4734
        %v4863 = vadd.f32 %v2288, %v4735
        %v4864 = vadd.f32 %v2289, %v4736
        %v4865 = vadd.f32 %v2290, %v4737
        %v4866 = vadd.f32 %v2291, %v4738
        %v4867 = vadd.f32 %v2292, %v4739
        %v4868 = vadd.f32 %v2293, %v4740
        %v4869 = vadd.f32 %v2294, %v4741
        %v4870 = vadd.f32 %v2295, %v4742
        %v4871 = vadd.f32 %v2296, %v4743
        %v4872 = vadd.f32 %v2297, %v4744
        %v4873 = vadd.f32 %v2298, %v4745
        %v4874 = vadd.f32 %v2299, %v4746
        %v4875 = vadd.f32 %v2300, %v4747
        %v4876 = vadd.f32 %v2301, %v4748
        %v4877 = vadd.f32 %v2302, %v4749
        %v4878 = vadd.f32 %v2303, %v4750
        %v4879 = vadd.f32 %v2304, %v4751
        %v4880 = vadd.f32 %v2305, %v4752
        %v4881 = vadd.f32 %v2306, %v4753
        %v4882 = vadd.f32 %v2307, %v4754
        %v4883 = vadd.f32 %v2308, %v4755
        %v4884 = vadd.f32 %v2309, %v4756
        %v4885 = vadd.f32 %v2310, %v4757
        %v4886 = vadd.f32 %v2311, %v4758
        %v4887 = vadd.f32 %v2312, %v4759
        %v4888 = vadd.f32 %v2313, %v4760
        %v4889 = vadd.f32 %v2314, %v4761
        %v4890 = vadd.f32 %v2315, %v4762
        %v4891 = vadd.f32 %v2316, %v4763
        %v4892 = vadd.f32 %v2317, %v4764
        %v4893 = vadd.f32 %v2318, %v4765
        %v4894 = vadd.f32 %v2319, %v4766
        %v4895 = vadd.f32 %v2320, %v4767
        %v4896 = vadd.f32 %v2321, %v4768
        %v4897 = vadd.f32 %v2322, %v4769
        %v4898 = vadd.f32 %v2323, %v4770
        %v4899 = vadd.f32 %v2324, %v4771
        %v4900 = vadd.f32 %v2325, %v4772
        %v4901 = vadd.f32 %v2326, %v4773
        %v4902 = vadd.f32 %v2327, %v4774
        %v4903 = vadd.f32 %v2328, %v4775
        %v4904 = vadd.f32 %v2329, %v4776
        %v4905 = vadd.f32 %v2330, %v4777
        %v4906 = vadd.f32 %v2331, %v4778
        %v4907 = vadd.f32 %v2332, %v4779
        %v4908 = vadd.f32 %v2333, %v4780
        %v4909 = vadd.f32 %v2334, %v4781
        %v4910 = vadd.f32 %v2335, %v4782
        %v4911 = vadd.f32 %v2336, %v4783
        %v4912 = vadd.f32 %v2337, %v4784
        %v4913 = vadd.f32 %v2338, %v4785
        %v4914 = vadd.f32 %v2339, %v4786
        %v4915 = vadd.f32 %v2340, %v4787
        %v4916 = vadd.f32 %v2341, %v4788
        %v4917 = vadd.f32 %v2342, %v4789
        %v4918 = vadd.f32 %v2343, %v4790
        %v4919 = vadd.f32 %v2344, %v4791
        %v4920 = vadd.f32 %v2345, %v4792
        %v4921 = vadd.f32 %v2346, %v4793
        %v4922 = vadd.f32 %v2347, %v4794
        %v4923 = vadd.f32 %v2348, %v4795
        %v4924 = vadd.f32 %v2349, %v4796
        %v4925 = vadd.f32 %v2350, %v4797
        %v4926 = vadd.f32 %v2351, %v4798
        %v4927 = vadd.f32 %v2352, %v4799
        %v4928 = vadd.f32 %v2353, %v4800
        %v4929 = vadd.f32 %v2354, %v4801
        %v4930 = vadd.f32 %v2355, %v4802
        %v4931 = vadd.f32 %v2356, %v4803
        %v4932 = vadd.f32 %v2357, %v4804
        %v4933 = vadd.f32 %v2358, %v4805
        %v4934 = vadd.f32 %v2359, %v4806
        %v4935 = vadd.f32 %v2360, %v4807
        %v4936 = vadd.f32 %v2361, %v4808
        %v4937 = vadd.f32 %v2362, %v4809
        %v4938 = vadd.f32 %v2363, %v4810
        %v4939 = vadd.f32 %v2364, %v4811
        %v4940 = vadd.f32 %v2365, %v4812
        %v4941 = vadd.f32 %v2366, %v4813
        %v4942 = vadd.f32 %v2367, %v4814
        %v4943 = vadd.f32 %v2368, %v4815
        %v4944 = vadd.f32 %v2369, %v4816
        %v4945 = vadd.f32 %v2370, %v4817
        %v4946 = vadd.f32 %v2371, %v4818
        %v4947 = vadd.f32 %v2372, %v4819
        %v4948 = vadd.f32 %v2373, %v4820
        %v4949 = vadd.f32 %v2374, %v4821
        %v4950 = vadd.f32 %v2375, %v4822
        %v4951 = vadd.f32 %v2376, %v4823
        %v4952 = vadd.f32 %v2377, %v4824
        %v4953 = vadd.f32 %v2378, %v4825
        %v4954 = vadd.f32 %v2379, %v4826
        %v4955 = vadd.f32 %v2380, %v4827
        %v4956 = vadd.f32 %v2381, %v4828
        %v4957 = vadd.f32 %v2382, %v4829
        %v4958 = vadd.f32 %v2383, %v4830
        %v4959 = vadd.f32 %v2384, %v4831
        %v4960 = vadd.f32 %v2385, %v4832
        %v4961 = vadd.f32 %v2386, %v4833
        %v4962 = vadd.f32 %v2387, %v4834
        %v4963 = vadd.f32 %v2388, %v4835
        %v4964 = vadd.f32 %v2389, %v4836
        %v4965 = vadd.f32 %v2390, %v4837
        %v4966 = vadd.f32 %v2391, %v4838
        %v4967 = vadd.f32 %v2392, %v4839
        %v4968 = vadd.f32 %v2393, %v4840
        %v4969 = vadd.f32 %v2394, %v4841
        %v4970 = vadd.f32 %v2395, %v4842
        %v4971 = vadd.f32 %v2396, %v4843
        %v4972 = vld [vmem:[%s392] sm:$0xf]
        %v4973 = vld [vmem:[%s392 + $0x4] sm:$0xf]
        %v4974 = vld [vmem:[%s392 + $0x8] sm:$0xf]
        %v4975 = vld [vmem:[%s392 + $0xc] sm:$0xf]
        %v4976 = vld [vmem:[%s392 + $0x10] sm:$0xf]
        %v4977 = vld [vmem:[%s392 + $0x14] sm:$0xf]
        %v4978 = vld [vmem:[%s392 + $0x18] sm:$0xf]
        %v4979 = vld [vmem:[%s392 + $0x1c] sm:$0xf]
        %v4980 = vld [vmem:[%s392 + $0x20] sm:$0xf]
        %v4981 = vld [vmem:[%s392 + $0x24] sm:$0xf]
        %v4982 = vld [vmem:[%s392 + $0x28] sm:$0xf]
        %v4983 = vld [vmem:[%s392 + $0x2c] sm:$0xf]
        %v4984 = vld [vmem:[%s392 + $0x30] sm:$0xf]
        %v4985 = vld [vmem:[%s392 + $0x34] sm:$0xf]
        %v4986 = vld [vmem:[%s392 + $0x38] sm:$0xf]
        %v4987 = vld [vmem:[%s392 + $0x3c] sm:$0xf]
        %v4988 = vld [vmem:[%s392 + $0x40] sm:$0xf]
        %v4989 = vld [vmem:[%s392 + $0x44] sm:$0xf]
        %v4990 = vld [vmem:[%s392 + $0x48] sm:$0xf]
        %v4991 = vld [vmem:[%s392 + $0x4c] sm:$0xf]
        %v4992 = vld [vmem:[%s392 + $0x50] sm:$0xf]
        %v4993 = vld [vmem:[%s392 + $0x54] sm:$0xf]
        %v4994 = vld [vmem:[%s392 + $0x58] sm:$0xf]
        %v4995 = vld [vmem:[%s392 + $0x5c] sm:$0xf]
        %v4996 = vld [vmem:[%s392 + $0x60] sm:$0xf]
        %v4997 = vld [vmem:[%s392 + $0x64] sm:$0xf]
        %v4998 = vld [vmem:[%s392 + $0x68] sm:$0xf]
        %v4999 = vld [vmem:[%s392 + $0x6c] sm:$0xf]
        %v5000 = vld [vmem:[%s392 + $0x70] sm:$0xf]
        %v5001 = vld [vmem:[%s392 + $0x74] sm:$0xf]
        %v5002 = vld [vmem:[%s392 + $0x78] sm:$0xf]
        %v5003 = vld [vmem:[%s392 + $0x7c] sm:$0xf]
        %v5004 = vld [vmem:[%s392 + $0x80] sm:$0xf]
        %v5005 = vld [vmem:[%s392 + $0x84] sm:$0xf]
        %v5006 = vld [vmem:[%s392 + $0x88] sm:$0xf]
        %v5007 = vld [vmem:[%s392 + $0x8c] sm:$0xf]
        %v5008 = vld [vmem:[%s392 + $0x90] sm:$0xf]
        %v5009 = vld [vmem:[%s392 + $0x94] sm:$0xf]
        %v5010 = vld [vmem:[%s392 + $0x98] sm:$0xf]
        %v5011 = vld [vmem:[%s392 + $0x9c] sm:$0xf]
        %v5012 = vld [vmem:[%s392 + $0xa0] sm:$0xf]
        %v5013 = vld [vmem:[%s392 + $0xa4] sm:$0xf]
        %v5014 = vld [vmem:[%s392 + $0xa8] sm:$0xf]
        %v5015 = vld [vmem:[%s392 + $0xac] sm:$0xf]
        %v5016 = vld [vmem:[%s392 + $0xb0] sm:$0xf]
        %v5017 = vld [vmem:[%s392 + $0xb4] sm:$0xf]
        %v5018 = vld [vmem:[%s392 + $0xb8] sm:$0xf]
        %v5019 = vld [vmem:[%s392 + $0xbc] sm:$0xf]
        %v5020 = vld [vmem:[%s392 + $0xc0] sm:$0xf]
        %v5021 = vld [vmem:[%s392 + $0xc4] sm:$0xf]
        %v5022 = vld [vmem:[%s392 + $0xc8] sm:$0xf]
        %v5023 = vld [vmem:[%s392 + $0xcc] sm:$0xf]
        %v5024 = vld [vmem:[%s392 + $0xd0] sm:$0xf]
        %v5025 = vld [vmem:[%s392 + $0xd4] sm:$0xf]
        %v5026 = vld [vmem:[%s392 + $0xd8] sm:$0xf]
        %v5027 = vld [vmem:[%s392 + $0xdc] sm:$0xf]
        %v5028 = vld [vmem:[%s392 + $0xe0] sm:$0xf]
        %v5029 = vld [vmem:[%s392 + $0xe4] sm:$0xf]
        %v5030 = vld [vmem:[%s392 + $0xe8] sm:$0xf]
        %v5031 = vld [vmem:[%s392 + $0xec] sm:$0xf]
        %v5032 = vld [vmem:[%s392 + $0xf0] sm:$0xf]
        %v5033 = vld [vmem:[%s392 + $0xf4] sm:$0xf]
        %v5034 = vld [vmem:[%s392 + $0xf8] sm:$0xf]
        %v5035 = vld [vmem:[%s392 + $0xfc] sm:$0xf]
        %v5036 = vld [vmem:[%s392 + $0x100] sm:$0xf]
        %v5037 = vld [vmem:[%s392 + $0x104] sm:$0xf]
        %v5038 = vld [vmem:[%s392 + $0x108] sm:$0xf]
        %v5039 = vld [vmem:[%s392 + $0x10c] sm:$0xf]
        %v5040 = vld [vmem:[%s392 + $0x110] sm:$0xf]
        %v5041 = vld [vmem:[%s392 + $0x114] sm:$0xf]
        %v5042 = vld [vmem:[%s392 + $0x118] sm:$0xf]
        %v5043 = vld [vmem:[%s392 + $0x11c] sm:$0xf]
        %v5044 = vld [vmem:[%s392 + $0x120] sm:$0xf]
        %v5045 = vld [vmem:[%s392 + $0x124] sm:$0xf]
        %v5046 = vld [vmem:[%s392 + $0x128] sm:$0xf]
        %v5047 = vld [vmem:[%s392 + $0x12c] sm:$0xf]
        %v5048 = vld [vmem:[%s392 + $0x130] sm:$0xf]
        %v5049 = vld [vmem:[%s392 + $0x134] sm:$0xf]
        %v5050 = vld [vmem:[%s392 + $0x138] sm:$0xf]
        %v5051 = vld [vmem:[%s392 + $0x13c] sm:$0xf]
        %v5052 = vld [vmem:[%s392 + $0x140] sm:$0xf]
        %v5053 = vld [vmem:[%s392 + $0x144] sm:$0xf]
        %v5054 = vld [vmem:[%s392 + $0x148] sm:$0xf]
        %v5055 = vld [vmem:[%s392 + $0x14c] sm:$0xf]
        %v5056 = vld [vmem:[%s392 + $0x150] sm:$0xf]
        %v5057 = vld [vmem:[%s392 + $0x154] sm:$0xf]
        %v5058 = vld [vmem:[%s392 + $0x158] sm:$0xf]
        %v5059 = vld [vmem:[%s392 + $0x15c] sm:$0xf]
        %v5060 = vld [vmem:[%s392 + $0x160] sm:$0xf]
        %v5061 = vld [vmem:[%s392 + $0x164] sm:$0xf]
        %v5062 = vld [vmem:[%s392 + $0x168] sm:$0xf]
        %v5063 = vld [vmem:[%s392 + $0x16c] sm:$0xf]
        %v5064 = vld [vmem:[%s392 + $0x170] sm:$0xf]
        %v5065 = vld [vmem:[%s392 + $0x174] sm:$0xf]
        %v5066 = vld [vmem:[%s392 + $0x178] sm:$0xf]
        %v5067 = vld [vmem:[%s392 + $0x17c] sm:$0xf]
        %v5068 = vld [vmem:[%s392 + $0x180] sm:$0xf]
        %v5069 = vld [vmem:[%s392 + $0x184] sm:$0xf]
        %v5070 = vld [vmem:[%s392 + $0x188] sm:$0xf]
        %v5071 = vld [vmem:[%s392 + $0x18c] sm:$0xf]
        %v5072 = vld [vmem:[%s392 + $0x190] sm:$0xf]
        %v5073 = vld [vmem:[%s392 + $0x194] sm:$0xf]
        %v5074 = vld [vmem:[%s392 + $0x198] sm:$0xf]
        %v5075 = vld [vmem:[%s392 + $0x19c] sm:$0xf]
        %v5076 = vld [vmem:[%s392 + $0x1a0] sm:$0xf]
        %v5077 = vld [vmem:[%s392 + $0x1a4] sm:$0xf]
        %v5078 = vld [vmem:[%s392 + $0x1a8] sm:$0xf]
        %v5079 = vld [vmem:[%s392 + $0x1ac] sm:$0xf]
        %v5080 = vld [vmem:[%s392 + $0x1b0] sm:$0xf]
        %v5081 = vld [vmem:[%s392 + $0x1b4] sm:$0xf]
        %v5082 = vld [vmem:[%s392 + $0x1b8] sm:$0xf]
        %v5083 = vld [vmem:[%s392 + $0x1bc] sm:$0xf]
        %v5084 = vld [vmem:[%s392 + $0x1c0] sm:$0xf]
        %v5085 = vld [vmem:[%s392 + $0x1c4] sm:$0xf]
        %v5086 = vld [vmem:[%s392 + $0x1c8] sm:$0xf]
        %v5087 = vld [vmem:[%s392 + $0x1cc] sm:$0xf]
        %v5088 = vld [vmem:[%s392 + $0x1d0] sm:$0xf]
        %v5089 = vld [vmem:[%s392 + $0x1d4] sm:$0xf]
        %v5090 = vld [vmem:[%s392 + $0x1d8] sm:$0xf]
        %v5091 = vld [vmem:[%s392 + $0x1dc] sm:$0xf]
        %v5092 = vld [vmem:[%s392 + $0x1e0] sm:$0xf]
        %v5093 = vld [vmem:[%s392 + $0x1e4] sm:$0xf]
        %v5094 = vld [vmem:[%s392 + $0x1e8] sm:$0xf]
        %v5095 = vld [vmem:[%s392 + $0x1ec] sm:$0xf]
        %v5096 = vld [vmem:[%s392 + $0x1f0] sm:$0xf]
        %v5097 = vld [vmem:[%s392 + $0x1f4] sm:$0xf]
        %v5098 = vld [vmem:[%s392 + $0x1f8] sm:$0xf]
        %v5099 = vld [vmem:[%s392 + $0x1fc] sm:$0xf]
        %v5100 = vunpack.c.l.bf16 %v4972
        %v5101 = vunpack.c.l.bf16 %v4973
        %v5102 = vunpack.c.l.bf16 %v4974
        %v5103 = vunpack.c.l.bf16 %v4975
        %v5104 = vunpack.c.l.bf16 %v4976
        %v5105 = vunpack.c.l.bf16 %v4977
        %v5106 = vunpack.c.l.bf16 %v4978
        %v5107 = vunpack.c.l.bf16 %v4979
        %v5108 = vunpack.c.l.bf16 %v4980
        %v5109 = vunpack.c.l.bf16 %v4981
        %v5110 = vunpack.c.l.bf16 %v4982
        %v5111 = vunpack.c.l.bf16 %v4983
        %v5112 = vunpack.c.l.bf16 %v4984
        %v5113 = vunpack.c.l.bf16 %v4985
        %v5114 = vunpack.c.l.bf16 %v4986
        %v5115 = vunpack.c.l.bf16 %v4987
        %v5116 = vunpack.c.l.bf16 %v4988
        %v5117 = vunpack.c.l.bf16 %v4989
        %v5118 = vunpack.c.l.bf16 %v4990
        %v5119 = vunpack.c.l.bf16 %v4991
        %v5120 = vunpack.c.l.bf16 %v4992
        %v5121 = vunpack.c.l.bf16 %v4993
        %v5122 = vunpack.c.l.bf16 %v4994
        %v5123 = vunpack.c.l.bf16 %v4995
        %v5124 = vunpack.c.l.bf16 %v4996
        %v5125 = vunpack.c.l.bf16 %v4997
        %v5126 = vunpack.c.l.bf16 %v4998
        %v5127 = vunpack.c.l.bf16 %v4999
        %v5128 = vunpack.c.l.bf16 %v5000
        %v5129 = vunpack.c.l.bf16 %v5001
        %v5130 = vunpack.c.l.bf16 %v5002
        %v5131 = vunpack.c.l.bf16 %v5003
        %v5132 = vunpack.c.l.bf16 %v5004
        %v5133 = vunpack.c.l.bf16 %v5005
        %v5134 = vunpack.c.l.bf16 %v5006
        %v5135 = vunpack.c.l.bf16 %v5007
        %v5136 = vunpack.c.l.bf16 %v5008
        %v5137 = vunpack.c.l.bf16 %v5009
        %v5138 = vunpack.c.l.bf16 %v5010
        %v5139 = vunpack.c.l.bf16 %v5011
        %v5140 = vunpack.c.l.bf16 %v5012
        %v5141 = vunpack.c.l.bf16 %v5013
        %v5142 = vunpack.c.l.bf16 %v5014
        %v5143 = vunpack.c.l.bf16 %v5015
        %v5144 = vunpack.c.l.bf16 %v5016
        %v5145 = vunpack.c.l.bf16 %v5017
        %v5146 = vunpack.c.l.bf16 %v5018
        %v5147 = vunpack.c.l.bf16 %v5019
        %v5148 = vunpack.c.l.bf16 %v5020
        %v5149 = vunpack.c.l.bf16 %v5021
        %v5150 = vunpack.c.l.bf16 %v5022
        %v5151 = vunpack.c.l.bf16 %v5023
        %v5152 = vunpack.c.l.bf16 %v5024
        %v5153 = vunpack.c.l.bf16 %v5025
        %v5154 = vunpack.c.l.bf16 %v5026
        %v5155 = vunpack.c.l.bf16 %v5027
        %v5156 = vunpack.c.l.bf16 %v5028
        %v5157 = vunpack.c.l.bf16 %v5029
        %v5158 = vunpack.c.l.bf16 %v5030
        %v5159 = vunpack.c.l.bf16 %v5031
        %v5160 = vunpack.c.l.bf16 %v5032
        %v5161 = vunpack.c.l.bf16 %v5033
        %v5162 = vunpack.c.l.bf16 %v5034
        %v5163 = vunpack.c.l.bf16 %v5035
        %v5164 = vunpack.c.l.bf16 %v5036
        %v5165 = vunpack.c.l.bf16 %v5037
        %v5166 = vunpack.c.l.bf16 %v5038
        %v5167 = vunpack.c.l.bf16 %v5039
        %v5168 = vunpack.c.l.bf16 %v5040
        %v5169 = vunpack.c.l.bf16 %v5041
        %v5170 = vunpack.c.l.bf16 %v5042
        %v5171 = vunpack.c.l.bf16 %v5043
        %v5172 = vunpack.c.l.bf16 %v5044
        %v5173 = vunpack.c.l.bf16 %v5045
        %v5174 = vunpack.c.l.bf16 %v5046
        %v5175 = vunpack.c.l.bf16 %v5047
        %v5176 = vunpack.c.l.bf16 %v5048
        %v5177 = vunpack.c.l.bf16 %v5049
        %v5178 = vunpack.c.l.bf16 %v5050
        %v5179 = vunpack.c.l.bf16 %v5051
        %v5180 = vunpack.c.l.bf16 %v5052
        %v5181 = vunpack.c.l.bf16 %v5053
        %v5182 = vunpack.c.l.bf16 %v5054
        %v5183 = vunpack.c.l.bf16 %v5055
        %v5184 = vunpack.c.l.bf16 %v5056
        %v5185 = vunpack.c.l.bf16 %v5057
        %v5186 = vunpack.c.l.bf16 %v5058
        %v5187 = vunpack.c.l.bf16 %v5059
        %v5188 = vunpack.c.l.bf16 %v5060
        %v5189 = vunpack.c.l.bf16 %v5061
        %v5190 = vunpack.c.l.bf16 %v5062
        %v5191 = vunpack.c.l.bf16 %v5063
        %v5192 = vunpack.c.l.bf16 %v5064
        %v5193 = vunpack.c.l.bf16 %v5065
        %v5194 = vunpack.c.l.bf16 %v5066
        %v5195 = vunpack.c.l.bf16 %v5067
        %v5196 = vunpack.c.l.bf16 %v5068
        %v5197 = vunpack.c.l.bf16 %v5069
        %v5198 = vunpack.c.l.bf16 %v5070
        %v5199 = vunpack.c.l.bf16 %v5071
        %v5200 = vunpack.c.l.bf16 %v5072
        %v5201 = vunpack.c.l.bf16 %v5073
        %v5202 = vunpack.c.l.bf16 %v5074
        %v5203 = vunpack.c.l.bf16 %v5075
        %v5204 = vunpack.c.l.bf16 %v5076
        %v5205 = vunpack.c.l.bf16 %v5077
        %v5206 = vunpack.c.l.bf16 %v5078
        %v5207 = vunpack.c.l.bf16 %v5079
        %v5208 = vunpack.c.l.bf16 %v5080
        %v5209 = vunpack.c.l.bf16 %v5081
        %v5210 = vunpack.c.l.bf16 %v5082
        %v5211 = vunpack.c.l.bf16 %v5083
        %v5212 = vunpack.c.l.bf16 %v5084
        %v5213 = vunpack.c.l.bf16 %v5085
        %v5214 = vunpack.c.l.bf16 %v5086
        %v5215 = vunpack.c.l.bf16 %v5087
        %v5216 = vunpack.c.l.bf16 %v5088
        %v5217 = vunpack.c.l.bf16 %v5089
        %v5218 = vunpack.c.l.bf16 %v5090
        %v5219 = vunpack.c.l.bf16 %v5091
        %v5220 = vunpack.c.l.bf16 %v5092
        %v5221 = vunpack.c.l.bf16 %v5093
        %v5222 = vunpack.c.l.bf16 %v5094
        %v5223 = vunpack.c.l.bf16 %v5095
        %v5224 = vunpack.c.l.bf16 %v5096
        %v5225 = vunpack.c.l.bf16 %v5097
        %v5226 = vunpack.c.l.bf16 %v5098
        %v5227 = vunpack.c.l.bf16 %v5099
        %v5228 = vld [vmem:[#allocation14] sm:$0x1]
        %v5229 = vlaneseq
        %v5230 = vshrl.u32 %v5229, 7
        %v5231 = vsub.s32 0, %v5230
        %v5232 = vrot.slane %v5228, %v5231
        %v5233 = vmul.f32 %v5100, %v5232
        %v5234 = vmul.f32 %v5101, %v5232
        %v5235 = vmul.f32 %v5102, %v5232
        %v5236 = vmul.f32 %v5103, %v5232
        %v5237 = vmul.f32 %v5104, %v5232
        %v5238 = vmul.f32 %v5105, %v5232
        %v5239 = vmul.f32 %v5106, %v5232
        %v5240 = vmul.f32 %v5107, %v5232
        %v5241 = vmul.f32 %v5108, %v5232
        %v5242 = vmul.f32 %v5109, %v5232
        %v5243 = vmul.f32 %v5110, %v5232
        %v5244 = vmul.f32 %v5111, %v5232
        %v5245 = vmul.f32 %v5112, %v5232
        %v5246 = vmul.f32 %v5113, %v5232
        %v5247 = vmul.f32 %v5114, %v5232
        %v5248 = vmul.f32 %v5115, %v5232
        %v5249 = vmul.f32 %v5116, %v5232
        %v5250 = vmul.f32 %v5117, %v5232
        %v5251 = vmul.f32 %v5118, %v5232
        %v5252 = vmul.f32 %v5119, %v5232
        %v5253 = vmul.f32 %v5120, %v5232
        %v5254 = vmul.f32 %v5121, %v5232
        %v5255 = vmul.f32 %v5122, %v5232
        %v5256 = vmul.f32 %v5123, %v5232
        %v5257 = vmul.f32 %v5124, %v5232
        %v5258 = vmul.f32 %v5125, %v5232
        %v5259 = vmul.f32 %v5126, %v5232
        %v5260 = vmul.f32 %v5127, %v5232
        %v5261 = vmul.f32 %v5128, %v5232
        %v5262 = vmul.f32 %v5129, %v5232
        %v5263 = vmul.f32 %v5130, %v5232
        %v5264 = vmul.f32 %v5131, %v5232
        %v5265 = vmul.f32 %v5132, %v5232
        %v5266 = vmul.f32 %v5133, %v5232
        %v5267 = vmul.f32 %v5134, %v5232
        %v5268 = vmul.f32 %v5135, %v5232
        %v5269 = vmul.f32 %v5136, %v5232
        %v5270 = vmul.f32 %v5137, %v5232
        %v5271 = vmul.f32 %v5138, %v5232
        %v5272 = vmul.f32 %v5139, %v5232
        %v5273 = vmul.f32 %v5140, %v5232
        %v5274 = vmul.f32 %v5141, %v5232
        %v5275 = vmul.f32 %v5142, %v5232
        %v5276 = vmul.f32 %v5143, %v5232
        %v5277 = vmul.f32 %v5144, %v5232
        %v5278 = vmul.f32 %v5145, %v5232
        %v5279 = vmul.f32 %v5146, %v5232
        %v5280 = vmul.f32 %v5147, %v5232
        %v5281 = vmul.f32 %v5148, %v5232
        %v5282 = vmul.f32 %v5149, %v5232
        %v5283 = vmul.f32 %v5150, %v5232
        %v5284 = vmul.f32 %v5151, %v5232
        %v5285 = vmul.f32 %v5152, %v5232
        %v5286 = vmul.f32 %v5153, %v5232
        %v5287 = vmul.f32 %v5154, %v5232
        %v5288 = vmul.f32 %v5155, %v5232
        %v5289 = vmul.f32 %v5156, %v5232
        %v5290 = vmul.f32 %v5157, %v5232
        %v5291 = vmul.f32 %v5158, %v5232
        %v5292 = vmul.f32 %v5159, %v5232
        %v5293 = vmul.f32 %v5160, %v5232
        %v5294 = vmul.f32 %v5161, %v5232
        %v5295 = vmul.f32 %v5162, %v5232
        %v5296 = vmul.f32 %v5163, %v5232
        %v5297 = vmul.f32 %v5164, %v5232
        %v5298 = vmul.f32 %v5165, %v5232
        %v5299 = vmul.f32 %v5166, %v5232
        %v5300 = vmul.f32 %v5167, %v5232
        %v5301 = vmul.f32 %v5168, %v5232
        %v5302 = vmul.f32 %v5169, %v5232
        %v5303 = vmul.f32 %v5170, %v5232
        %v5304 = vmul.f32 %v5171, %v5232
        %v5305 = vmul.f32 %v5172, %v5232
        %v5306 = vmul.f32 %v5173, %v5232
        %v5307 = vmul.f32 %v5174, %v5232
        %v5308 = vmul.f32 %v5175, %v5232
        %v5309 = vmul.f32 %v5176, %v5232
        %v5310 = vmul.f32 %v5177, %v5232
        %v5311 = vmul.f32 %v5178, %v5232
        %v5312 = vmul.f32 %v5179, %v5232
        %v5313 = vmul.f32 %v5180, %v5232
        %v5314 = vmul.f32 %v5181, %v5232
        %v5315 = vmul.f32 %v5182, %v5232
        %v5316 = vmul.f32 %v5183, %v5232
        %v5317 = vmul.f32 %v5184, %v5232
        %v5318 = vmul.f32 %v5185, %v5232
        %v5319 = vmul.f32 %v5186, %v5232
        %v5320 = vmul.f32 %v5187, %v5232
        %v5321 = vmul.f32 %v5188, %v5232
        %v5322 = vmul.f32 %v5189, %v5232
        %v5323 = vmul.f32 %v5190, %v5232
        %v5324 = vmul.f32 %v5191, %v5232
        %v5325 = vmul.f32 %v5192, %v5232
        %v5326 = vmul.f32 %v5193, %v5232
        %v5327 = vmul.f32 %v5194, %v5232
        %v5328 = vmul.f32 %v5195, %v5232
        %v5329 = vmul.f32 %v5196, %v5232
        %v5330 = vmul.f32 %v5197, %v5232
        %v5331 = vmul.f32 %v5198, %v5232
        %v5332 = vmul.f32 %v5199, %v5232
        %v5333 = vmul.f32 %v5200, %v5232
        %v5334 = vmul.f32 %v5201, %v5232
        %v5335 = vmul.f32 %v5202, %v5232
        %v5336 = vmul.f32 %v5203, %v5232
        %v5337 = vmul.f32 %v5204, %v5232
        %v5338 = vmul.f32 %v5205, %v5232
        %v5339 = vmul.f32 %v5206, %v5232
        %v5340 = vmul.f32 %v5207, %v5232
        %v5341 = vmul.f32 %v5208, %v5232
        %v5342 = vmul.f32 %v5209, %v5232
        %v5343 = vmul.f32 %v5210, %v5232
        %v5344 = vmul.f32 %v5211, %v5232
        %v5345 = vmul.f32 %v5212, %v5232
        %v5346 = vmul.f32 %v5213, %v5232
        %v5347 = vmul.f32 %v5214, %v5232
        %v5348 = vmul.f32 %v5215, %v5232
        %v5349 = vmul.f32 %v5216, %v5232
        %v5350 = vmul.f32 %v5217, %v5232
        %v5351 = vmul.f32 %v5218, %v5232
        %v5352 = vmul.f32 %v5219, %v5232
        %v5353 = vmul.f32 %v5220, %v5232
        %v5354 = vmul.f32 %v5221, %v5232
        %v5355 = vmul.f32 %v5222, %v5232
        %v5356 = vmul.f32 %v5223, %v5232
        %v5357 = vmul.f32 %v5224, %v5232
        %v5358 = vmul.f32 %v5225, %v5232
        %v5359 = vmul.f32 %v5226, %v5232
        %v5360 = vmul.f32 %v5227, %v5232
        %5361 = vadd.xlane.f32.xlu0 %v5233
        %v5362 = vpop.xlane.xlu0 %5361
        %5363 = vadd.xlane.f32.xlu0 %v5234
        %v5364 = vpop.xlane.xlu0 %5363
        %5365 = vadd.xlane.f32.xlu0 %v5235
        %v5366 = vpop.xlane.xlu0 %5365
        %5367 = vadd.xlane.f32.xlu0 %v5236
        %v5368 = vpop.xlane.xlu0 %5367
        %5369 = vadd.xlane.f32.xlu0 %v5237
        %v5370 = vpop.xlane.xlu0 %5369
        %5371 = vadd.xlane.f32.xlu0 %v5238
        %v5372 = vpop.xlane.xlu0 %5371
        %5373 = vadd.xlane.f32.xlu0 %v5239
        %v5374 = vpop.xlane.xlu0 %5373
        %5375 = vadd.xlane.f32.xlu0 %v5240
        %v5376 = vpop.xlane.xlu0 %5375
        %5377 = vadd.xlane.f32.xlu0 %v5241
        %v5378 = vpop.xlane.xlu0 %5377
        %5379 = vadd.xlane.f32.xlu0 %v5242
        %v5380 = vpop.xlane.xlu0 %5379
        %5381 = vadd.xlane.f32.xlu0 %v5243
        %v5382 = vpop.xlane.xlu0 %5381
        %5383 = vadd.xlane.f32.xlu0 %v5244
        %v5384 = vpop.xlane.xlu0 %5383
        %5385 = vadd.xlane.f32.xlu0 %v5245
        %v5386 = vpop.xlane.xlu0 %5385
        %5387 = vadd.xlane.f32.xlu0 %v5246
        %v5388 = vpop.xlane.xlu0 %5387
        %5389 = vadd.xlane.f32.xlu0 %v5247
        %v5390 = vpop.xlane.xlu0 %5389
        %5391 = vadd.xlane.f32.xlu0 %v5248
        %v5392 = vpop.xlane.xlu0 %5391
        %5393 = vadd.xlane.f32.xlu0 %v5249
        %v5394 = vpop.xlane.xlu0 %5393
        %5395 = vadd.xlane.f32.xlu0 %v5250
        %v5396 = vpop.xlane.xlu0 %5395
        %5397 = vadd.xlane.f32.xlu0 %v5251
        %v5398 = vpop.xlane.xlu0 %5397
        %5399 = vadd.xlane.f32.xlu0 %v5252
        %v5400 = vpop.xlane.xlu0 %5399
        %5401 = vadd.xlane.f32.xlu0 %v5253
        %v5402 = vpop.xlane.xlu0 %5401
        %5403 = vadd.xlane.f32.xlu0 %v5254
        %v5404 = vpop.xlane.xlu0 %5403
        %5405 = vadd.xlane.f32.xlu0 %v5255
        %v5406 = vpop.xlane.xlu0 %5405
        %5407 = vadd.xlane.f32.xlu0 %v5256
        %v5408 = vpop.xlane.xlu0 %5407
        %5409 = vadd.xlane.f32.xlu0 %v5257
        %v5410 = vpop.xlane.xlu0 %5409
        %5411 = vadd.xlane.f32.xlu0 %v5258
        %v5412 = vpop.xlane.xlu0 %5411
        %5413 = vadd.xlane.f32.xlu0 %v5259
        %v5414 = vpop.xlane.xlu0 %5413
        %5415 = vadd.xlane.f32.xlu0 %v5260
        %v5416 = vpop.xlane.xlu0 %5415
        %5417 = vadd.xlane.f32.xlu0 %v5261
        %v5418 = vpop.xlane.xlu0 %5417
        %5419 = vadd.xlane.f32.xlu0 %v5262
        %v5420 = vpop.xlane.xlu0 %5419
        %5421 = vadd.xlane.f32.xlu0 %v5263
        %v5422 = vpop.xlane.xlu0 %5421
        %5423 = vadd.xlane.f32.xlu0 %v5264
        %v5424 = vpop.xlane.xlu0 %5423
        %5425 = vadd.xlane.f32.xlu0 %v5265
        %v5426 = vpop.xlane.xlu0 %5425
        %5427 = vadd.xlane.f32.xlu0 %v5266
        %v5428 = vpop.xlane.xlu0 %5427
        %5429 = vadd.xlane.f32.xlu0 %v5267
        %v5430 = vpop.xlane.xlu0 %5429
        %5431 = vadd.xlane.f32.xlu0 %v5268
        %v5432 = vpop.xlane.xlu0 %5431
        %5433 = vadd.xlane.f32.xlu0 %v5269
        %v5434 = vpop.xlane.xlu0 %5433
        %5435 = vadd.xlane.f32.xlu0 %v5270
        %v5436 = vpop.xlane.xlu0 %5435
        %5437 = vadd.xlane.f32.xlu0 %v5271
        %v5438 = vpop.xlane.xlu0 %5437
        %5439 = vadd.xlane.f32.xlu0 %v5272
        %v5440 = vpop.xlane.xlu0 %5439
        %5441 = vadd.xlane.f32.xlu0 %v5273
        %v5442 = vpop.xlane.xlu0 %5441
        %5443 = vadd.xlane.f32.xlu0 %v5274
        %v5444 = vpop.xlane.xlu0 %5443
        %5445 = vadd.xlane.f32.xlu0 %v5275
        %v5446 = vpop.xlane.xlu0 %5445
        %5447 = vadd.xlane.f32.xlu0 %v5276
        %v5448 = vpop.xlane.xlu0 %5447
        %5449 = vadd.xlane.f32.xlu0 %v5277
        %v5450 = vpop.xlane.xlu0 %5449
        %5451 = vadd.xlane.f32.xlu0 %v5278
        %v5452 = vpop.xlane.xlu0 %5451
        %5453 = vadd.xlane.f32.xlu0 %v5279
        %v5454 = vpop.xlane.xlu0 %5453
        %5455 = vadd.xlane.f32.xlu0 %v5280
        %v5456 = vpop.xlane.xlu0 %5455
        %5457 = vadd.xlane.f32.xlu0 %v5281
        %v5458 = vpop.xlane.xlu0 %5457
        %5459 = vadd.xlane.f32.xlu0 %v5282
        %v5460 = vpop.xlane.xlu0 %5459
        %5461 = vadd.xlane.f32.xlu0 %v5283
        %v5462 = vpop.xlane.xlu0 %5461
        %5463 = vadd.xlane.f32.xlu0 %v5284
        %v5464 = vpop.xlane.xlu0 %5463
        %5465 = vadd.xlane.f32.xlu0 %v5285
        %v5466 = vpop.xlane.xlu0 %5465
        %5467 = vadd.xlane.f32.xlu0 %v5286
        %v5468 = vpop.xlane.xlu0 %5467
        %5469 = vadd.xlane.f32.xlu0 %v5287
        %v5470 = vpop.xlane.xlu0 %5469
        %5471 = vadd.xlane.f32.xlu0 %v5288
        %v5472 = vpop.xlane.xlu0 %5471
        %5473 = vadd.xlane.f32.xlu0 %v5289
        %v5474 = vpop.xlane.xlu0 %5473
        %5475 = vadd.xlane.f32.xlu0 %v5290
        %v5476 = vpop.xlane.xlu0 %5475
        %5477 = vadd.xlane.f32.xlu0 %v5291
        %v5478 = vpop.xlane.xlu0 %5477
        %5479 = vadd.xlane.f32.xlu0 %v5292
        %v5480 = vpop.xlane.xlu0 %5479
        %5481 = vadd.xlane.f32.xlu0 %v5293
        %v5482 = vpop.xlane.xlu0 %5481
        %5483 = vadd.xlane.f32.xlu0 %v5294
        %v5484 = vpop.xlane.xlu0 %5483
        %5485 = vadd.xlane.f32.xlu0 %v5295
        %v5486 = vpop.xlane.xlu0 %5485
        %5487 = vadd.xlane.f32.xlu0 %v5296
        %v5488 = vpop.xlane.xlu0 %5487
        %5489 = vadd.xlane.f32.xlu0 %v5297
        %v5490 = vpop.xlane.xlu0 %5489
        %5491 = vadd.xlane.f32.xlu0 %v5298
        %v5492 = vpop.xlane.xlu0 %5491
        %5493 = vadd.xlane.f32.xlu0 %v5299
        %v5494 = vpop.xlane.xlu0 %5493
        %5495 = vadd.xlane.f32.xlu0 %v5300
        %v5496 = vpop.xlane.xlu0 %5495
        %5497 = vadd.xlane.f32.xlu0 %v5301
        %v5498 = vpop.xlane.xlu0 %5497
        %5499 = vadd.xlane.f32.xlu0 %v5302
        %v5500 = vpop.xlane.xlu0 %5499
        %5501 = vadd.xlane.f32.xlu0 %v5303
        %v5502 = vpop.xlane.xlu0 %5501
        %5503 = vadd.xlane.f32.xlu0 %v5304
        %v5504 = vpop.xlane.xlu0 %5503
        %5505 = vadd.xlane.f32.xlu0 %v5305
        %v5506 = vpop.xlane.xlu0 %5505
        %5507 = vadd.xlane.f32.xlu0 %v5306
        %v5508 = vpop.xlane.xlu0 %5507
        %5509 = vadd.xlane.f32.xlu0 %v5307
        %v5510 = vpop.xlane.xlu0 %5509
        %5511 = vadd.xlane.f32.xlu0 %v5308
        %v5512 = vpop.xlane.xlu0 %5511
        %5513 = vadd.xlane.f32.xlu0 %v5309
        %v5514 = vpop.xlane.xlu0 %5513
        %5515 = vadd.xlane.f32.xlu0 %v5310
        %v5516 = vpop.xlane.xlu0 %5515
        %5517 = vadd.xlane.f32.xlu0 %v5311
        %v5518 = vpop.xlane.xlu0 %5517
        %5519 = vadd.xlane.f32.xlu0 %v5312
        %v5520 = vpop.xlane.xlu0 %5519
        %5521 = vadd.xlane.f32.xlu0 %v5313
        %v5522 = vpop.xlane.xlu0 %5521
        %5523 = vadd.xlane.f32.xlu0 %v5314
        %v5524 = vpop.xlane.xlu0 %5523
        %5525 = vadd.xlane.f32.xlu0 %v5315
        %v5526 = vpop.xlane.xlu0 %5525
        %5527 = vadd.xlane.f32.xlu0 %v5316
        %v5528 = vpop.xlane.xlu0 %5527
        %5529 = vadd.xlane.f32.xlu0 %v5317
        %v5530 = vpop.xlane.xlu0 %5529
        %5531 = vadd.xlane.f32.xlu0 %v5318
        %v5532 = vpop.xlane.xlu0 %5531
        %5533 = vadd.xlane.f32.xlu0 %v5319
        %v5534 = vpop.xlane.xlu0 %5533
        %5535 = vadd.xlane.f32.xlu0 %v5320
        %v5536 = vpop.xlane.xlu0 %5535
        %5537 = vadd.xlane.f32.xlu0 %v5321
        %v5538 = vpop.xlane.xlu0 %5537
        %5539 = vadd.xlane.f32.xlu0 %v5322
        %v5540 = vpop.xlane.xlu0 %5539
        %5541 = vadd.xlane.f32.xlu0 %v5323
        %v5542 = vpop.xlane.xlu0 %5541
        %5543 = vadd.xlane.f32.xlu0 %v5324
        %v5544 = vpop.xlane.xlu0 %5543
        %5545 = vadd.xlane.f32.xlu0 %v5325
        %v5546 = vpop.xlane.xlu0 %5545
        %5547 = vadd.xlane.f32.xlu0 %v5326
        %v5548 = vpop.xlane.xlu0 %5547
        %5549 = vadd.xlane.f32.xlu0 %v5327
        %v5550 = vpop.xlane.xlu0 %5549
        %5551 = vadd.xlane.f32.xlu0 %v5328
        %v5552 = vpop.xlane.xlu0 %5551
        %5553 = vadd.xlane.f32.xlu0 %v5329
        %v5554 = vpop.xlane.xlu0 %5553
        %5555 = vadd.xlane.f32.xlu0 %v5330
        %v5556 = vpop.xlane.xlu0 %5555
        %5557 = vadd.xlane.f32.xlu0 %v5331
        %v5558 = vpop.xlane.xlu0 %5557
        %5559 = vadd.xlane.f32.xlu0 %v5332
        %v5560 = vpop.xlane.xlu0 %5559
        %5561 = vadd.xlane.f32.xlu0 %v5333
        %v5562 = vpop.xlane.xlu0 %5561
        %5563 = vadd.xlane.f32.xlu0 %v5334
        %v5564 = vpop.xlane.xlu0 %5563
        %5565 = vadd.xlane.f32.xlu0 %v5335
        %v5566 = vpop.xlane.xlu0 %5565
        %5567 = vadd.xlane.f32.xlu0 %v5336
        %v5568 = vpop.xlane.xlu0 %5567
        %5569 = vadd.xlane.f32.xlu0 %v5337
        %v5570 = vpop.xlane.xlu0 %5569
        %5571 = vadd.xlane.f32.xlu0 %v5338
        %v5572 = vpop.xlane.xlu0 %5571
        %5573 = vadd.xlane.f32.xlu0 %v5339
        %v5574 = vpop.xlane.xlu0 %5573
        %5575 = vadd.xlane.f32.xlu0 %v5340
        %v5576 = vpop.xlane.xlu0 %5575
        %5577 = vadd.xlane.f32.xlu0 %v5341
        %v5578 = vpop.xlane.xlu0 %5577
        %5579 = vadd.xlane.f32.xlu0 %v5342
        %v5580 = vpop.xlane.xlu0 %5579
        %5581 = vadd.xlane.f32.xlu0 %v5343
        %v5582 = vpop.xlane.xlu0 %5581
        %5583 = vadd.xlane.f32.xlu0 %v5344
        %v5584 = vpop.xlane.xlu0 %5583
        %5585 = vadd.xlane.f32.xlu0 %v5345
        %v5586 = vpop.xlane.xlu0 %5585
        %5587 = vadd.xlane.f32.xlu0 %v5346
        %v5588 = vpop.xlane.xlu0 %5587
        %5589 = vadd.xlane.f32.xlu0 %v5347
        %v5590 = vpop.xlane.xlu0 %5589
        %5591 = vadd.xlane.f32.xlu0 %v5348
        %v5592 = vpop.xlane.xlu0 %5591
        %5593 = vadd.xlane.f32.xlu0 %v5349
        %v5594 = vpop.xlane.xlu0 %5593
        %5595 = vadd.xlane.f32.xlu0 %v5350
        %v5596 = vpop.xlane.xlu0 %5595
        %5597 = vadd.xlane.f32.xlu0 %v5351
        %v5598 = vpop.xlane.xlu0 %5597
        %5599 = vadd.xlane.f32.xlu0 %v5352
        %v5600 = vpop.xlane.xlu0 %5599
        %5601 = vadd.xlane.f32.xlu0 %v5353
        %v5602 = vpop.xlane.xlu0 %5601
        %5603 = vadd.xlane.f32.xlu0 %v5354
        %v5604 = vpop.xlane.xlu0 %5603
        %5605 = vadd.xlane.f32.xlu0 %v5355
        %v5606 = vpop.xlane.xlu0 %5605
        %5607 = vadd.xlane.f32.xlu0 %v5356
        %v5608 = vpop.xlane.xlu0 %5607
        %5609 = vadd.xlane.f32.xlu0 %v5357
        %v5610 = vpop.xlane.xlu0 %5609
        %5611 = vadd.xlane.f32.xlu0 %v5358
        %v5612 = vpop.xlane.xlu0 %5611
        %5613 = vadd.xlane.f32.xlu0 %v5359
        %v5614 = vpop.xlane.xlu0 %5613
        %5615 = vadd.xlane.f32.xlu0 %v5360
        %v5616 = vpop.xlane.xlu0 %5615
        %v5617 = vld [vmem:[#allocation14 + $0x1] sm:$0x1]
        %v5618 = vlaneseq
        %v5619 = vshrl.u32 %v5618, 7
        %v5620 = vsub.s32 0, %v5619
        %v5621 = vrot.slane %v5617, %v5620
        %v5622 = vmul.f32 %v4844, %v5621
        %v5623 = vmul.f32 %v4845, %v5621
        %v5624 = vmul.f32 %v4846, %v5621
        %v5625 = vmul.f32 %v4847, %v5621
        %v5626 = vmul.f32 %v4848, %v5621
        %v5627 = vmul.f32 %v4849, %v5621
        %v5628 = vmul.f32 %v4850, %v5621
        %v5629 = vmul.f32 %v4851, %v5621
        %v5630 = vmul.f32 %v4852, %v5621
        %v5631 = vmul.f32 %v4853, %v5621
        %v5632 = vmul.f32 %v4854, %v5621
        %v5633 = vmul.f32 %v4855, %v5621
        %v5634 = vmul.f32 %v4856, %v5621
        %v5635 = vmul.f32 %v4857, %v5621
        %v5636 = vmul.f32 %v4858, %v5621
        %v5637 = vmul.f32 %v4859, %v5621
        %v5638 = vmul.f32 %v4860, %v5621
        %v5639 = vmul.f32 %v4861, %v5621
        %v5640 = vmul.f32 %v4862, %v5621
        %v5641 = vmul.f32 %v4863, %v5621
        %v5642 = vmul.f32 %v4864, %v5621
        %v5643 = vmul.f32 %v4865, %v5621
        %v5644 = vmul.f32 %v4866, %v5621
        %v5645 = vmul.f32 %v4867, %v5621
        %v5646 = vmul.f32 %v4868, %v5621
        %v5647 = vmul.f32 %v4869, %v5621
        %v5648 = vmul.f32 %v4870, %v5621
        %v5649 = vmul.f32 %v4871, %v5621
        %v5650 = vmul.f32 %v4872, %v5621
        %v5651 = vmul.f32 %v4873, %v5621
        %v5652 = vmul.f32 %v4874, %v5621
        %v5653 = vmul.f32 %v4875, %v5621
        %v5654 = vmul.f32 %v4876, %v5621
        %v5655 = vmul.f32 %v4877, %v5621
        %v5656 = vmul.f32 %v4878, %v5621
        %v5657 = vmul.f32 %v4879, %v5621
        %v5658 = vmul.f32 %v4880, %v5621
        %v5659 = vmul.f32 %v4881, %v5621
        %v5660 = vmul.f32 %v4882, %v5621
        %v5661 = vmul.f32 %v4883, %v5621
        %v5662 = vmul.f32 %v4884, %v5621
        %v5663 = vmul.f32 %v4885, %v5621
        %v5664 = vmul.f32 %v4886, %v5621
        %v5665 = vmul.f32 %v4887, %v5621
        %v5666 = vmul.f32 %v4888, %v5621
        %v5667 = vmul.f32 %v4889, %v5621
        %v5668 = vmul.f32 %v4890, %v5621
        %v5669 = vmul.f32 %v4891, %v5621
        %v5670 = vmul.f32 %v4892, %v5621
        %v5671 = vmul.f32 %v4893, %v5621
        %v5672 = vmul.f32 %v4894, %v5621
        %v5673 = vmul.f32 %v4895, %v5621
        %v5674 = vmul.f32 %v4896, %v5621
        %v5675 = vmul.f32 %v4897, %v5621
        %v5676 = vmul.f32 %v4898, %v5621
        %v5677 = vmul.f32 %v4899, %v5621
        %v5678 = vmul.f32 %v4900, %v5621
        %v5679 = vmul.f32 %v4901, %v5621
        %v5680 = vmul.f32 %v4902, %v5621
        %v5681 = vmul.f32 %v4903, %v5621
        %v5682 = vmul.f32 %v4904, %v5621
        %v5683 = vmul.f32 %v4905, %v5621
        %v5684 = vmul.f32 %v4906, %v5621
        %v5685 = vmul.f32 %v4907, %v5621
        %v5686 = vmul.f32 %v4908, %v5621
        %v5687 = vmul.f32 %v4909, %v5621
        %v5688 = vmul.f32 %v4910, %v5621
        %v5689 = vmul.f32 %v4911, %v5621
        %v5690 = vmul.f32 %v4912, %v5621
        %v5691 = vmul.f32 %v4913, %v5621
        %v5692 = vmul.f32 %v4914, %v5621
        %v5693 = vmul.f32 %v4915, %v5621
        %v5694 = vmul.f32 %v4916, %v5621
        %v5695 = vmul.f32 %v4917, %v5621
        %v5696 = vmul.f32 %v4918, %v5621
        %v5697 = vmul.f32 %v4919, %v5621
        %v5698 = vmul.f32 %v4920, %v5621
        %v5699 = vmul.f32 %v4921, %v5621
        %v5700 = vmul.f32 %v4922, %v5621
        %v5701 = vmul.f32 %v4923, %v5621
        %v5702 = vmul.f32 %v4924, %v5621
        %v5703 = vmul.f32 %v4925, %v5621
        %v5704 = vmul.f32 %v4926, %v5621
        %v5705 = vmul.f32 %v4927, %v5621
        %v5706 = vmul.f32 %v4928, %v5621
        %v5707 = vmul.f32 %v4929, %v5621
        %v5708 = vmul.f32 %v4930, %v5621
        %v5709 = vmul.f32 %v4931, %v5621
        %v5710 = vmul.f32 %v4932, %v5621
        %v5711 = vmul.f32 %v4933, %v5621
        %v5712 = vmul.f32 %v4934, %v5621
        %v5713 = vmul.f32 %v4935, %v5621
        %v5714 = vmul.f32 %v4936, %v5621
        %v5715 = vmul.f32 %v4937, %v5621
        %v5716 = vmul.f32 %v4938, %v5621
        %v5717 = vmul.f32 %v4939, %v5621
        %v5718 = vmul.f32 %v4940, %v5621
        %v5719 = vmul.f32 %v4941, %v5621
        %v5720 = vmul.f32 %v4942, %v5621
        %v5721 = vmul.f32 %v4943, %v5621
        %v5722 = vmul.f32 %v4944, %v5621
        %v5723 = vmul.f32 %v4945, %v5621
        %v5724 = vmul.f32 %v4946, %v5621
        %v5725 = vmul.f32 %v4947, %v5621
        %v5726 = vmul.f32 %v4948, %v5621
        %v5727 = vmul.f32 %v4949, %v5621
        %v5728 = vmul.f32 %v4950, %v5621
        %v5729 = vmul.f32 %v4951, %v5621
        %v5730 = vmul.f32 %v4952, %v5621
        %v5731 = vmul.f32 %v4953, %v5621
        %v5732 = vmul.f32 %v4954, %v5621
        %v5733 = vmul.f32 %v4955, %v5621
        %v5734 = vmul.f32 %v4956, %v5621
        %v5735 = vmul.f32 %v4957, %v5621
        %v5736 = vmul.f32 %v4958, %v5621
        %v5737 = vmul.f32 %v4959, %v5621
        %v5738 = vmul.f32 %v4960, %v5621
        %v5739 = vmul.f32 %v4961, %v5621
        %v5740 = vmul.f32 %v4962, %v5621
        %v5741 = vmul.f32 %v4963, %v5621
        %v5742 = vmul.f32 %v4964, %v5621
        %v5743 = vmul.f32 %v4965, %v5621
        %v5744 = vmul.f32 %v4966, %v5621
        %v5745 = vmul.f32 %v4967, %v5621
        %v5746 = vmul.f32 %v4968, %v5621
        %v5747 = vmul.f32 %v4969, %v5621
        %v5748 = vmul.f32 %v4970, %v5621
        %v5749 = vmul.f32 %v4971, %v5621
        %5750 = vadd.xlane.f32.xlu0 %v5622
        %v5751 = vpop.xlane.xlu0 %5750
        %5752 = vadd.xlane.f32.xlu0 %v5623
        %v5753 = vpop.xlane.xlu0 %5752
        %5754 = vadd.xlane.f32.xlu0 %v5624
        %v5755 = vpop.xlane.xlu0 %5754
        %5756 = vadd.xlane.f32.xlu0 %v5625
        %v5757 = vpop.xlane.xlu0 %5756
        %5758 = vadd.xlane.f32.xlu0 %v5626
        %v5759 = vpop.xlane.xlu0 %5758
        %5760 = vadd.xlane.f32.xlu0 %v5627
        %v5761 = vpop.xlane.xlu0 %5760
        %5762 = vadd.xlane.f32.xlu0 %v5628
        %v5763 = vpop.xlane.xlu0 %5762
        %5764 = vadd.xlane.f32.xlu0 %v5629
        %v5765 = vpop.xlane.xlu0 %5764
        %5766 = vadd.xlane.f32.xlu0 %v5630
        %v5767 = vpop.xlane.xlu0 %5766
        %5768 = vadd.xlane.f32.xlu0 %v5631
        %v5769 = vpop.xlane.xlu0 %5768
        %5770 = vadd.xlane.f32.xlu0 %v5632
        %v5771 = vpop.xlane.xlu0 %5770
        %5772 = vadd.xlane.f32.xlu0 %v5633
        %v5773 = vpop.xlane.xlu0 %5772
        %5774 = vadd.xlane.f32.xlu0 %v5634
        %v5775 = vpop.xlane.xlu0 %5774
        %5776 = vadd.xlane.f32.xlu0 %v5635
        %v5777 = vpop.xlane.xlu0 %5776
        %5778 = vadd.xlane.f32.xlu0 %v5636
        %v5779 = vpop.xlane.xlu0 %5778
        %5780 = vadd.xlane.f32.xlu0 %v5637
        %v5781 = vpop.xlane.xlu0 %5780
        %5782 = vadd.xlane.f32.xlu0 %v5638
        %v5783 = vpop.xlane.xlu0 %5782
        %5784 = vadd.xlane.f32.xlu0 %v5639
        %v5785 = vpop.xlane.xlu0 %5784
        %5786 = vadd.xlane.f32.xlu0 %v5640
        %v5787 = vpop.xlane.xlu0 %5786
        %5788 = vadd.xlane.f32.xlu0 %v5641
        %v5789 = vpop.xlane.xlu0 %5788
        %5790 = vadd.xlane.f32.xlu0 %v5642
        %v5791 = vpop.xlane.xlu0 %5790
        %5792 = vadd.xlane.f32.xlu0 %v5643
        %v5793 = vpop.xlane.xlu0 %5792
        %5794 = vadd.xlane.f32.xlu0 %v5644
        %v5795 = vpop.xlane.xlu0 %5794
        %5796 = vadd.xlane.f32.xlu0 %v5645
        %v5797 = vpop.xlane.xlu0 %5796
        %5798 = vadd.xlane.f32.xlu0 %v5646
        %v5799 = vpop.xlane.xlu0 %5798
        %5800 = vadd.xlane.f32.xlu0 %v5647
        %v5801 = vpop.xlane.xlu0 %5800
        %5802 = vadd.xlane.f32.xlu0 %v5648
        %v5803 = vpop.xlane.xlu0 %5802
        %5804 = vadd.xlane.f32.xlu0 %v5649
        %v5805 = vpop.xlane.xlu0 %5804
        %5806 = vadd.xlane.f32.xlu0 %v5650
        %v5807 = vpop.xlane.xlu0 %5806
        %5808 = vadd.xlane.f32.xlu0 %v5651
        %v5809 = vpop.xlane.xlu0 %5808
        %5810 = vadd.xlane.f32.xlu0 %v5652
        %v5811 = vpop.xlane.xlu0 %5810
        %5812 = vadd.xlane.f32.xlu0 %v5653
        %v5813 = vpop.xlane.xlu0 %5812
        %5814 = vadd.xlane.f32.xlu0 %v5654
        %v5815 = vpop.xlane.xlu0 %5814
        %5816 = vadd.xlane.f32.xlu0 %v5655
        %v5817 = vpop.xlane.xlu0 %5816
        %5818 = vadd.xlane.f32.xlu0 %v5656
        %v5819 = vpop.xlane.xlu0 %5818
        %5820 = vadd.xlane.f32.xlu0 %v5657
        %v5821 = vpop.xlane.xlu0 %5820
        %5822 = vadd.xlane.f32.xlu0 %v5658
        %v5823 = vpop.xlane.xlu0 %5822
        %5824 = vadd.xlane.f32.xlu0 %v5659
        %v5825 = vpop.xlane.xlu0 %5824
        %5826 = vadd.xlane.f32.xlu0 %v5660
        %v5827 = vpop.xlane.xlu0 %5826
        %5828 = vadd.xlane.f32.xlu0 %v5661
        %v5829 = vpop.xlane.xlu0 %5828
        %5830 = vadd.xlane.f32.xlu0 %v5662
        %v5831 = vpop.xlane.xlu0 %5830
        %5832 = vadd.xlane.f32.xlu0 %v5663
        %v5833 = vpop.xlane.xlu0 %5832
        %5834 = vadd.xlane.f32.xlu0 %v5664
        %v5835 = vpop.xlane.xlu0 %5834
        %5836 = vadd.xlane.f32.xlu0 %v5665
        %v5837 = vpop.xlane.xlu0 %5836
        %5838 = vadd.xlane.f32.xlu0 %v5666
        %v5839 = vpop.xlane.xlu0 %5838
        %5840 = vadd.xlane.f32.xlu0 %v5667
        %v5841 = vpop.xlane.xlu0 %5840
        %5842 = vadd.xlane.f32.xlu0 %v5668
        %v5843 = vpop.xlane.xlu0 %5842
        %5844 = vadd.xlane.f32.xlu0 %v5669
        %v5845 = vpop.xlane.xlu0 %5844
        %5846 = vadd.xlane.f32.xlu0 %v5670
        %v5847 = vpop.xlane.xlu0 %5846
        %5848 = vadd.xlane.f32.xlu0 %v5671
        %v5849 = vpop.xlane.xlu0 %5848
        %5850 = vadd.xlane.f32.xlu0 %v5672
        %v5851 = vpop.xlane.xlu0 %5850
        %5852 = vadd.xlane.f32.xlu0 %v5673
        %v5853 = vpop.xlane.xlu0 %5852
        %5854 = vadd.xlane.f32.xlu0 %v5674
        %v5855 = vpop.xlane.xlu0 %5854
        %5856 = vadd.xlane.f32.xlu0 %v5675
        %v5857 = vpop.xlane.xlu0 %5856
        %5858 = vadd.xlane.f32.xlu0 %v5676
        %v5859 = vpop.xlane.xlu0 %5858
        %5860 = vadd.xlane.f32.xlu0 %v5677
        %v5861 = vpop.xlane.xlu0 %5860
        %5862 = vadd.xlane.f32.xlu0 %v5678
        %v5863 = vpop.xlane.xlu0 %5862
        %5864 = vadd.xlane.f32.xlu0 %v5679
        %v5865 = vpop.xlane.xlu0 %5864
        %5866 = vadd.xlane.f32.xlu0 %v5680
        %v5867 = vpop.xlane.xlu0 %5866
        %5868 = vadd.xlane.f32.xlu0 %v5681
        %v5869 = vpop.xlane.xlu0 %5868
        %5870 = vadd.xlane.f32.xlu0 %v5682
        %v5871 = vpop.xlane.xlu0 %5870
        %5872 = vadd.xlane.f32.xlu0 %v5683
        %v5873 = vpop.xlane.xlu0 %5872
        %5874 = vadd.xlane.f32.xlu0 %v5684
        %v5875 = vpop.xlane.xlu0 %5874
        %5876 = vadd.xlane.f32.xlu0 %v5685
        %v5877 = vpop.xlane.xlu0 %5876
        %5878 = vadd.xlane.f32.xlu0 %v5686
        %v5879 = vpop.xlane.xlu0 %5878
        %5880 = vadd.xlane.f32.xlu0 %v5687
        %v5881 = vpop.xlane.xlu0 %5880
        %5882 = vadd.xlane.f32.xlu0 %v5688
        %v5883 = vpop.xlane.xlu0 %5882
        %5884 = vadd.xlane.f32.xlu0 %v5689
        %v5885 = vpop.xlane.xlu0 %5884
        %5886 = vadd.xlane.f32.xlu0 %v5690
        %v5887 = vpop.xlane.xlu0 %5886
        %5888 = vadd.xlane.f32.xlu0 %v5691
        %v5889 = vpop.xlane.xlu0 %5888
        %5890 = vadd.xlane.f32.xlu0 %v5692
        %v5891 = vpop.xlane.xlu0 %5890
        %5892 = vadd.xlane.f32.xlu0 %v5693
        %v5893 = vpop.xlane.xlu0 %5892
        %5894 = vadd.xlane.f32.xlu0 %v5694
        %v5895 = vpop.xlane.xlu0 %5894
        %5896 = vadd.xlane.f32.xlu0 %v5695
        %v5897 = vpop.xlane.xlu0 %5896
        %5898 = vadd.xlane.f32.xlu0 %v5696
        %v5899 = vpop.xlane.xlu0 %5898
        %5900 = vadd.xlane.f32.xlu0 %v5697
        %v5901 = vpop.xlane.xlu0 %5900
        %5902 = vadd.xlane.f32.xlu0 %v5698
        %v5903 = vpop.xlane.xlu0 %5902
        %5904 = vadd.xlane.f32.xlu0 %v5699
        %v5905 = vpop.xlane.xlu0 %5904
        %5906 = vadd.xlane.f32.xlu0 %v5700
        %v5907 = vpop.xlane.xlu0 %5906
        %5908 = vadd.xlane.f32.xlu0 %v5701
        %v5909 = vpop.xlane.xlu0 %5908
        %5910 = vadd.xlane.f32.xlu0 %v5702
        %v5911 = vpop.xlane.xlu0 %5910
        %5912 = vadd.xlane.f32.xlu0 %v5703
        %v5913 = vpop.xlane.xlu0 %5912
        %5914 = vadd.xlane.f32.xlu0 %v5704
        %v5915 = vpop.xlane.xlu0 %5914
        %5916 = vadd.xlane.f32.xlu0 %v5705
        %v5917 = vpop.xlane.xlu0 %5916
        %5918 = vadd.xlane.f32.xlu0 %v5706
        %v5919 = vpop.xlane.xlu0 %5918
        %5920 = vadd.xlane.f32.xlu0 %v5707
        %v5921 = vpop.xlane.xlu0 %5920
        %5922 = vadd.xlane.f32.xlu0 %v5708
        %v5923 = vpop.xlane.xlu0 %5922
        %5924 = vadd.xlane.f32.xlu0 %v5709
        %v5925 = vpop.xlane.xlu0 %5924
        %5926 = vadd.xlane.f32.xlu0 %v5710
        %v5927 = vpop.xlane.xlu0 %5926
        %5928 = vadd.xlane.f32.xlu0 %v5711
        %v5929 = vpop.xlane.xlu0 %5928
        %5930 = vadd.xlane.f32.xlu0 %v5712
        %v5931 = vpop.xlane.xlu0 %5930
        %5932 = vadd.xlane.f32.xlu0 %v5713
        %v5933 = vpop.xlane.xlu0 %5932
        %5934 = vadd.xlane.f32.xlu0 %v5714
        %v5935 = vpop.xlane.xlu0 %5934
        %5936 = vadd.xlane.f32.xlu0 %v5715
        %v5937 = vpop.xlane.xlu0 %5936
        %5938 = vadd.xlane.f32.xlu0 %v5716
        %v5939 = vpop.xlane.xlu0 %5938
        %5940 = vadd.xlane.f32.xlu0 %v5717
        %v5941 = vpop.xlane.xlu0 %5940
        %5942 = vadd.xlane.f32.xlu0 %v5718
        %v5943 = vpop.xlane.xlu0 %5942
        %5944 = vadd.xlane.f32.xlu0 %v5719
        %v5945 = vpop.xlane.xlu0 %5944
        %5946 = vadd.xlane.f32.xlu0 %v5720
        %v5947 = vpop.xlane.xlu0 %5946
        %5948 = vadd.xlane.f32.xlu0 %v5721
        %v5949 = vpop.xlane.xlu0 %5948
        %5950 = vadd.xlane.f32.xlu0 %v5722
        %v5951 = vpop.xlane.xlu0 %5950
        %5952 = vadd.xlane.f32.xlu0 %v5723
        %v5953 = vpop.xlane.xlu0 %5952
        %5954 = vadd.xlane.f32.xlu0 %v5724
        %v5955 = vpop.xlane.xlu0 %5954
        %5956 = vadd.xlane.f32.xlu0 %v5725
        %v5957 = vpop.xlane.xlu0 %5956
        %5958 = vadd.xlane.f32.xlu0 %v5726
        %v5959 = vpop.xlane.xlu0 %5958
        %5960 = vadd.xlane.f32.xlu0 %v5727
        %v5961 = vpop.xlane.xlu0 %5960
        %5962 = vadd.xlane.f32.xlu0 %v5728
        %v5963 = vpop.xlane.xlu0 %5962
        %5964 = vadd.xlane.f32.xlu0 %v5729
        %v5965 = vpop.xlane.xlu0 %5964
        %5966 = vadd.xlane.f32.xlu0 %v5730
        %v5967 = vpop.xlane.xlu0 %5966
        %5968 = vadd.xlane.f32.xlu0 %v5731
        %v5969 = vpop.xlane.xlu0 %5968
        %5970 = vadd.xlane.f32.xlu0 %v5732
        %v5971 = vpop.xlane.xlu0 %5970
        %5972 = vadd.xlane.f32.xlu0 %v5733
        %v5973 = vpop.xlane.xlu0 %5972
        %5974 = vadd.xlane.f32.xlu0 %v5734
        %v5975 = vpop.xlane.xlu0 %5974
        %5976 = vadd.xlane.f32.xlu0 %v5735
        %v5977 = vpop.xlane.xlu0 %5976
        %5978 = vadd.xlane.f32.xlu0 %v5736
        %v5979 = vpop.xlane.xlu0 %5978
        %5980 = vadd.xlane.f32.xlu0 %v5737
        %v5981 = vpop.xlane.xlu0 %5980
        %5982 = vadd.xlane.f32.xlu0 %v5738
        %v5983 = vpop.xlane.xlu0 %5982
        %5984 = vadd.xlane.f32.xlu0 %v5739
        %v5985 = vpop.xlane.xlu0 %5984
        %5986 = vadd.xlane.f32.xlu0 %v5740
        %v5987 = vpop.xlane.xlu0 %5986
        %5988 = vadd.xlane.f32.xlu0 %v5741
        %v5989 = vpop.xlane.xlu0 %5988
        %5990 = vadd.xlane.f32.xlu0 %v5742
        %v5991 = vpop.xlane.xlu0 %5990
        %5992 = vadd.xlane.f32.xlu0 %v5743
        %v5993 = vpop.xlane.xlu0 %5992
        %5994 = vadd.xlane.f32.xlu0 %v5744
        %v5995 = vpop.xlane.xlu0 %5994
        %5996 = vadd.xlane.f32.xlu0 %v5745
        %v5997 = vpop.xlane.xlu0 %5996
        %5998 = vadd.xlane.f32.xlu0 %v5746
        %v5999 = vpop.xlane.xlu0 %5998
        %6000 = vadd.xlane.f32.xlu0 %v5747
        %v6001 = vpop.xlane.xlu0 %6000
        %6002 = vadd.xlane.f32.xlu0 %v5748
        %v6003 = vpop.xlane.xlu0 %6002
        %6004 = vadd.xlane.f32.xlu0 %v5749
        %v6005 = vpop.xlane.xlu0 %6004
        %v6006 = vadd.f32 %v5362, %v5751
        %v6007 = vadd.f32 %v5364, %v5753
        %v6008 = vadd.f32 %v5366, %v5755
        %v6009 = vadd.f32 %v5368, %v5757
        %v6010 = vadd.f32 %v5370, %v5759
        %v6011 = vadd.f32 %v5372, %v5761
        %v6012 = vadd.f32 %v5374, %v5763
        %v6013 = vadd.f32 %v5376, %v5765
        %v6014 = vadd.f32 %v5378, %v5767
        %v6015 = vadd.f32 %v5380, %v5769
        %v6016 = vadd.f32 %v5382, %v5771
        %v6017 = vadd.f32 %v5384, %v5773
        %v6018 = vadd.f32 %v5386, %v5775
        %v6019 = vadd.f32 %v5388, %v5777
        %v6020 = vadd.f32 %v5390, %v5779
        %v6021 = vadd.f32 %v5392, %v5781
        %v6022 = vadd.f32 %v5394, %v5783
        %v6023 = vadd.f32 %v5396, %v5785
        %v6024 = vadd.f32 %v5398, %v5787
        %v6025 = vadd.f32 %v5400, %v5789
        %v6026 = vadd.f32 %v5402, %v5791
        %v6027 = vadd.f32 %v5404, %v5793
        %v6028 = vadd.f32 %v5406, %v5795
        %v6029 = vadd.f32 %v5408, %v5797
        %v6030 = vadd.f32 %v5410, %v5799
        %v6031 = vadd.f32 %v5412, %v5801
        %v6032 = vadd.f32 %v5414, %v5803
        %v6033 = vadd.f32 %v5416, %v5805
        %v6034 = vadd.f32 %v5418, %v5807
        %v6035 = vadd.f32 %v5420, %v5809
        %v6036 = vadd.f32 %v5422, %v5811
        %v6037 = vadd.f32 %v5424, %v5813
        %v6038 = vadd.f32 %v5426, %v5815
        %v6039 = vadd.f32 %v5428, %v5817
        %v6040 = vadd.f32 %v5430, %v5819
        %v6041 = vadd.f32 %v5432, %v5821
        %v6042 = vadd.f32 %v5434, %v5823
        %v6043 = vadd.f32 %v5436, %v5825
        %v6044 = vadd.f32 %v5438, %v5827
        %v6045 = vadd.f32 %v5440, %v5829
        %v6046 = vadd.f32 %v5442, %v5831
        %v6047 = vadd.f32 %v5444, %v5833
        %v6048 = vadd.f32 %v5446, %v5835
        %v6049 = vadd.f32 %v5448, %v5837
        %v6050 = vadd.f32 %v5450, %v5839
        %v6051 = vadd.f32 %v5452, %v5841
        %v6052 = vadd.f32 %v5454, %v5843
        %v6053 = vadd.f32 %v5456, %v5845
        %v6054 = vadd.f32 %v5458, %v5847
        %v6055 = vadd.f32 %v5460, %v5849
        %v6056 = vadd.f32 %v5462, %v5851
        %v6057 = vadd.f32 %v5464, %v5853
        %v6058 = vadd.f32 %v5466, %v5855
        %v6059 = vadd.f32 %v5468, %v5857
        %v6060 = vadd.f32 %v5470, %v5859
        %v6061 = vadd.f32 %v5472, %v5861
        %v6062 = vadd.f32 %v5474, %v5863
        %v6063 = vadd.f32 %v5476, %v5865
        %v6064 = vadd.f32 %v5478, %v5867
        %v6065 = vadd.f32 %v5480, %v5869
        %v6066 = vadd.f32 %v5482, %v5871
        %v6067 = vadd.f32 %v5484, %v5873
        %v6068 = vadd.f32 %v5486, %v5875
        %v6069 = vadd.f32 %v5488, %v5877
        %v6070 = vadd.f32 %v5490, %v5879
        %v6071 = vadd.f32 %v5492, %v5881
        %v6072 = vadd.f32 %v5494, %v5883
        %v6073 = vadd.f32 %v5496, %v5885
        %v6074 = vadd.f32 %v5498, %v5887
        %v6075 = vadd.f32 %v5500, %v5889
        %v6076 = vadd.f32 %v5502, %v5891
        %v6077 = vadd.f32 %v5504, %v5893
        %v6078 = vadd.f32 %v5506, %v5895
        %v6079 = vadd.f32 %v5508, %v5897
        %v6080 = vadd.f32 %v5510, %v5899
        %v6081 = vadd.f32 %v5512, %v5901
        %v6082 = vadd.f32 %v5514, %v5903
        %v6083 = vadd.f32 %v5516, %v5905
        %v6084 = vadd.f32 %v5518, %v5907
        %v6085 = vadd.f32 %v5520, %v5909
        %v6086 = vadd.f32 %v5522, %v5911
        %v6087 = vadd.f32 %v5524, %v5913
        %v6088 = vadd.f32 %v5526, %v5915
        %v6089 = vadd.f32 %v5528, %v5917
        %v6090 = vadd.f32 %v5530, %v5919
        %v6091 = vadd.f32 %v5532, %v5921
        %v6092 = vadd.f32 %v5534, %v5923
        %v6093 = vadd.f32 %v5536, %v5925
        %v6094 = vadd.f32 %v5538, %v5927
        %v6095 = vadd.f32 %v5540, %v5929
        %v6096 = vadd.f32 %v5542, %v5931
        %v6097 = vadd.f32 %v5544, %v5933
        %v6098 = vadd.f32 %v5546, %v5935
        %v6099 = vadd.f32 %v5548, %v5937
        %v6100 = vadd.f32 %v5550, %v5939
        %v6101 = vadd.f32 %v5552, %v5941
        %v6102 = vadd.f32 %v5554, %v5943
        %v6103 = vadd.f32 %v5556, %v5945
        %v6104 = vadd.f32 %v5558, %v5947
        %v6105 = vadd.f32 %v5560, %v5949
        %v6106 = vadd.f32 %v5562, %v5951
        %v6107 = vadd.f32 %v5564, %v5953
        %v6108 = vadd.f32 %v5566, %v5955
        %v6109 = vadd.f32 %v5568, %v5957
        %v6110 = vadd.f32 %v5570, %v5959
        %v6111 = vadd.f32 %v5572, %v5961
        %v6112 = vadd.f32 %v5574, %v5963
        %v6113 = vadd.f32 %v5576, %v5965
        %v6114 = vadd.f32 %v5578, %v5967
        %v6115 = vadd.f32 %v5580, %v5969
        %v6116 = vadd.f32 %v5582, %v5971
        %v6117 = vadd.f32 %v5584, %v5973
        %v6118 = vadd.f32 %v5586, %v5975
        %v6119 = vadd.f32 %v5588, %v5977
        %v6120 = vadd.f32 %v5590, %v5979
        %v6121 = vadd.f32 %v5592, %v5981
        %v6122 = vadd.f32 %v5594, %v5983
        %v6123 = vadd.f32 %v5596, %v5985
        %v6124 = vadd.f32 %v5598, %v5987
        %v6125 = vadd.f32 %v5600, %v5989
        %v6126 = vadd.f32 %v5602, %v5991
        %v6127 = vadd.f32 %v5604, %v5993
        %v6128 = vadd.f32 %v5606, %v5995
        %v6129 = vadd.f32 %v5608, %v5997
        %v6130 = vadd.f32 %v5610, %v5999
        %v6131 = vadd.f32 %v5612, %v6001
        %v6132 = vadd.f32 %v5614, %v6003
        %v6133 = vadd.f32 %v5616, %v6005
        %s6134 = sld [smem:[#allocation5]]
        %v6135 = vstv %s6134
        %v6136 = vadd.f32 %v6006, %v6135
        %v6137 = vadd.f32 %v6007, %v6135
        %v6138 = vadd.f32 %v6008, %v6135
        %v6139 = vadd.f32 %v6009, %v6135
        %v6140 = vadd.f32 %v6010, %v6135
        %v6141 = vadd.f32 %v6011, %v6135
        %v6142 = vadd.f32 %v6012, %v6135
        %v6143 = vadd.f32 %v6013, %v6135
        %v6144 = vadd.f32 %v6014, %v6135
        %v6145 = vadd.f32 %v6015, %v6135
        %v6146 = vadd.f32 %v6016, %v6135
        %v6147 = vadd.f32 %v6017, %v6135
        %v6148 = vadd.f32 %v6018, %v6135
        %v6149 = vadd.f32 %v6019, %v6135
        %v6150 = vadd.f32 %v6020, %v6135
        %v6151 = vadd.f32 %v6021, %v6135
        %v6152 = vadd.f32 %v6022, %v6135
        %v6153 = vadd.f32 %v6023, %v6135
        %v6154 = vadd.f32 %v6024, %v6135
        %v6155 = vadd.f32 %v6025, %v6135
        %v6156 = vadd.f32 %v6026, %v6135
        %v6157 = vadd.f32 %v6027, %v6135
        %v6158 = vadd.f32 %v6028, %v6135
        %v6159 = vadd.f32 %v6029, %v6135
        %v6160 = vadd.f32 %v6030, %v6135
        %v6161 = vadd.f32 %v6031, %v6135
        %v6162 = vadd.f32 %v6032, %v6135
        %v6163 = vadd.f32 %v6033, %v6135
        %v6164 = vadd.f32 %v6034, %v6135
        %v6165 = vadd.f32 %v6035, %v6135
        %v6166 = vadd.f32 %v6036, %v6135
        %v6167 = vadd.f32 %v6037, %v6135
        %v6168 = vadd.f32 %v6038, %v6135
        %v6169 = vadd.f32 %v6039, %v6135
        %v6170 = vadd.f32 %v6040, %v6135
        %v6171 = vadd.f32 %v6041, %v6135
        %v6172 = vadd.f32 %v6042, %v6135
        %v6173 = vadd.f32 %v6043, %v6135
        %v6174 = vadd.f32 %v6044, %v6135
        %v6175 = vadd.f32 %v6045, %v6135
        %v6176 = vadd.f32 %v6046, %v6135
        %v6177 = vadd.f32 %v6047, %v6135
        %v6178 = vadd.f32 %v6048, %v6135
        %v6179 = vadd.f32 %v6049, %v6135
        %v6180 = vadd.f32 %v6050, %v6135
        %v6181 = vadd.f32 %v6051, %v6135
        %v6182 = vadd.f32 %v6052, %v6135
        %v6183 = vadd.f32 %v6053, %v6135
        %v6184 = vadd.f32 %v6054, %v6135
        %v6185 = vadd.f32 %v6055, %v6135
        %v6186 = vadd.f32 %v6056, %v6135
        %v6187 = vadd.f32 %v6057, %v6135
        %v6188 = vadd.f32 %v6058, %v6135
        %v6189 = vadd.f32 %v6059, %v6135
        %v6190 = vadd.f32 %v6060, %v6135
        %v6191 = vadd.f32 %v6061, %v6135
        %v6192 = vadd.f32 %v6062, %v6135
        %v6193 = vadd.f32 %v6063, %v6135
        %v6194 = vadd.f32 %v6064, %v6135
        %v6195 = vadd.f32 %v6065, %v6135
        %v6196 = vadd.f32 %v6066, %v6135
        %v6197 = vadd.f32 %v6067, %v6135
        %v6198 = vadd.f32 %v6068, %v6135
        %v6199 = vadd.f32 %v6069, %v6135
        %v6200 = vadd.f32 %v6070, %v6135
        %v6201 = vadd.f32 %v6071, %v6135
        %v6202 = vadd.f32 %v6072, %v6135
        %v6203 = vadd.f32 %v6073, %v6135
        %v6204 = vadd.f32 %v6074, %v6135
        %v6205 = vadd.f32 %v6075, %v6135
        %v6206 = vadd.f32 %v6076, %v6135
        %v6207 = vadd.f32 %v6077, %v6135
        %v6208 = vadd.f32 %v6078, %v6135
        %v6209 = vadd.f32 %v6079, %v6135
        %v6210 = vadd.f32 %v6080, %v6135
        %v6211 = vadd.f32 %v6081, %v6135
        %v6212 = vadd.f32 %v6082, %v6135
        %v6213 = vadd.f32 %v6083, %v6135
        %v6214 = vadd.f32 %v6084, %v6135
        %v6215 = vadd.f32 %v6085, %v6135
        %v6216 = vadd.f32 %v6086, %v6135
        %v6217 = vadd.f32 %v6087, %v6135
        %v6218 = vadd.f32 %v6088, %v6135
        %v6219 = vadd.f32 %v6089, %v6135
        %v6220 = vadd.f32 %v6090, %v6135
        %v6221 = vadd.f32 %v6091, %v6135
        %v6222 = vadd.f32 %v6092, %v6135
        %v6223 = vadd.f32 %v6093, %v6135
        %v6224 = vadd.f32 %v6094, %v6135
        %v6225 = vadd.f32 %v6095, %v6135
        %v6226 = vadd.f32 %v6096, %v6135
        %v6227 = vadd.f32 %v6097, %v6135
        %v6228 = vadd.f32 %v6098, %v6135
        %v6229 = vadd.f32 %v6099, %v6135
        %v6230 = vadd.f32 %v6100, %v6135
        %v6231 = vadd.f32 %v6101, %v6135
        %v6232 = vadd.f32 %v6102, %v6135
        %v6233 = vadd.f32 %v6103, %v6135
        %v6234 = vadd.f32 %v6104, %v6135
        %v6235 = vadd.f32 %v6105, %v6135
        %v6236 = vadd.f32 %v6106, %v6135
        %v6237 = vadd.f32 %v6107, %v6135
        %v6238 = vadd.f32 %v6108, %v6135
        %v6239 = vadd.f32 %v6109, %v6135
        %v6240 = vadd.f32 %v6110, %v6135
        %v6241 = vadd.f32 %v6111, %v6135
        %v6242 = vadd.f32 %v6112, %v6135
        %v6243 = vadd.f32 %v6113, %v6135
        %v6244 = vadd.f32 %v6114, %v6135
        %v6245 = vadd.f32 %v6115, %v6135
        %v6246 = vadd.f32 %v6116, %v6135
        %v6247 = vadd.f32 %v6117, %v6135
        %v6248 = vadd.f32 %v6118, %v6135
        %v6249 = vadd.f32 %v6119, %v6135
        %v6250 = vadd.f32 %v6120, %v6135
        %v6251 = vadd.f32 %v6121, %v6135
        %v6252 = vadd.f32 %v6122, %v6135
        %v6253 = vadd.f32 %v6123, %v6135
        %v6254 = vadd.f32 %v6124, %v6135
        %v6255 = vadd.f32 %v6125, %v6135
        %v6256 = vadd.f32 %v6126, %v6135
        %v6257 = vadd.f32 %v6127, %v6135
        %v6258 = vadd.f32 %v6128, %v6135
        %v6259 = vadd.f32 %v6129, %v6135
        %v6260 = vadd.f32 %v6130, %v6135
        %v6261 = vadd.f32 %v6131, %v6135
        %v6262 = vadd.f32 %v6132, %v6135
        %v6263 = vadd.f32 %v6133, %v6135
        %v6264 = vld [vmem:[%s410] sm:$0xff]
        %v6266 = vlaneseq
        %v6267 = vshrl.u32 %v6266, 7
        %v6268 = vsub.s32 0, %v6267
        %v6269 = vrot.slane %v6264, %v6268
        %6271 = vbcast.lane.b32.xlu0 %v6269, 256
        %v6272 = vpop.permute.xlu0 %6271
        %s6274 = sor.u32 256, 8
        %6275 = vbcast.lane.b32.xlu0 %v6269, %s6274
        %v6276 = vpop.permute.xlu0 %6275
        %s6278 = sor.u32 256, 16
        %6279 = vbcast.lane.b32.xlu0 %v6269, %s6278
        %v6280 = vpop.permute.xlu0 %6279
        %s6282 = sor.u32 256, 24
        %6283 = vbcast.lane.b32.xlu0 %v6269, %s6282
        %v6284 = vpop.permute.xlu0 %6283
        %s6286 = sor.u32 256, 32
        %6287 = vbcast.lane.b32.xlu0 %v6269, %s6286
        %v6288 = vpop.permute.xlu0 %6287
        %s6290 = sor.u32 256, 40
        %6291 = vbcast.lane.b32.xlu0 %v6269, %s6290
        %v6292 = vpop.permute.xlu0 %6291
        %s6294 = sor.u32 256, 48
        %6295 = vbcast.lane.b32.xlu0 %v6269, %s6294
        %v6296 = vpop.permute.xlu0 %6295
        %s6298 = sor.u32 256, 56
        %6299 = vbcast.lane.b32.xlu0 %v6269, %s6298
        %v6300 = vpop.permute.xlu0 %6299
        %s6302 = sor.u32 256, 64
        %6303 = vbcast.lane.b32.xlu0 %v6269, %s6302
        %v6304 = vpop.permute.xlu0 %6303
        %s6306 = sor.u32 256, 72
        %6307 = vbcast.lane.b32.xlu0 %v6269, %s6306
        %v6308 = vpop.permute.xlu0 %6307
        %s6310 = sor.u32 256, 80
        %6311 = vbcast.lane.b32.xlu0 %v6269, %s6310
        %v6312 = vpop.permute.xlu0 %6311
        %s6314 = sor.u32 256, 88
        %6315 = vbcast.lane.b32.xlu0 %v6269, %s6314
        %v6316 = vpop.permute.xlu0 %6315
        %s6318 = sor.u32 256, 96
        %6319 = vbcast.lane.b32.xlu0 %v6269, %s6318
        %v6320 = vpop.permute.xlu0 %6319
        %s6322 = sor.u32 256, 104
        %6323 = vbcast.lane.b32.xlu0 %v6269, %s6322
        %v6324 = vpop.permute.xlu0 %6323
        %s6326 = sor.u32 256, 112
        %6327 = vbcast.lane.b32.xlu0 %v6269, %s6326
        %v6328 = vpop.permute.xlu0 %6327
        %s6330 = sor.u32 256, 120
        %6331 = vbcast.lane.b32.xlu0 %v6269, %s6330
        %v6332 = vpop.permute.xlu0 %6331
        %v6333 = vlaneseq
        %v6334 = vshrl.u32 %v6333, 7
        %v6335 = vsub.s32 1, %v6334
        %v6336 = vrot.slane %v6264, %v6335
        %6338 = vbcast.lane.b32.xlu0 %v6336, 256
        %v6339 = vpop.permute.xlu0 %6338
        %s6341 = sor.u32 256, 8
        %6342 = vbcast.lane.b32.xlu0 %v6336, %s6341
        %v6343 = vpop.permute.xlu0 %6342
        %s6345 = sor.u32 256, 16
        %6346 = vbcast.lane.b32.xlu0 %v6336, %s6345
        %v6347 = vpop.permute.xlu0 %6346
        %s6349 = sor.u32 256, 24
        %6350 = vbcast.lane.b32.xlu0 %v6336, %s6349
        %v6351 = vpop.permute.xlu0 %6350
        %s6353 = sor.u32 256, 32
        %6354 = vbcast.lane.b32.xlu0 %v6336, %s6353
        %v6355 = vpop.permute.xlu0 %6354
        %s6357 = sor.u32 256, 40
        %6358 = vbcast.lane.b32.xlu0 %v6336, %s6357
        %v6359 = vpop.permute.xlu0 %6358
        %s6361 = sor.u32 256, 48
        %6362 = vbcast.lane.b32.xlu0 %v6336, %s6361
        %v6363 = vpop.permute.xlu0 %6362
        %s6365 = sor.u32 256, 56
        %6366 = vbcast.lane.b32.xlu0 %v6336, %s6365
        %v6367 = vpop.permute.xlu0 %6366
        %s6369 = sor.u32 256, 64
        %6370 = vbcast.lane.b32.xlu0 %v6336, %s6369
        %v6371 = vpop.permute.xlu0 %6370
        %s6373 = sor.u32 256, 72
        %6374 = vbcast.lane.b32.xlu0 %v6336, %s6373
        %v6375 = vpop.permute.xlu0 %6374
        %s6377 = sor.u32 256, 80
        %6378 = vbcast.lane.b32.xlu0 %v6336, %s6377
        %v6379 = vpop.permute.xlu0 %6378
        %s6381 = sor.u32 256, 88
        %6382 = vbcast.lane.b32.xlu0 %v6336, %s6381
        %v6383 = vpop.permute.xlu0 %6382
        %s6385 = sor.u32 256, 96
        %6386 = vbcast.lane.b32.xlu0 %v6336, %s6385
        %v6387 = vpop.permute.xlu0 %6386
        %s6389 = sor.u32 256, 104
        %6390 = vbcast.lane.b32.xlu0 %v6336, %s6389
        %v6391 = vpop.permute.xlu0 %6390
        %s6393 = sor.u32 256, 112
        %6394 = vbcast.lane.b32.xlu0 %v6336, %s6393
        %v6395 = vpop.permute.xlu0 %6394
        %s6397 = sor.u32 256, 120
        %6398 = vbcast.lane.b32.xlu0 %v6336, %s6397
        %v6399 = vpop.permute.xlu0 %6398
        %v6400 = vlaneseq
        %v6401 = vshrl.u32 %v6400, 7
        %v6402 = vsub.s32 2, %v6401
        %v6403 = vrot.slane %v6264, %v6402
        %6405 = vbcast.lane.b32.xlu0 %v6403, 256
        %v6406 = vpop.permute.xlu0 %6405
        %s6408 = sor.u32 256, 8
        %6409 = vbcast.lane.b32.xlu0 %v6403, %s6408
        %v6410 = vpop.permute.xlu0 %6409
        %s6412 = sor.u32 256, 16
        %6413 = vbcast.lane.b32.xlu0 %v6403, %s6412
        %v6414 = vpop.permute.xlu0 %6413
        %s6416 = sor.u32 256, 24
        %6417 = vbcast.lane.b32.xlu0 %v6403, %s6416
        %v6418 = vpop.permute.xlu0 %6417
        %s6420 = sor.u32 256, 32
        %6421 = vbcast.lane.b32.xlu0 %v6403, %s6420
        %v6422 = vpop.permute.xlu0 %6421
        %s6424 = sor.u32 256, 40
        %6425 = vbcast.lane.b32.xlu0 %v6403, %s6424
        %v6426 = vpop.permute.xlu0 %6425
        %s6428 = sor.u32 256, 48
        %6429 = vbcast.lane.b32.xlu0 %v6403, %s6428
        %v6430 = vpop.permute.xlu0 %6429
        %s6432 = sor.u32 256, 56
        %6433 = vbcast.lane.b32.xlu0 %v6403, %s6432
        %v6434 = vpop.permute.xlu0 %6433
        %s6436 = sor.u32 256, 64
        %6437 = vbcast.lane.b32.xlu0 %v6403, %s6436
        %v6438 = vpop.permute.xlu0 %6437
        %s6440 = sor.u32 256, 72
        %6441 = vbcast.lane.b32.xlu0 %v6403, %s6440
        %v6442 = vpop.permute.xlu0 %6441
        %s6444 = sor.u32 256, 80
        %6445 = vbcast.lane.b32.xlu0 %v6403, %s6444
        %v6446 = vpop.permute.xlu0 %6445
        %s6448 = sor.u32 256, 88
        %6449 = vbcast.lane.b32.xlu0 %v6403, %s6448
        %v6450 = vpop.permute.xlu0 %6449
        %s6452 = sor.u32 256, 96
        %6453 = vbcast.lane.b32.xlu0 %v6403, %s6452
        %v6454 = vpop.permute.xlu0 %6453
        %s6456 = sor.u32 256, 104
        %6457 = vbcast.lane.b32.xlu0 %v6403, %s6456
        %v6458 = vpop.permute.xlu0 %6457
        %s6460 = sor.u32 256, 112
        %6461 = vbcast.lane.b32.xlu0 %v6403, %s6460
        %v6462 = vpop.permute.xlu0 %6461
        %s6464 = sor.u32 256, 120
        %6465 = vbcast.lane.b32.xlu0 %v6403, %s6464
        %v6466 = vpop.permute.xlu0 %6465
        %v6467 = vlaneseq
        %v6468 = vshrl.u32 %v6467, 7
        %v6469 = vsub.s32 3, %v6468
        %v6470 = vrot.slane %v6264, %v6469
        %6472 = vbcast.lane.b32.xlu0 %v6470, 256
        %v6473 = vpop.permute.xlu0 %6472
        %s6475 = sor.u32 256, 8
        %6476 = vbcast.lane.b32.xlu0 %v6470, %s6475
        %v6477 = vpop.permute.xlu0 %6476
        %s6479 = sor.u32 256, 16
        %6480 = vbcast.lane.b32.xlu0 %v6470, %s6479
        %v6481 = vpop.permute.xlu0 %6480
        %s6483 = sor.u32 256, 24
        %6484 = vbcast.lane.b32.xlu0 %v6470, %s6483
        %v6485 = vpop.permute.xlu0 %6484
        %s6487 = sor.u32 256, 32
        %6488 = vbcast.lane.b32.xlu0 %v6470, %s6487
        %v6489 = vpop.permute.xlu0 %6488
        %s6491 = sor.u32 256, 40
        %6492 = vbcast.lane.b32.xlu0 %v6470, %s6491
        %v6493 = vpop.permute.xlu0 %6492
        %s6495 = sor.u32 256, 48
        %6496 = vbcast.lane.b32.xlu0 %v6470, %s6495
        %v6497 = vpop.permute.xlu0 %6496
        %s6499 = sor.u32 256, 56
        %6500 = vbcast.lane.b32.xlu0 %v6470, %s6499
        %v6501 = vpop.permute.xlu0 %6500
        %s6503 = sor.u32 256, 64
        %6504 = vbcast.lane.b32.xlu0 %v6470, %s6503
        %v6505 = vpop.permute.xlu0 %6504
        %s6507 = sor.u32 256, 72
        %6508 = vbcast.lane.b32.xlu0 %v6470, %s6507
        %v6509 = vpop.permute.xlu0 %6508
        %s6511 = sor.u32 256, 80
        %6512 = vbcast.lane.b32.xlu0 %v6470, %s6511
        %v6513 = vpop.permute.xlu0 %6512
        %s6515 = sor.u32 256, 88
        %6516 = vbcast.lane.b32.xlu0 %v6470, %s6515
        %v6517 = vpop.permute.xlu0 %6516
        %s6519 = sor.u32 256, 96
        %6520 = vbcast.lane.b32.xlu0 %v6470, %s6519
        %v6521 = vpop.permute.xlu0 %6520
        %s6523 = sor.u32 256, 104
        %6524 = vbcast.lane.b32.xlu0 %v6470, %s6523
        %v6525 = vpop.permute.xlu0 %6524
        %s6527 = sor.u32 256, 112
        %6528 = vbcast.lane.b32.xlu0 %v6470, %s6527
        %v6529 = vpop.permute.xlu0 %6528
        %s6531 = sor.u32 256, 120
        %6532 = vbcast.lane.b32.xlu0 %v6470, %s6531
        %v6533 = vpop.permute.xlu0 %6532
        %v6534 = vlaneseq
        %v6535 = vshrl.u32 %v6534, 7
        %v6536 = vsub.s32 4, %v6535
        %v6537 = vrot.slane %v6264, %v6536
        %6539 = vbcast.lane.b32.xlu0 %v6537, 256
        %v6540 = vpop.permute.xlu0 %6539
        %s6542 = sor.u32 256, 8
        %6543 = vbcast.lane.b32.xlu0 %v6537, %s6542
        %v6544 = vpop.permute.xlu0 %6543
        %s6546 = sor.u32 256, 16
        %6547 = vbcast.lane.b32.xlu0 %v6537, %s6546
        %v6548 = vpop.permute.xlu0 %6547
        %s6550 = sor.u32 256, 24
        %6551 = vbcast.lane.b32.xlu0 %v6537, %s6550
        %v6552 = vpop.permute.xlu0 %6551
        %s6554 = sor.u32 256, 32
        %6555 = vbcast.lane.b32.xlu0 %v6537, %s6554
        %v6556 = vpop.permute.xlu0 %6555
        %s6558 = sor.u32 256, 40
        %6559 = vbcast.lane.b32.xlu0 %v6537, %s6558
        %v6560 = vpop.permute.xlu0 %6559
        %s6562 = sor.u32 256, 48
        %6563 = vbcast.lane.b32.xlu0 %v6537, %s6562
        %v6564 = vpop.permute.xlu0 %6563
        %s6566 = sor.u32 256, 56
        %6567 = vbcast.lane.b32.xlu0 %v6537, %s6566
        %v6568 = vpop.permute.xlu0 %6567
        %s6570 = sor.u32 256, 64
        %6571 = vbcast.lane.b32.xlu0 %v6537, %s6570
        %v6572 = vpop.permute.xlu0 %6571
        %s6574 = sor.u32 256, 72
        %6575 = vbcast.lane.b32.xlu0 %v6537, %s6574
        %v6576 = vpop.permute.xlu0 %6575
        %s6578 = sor.u32 256, 80
        %6579 = vbcast.lane.b32.xlu0 %v6537, %s6578
        %v6580 = vpop.permute.xlu0 %6579
        %s6582 = sor.u32 256, 88
        %6583 = vbcast.lane.b32.xlu0 %v6537, %s6582
        %v6584 = vpop.permute.xlu0 %6583
        %s6586 = sor.u32 256, 96
        %6587 = vbcast.lane.b32.xlu0 %v6537, %s6586
        %v6588 = vpop.permute.xlu0 %6587
        %s6590 = sor.u32 256, 104
        %6591 = vbcast.lane.b32.xlu0 %v6537, %s6590
        %v6592 = vpop.permute.xlu0 %6591
        %s6594 = sor.u32 256, 112
        %6595 = vbcast.lane.b32.xlu0 %v6537, %s6594
        %v6596 = vpop.permute.xlu0 %6595
        %s6598 = sor.u32 256, 120
        %6599 = vbcast.lane.b32.xlu0 %v6537, %s6598
        %v6600 = vpop.permute.xlu0 %6599
        %v6601 = vlaneseq
        %v6602 = vshrl.u32 %v6601, 7
        %v6603 = vsub.s32 5, %v6602
        %v6604 = vrot.slane %v6264, %v6603
        %6606 = vbcast.lane.b32.xlu0 %v6604, 256
        %v6607 = vpop.permute.xlu0 %6606
        %s6609 = sor.u32 256, 8
        %6610 = vbcast.lane.b32.xlu0 %v6604, %s6609
        %v6611 = vpop.permute.xlu0 %6610
        %s6613 = sor.u32 256, 16
        %6614 = vbcast.lane.b32.xlu0 %v6604, %s6613
        %v6615 = vpop.permute.xlu0 %6614
        %s6617 = sor.u32 256, 24
        %6618 = vbcast.lane.b32.xlu0 %v6604, %s6617
        %v6619 = vpop.permute.xlu0 %6618
        %s6621 = sor.u32 256, 32
        %6622 = vbcast.lane.b32.xlu0 %v6604, %s6621
        %v6623 = vpop.permute.xlu0 %6622
        %s6625 = sor.u32 256, 40
        %6626 = vbcast.lane.b32.xlu0 %v6604, %s6625
        %v6627 = vpop.permute.xlu0 %6626
        %s6629 = sor.u32 256, 48
        %6630 = vbcast.lane.b32.xlu0 %v6604, %s6629
        %v6631 = vpop.permute.xlu0 %6630
        %s6633 = sor.u32 256, 56
        %6634 = vbcast.lane.b32.xlu0 %v6604, %s6633
        %v6635 = vpop.permute.xlu0 %6634
        %s6637 = sor.u32 256, 64
        %6638 = vbcast.lane.b32.xlu0 %v6604, %s6637
        %v6639 = vpop.permute.xlu0 %6638
        %s6641 = sor.u32 256, 72
        %6642 = vbcast.lane.b32.xlu0 %v6604, %s6641
        %v6643 = vpop.permute.xlu0 %6642
        %s6645 = sor.u32 256, 80
        %6646 = vbcast.lane.b32.xlu0 %v6604, %s6645
        %v6647 = vpop.permute.xlu0 %6646
        %s6649 = sor.u32 256, 88
        %6650 = vbcast.lane.b32.xlu0 %v6604, %s6649
        %v6651 = vpop.permute.xlu0 %6650
        %s6653 = sor.u32 256, 96
        %6654 = vbcast.lane.b32.xlu0 %v6604, %s6653
        %v6655 = vpop.permute.xlu0 %6654
        %s6657 = sor.u32 256, 104
        %6658 = vbcast.lane.b32.xlu0 %v6604, %s6657
        %v6659 = vpop.permute.xlu0 %6658
        %s6661 = sor.u32 256, 112
        %6662 = vbcast.lane.b32.xlu0 %v6604, %s6661
        %v6663 = vpop.permute.xlu0 %6662
        %s6665 = sor.u32 256, 120
        %6666 = vbcast.lane.b32.xlu0 %v6604, %s6665
        %v6667 = vpop.permute.xlu0 %6666
        %v6668 = vlaneseq
        %v6669 = vshrl.u32 %v6668, 7
        %v6670 = vsub.s32 6, %v6669
        %v6671 = vrot.slane %v6264, %v6670
        %6673 = vbcast.lane.b32.xlu0 %v6671, 256
        %v6674 = vpop.permute.xlu0 %6673
        %s6676 = sor.u32 256, 8
        %6677 = vbcast.lane.b32.xlu0 %v6671, %s6676
        %v6678 = vpop.permute.xlu0 %6677
        %s6680 = sor.u32 256, 16
        %6681 = vbcast.lane.b32.xlu0 %v6671, %s6680
        %v6682 = vpop.permute.xlu0 %6681
        %s6684 = sor.u32 256, 24
        %6685 = vbcast.lane.b32.xlu0 %v6671, %s6684
        %v6686 = vpop.permute.xlu0 %6685
        %s6688 = sor.u32 256, 32
        %6689 = vbcast.lane.b32.xlu0 %v6671, %s6688
        %v6690 = vpop.permute.xlu0 %6689
        %s6692 = sor.u32 256, 40
        %6693 = vbcast.lane.b32.xlu0 %v6671, %s6692
        %v6694 = vpop.permute.xlu0 %6693
        %s6696 = sor.u32 256, 48
        %6697 = vbcast.lane.b32.xlu0 %v6671, %s6696
        %v6698 = vpop.permute.xlu0 %6697
        %s6700 = sor.u32 256, 56
        %6701 = vbcast.lane.b32.xlu0 %v6671, %s6700
        %v6702 = vpop.permute.xlu0 %6701
        %s6704 = sor.u32 256, 64
        %6705 = vbcast.lane.b32.xlu0 %v6671, %s6704
        %v6706 = vpop.permute.xlu0 %6705
        %s6708 = sor.u32 256, 72
        %6709 = vbcast.lane.b32.xlu0 %v6671, %s6708
        %v6710 = vpop.permute.xlu0 %6709
        %s6712 = sor.u32 256, 80
        %6713 = vbcast.lane.b32.xlu0 %v6671, %s6712
        %v6714 = vpop.permute.xlu0 %6713
        %s6716 = sor.u32 256, 88
        %6717 = vbcast.lane.b32.xlu0 %v6671, %s6716
        %v6718 = vpop.permute.xlu0 %6717
        %s6720 = sor.u32 256, 96
        %6721 = vbcast.lane.b32.xlu0 %v6671, %s6720
        %v6722 = vpop.permute.xlu0 %6721
        %s6724 = sor.u32 256, 104
        %6725 = vbcast.lane.b32.xlu0 %v6671, %s6724
        %v6726 = vpop.permute.xlu0 %6725
        %s6728 = sor.u32 256, 112
        %6729 = vbcast.lane.b32.xlu0 %v6671, %s6728
        %v6730 = vpop.permute.xlu0 %6729
        %s6732 = sor.u32 256, 120
        %6733 = vbcast.lane.b32.xlu0 %v6671, %s6732
        %v6734 = vpop.permute.xlu0 %6733
        %v6735 = vlaneseq
        %v6736 = vshrl.u32 %v6735, 7
        %v6737 = vsub.s32 7, %v6736
        %v6738 = vrot.slane %v6264, %v6737
        %6740 = vbcast.lane.b32.xlu0 %v6738, 256
        %v6741 = vpop.permute.xlu0 %6740
        %s6743 = sor.u32 256, 8
        %6744 = vbcast.lane.b32.xlu0 %v6738, %s6743
        %v6745 = vpop.permute.xlu0 %6744
        %s6747 = sor.u32 256, 16
        %6748 = vbcast.lane.b32.xlu0 %v6738, %s6747
        %v6749 = vpop.permute.xlu0 %6748
        %s6751 = sor.u32 256, 24
        %6752 = vbcast.lane.b32.xlu0 %v6738, %s6751
        %v6753 = vpop.permute.xlu0 %6752
        %s6755 = sor.u32 256, 32
        %6756 = vbcast.lane.b32.xlu0 %v6738, %s6755
        %v6757 = vpop.permute.xlu0 %6756
        %s6759 = sor.u32 256, 40
        %6760 = vbcast.lane.b32.xlu0 %v6738, %s6759
        %v6761 = vpop.permute.xlu0 %6760
        %s6763 = sor.u32 256, 48
        %6764 = vbcast.lane.b32.xlu0 %v6738, %s6763
        %v6765 = vpop.permute.xlu0 %6764
        %s6767 = sor.u32 256, 56
        %6768 = vbcast.lane.b32.xlu0 %v6738, %s6767
        %v6769 = vpop.permute.xlu0 %6768
        %s6771 = sor.u32 256, 64
        %6772 = vbcast.lane.b32.xlu0 %v6738, %s6771
        %v6773 = vpop.permute.xlu0 %6772
        %s6775 = sor.u32 256, 72
        %6776 = vbcast.lane.b32.xlu0 %v6738, %s6775
        %v6777 = vpop.permute.xlu0 %6776
        %s6779 = sor.u32 256, 80
        %6780 = vbcast.lane.b32.xlu0 %v6738, %s6779
        %v6781 = vpop.permute.xlu0 %6780
        %s6783 = sor.u32 256, 88
        %6784 = vbcast.lane.b32.xlu0 %v6738, %s6783
        %v6785 = vpop.permute.xlu0 %6784
        %s6787 = sor.u32 256, 96
        %6788 = vbcast.lane.b32.xlu0 %v6738, %s6787
        %v6789 = vpop.permute.xlu0 %6788
        %s6791 = sor.u32 256, 104
        %6792 = vbcast.lane.b32.xlu0 %v6738, %s6791
        %v6793 = vpop.permute.xlu0 %6792
        %s6795 = sor.u32 256, 112
        %6796 = vbcast.lane.b32.xlu0 %v6738, %s6795
        %v6797 = vpop.permute.xlu0 %6796
        %s6799 = sor.u32 256, 120
        %6800 = vbcast.lane.b32.xlu0 %v6738, %s6799
        %v6801 = vpop.permute.xlu0 %6800
        %v6930 = vmul.f32 %v6136, %v6272
        %v6931 = vmul.f32 %v6137, %v6276
        %v6932 = vmul.f32 %v6138, %v6280
        %v6933 = vmul.f32 %v6139, %v6284
        %v6934 = vmul.f32 %v6140, %v6288
        %v6935 = vmul.f32 %v6141, %v6292
        %v6936 = vmul.f32 %v6142, %v6296
        %v6937 = vmul.f32 %v6143, %v6300
        %v6938 = vmul.f32 %v6144, %v6304
        %v6939 = vmul.f32 %v6145, %v6308
        %v6940 = vmul.f32 %v6146, %v6312
        %v6941 = vmul.f32 %v6147, %v6316
        %v6942 = vmul.f32 %v6148, %v6320
        %v6943 = vmul.f32 %v6149, %v6324
        %v6944 = vmul.f32 %v6150, %v6328
        %v6945 = vmul.f32 %v6151, %v6332
        %v6946 = vmul.f32 %v6152, %v6339
        %v6947 = vmul.f32 %v6153, %v6343
        %v6948 = vmul.f32 %v6154, %v6347
        %v6949 = vmul.f32 %v6155, %v6351
        %v6950 = vmul.f32 %v6156, %v6355
        %v6951 = vmul.f32 %v6157, %v6359
        %v6952 = vmul.f32 %v6158, %v6363
        %v6953 = vmul.f32 %v6159, %v6367
        %v6954 = vmul.f32 %v6160, %v6371
        %v6955 = vmul.f32 %v6161, %v6375
        %v6956 = vmul.f32 %v6162, %v6379
        %v6957 = vmul.f32 %v6163, %v6383
        %v6958 = vmul.f32 %v6164, %v6387
        %v6959 = vmul.f32 %v6165, %v6391
        %v6960 = vmul.f32 %v6166, %v6395
        %v6961 = vmul.f32 %v6167, %v6399
        %v6962 = vmul.f32 %v6168, %v6406
        %v6963 = vmul.f32 %v6169, %v6410
        %v6964 = vmul.f32 %v6170, %v6414
        %v6965 = vmul.f32 %v6171, %v6418
        %v6966 = vmul.f32 %v6172, %v6422
        %v6967 = vmul.f32 %v6173, %v6426
        %v6968 = vmul.f32 %v6174, %v6430
        %v6969 = vmul.f32 %v6175, %v6434
        %v6970 = vmul.f32 %v6176, %v6438
        %v6971 = vmul.f32 %v6177, %v6442
        %v6972 = vmul.f32 %v6178, %v6446
        %v6973 = vmul.f32 %v6179, %v6450
        %v6974 = vmul.f32 %v6180, %v6454
        %v6975 = vmul.f32 %v6181, %v6458
        %v6976 = vmul.f32 %v6182, %v6462
        %v6977 = vmul.f32 %v6183, %v6466
        %v6978 = vmul.f32 %v6184, %v6473
        %v6979 = vmul.f32 %v6185, %v6477
        %v6980 = vmul.f32 %v6186, %v6481
        %v6981 = vmul.f32 %v6187, %v6485
        %v6982 = vmul.f32 %v6188, %v6489
        %v6983 = vmul.f32 %v6189, %v6493
        %v6984 = vmul.f32 %v6190, %v6497
        %v6985 = vmul.f32 %v6191, %v6501
        %v6986 = vmul.f32 %v6192, %v6505
        %v6987 = vmul.f32 %v6193, %v6509
        %v6988 = vmul.f32 %v6194, %v6513
        %v6989 = vmul.f32 %v6195, %v6517
        %v6990 = vmul.f32 %v6196, %v6521
        %v6991 = vmul.f32 %v6197, %v6525
        %v6992 = vmul.f32 %v6198, %v6529
        %v6993 = vmul.f32 %v6199, %v6533
        %v6994 = vmul.f32 %v6200, %v6540
        %v6995 = vmul.f32 %v6201, %v6544
        %v6996 = vmul.f32 %v6202, %v6548
        %v6997 = vmul.f32 %v6203, %v6552
        %v6998 = vmul.f32 %v6204, %v6556
        %v6999 = vmul.f32 %v6205, %v6560
        %v7000 = vmul.f32 %v6206, %v6564
        %v7001 = vmul.f32 %v6207, %v6568
        %v7002 = vmul.f32 %v6208, %v6572
        %v7003 = vmul.f32 %v6209, %v6576
        %v7004 = vmul.f32 %v6210, %v6580
        %v7005 = vmul.f32 %v6211, %v6584
        %v7006 = vmul.f32 %v6212, %v6588
        %v7007 = vmul.f32 %v6213, %v6592
        %v7008 = vmul.f32 %v6214, %v6596
        %v7009 = vmul.f32 %v6215, %v6600
        %v7010 = vmul.f32 %v6216, %v6607
        %v7011 = vmul.f32 %v6217, %v6611
        %v7012 = vmul.f32 %v6218, %v6615
        %v7013 = vmul.f32 %v6219, %v6619
        %v7014 = vmul.f32 %v6220, %v6623
        %v7015 = vmul.f32 %v6221, %v6627
        %v7016 = vmul.f32 %v6222, %v6631
        %v7017 = vmul.f32 %v6223, %v6635
        %v7018 = vmul.f32 %v6224, %v6639
        %v7019 = vmul.f32 %v6225, %v6643
        %v7020 = vmul.f32 %v6226, %v6647
        %v7021 = vmul.f32 %v6227, %v6651
        %v7022 = vmul.f32 %v6228, %v6655
        %v7023 = vmul.f32 %v6229, %v6659
        %v7024 = vmul.f32 %v6230, %v6663
        %v7025 = vmul.f32 %v6231, %v6667
        %v7026 = vmul.f32 %v6232, %v6674
        %v7027 = vmul.f32 %v6233, %v6678
        %v7028 = vmul.f32 %v6234, %v6682
        %v7029 = vmul.f32 %v6235, %v6686
        %v7030 = vmul.f32 %v6236, %v6690
        %v7031 = vmul.f32 %v6237, %v6694
        %v7032 = vmul.f32 %v6238, %v6698
        %v7033 = vmul.f32 %v6239, %v6702
        %v7034 = vmul.f32 %v6240, %v6706
        %v7035 = vmul.f32 %v6241, %v6710
        %v7036 = vmul.f32 %v6242, %v6714
        %v7037 = vmul.f32 %v6243, %v6718
        %v7038 = vmul.f32 %v6244, %v6722
        %v7039 = vmul.f32 %v6245, %v6726
        %v7040 = vmul.f32 %v6246, %v6730
        %v7041 = vmul.f32 %v6247, %v6734
        %v7042 = vmul.f32 %v6248, %v6741
        %v7043 = vmul.f32 %v6249, %v6745
        %v7044 = vmul.f32 %v6250, %v6749
        %v7045 = vmul.f32 %v6251, %v6753
        %v7046 = vmul.f32 %v6252, %v6757
        %v7047 = vmul.f32 %v6253, %v6761
        %v7048 = vmul.f32 %v6254, %v6765
        %v7049 = vmul.f32 %v6255, %v6769
        %v7050 = vmul.f32 %v6256, %v6773
        %v7051 = vmul.f32 %v6257, %v6777
        %v7052 = vmul.f32 %v6258, %v6781
        %v7053 = vmul.f32 %v6259, %v6785
        %v7054 = vmul.f32 %v6260, %v6789
        %v7055 = vmul.f32 %v6261, %v6793
        %v7056 = vmul.f32 %v6262, %v6797
        %v7057 = vmul.f32 %v6263, %v6801
        %v7058 = vsub.f32 %v6264, 1.0
        %v7059 = vmul.f32 %v7058, 100000.0
        %v7061 = vlaneseq
        %v7062 = vshrl.u32 %v7061, 7
        %v7063 = vsub.s32 0, %v7062
        %v7064 = vrot.slane %v7059, %v7063
        %7066 = vbcast.lane.b32.xlu0 %v7064, 256
        %v7067 = vpop.permute.xlu0 %7066
        %s7069 = sor.u32 256, 8
        %7070 = vbcast.lane.b32.xlu0 %v7064, %s7069
        %v7071 = vpop.permute.xlu0 %7070
        %s7073 = sor.u32 256, 16
        %7074 = vbcast.lane.b32.xlu0 %v7064, %s7073
        %v7075 = vpop.permute.xlu0 %7074
        %s7077 = sor.u32 256, 24
        %7078 = vbcast.lane.b32.xlu0 %v7064, %s7077
        %v7079 = vpop.permute.xlu0 %7078
        %s7081 = sor.u32 256, 32
        %7082 = vbcast.lane.b32.xlu0 %v7064, %s7081
        %v7083 = vpop.permute.xlu0 %7082
        %s7085 = sor.u32 256, 40
        %7086 = vbcast.lane.b32.xlu0 %v7064, %s7085
        %v7087 = vpop.permute.xlu0 %7086
        %s7089 = sor.u32 256, 48
        %7090 = vbcast.lane.b32.xlu0 %v7064, %s7089
        %v7091 = vpop.permute.xlu0 %7090
        %s7093 = sor.u32 256, 56
        %7094 = vbcast.lane.b32.xlu0 %v7064, %s7093
        %v7095 = vpop.permute.xlu0 %7094
        %s7097 = sor.u32 256, 64
        %7098 = vbcast.lane.b32.xlu0 %v7064, %s7097
        %v7099 = vpop.permute.xlu0 %7098
        %s7101 = sor.u32 256, 72
        %7102 = vbcast.lane.b32.xlu0 %v7064, %s7101
        %v7103 = vpop.permute.xlu0 %7102
        %s7105 = sor.u32 256, 80
        %7106 = vbcast.lane.b32.xlu0 %v7064, %s7105
        %v7107 = vpop.permute.xlu0 %7106
        %s7109 = sor.u32 256, 88
        %7110 = vbcast.lane.b32.xlu0 %v7064, %s7109
        %v7111 = vpop.permute.xlu0 %7110
        %s7113 = sor.u32 256, 96
        %7114 = vbcast.lane.b32.xlu0 %v7064, %s7113
        %v7115 = vpop.permute.xlu0 %7114
        %s7117 = sor.u32 256, 104
        %7118 = vbcast.lane.b32.xlu0 %v7064, %s7117
        %v7119 = vpop.permute.xlu0 %7118
        %s7121 = sor.u32 256, 112
        %7122 = vbcast.lane.b32.xlu0 %v7064, %s7121
        %v7123 = vpop.permute.xlu0 %7122
        %s7125 = sor.u32 256, 120
        %7126 = vbcast.lane.b32.xlu0 %v7064, %s7125
        %v7127 = vpop.permute.xlu0 %7126
        %v7128 = vlaneseq
        %v7129 = vshrl.u32 %v7128, 7
        %v7130 = vsub.s32 1, %v7129
        %v7131 = vrot.slane %v7059, %v7130
        %7133 = vbcast.lane.b32.xlu0 %v7131, 256
        %v7134 = vpop.permute.xlu0 %7133
        %s7136 = sor.u32 256, 8
        %7137 = vbcast.lane.b32.xlu0 %v7131, %s7136
        %v7138 = vpop.permute.xlu0 %7137
        %s7140 = sor.u32 256, 16
        %7141 = vbcast.lane.b32.xlu0 %v7131, %s7140
        %v7142 = vpop.permute.xlu0 %7141
        %s7144 = sor.u32 256, 24
        %7145 = vbcast.lane.b32.xlu0 %v7131, %s7144
        %v7146 = vpop.permute.xlu0 %7145
        %s7148 = sor.u32 256, 32
        %7149 = vbcast.lane.b32.xlu0 %v7131, %s7148
        %v7150 = vpop.permute.xlu0 %7149
        %s7152 = sor.u32 256, 40
        %7153 = vbcast.lane.b32.xlu0 %v7131, %s7152
        %v7154 = vpop.permute.xlu0 %7153
        %s7156 = sor.u32 256, 48
        %7157 = vbcast.lane.b32.xlu0 %v7131, %s7156
        %v7158 = vpop.permute.xlu0 %7157
        %s7160 = sor.u32 256, 56
        %7161 = vbcast.lane.b32.xlu0 %v7131, %s7160
        %v7162 = vpop.permute.xlu0 %7161
        %s7164 = sor.u32 256, 64
        %7165 = vbcast.lane.b32.xlu0 %v7131, %s7164
        %v7166 = vpop.permute.xlu0 %7165
        %s7168 = sor.u32 256, 72
        %7169 = vbcast.lane.b32.xlu0 %v7131, %s7168
        %v7170 = vpop.permute.xlu0 %7169
        %s7172 = sor.u32 256, 80
        %7173 = vbcast.lane.b32.xlu0 %v7131, %s7172
        %v7174 = vpop.permute.xlu0 %7173
        %s7176 = sor.u32 256, 88
        %7177 = vbcast.lane.b32.xlu0 %v7131, %s7176
        %v7178 = vpop.permute.xlu0 %7177
        %s7180 = sor.u32 256, 96
        %7181 = vbcast.lane.b32.xlu0 %v7131, %s7180
        %v7182 = vpop.permute.xlu0 %7181
        %s7184 = sor.u32 256, 104
        %7185 = vbcast.lane.b32.xlu0 %v7131, %s7184
        %v7186 = vpop.permute.xlu0 %7185
        %s7188 = sor.u32 256, 112
        %7189 = vbcast.lane.b32.xlu0 %v7131, %s7188
        %v7190 = vpop.permute.xlu0 %7189
        %s7192 = sor.u32 256, 120
        %7193 = vbcast.lane.b32.xlu0 %v7131, %s7192
        %v7194 = vpop.permute.xlu0 %7193
        %v7195 = vlaneseq
        %v7196 = vshrl.u32 %v7195, 7
        %v7197 = vsub.s32 2, %v7196
        %v7198 = vrot.slane %v7059, %v7197
        %7200 = vbcast.lane.b32.xlu0 %v7198, 256
        %v7201 = vpop.permute.xlu0 %7200
        %s7203 = sor.u32 256, 8
        %7204 = vbcast.lane.b32.xlu0 %v7198, %s7203
        %v7205 = vpop.permute.xlu0 %7204
        %s7207 = sor.u32 256, 16
        %7208 = vbcast.lane.b32.xlu0 %v7198, %s7207
        %v7209 = vpop.permute.xlu0 %7208
        %s7211 = sor.u32 256, 24
        %7212 = vbcast.lane.b32.xlu0 %v7198, %s7211
        %v7213 = vpop.permute.xlu0 %7212
        %s7215 = sor.u32 256, 32
        %7216 = vbcast.lane.b32.xlu0 %v7198, %s7215
        %v7217 = vpop.permute.xlu0 %7216
        %s7219 = sor.u32 256, 40
        %7220 = vbcast.lane.b32.xlu0 %v7198, %s7219
        %v7221 = vpop.permute.xlu0 %7220
        %s7223 = sor.u32 256, 48
        %7224 = vbcast.lane.b32.xlu0 %v7198, %s7223
        %v7225 = vpop.permute.xlu0 %7224
        %s7227 = sor.u32 256, 56
        %7228 = vbcast.lane.b32.xlu0 %v7198, %s7227
        %v7229 = vpop.permute.xlu0 %7228
        %s7231 = sor.u32 256, 64
        %7232 = vbcast.lane.b32.xlu0 %v7198, %s7231
        %v7233 = vpop.permute.xlu0 %7232
        %s7235 = sor.u32 256, 72
        %7236 = vbcast.lane.b32.xlu0 %v7198, %s7235
        %v7237 = vpop.permute.xlu0 %7236
        %s7239 = sor.u32 256, 80
        %7240 = vbcast.lane.b32.xlu0 %v7198, %s7239
        %v7241 = vpop.permute.xlu0 %7240
        %s7243 = sor.u32 256, 88
        %7244 = vbcast.lane.b32.xlu0 %v7198, %s7243
        %v7245 = vpop.permute.xlu0 %7244
        %s7247 = sor.u32 256, 96
        %7248 = vbcast.lane.b32.xlu0 %v7198, %s7247
        %v7249 = vpop.permute.xlu0 %7248
        %s7251 = sor.u32 256, 104
        %7252 = vbcast.lane.b32.xlu0 %v7198, %s7251
        %v7253 = vpop.permute.xlu0 %7252
        %s7255 = sor.u32 256, 112
        %7256 = vbcast.lane.b32.xlu0 %v7198, %s7255
        %v7257 = vpop.permute.xlu0 %7256
        %s7259 = sor.u32 256, 120
        %7260 = vbcast.lane.b32.xlu0 %v7198, %s7259
        %v7261 = vpop.permute.xlu0 %7260
        %v7262 = vlaneseq
        %v7263 = vshrl.u32 %v7262, 7
        %v7264 = vsub.s32 3, %v7263
        %v7265 = vrot.slane %v7059, %v7264
        %7267 = vbcast.lane.b32.xlu0 %v7265, 256
        %v7268 = vpop.permute.xlu0 %7267
        %s7270 = sor.u32 256, 8
        %7271 = vbcast.lane.b32.xlu0 %v7265, %s7270
        %v7272 = vpop.permute.xlu0 %7271
        %s7274 = sor.u32 256, 16
        %7275 = vbcast.lane.b32.xlu0 %v7265, %s7274
        %v7276 = vpop.permute.xlu0 %7275
        %s7278 = sor.u32 256, 24
        %7279 = vbcast.lane.b32.xlu0 %v7265, %s7278
        %v7280 = vpop.permute.xlu0 %7279
        %s7282 = sor.u32 256, 32
        %7283 = vbcast.lane.b32.xlu0 %v7265, %s7282
        %v7284 = vpop.permute.xlu0 %7283
        %s7286 = sor.u32 256, 40
        %7287 = vbcast.lane.b32.xlu0 %v7265, %s7286
        %v7288 = vpop.permute.xlu0 %7287
        %s7290 = sor.u32 256, 48
        %7291 = vbcast.lane.b32.xlu0 %v7265, %s7290
        %v7292 = vpop.permute.xlu0 %7291
        %s7294 = sor.u32 256, 56
        %7295 = vbcast.lane.b32.xlu0 %v7265, %s7294
        %v7296 = vpop.permute.xlu0 %7295
        %s7298 = sor.u32 256, 64
        %7299 = vbcast.lane.b32.xlu0 %v7265, %s7298
        %v7300 = vpop.permute.xlu0 %7299
        %s7302 = sor.u32 256, 72
        %7303 = vbcast.lane.b32.xlu0 %v7265, %s7302
        %v7304 = vpop.permute.xlu0 %7303
        %s7306 = sor.u32 256, 80
        %7307 = vbcast.lane.b32.xlu0 %v7265, %s7306
        %v7308 = vpop.permute.xlu0 %7307
        %s7310 = sor.u32 256, 88
        %7311 = vbcast.lane.b32.xlu0 %v7265, %s7310
        %v7312 = vpop.permute.xlu0 %7311
        %s7314 = sor.u32 256, 96
        %7315 = vbcast.lane.b32.xlu0 %v7265, %s7314
        %v7316 = vpop.permute.xlu0 %7315
        %s7318 = sor.u32 256, 104
        %7319 = vbcast.lane.b32.xlu0 %v7265, %s7318
        %v7320 = vpop.permute.xlu0 %7319
        %s7322 = sor.u32 256, 112
        %7323 = vbcast.lane.b32.xlu0 %v7265, %s7322
        %v7324 = vpop.permute.xlu0 %7323
        %s7326 = sor.u32 256, 120
        %7327 = vbcast.lane.b32.xlu0 %v7265, %s7326
        %v7328 = vpop.permute.xlu0 %7327
        %v7329 = vlaneseq
        %v7330 = vshrl.u32 %v7329, 7
        %v7331 = vsub.s32 4, %v7330
        %v7332 = vrot.slane %v7059, %v7331
        %7334 = vbcast.lane.b32.xlu0 %v7332, 256
        %v7335 = vpop.permute.xlu0 %7334
        %s7337 = sor.u32 256, 8
        %7338 = vbcast.lane.b32.xlu0 %v7332, %s7337
        %v7339 = vpop.permute.xlu0 %7338
        %s7341 = sor.u32 256, 16
        %7342 = vbcast.lane.b32.xlu0 %v7332, %s7341
        %v7343 = vpop.permute.xlu0 %7342
        %s7345 = sor.u32 256, 24
        %7346 = vbcast.lane.b32.xlu0 %v7332, %s7345
        %v7347 = vpop.permute.xlu0 %7346
        %s7349 = sor.u32 256, 32
        %7350 = vbcast.lane.b32.xlu0 %v7332, %s7349
        %v7351 = vpop.permute.xlu0 %7350
        %s7353 = sor.u32 256, 40
        %7354 = vbcast.lane.b32.xlu0 %v7332, %s7353
        %v7355 = vpop.permute.xlu0 %7354
        %s7357 = sor.u32 256, 48
        %7358 = vbcast.lane.b32.xlu0 %v7332, %s7357
        %v7359 = vpop.permute.xlu0 %7358
        %s7361 = sor.u32 256, 56
        %7362 = vbcast.lane.b32.xlu0 %v7332, %s7361
        %v7363 = vpop.permute.xlu0 %7362
        %s7365 = sor.u32 256, 64
        %7366 = vbcast.lane.b32.xlu0 %v7332, %s7365
        %v7367 = vpop.permute.xlu0 %7366
        %s7369 = sor.u32 256, 72
        %7370 = vbcast.lane.b32.xlu0 %v7332, %s7369
        %v7371 = vpop.permute.xlu0 %7370
        %s7373 = sor.u32 256, 80
        %7374 = vbcast.lane.b32.xlu0 %v7332, %s7373
        %v7375 = vpop.permute.xlu0 %7374
        %s7377 = sor.u32 256, 88
        %7378 = vbcast.lane.b32.xlu0 %v7332, %s7377
        %v7379 = vpop.permute.xlu0 %7378
        %s7381 = sor.u32 256, 96
        %7382 = vbcast.lane.b32.xlu0 %v7332, %s7381
        %v7383 = vpop.permute.xlu0 %7382
        %s7385 = sor.u32 256, 104
        %7386 = vbcast.lane.b32.xlu0 %v7332, %s7385
        %v7387 = vpop.permute.xlu0 %7386
        %s7389 = sor.u32 256, 112
        %7390 = vbcast.lane.b32.xlu0 %v7332, %s7389
        %v7391 = vpop.permute.xlu0 %7390
        %s7393 = sor.u32 256, 120
        %7394 = vbcast.lane.b32.xlu0 %v7332, %s7393
        %v7395 = vpop.permute.xlu0 %7394
        %v7396 = vlaneseq
        %v7397 = vshrl.u32 %v7396, 7
        %v7398 = vsub.s32 5, %v7397
        %v7399 = vrot.slane %v7059, %v7398
        %7401 = vbcast.lane.b32.xlu0 %v7399, 256
        %v7402 = vpop.permute.xlu0 %7401
        %s7404 = sor.u32 256, 8
        %7405 = vbcast.lane.b32.xlu0 %v7399, %s7404
        %v7406 = vpop.permute.xlu0 %7405
        %s7408 = sor.u32 256, 16
        %7409 = vbcast.lane.b32.xlu0 %v7399, %s7408
        %v7410 = vpop.permute.xlu0 %7409
        %s7412 = sor.u32 256, 24
        %7413 = vbcast.lane.b32.xlu0 %v7399, %s7412
        %v7414 = vpop.permute.xlu0 %7413
        %s7416 = sor.u32 256, 32
        %7417 = vbcast.lane.b32.xlu0 %v7399, %s7416
        %v7418 = vpop.permute.xlu0 %7417
        %s7420 = sor.u32 256, 40
        %7421 = vbcast.lane.b32.xlu0 %v7399, %s7420
        %v7422 = vpop.permute.xlu0 %7421
        %s7424 = sor.u32 256, 48
        %7425 = vbcast.lane.b32.xlu0 %v7399, %s7424
        %v7426 = vpop.permute.xlu0 %7425
        %s7428 = sor.u32 256, 56
        %7429 = vbcast.lane.b32.xlu0 %v7399, %s7428
        %v7430 = vpop.permute.xlu0 %7429
        %s7432 = sor.u32 256, 64
        %7433 = vbcast.lane.b32.xlu0 %v7399, %s7432
        %v7434 = vpop.permute.xlu0 %7433
        %s7436 = sor.u32 256, 72
        %7437 = vbcast.lane.b32.xlu0 %v7399, %s7436
        %v7438 = vpop.permute.xlu0 %7437
        %s7440 = sor.u32 256, 80
        %7441 = vbcast.lane.b32.xlu0 %v7399, %s7440
        %v7442 = vpop.permute.xlu0 %7441
        %s7444 = sor.u32 256, 88
        %7445 = vbcast.lane.b32.xlu0 %v7399, %s7444
        %v7446 = vpop.permute.xlu0 %7445
        %s7448 = sor.u32 256, 96
        %7449 = vbcast.lane.b32.xlu0 %v7399, %s7448
        %v7450 = vpop.permute.xlu0 %7449
        %s7452 = sor.u32 256, 104
        %7453 = vbcast.lane.b32.xlu0 %v7399, %s7452
        %v7454 = vpop.permute.xlu0 %7453
        %s7456 = sor.u32 256, 112
        %7457 = vbcast.lane.b32.xlu0 %v7399, %s7456
        %v7458 = vpop.permute.xlu0 %7457
        %s7460 = sor.u32 256, 120
        %7461 = vbcast.lane.b32.xlu0 %v7399, %s7460
        %v7462 = vpop.permute.xlu0 %7461
        %v7463 = vlaneseq
        %v7464 = vshrl.u32 %v7463, 7
        %v7465 = vsub.s32 6, %v7464
        %v7466 = vrot.slane %v7059, %v7465
        %7468 = vbcast.lane.b32.xlu0 %v7466, 256
        %v7469 = vpop.permute.xlu0 %7468
        %s7471 = sor.u32 256, 8
        %7472 = vbcast.lane.b32.xlu0 %v7466, %s7471
        %v7473 = vpop.permute.xlu0 %7472
        %s7475 = sor.u32 256, 16
        %7476 = vbcast.lane.b32.xlu0 %v7466, %s7475
        %v7477 = vpop.permute.xlu0 %7476
        %s7479 = sor.u32 256, 24
        %7480 = vbcast.lane.b32.xlu0 %v7466, %s7479
        %v7481 = vpop.permute.xlu0 %7480
        %s7483 = sor.u32 256, 32
        %7484 = vbcast.lane.b32.xlu0 %v7466, %s7483
        %v7485 = vpop.permute.xlu0 %7484
        %s7487 = sor.u32 256, 40
        %7488 = vbcast.lane.b32.xlu0 %v7466, %s7487
        %v7489 = vpop.permute.xlu0 %7488
        %s7491 = sor.u32 256, 48
        %7492 = vbcast.lane.b32.xlu0 %v7466, %s7491
        %v7493 = vpop.permute.xlu0 %7492
        %s7495 = sor.u32 256, 56
        %7496 = vbcast.lane.b32.xlu0 %v7466, %s7495
        %v7497 = vpop.permute.xlu0 %7496
        %s7499 = sor.u32 256, 64
        %7500 = vbcast.lane.b32.xlu0 %v7466, %s7499
        %v7501 = vpop.permute.xlu0 %7500
        %s7503 = sor.u32 256, 72
        %7504 = vbcast.lane.b32.xlu0 %v7466, %s7503
        %v7505 = vpop.permute.xlu0 %7504
        %s7507 = sor.u32 256, 80
        %7508 = vbcast.lane.b32.xlu0 %v7466, %s7507
        %v7509 = vpop.permute.xlu0 %7508
        %s7511 = sor.u32 256, 88
        %7512 = vbcast.lane.b32.xlu0 %v7466, %s7511
        %v7513 = vpop.permute.xlu0 %7512
        %s7515 = sor.u32 256, 96
        %7516 = vbcast.lane.b32.xlu0 %v7466, %s7515
        %v7517 = vpop.permute.xlu0 %7516
        %s7519 = sor.u32 256, 104
        %7520 = vbcast.lane.b32.xlu0 %v7466, %s7519
        %v7521 = vpop.permute.xlu0 %7520
        %s7523 = sor.u32 256, 112
        %7524 = vbcast.lane.b32.xlu0 %v7466, %s7523
        %v7525 = vpop.permute.xlu0 %7524
        %s7527 = sor.u32 256, 120
        %7528 = vbcast.lane.b32.xlu0 %v7466, %s7527
        %v7529 = vpop.permute.xlu0 %7528
        %v7530 = vlaneseq
        %v7531 = vshrl.u32 %v7530, 7
        %v7532 = vsub.s32 7, %v7531
        %v7533 = vrot.slane %v7059, %v7532
        %7535 = vbcast.lane.b32.xlu0 %v7533, 256
        %v7536 = vpop.permute.xlu0 %7535
        %s7538 = sor.u32 256, 8
        %7539 = vbcast.lane.b32.xlu0 %v7533, %s7538
        %v7540 = vpop.permute.xlu0 %7539
        %s7542 = sor.u32 256, 16
        %7543 = vbcast.lane.b32.xlu0 %v7533, %s7542
        %v7544 = vpop.permute.xlu0 %7543
        %s7546 = sor.u32 256, 24
        %7547 = vbcast.lane.b32.xlu0 %v7533, %s7546
        %v7548 = vpop.permute.xlu0 %7547
        %s7550 = sor.u32 256, 32
        %7551 = vbcast.lane.b32.xlu0 %v7533, %s7550
        %v7552 = vpop.permute.xlu0 %7551
        %s7554 = sor.u32 256, 40
        %7555 = vbcast.lane.b32.xlu0 %v7533, %s7554
        %v7556 = vpop.permute.xlu0 %7555
        %s7558 = sor.u32 256, 48
        %7559 = vbcast.lane.b32.xlu0 %v7533, %s7558
        %v7560 = vpop.permute.xlu0 %7559
        %s7562 = sor.u32 256, 56
        %7563 = vbcast.lane.b32.xlu0 %v7533, %s7562
        %v7564 = vpop.permute.xlu0 %7563
        %s7566 = sor.u32 256, 64
        %7567 = vbcast.lane.b32.xlu0 %v7533, %s7566
        %v7568 = vpop.permute.xlu0 %7567
        %s7570 = sor.u32 256, 72
        %7571 = vbcast.lane.b32.xlu0 %v7533, %s7570
        %v7572 = vpop.permute.xlu0 %7571
        %s7574 = sor.u32 256, 80
        %7575 = vbcast.lane.b32.xlu0 %v7533, %s7574
        %v7576 = vpop.permute.xlu0 %7575
        %s7578 = sor.u32 256, 88
        %7579 = vbcast.lane.b32.xlu0 %v7533, %s7578
        %v7580 = vpop.permute.xlu0 %7579
        %s7582 = sor.u32 256, 96
        %7583 = vbcast.lane.b32.xlu0 %v7533, %s7582
        %v7584 = vpop.permute.xlu0 %7583
        %s7586 = sor.u32 256, 104
        %7587 = vbcast.lane.b32.xlu0 %v7533, %s7586
        %v7588 = vpop.permute.xlu0 %7587
        %s7590 = sor.u32 256, 112
        %7591 = vbcast.lane.b32.xlu0 %v7533, %s7590
        %v7592 = vpop.permute.xlu0 %7591
        %s7594 = sor.u32 256, 120
        %7595 = vbcast.lane.b32.xlu0 %v7533, %s7594
        %v7596 = vpop.permute.xlu0 %7595
        %v7725 = vadd.f32 %v6930, %v7067
        %v7726 = vadd.f32 %v6931, %v7071
        %v7727 = vadd.f32 %v6932, %v7075
        %v7728 = vadd.f32 %v6933, %v7079
        %v7729 = vadd.f32 %v6934, %v7083
        %v7730 = vadd.f32 %v6935, %v7087
        %v7731 = vadd.f32 %v6936, %v7091
        %v7732 = vadd.f32 %v6937, %v7095
        %v7733 = vadd.f32 %v6938, %v7099
        %v7734 = vadd.f32 %v6939, %v7103
        %v7735 = vadd.f32 %v6940, %v7107
        %v7736 = vadd.f32 %v6941, %v7111
        %v7737 = vadd.f32 %v6942, %v7115
        %v7738 = vadd.f32 %v6943, %v7119
        %v7739 = vadd.f32 %v6944, %v7123
        %v7740 = vadd.f32 %v6945, %v7127
        %v7741 = vadd.f32 %v6946, %v7134
        %v7742 = vadd.f32 %v6947, %v7138
        %v7743 = vadd.f32 %v6948, %v7142
        %v7744 = vadd.f32 %v6949, %v7146
        %v7745 = vadd.f32 %v6950, %v7150
        %v7746 = vadd.f32 %v6951, %v7154
        %v7747 = vadd.f32 %v6952, %v7158
        %v7748 = vadd.f32 %v6953, %v7162
        %v7749 = vadd.f32 %v6954, %v7166
        %v7750 = vadd.f32 %v6955, %v7170
        %v7751 = vadd.f32 %v6956, %v7174
        %v7752 = vadd.f32 %v6957, %v7178
        %v7753 = vadd.f32 %v6958, %v7182
        %v7754 = vadd.f32 %v6959, %v7186
        %v7755 = vadd.f32 %v6960, %v7190
        %v7756 = vadd.f32 %v6961, %v7194
        %v7757 = vadd.f32 %v6962, %v7201
        %v7758 = vadd.f32 %v6963, %v7205
        %v7759 = vadd.f32 %v6964, %v7209
        %v7760 = vadd.f32 %v6965, %v7213
        %v7761 = vadd.f32 %v6966, %v7217
        %v7762 = vadd.f32 %v6967, %v7221
        %v7763 = vadd.f32 %v6968, %v7225
        %v7764 = vadd.f32 %v6969, %v7229
        %v7765 = vadd.f32 %v6970, %v7233
        %v7766 = vadd.f32 %v6971, %v7237
        %v7767 = vadd.f32 %v6972, %v7241
        %v7768 = vadd.f32 %v6973, %v7245
        %v7769 = vadd.f32 %v6974, %v7249
        %v7770 = vadd.f32 %v6975, %v7253
        %v7771 = vadd.f32 %v6976, %v7257
        %v7772 = vadd.f32 %v6977, %v7261
        %v7773 = vadd.f32 %v6978, %v7268
        %v7774 = vadd.f32 %v6979, %v7272
        %v7775 = vadd.f32 %v6980, %v7276
        %v7776 = vadd.f32 %v6981, %v7280
        %v7777 = vadd.f32 %v6982, %v7284
        %v7778 = vadd.f32 %v6983, %v7288
        %v7779 = vadd.f32 %v6984, %v7292
        %v7780 = vadd.f32 %v6985, %v7296
        %v7781 = vadd.f32 %v6986, %v7300
        %v7782 = vadd.f32 %v6987, %v7304
        %v7783 = vadd.f32 %v6988, %v7308
        %v7784 = vadd.f32 %v6989, %v7312
        %v7785 = vadd.f32 %v6990, %v7316
        %v7786 = vadd.f32 %v6991, %v7320
        %v7787 = vadd.f32 %v6992, %v7324
        %v7788 = vadd.f32 %v6993, %v7328
        %v7789 = vadd.f32 %v6994, %v7335
        %v7790 = vadd.f32 %v6995, %v7339
        %v7791 = vadd.f32 %v6996, %v7343
        %v7792 = vadd.f32 %v6997, %v7347
        %v7793 = vadd.f32 %v6998, %v7351
        %v7794 = vadd.f32 %v6999, %v7355
        %v7795 = vadd.f32 %v7000, %v7359
        %v7796 = vadd.f32 %v7001, %v7363
        %v7797 = vadd.f32 %v7002, %v7367
        %v7798 = vadd.f32 %v7003, %v7371
        %v7799 = vadd.f32 %v7004, %v7375
        %v7800 = vadd.f32 %v7005, %v7379
        %v7801 = vadd.f32 %v7006, %v7383
        %v7802 = vadd.f32 %v7007, %v7387
        %v7803 = vadd.f32 %v7008, %v7391
        %v7804 = vadd.f32 %v7009, %v7395
        %v7805 = vadd.f32 %v7010, %v7402
        %v7806 = vadd.f32 %v7011, %v7406
        %v7807 = vadd.f32 %v7012, %v7410
        %v7808 = vadd.f32 %v7013, %v7414
        %v7809 = vadd.f32 %v7014, %v7418
        %v7810 = vadd.f32 %v7015, %v7422
        %v7811 = vadd.f32 %v7016, %v7426
        %v7812 = vadd.f32 %v7017, %v7430
        %v7813 = vadd.f32 %v7018, %v7434
        %v7814 = vadd.f32 %v7019, %v7438
        %v7815 = vadd.f32 %v7020, %v7442
        %v7816 = vadd.f32 %v7021, %v7446
        %v7817 = vadd.f32 %v7022, %v7450
        %v7818 = vadd.f32 %v7023, %v7454
        %v7819 = vadd.f32 %v7024, %v7458
        %v7820 = vadd.f32 %v7025, %v7462
        %v7821 = vadd.f32 %v7026, %v7469
        %v7822 = vadd.f32 %v7027, %v7473
        %v7823 = vadd.f32 %v7028, %v7477
        %v7824 = vadd.f32 %v7029, %v7481
        %v7825 = vadd.f32 %v7030, %v7485
        %v7826 = vadd.f32 %v7031, %v7489
        %v7827 = vadd.f32 %v7032, %v7493
        %v7828 = vadd.f32 %v7033, %v7497
        %v7829 = vadd.f32 %v7034, %v7501
        %v7830 = vadd.f32 %v7035, %v7505
        %v7831 = vadd.f32 %v7036, %v7509
        %v7832 = vadd.f32 %v7037, %v7513
        %v7833 = vadd.f32 %v7038, %v7517
        %v7834 = vadd.f32 %v7039, %v7521
        %v7835 = vadd.f32 %v7040, %v7525
        %v7836 = vadd.f32 %v7041, %v7529
        %v7837 = vadd.f32 %v7042, %v7536
        %v7838 = vadd.f32 %v7043, %v7540
        %v7839 = vadd.f32 %v7044, %v7544
        %v7840 = vadd.f32 %v7045, %v7548
        %v7841 = vadd.f32 %v7046, %v7552
        %v7842 = vadd.f32 %v7047, %v7556
        %v7843 = vadd.f32 %v7048, %v7560
        %v7844 = vadd.f32 %v7049, %v7564
        %v7845 = vadd.f32 %v7050, %v7568
        %v7846 = vadd.f32 %v7051, %v7572
        %v7847 = vadd.f32 %v7052, %v7576
        %v7848 = vadd.f32 %v7053, %v7580
        %v7849 = vadd.f32 %v7054, %v7584
        %v7850 = vadd.f32 %v7055, %v7588
        %v7851 = vadd.f32 %v7056, %v7592
        %v7852 = vadd.f32 %v7057, %v7596
        %7981 = vset.pattern.permute.xlu0 0
        %7982 = vperm.xlu0 %7981, %v7725
        %v7983 = vpop.permute.xlu0 %7982
        %7984 = vset.pattern.permute.xlu0 0
        %7985 = vperm.xlu0 %7984, %v7726
        %v7986 = vpop.permute.xlu0 %7985
        %7987 = vset.pattern.permute.xlu0 0
        %7988 = vperm.xlu0 %7987, %v7727
        %v7989 = vpop.permute.xlu0 %7988
        %7990 = vset.pattern.permute.xlu0 0
        %7991 = vperm.xlu0 %7990, %v7728
        %v7992 = vpop.permute.xlu0 %7991
        %7993 = vset.pattern.permute.xlu0 0
        %7994 = vperm.xlu0 %7993, %v7729
        %v7995 = vpop.permute.xlu0 %7994
        %7996 = vset.pattern.permute.xlu0 0
        %7997 = vperm.xlu0 %7996, %v7730
        %v7998 = vpop.permute.xlu0 %7997
        %7999 = vset.pattern.permute.xlu0 0
        %8000 = vperm.xlu0 %7999, %v7731
        %v8001 = vpop.permute.xlu0 %8000
        %8002 = vset.pattern.permute.xlu0 0
        %8003 = vperm.xlu0 %8002, %v7732
        %v8004 = vpop.permute.xlu0 %8003
        %8005 = vset.pattern.permute.xlu0 0
        %8006 = vperm.xlu0 %8005, %v7733
        %v8007 = vpop.permute.xlu0 %8006
        %8008 = vset.pattern.permute.xlu0 0
        %8009 = vperm.xlu0 %8008, %v7734
        %v8010 = vpop.permute.xlu0 %8009
        %8011 = vset.pattern.permute.xlu0 0
        %8012 = vperm.xlu0 %8011, %v7735
        %v8013 = vpop.permute.xlu0 %8012
        %8014 = vset.pattern.permute.xlu0 0
        %8015 = vperm.xlu0 %8014, %v7736
        %v8016 = vpop.permute.xlu0 %8015
        %8017 = vset.pattern.permute.xlu0 0
        %8018 = vperm.xlu0 %8017, %v7737
        %v8019 = vpop.permute.xlu0 %8018
        %8020 = vset.pattern.permute.xlu0 0
        %8021 = vperm.xlu0 %8020, %v7738
        %v8022 = vpop.permute.xlu0 %8021
        %8023 = vset.pattern.permute.xlu0 0
        %8024 = vperm.xlu0 %8023, %v7739
        %v8025 = vpop.permute.xlu0 %8024
        %8026 = vset.pattern.permute.xlu0 0
        %8027 = vperm.xlu0 %8026, %v7740
        %v8028 = vpop.permute.xlu0 %8027
        %8029 = vset.pattern.permute.xlu0 0
        %8030 = vperm.xlu0 %8029, %v7741
        %v8031 = vpop.permute.xlu0 %8030
        %8032 = vset.pattern.permute.xlu0 0
        %8033 = vperm.xlu0 %8032, %v7742
        %v8034 = vpop.permute.xlu0 %8033
        %8035 = vset.pattern.permute.xlu0 0
        %8036 = vperm.xlu0 %8035, %v7743
        %v8037 = vpop.permute.xlu0 %8036
        %8038 = vset.pattern.permute.xlu0 0
        %8039 = vperm.xlu0 %8038, %v7744
        %v8040 = vpop.permute.xlu0 %8039
        %8041 = vset.pattern.permute.xlu0 0
        %8042 = vperm.xlu0 %8041, %v7745
        %v8043 = vpop.permute.xlu0 %8042
        %8044 = vset.pattern.permute.xlu0 0
        %8045 = vperm.xlu0 %8044, %v7746
        %v8046 = vpop.permute.xlu0 %8045
        %8047 = vset.pattern.permute.xlu0 0
        %8048 = vperm.xlu0 %8047, %v7747
        %v8049 = vpop.permute.xlu0 %8048
        %8050 = vset.pattern.permute.xlu0 0
        %8051 = vperm.xlu0 %8050, %v7748
        %v8052 = vpop.permute.xlu0 %8051
        %8053 = vset.pattern.permute.xlu0 0
        %8054 = vperm.xlu0 %8053, %v7749
        %v8055 = vpop.permute.xlu0 %8054
        %8056 = vset.pattern.permute.xlu0 0
        %8057 = vperm.xlu0 %8056, %v7750
        %v8058 = vpop.permute.xlu0 %8057
        %8059 = vset.pattern.permute.xlu0 0
        %8060 = vperm.xlu0 %8059, %v7751
        %v8061 = vpop.permute.xlu0 %8060
        %8062 = vset.pattern.permute.xlu0 0
        %8063 = vperm.xlu0 %8062, %v7752
        %v8064 = vpop.permute.xlu0 %8063
        %8065 = vset.pattern.permute.xlu0 0
        %8066 = vperm.xlu0 %8065, %v7753
        %v8067 = vpop.permute.xlu0 %8066
        %8068 = vset.pattern.permute.xlu0 0
        %8069 = vperm.xlu0 %8068, %v7754
        %v8070 = vpop.permute.xlu0 %8069
        %8071 = vset.pattern.permute.xlu0 0
        %8072 = vperm.xlu0 %8071, %v7755
        %v8073 = vpop.permute.xlu0 %8072
        %8074 = vset.pattern.permute.xlu0 0
        %8075 = vperm.xlu0 %8074, %v7756
        %v8076 = vpop.permute.xlu0 %8075
        %8077 = vset.pattern.permute.xlu0 0
        %8078 = vperm.xlu0 %8077, %v7757
        %v8079 = vpop.permute.xlu0 %8078
        %8080 = vset.pattern.permute.xlu0 0
        %8081 = vperm.xlu0 %8080, %v7758
        %v8082 = vpop.permute.xlu0 %8081
        %8083 = vset.pattern.permute.xlu0 0
        %8084 = vperm.xlu0 %8083, %v7759
        %v8085 = vpop.permute.xlu0 %8084
        %8086 = vset.pattern.permute.xlu0 0
        %8087 = vperm.xlu0 %8086, %v7760
        %v8088 = vpop.permute.xlu0 %8087
        %8089 = vset.pattern.permute.xlu0 0
        %8090 = vperm.xlu0 %8089, %v7761
        %v8091 = vpop.permute.xlu0 %8090
        %8092 = vset.pattern.permute.xlu0 0
        %8093 = vperm.xlu0 %8092, %v7762
        %v8094 = vpop.permute.xlu0 %8093
        %8095 = vset.pattern.permute.xlu0 0
        %8096 = vperm.xlu0 %8095, %v7763
        %v8097 = vpop.permute.xlu0 %8096
        %8098 = vset.pattern.permute.xlu0 0
        %8099 = vperm.xlu0 %8098, %v7764
        %v8100 = vpop.permute.xlu0 %8099
        %8101 = vset.pattern.permute.xlu0 0
        %8102 = vperm.xlu0 %8101, %v7765
        %v8103 = vpop.permute.xlu0 %8102
        %8104 = vset.pattern.permute.xlu0 0
        %8105 = vperm.xlu0 %8104, %v7766
        %v8106 = vpop.permute.xlu0 %8105
        %8107 = vset.pattern.permute.xlu0 0
        %8108 = vperm.xlu0 %8107, %v7767
        %v8109 = vpop.permute.xlu0 %8108
        %8110 = vset.pattern.permute.xlu0 0
        %8111 = vperm.xlu0 %8110, %v7768
        %v8112 = vpop.permute.xlu0 %8111
        %8113 = vset.pattern.permute.xlu0 0
        %8114 = vperm.xlu0 %8113, %v7769
        %v8115 = vpop.permute.xlu0 %8114
        %8116 = vset.pattern.permute.xlu0 0
        %8117 = vperm.xlu0 %8116, %v7770
        %v8118 = vpop.permute.xlu0 %8117
        %8119 = vset.pattern.permute.xlu0 0
        %8120 = vperm.xlu0 %8119, %v7771
        %v8121 = vpop.permute.xlu0 %8120
        %8122 = vset.pattern.permute.xlu0 0
        %8123 = vperm.xlu0 %8122, %v7772
        %v8124 = vpop.permute.xlu0 %8123
        %8125 = vset.pattern.permute.xlu0 0
        %8126 = vperm.xlu0 %8125, %v7773
        %v8127 = vpop.permute.xlu0 %8126
        %8128 = vset.pattern.permute.xlu0 0
        %8129 = vperm.xlu0 %8128, %v7774
        %v8130 = vpop.permute.xlu0 %8129
        %8131 = vset.pattern.permute.xlu0 0
        %8132 = vperm.xlu0 %8131, %v7775
        %v8133 = vpop.permute.xlu0 %8132
        %8134 = vset.pattern.permute.xlu0 0
        %8135 = vperm.xlu0 %8134, %v7776
        %v8136 = vpop.permute.xlu0 %8135
        %8137 = vset.pattern.permute.xlu0 0
        %8138 = vperm.xlu0 %8137, %v7777
        %v8139 = vpop.permute.xlu0 %8138
        %8140 = vset.pattern.permute.xlu0 0
        %8141 = vperm.xlu0 %8140, %v7778
        %v8142 = vpop.permute.xlu0 %8141
        %8143 = vset.pattern.permute.xlu0 0
        %8144 = vperm.xlu0 %8143, %v7779
        %v8145 = vpop.permute.xlu0 %8144
        %8146 = vset.pattern.permute.xlu0 0
        %8147 = vperm.xlu0 %8146, %v7780
        %v8148 = vpop.permute.xlu0 %8147
        %8149 = vset.pattern.permute.xlu0 0
        %8150 = vperm.xlu0 %8149, %v7781
        %v8151 = vpop.permute.xlu0 %8150
        %8152 = vset.pattern.permute.xlu0 0
        %8153 = vperm.xlu0 %8152, %v7782
        %v8154 = vpop.permute.xlu0 %8153
        %8155 = vset.pattern.permute.xlu0 0
        %8156 = vperm.xlu0 %8155, %v7783
        %v8157 = vpop.permute.xlu0 %8156
        %8158 = vset.pattern.permute.xlu0 0
        %8159 = vperm.xlu0 %8158, %v7784
        %v8160 = vpop.permute.xlu0 %8159
        %8161 = vset.pattern.permute.xlu0 0
        %8162 = vperm.xlu0 %8161, %v7785
        %v8163 = vpop.permute.xlu0 %8162
        %8164 = vset.pattern.permute.xlu0 0
        %8165 = vperm.xlu0 %8164, %v7786
        %v8166 = vpop.permute.xlu0 %8165
        %8167 = vset.pattern.permute.xlu0 0
        %8168 = vperm.xlu0 %8167, %v7787
        %v8169 = vpop.permute.xlu0 %8168
        %8170 = vset.pattern.permute.xlu0 0
        %8171 = vperm.xlu0 %8170, %v7788
        %v8172 = vpop.permute.xlu0 %8171
        %8173 = vset.pattern.permute.xlu0 0
        %8174 = vperm.xlu0 %8173, %v7789
        %v8175 = vpop.permute.xlu0 %8174
        %8176 = vset.pattern.permute.xlu0 0
        %8177 = vperm.xlu0 %8176, %v7790
        %v8178 = vpop.permute.xlu0 %8177
        %8179 = vset.pattern.permute.xlu0 0
        %8180 = vperm.xlu0 %8179, %v7791
        %v8181 = vpop.permute.xlu0 %8180
        %8182 = vset.pattern.permute.xlu0 0
        %8183 = vperm.xlu0 %8182, %v7792
        %v8184 = vpop.permute.xlu0 %8183
        %8185 = vset.pattern.permute.xlu0 0
        %8186 = vperm.xlu0 %8185, %v7793
        %v8187 = vpop.permute.xlu0 %8186
        %8188 = vset.pattern.permute.xlu0 0
        %8189 = vperm.xlu0 %8188, %v7794
        %v8190 = vpop.permute.xlu0 %8189
        %8191 = vset.pattern.permute.xlu0 0
        %8192 = vperm.xlu0 %8191, %v7795
        %v8193 = vpop.permute.xlu0 %8192
        %8194 = vset.pattern.permute.xlu0 0
        %8195 = vperm.xlu0 %8194, %v7796
        %v8196 = vpop.permute.xlu0 %8195
        %8197 = vset.pattern.permute.xlu0 0
        %8198 = vperm.xlu0 %8197, %v7797
        %v8199 = vpop.permute.xlu0 %8198
        %8200 = vset.pattern.permute.xlu0 0
        %8201 = vperm.xlu0 %8200, %v7798
        %v8202 = vpop.permute.xlu0 %8201
        %8203 = vset.pattern.permute.xlu0 0
        %8204 = vperm.xlu0 %8203, %v7799
        %v8205 = vpop.permute.xlu0 %8204
        %8206 = vset.pattern.permute.xlu0 0
        %8207 = vperm.xlu0 %8206, %v7800
        %v8208 = vpop.permute.xlu0 %8207
        %8209 = vset.pattern.permute.xlu0 0
        %8210 = vperm.xlu0 %8209, %v7801
        %v8211 = vpop.permute.xlu0 %8210
        %8212 = vset.pattern.permute.xlu0 0
        %8213 = vperm.xlu0 %8212, %v7802
        %v8214 = vpop.permute.xlu0 %8213
        %8215 = vset.pattern.permute.xlu0 0
        %8216 = vperm.xlu0 %8215, %v7803
        %v8217 = vpop.permute.xlu0 %8216
        %8218 = vset.pattern.permute.xlu0 0
        %8219 = vperm.xlu0 %8218, %v7804
        %v8220 = vpop.permute.xlu0 %8219
        %8221 = vset.pattern.permute.xlu0 0
        %8222 = vperm.xlu0 %8221, %v7805
        %v8223 = vpop.permute.xlu0 %8222
        %8224 = vset.pattern.permute.xlu0 0
        %8225 = vperm.xlu0 %8224, %v7806
        %v8226 = vpop.permute.xlu0 %8225
        %8227 = vset.pattern.permute.xlu0 0
        %8228 = vperm.xlu0 %8227, %v7807
        %v8229 = vpop.permute.xlu0 %8228
        %8230 = vset.pattern.permute.xlu0 0
        %8231 = vperm.xlu0 %8230, %v7808
        %v8232 = vpop.permute.xlu0 %8231
        %8233 = vset.pattern.permute.xlu0 0
        %8234 = vperm.xlu0 %8233, %v7809
        %v8235 = vpop.permute.xlu0 %8234
        %8236 = vset.pattern.permute.xlu0 0
        %8237 = vperm.xlu0 %8236, %v7810
        %v8238 = vpop.permute.xlu0 %8237
        %8239 = vset.pattern.permute.xlu0 0
        %8240 = vperm.xlu0 %8239, %v7811
        %v8241 = vpop.permute.xlu0 %8240
        %8242 = vset.pattern.permute.xlu0 0
        %8243 = vperm.xlu0 %8242, %v7812
        %v8244 = vpop.permute.xlu0 %8243
        %8245 = vset.pattern.permute.xlu0 0
        %8246 = vperm.xlu0 %8245, %v7813
        %v8247 = vpop.permute.xlu0 %8246
        %8248 = vset.pattern.permute.xlu0 0
        %8249 = vperm.xlu0 %8248, %v7814
        %v8250 = vpop.permute.xlu0 %8249
        %8251 = vset.pattern.permute.xlu0 0
        %8252 = vperm.xlu0 %8251, %v7815
        %v8253 = vpop.permute.xlu0 %8252
        %8254 = vset.pattern.permute.xlu0 0
        %8255 = vperm.xlu0 %8254, %v7816
        %v8256 = vpop.permute.xlu0 %8255
        %8257 = vset.pattern.permute.xlu0 0
        %8258 = vperm.xlu0 %8257, %v7817
        %v8259 = vpop.permute.xlu0 %8258
        %8260 = vset.pattern.permute.xlu0 0
        %8261 = vperm.xlu0 %8260, %v7818
        %v8262 = vpop.permute.xlu0 %8261
        %8263 = vset.pattern.permute.xlu0 0
        %8264 = vperm.xlu0 %8263, %v7819
        %v8265 = vpop.permute.xlu0 %8264
        %8266 = vset.pattern.permute.xlu0 0
        %8267 = vperm.xlu0 %8266, %v7820
        %v8268 = vpop.permute.xlu0 %8267
        %8269 = vset.pattern.permute.xlu0 0
        %8270 = vperm.xlu0 %8269, %v7821
        %v8271 = vpop.permute.xlu0 %8270
        %8272 = vset.pattern.permute.xlu0 0
        %8273 = vperm.xlu0 %8272, %v7822
        %v8274 = vpop.permute.xlu0 %8273
        %8275 = vset.pattern.permute.xlu0 0
        %8276 = vperm.xlu0 %8275, %v7823
        %v8277 = vpop.permute.xlu0 %8276
        %8278 = vset.pattern.permute.xlu0 0
        %8279 = vperm.xlu0 %8278, %v7824
        %v8280 = vpop.permute.xlu0 %8279
        %8281 = vset.pattern.permute.xlu0 0
        %8282 = vperm.xlu0 %8281, %v7825
        %v8283 = vpop.permute.xlu0 %8282
        %8284 = vset.pattern.permute.xlu0 0
        %8285 = vperm.xlu0 %8284, %v7826
        %v8286 = vpop.permute.xlu0 %8285
        %8287 = vset.pattern.permute.xlu0 0
        %8288 = vperm.xlu0 %8287, %v7827
        %v8289 = vpop.permute.xlu0 %8288
        %8290 = vset.pattern.permute.xlu0 0
        %8291 = vperm.xlu0 %8290, %v7828
        %v8292 = vpop.permute.xlu0 %8291
        %8293 = vset.pattern.permute.xlu0 0
        %8294 = vperm.xlu0 %8293, %v7829
        %v8295 = vpop.permute.xlu0 %8294
        %8296 = vset.pattern.permute.xlu0 0
        %8297 = vperm.xlu0 %8296, %v7830
        %v8298 = vpop.permute.xlu0 %8297
        %8299 = vset.pattern.permute.xlu0 0
        %8300 = vperm.xlu0 %8299, %v7831
        %v8301 = vpop.permute.xlu0 %8300
        %8302 = vset.pattern.permute.xlu0 0
        %8303 = vperm.xlu0 %8302, %v7832
        %v8304 = vpop.permute.xlu0 %8303
        %8305 = vset.pattern.permute.xlu0 0
        %8306 = vperm.xlu0 %8305, %v7833
        %v8307 = vpop.permute.xlu0 %8306
        %8308 = vset.pattern.permute.xlu0 0
        %8309 = vperm.xlu0 %8308, %v7834
        %v8310 = vpop.permute.xlu0 %8309
        %8311 = vset.pattern.permute.xlu0 0
        %8312 = vperm.xlu0 %8311, %v7835
        %v8313 = vpop.permute.xlu0 %8312
        %8314 = vset.pattern.permute.xlu0 0
        %8315 = vperm.xlu0 %8314, %v7836
        %v8316 = vpop.permute.xlu0 %8315
        %8317 = vset.pattern.permute.xlu0 0
        %8318 = vperm.xlu0 %8317, %v7837
        %v8319 = vpop.permute.xlu0 %8318
        %8320 = vset.pattern.permute.xlu0 0
        %8321 = vperm.xlu0 %8320, %v7838
        %v8322 = vpop.permute.xlu0 %8321
        %8323 = vset.pattern.permute.xlu0 0
        %8324 = vperm.xlu0 %8323, %v7839
        %v8325 = vpop.permute.xlu0 %8324
        %8326 = vset.pattern.permute.xlu0 0
        %8327 = vperm.xlu0 %8326, %v7840
        %v8328 = vpop.permute.xlu0 %8327
        %8329 = vset.pattern.permute.xlu0 0
        %8330 = vperm.xlu0 %8329, %v7841
        %v8331 = vpop.permute.xlu0 %8330
        %8332 = vset.pattern.permute.xlu0 0
        %8333 = vperm.xlu0 %8332, %v7842
        %v8334 = vpop.permute.xlu0 %8333
        %8335 = vset.pattern.permute.xlu0 0
        %8336 = vperm.xlu0 %8335, %v7843
        %v8337 = vpop.permute.xlu0 %8336
        %8338 = vset.pattern.permute.xlu0 0
        %8339 = vperm.xlu0 %8338, %v7844
        %v8340 = vpop.permute.xlu0 %8339
        %8341 = vset.pattern.permute.xlu0 0
        %8342 = vperm.xlu0 %8341, %v7845
        %v8343 = vpop.permute.xlu0 %8342
        %8344 = vset.pattern.permute.xlu0 0
        %8345 = vperm.xlu0 %8344, %v7846
        %v8346 = vpop.permute.xlu0 %8345
        %8347 = vset.pattern.permute.xlu0 0
        %8348 = vperm.xlu0 %8347, %v7847
        %v8349 = vpop.permute.xlu0 %8348
        %8350 = vset.pattern.permute.xlu0 0
        %8351 = vperm.xlu0 %8350, %v7848
        %v8352 = vpop.permute.xlu0 %8351
        %8353 = vset.pattern.permute.xlu0 0
        %8354 = vperm.xlu0 %8353, %v7849
        %v8355 = vpop.permute.xlu0 %8354
        %8356 = vset.pattern.permute.xlu0 0
        %8357 = vperm.xlu0 %8356, %v7850
        %v8358 = vpop.permute.xlu0 %8357
        %8359 = vset.pattern.permute.xlu0 0
        %8360 = vperm.xlu0 %8359, %v7851
        %v8361 = vpop.permute.xlu0 %8360
        %8362 = vset.pattern.permute.xlu0 0
        %8363 = vperm.xlu0 %8362, %v7852
        %v8364 = vpop.permute.xlu0 %8363
        %v8365 = vlaneseq
        %v8366 = vand.u32 %v8365, 127
        %v8367 = vlaneseq
        %v8368 = vshrl.u32 %v8367, 7
        %v8369 = vsub.s32 %v8366, %v8368
        %v8370 = vrot.slane %v7983, %v8369
        %v8371 = vadd.s32 %v8366, 4294967288
        %v8372 = vlaneseq
        %v8373 = vshrl.u32 %v8372, 7
        %v8374 = vsub.s32 %v8371, %v8373
        %v8375 = vrot.slane %v7986, %v8374
        %vm8376 = vcmask 130112
        %v8377 = vsel %vm8376, %v8375, %v8370
        %v8378 = vadd.s32 %v8366, 4294967280
        %v8379 = vlaneseq
        %v8380 = vshrl.u32 %v8379, 7
        %v8381 = vsub.s32 %v8378, %v8380
        %v8382 = vrot.slane %v7989, %v8381
        %vm8383 = vcmask 195712
        %v8384 = vsel %vm8383, %v8382, %v8377
        %v8385 = vadd.s32 %v8366, 4294967272
        %v8386 = vlaneseq
        %v8387 = vshrl.u32 %v8386, 7
        %v8388 = vsub.s32 %v8385, %v8387
        %v8389 = vrot.slane %v7992, %v8388
        %vm8390 = vcmask 261312
        %v8391 = vsel %vm8390, %v8389, %v8384
        %v8392 = vadd.s32 %v8366, 4294967264
        %v8393 = vlaneseq
        %v8394 = vshrl.u32 %v8393, 7
        %v8395 = vsub.s32 %v8392, %v8394
        %v8396 = vrot.slane %v7995, %v8395
        %vm8397 = vcmask 326912
        %v8398 = vsel %vm8397, %v8396, %v8391
        %v8399 = vadd.s32 %v8366, 4294967256
        %v8400 = vlaneseq
        %v8401 = vshrl.u32 %v8400, 7
        %v8402 = vsub.s32 %v8399, %v8401
        %v8403 = vrot.slane %v7998, %v8402
        %vm8404 = vcmask 392512
        %v8405 = vsel %vm8404, %v8403, %v8398
        %v8406 = vadd.s32 %v8366, 4294967248
        %v8407 = vlaneseq
        %v8408 = vshrl.u32 %v8407, 7
        %v8409 = vsub.s32 %v8406, %v8408
        %v8410 = vrot.slane %v8001, %v8409
        %vm8411 = vcmask 458112
        %v8412 = vsel %vm8411, %v8410, %v8405
        %v8413 = vadd.s32 %v8366, 4294967240
        %v8414 = vlaneseq
        %v8415 = vshrl.u32 %v8414, 7
        %v8416 = vsub.s32 %v8413, %v8415
        %v8417 = vrot.slane %v8004, %v8416
        %vm8418 = vcmask 523712
        %v8419 = vsel %vm8418, %v8417, %v8412
        %v8420 = vadd.s32 %v8366, 4294967232
        %v8421 = vlaneseq
        %v8422 = vshrl.u32 %v8421, 7
        %v8423 = vsub.s32 %v8420, %v8422
        %v8424 = vrot.slane %v8007, %v8423
        %vm8425 = vcmask 589312
        %v8426 = vsel %vm8425, %v8424, %v8419
        %v8427 = vadd.s32 %v8366, 4294967224
        %v8428 = vlaneseq
        %v8429 = vshrl.u32 %v8428, 7
        %v8430 = vsub.s32 %v8427, %v8429
        %v8431 = vrot.slane %v8010, %v8430
        %vm8432 = vcmask 654912
        %v8433 = vsel %vm8432, %v8431, %v8426
        %v8434 = vadd.s32 %v8366, 4294967216
        %v8435 = vlaneseq
        %v8436 = vshrl.u32 %v8435, 7
        %v8437 = vsub.s32 %v8434, %v8436
        %v8438 = vrot.slane %v8013, %v8437
        %vm8439 = vcmask 720512
        %v8440 = vsel %vm8439, %v8438, %v8433
        %v8441 = vadd.s32 %v8366, 4294967208
        %v8442 = vlaneseq
        %v8443 = vshrl.u32 %v8442, 7
        %v8444 = vsub.s32 %v8441, %v8443
        %v8445 = vrot.slane %v8016, %v8444
        %vm8446 = vcmask 786112
        %v8447 = vsel %vm8446, %v8445, %v8440
        %v8448 = vadd.s32 %v8366, 4294967200
        %v8449 = vlaneseq
        %v8450 = vshrl.u32 %v8449, 7
        %v8451 = vsub.s32 %v8448, %v8450
        %v8452 = vrot.slane %v8019, %v8451
        %vm8453 = vcmask 851712
        %v8454 = vsel %vm8453, %v8452, %v8447
        %v8455 = vadd.s32 %v8366, 4294967192
        %v8456 = vlaneseq
        %v8457 = vshrl.u32 %v8456, 7
        %v8458 = vsub.s32 %v8455, %v8457
        %v8459 = vrot.slane %v8022, %v8458
        %vm8460 = vcmask 917312
        %v8461 = vsel %vm8460, %v8459, %v8454
        %v8462 = vadd.s32 %v8366, 4294967184
        %v8463 = vlaneseq
        %v8464 = vshrl.u32 %v8463, 7
        %v8465 = vsub.s32 %v8462, %v8464
        %v8466 = vrot.slane %v8025, %v8465
        %vm8467 = vcmask 982912
        %v8468 = vsel %vm8467, %v8466, %v8461
        %v8469 = vadd.s32 %v8366, 4294967176
        %v8470 = vlaneseq
        %v8471 = vshrl.u32 %v8470, 7
        %v8472 = vsub.s32 %v8469, %v8471
        %v8473 = vrot.slane %v8028, %v8472
        %vm8474 = vcmask 1048512
        %v8475 = vsel %vm8474, %v8473, %v8468
        %v8476 = vlaneseq
        %v8477 = vshrl.u32 %v8476, 7
        %v8478 = vsub.s32 %v8366, %v8477
        %v8479 = vrot.slane %v8031, %v8478
        %v8480 = vlaneseq
        %v8481 = vshrl.u32 %v8480, 7
        %v8482 = vsub.s32 %v8371, %v8481
        %v8483 = vrot.slane %v8034, %v8482
        %v8484 = vsel %vm8376, %v8483, %v8479
        %v8485 = vlaneseq
        %v8486 = vshrl.u32 %v8485, 7
        %v8487 = vsub.s32 %v8378, %v8486
        %v8488 = vrot.slane %v8037, %v8487
        %v8489 = vsel %vm8383, %v8488, %v8484
        %v8490 = vlaneseq
        %v8491 = vshrl.u32 %v8490, 7
        %v8492 = vsub.s32 %v8385, %v8491
        %v8493 = vrot.slane %v8040, %v8492
        %v8494 = vsel %vm8390, %v8493, %v8489
        %v8495 = vlaneseq
        %v8496 = vshrl.u32 %v8495, 7
        %v8497 = vsub.s32 %v8392, %v8496
        %v8498 = vrot.slane %v8043, %v8497
        %v8499 = vsel %vm8397, %v8498, %v8494
        %v8500 = vlaneseq
        %v8501 = vshrl.u32 %v8500, 7
        %v8502 = vsub.s32 %v8399, %v8501
        %v8503 = vrot.slane %v8046, %v8502
        %v8504 = vsel %vm8404, %v8503, %v8499
        %v8505 = vlaneseq
        %v8506 = vshrl.u32 %v8505, 7
        %v8507 = vsub.s32 %v8406, %v8506
        %v8508 = vrot.slane %v8049, %v8507
        %v8509 = vsel %vm8411, %v8508, %v8504
        %v8510 = vlaneseq
        %v8511 = vshrl.u32 %v8510, 7
        %v8512 = vsub.s32 %v8413, %v8511
        %v8513 = vrot.slane %v8052, %v8512
        %v8514 = vsel %vm8418, %v8513, %v8509
        %v8515 = vlaneseq
        %v8516 = vshrl.u32 %v8515, 7
        %v8517 = vsub.s32 %v8420, %v8516
        %v8518 = vrot.slane %v8055, %v8517
        %v8519 = vsel %vm8425, %v8518, %v8514
        %v8520 = vlaneseq
        %v8521 = vshrl.u32 %v8520, 7
        %v8522 = vsub.s32 %v8427, %v8521
        %v8523 = vrot.slane %v8058, %v8522
        %v8524 = vsel %vm8432, %v8523, %v8519
        %v8525 = vlaneseq
        %v8526 = vshrl.u32 %v8525, 7
        %v8527 = vsub.s32 %v8434, %v8526
        %v8528 = vrot.slane %v8061, %v8527
        %v8529 = vsel %vm8439, %v8528, %v8524
        %v8530 = vlaneseq
        %v8531 = vshrl.u32 %v8530, 7
        %v8532 = vsub.s32 %v8441, %v8531
        %v8533 = vrot.slane %v8064, %v8532
        %v8534 = vsel %vm8446, %v8533, %v8529
        %v8535 = vlaneseq
        %v8536 = vshrl.u32 %v8535, 7
        %v8537 = vsub.s32 %v8448, %v8536
        %v8538 = vrot.slane %v8067, %v8537
        %v8539 = vsel %vm8453, %v8538, %v8534
        %v8540 = vlaneseq
        %v8541 = vshrl.u32 %v8540, 7
        %v8542 = vsub.s32 %v8455, %v8541
        %v8543 = vrot.slane %v8070, %v8542
        %v8544 = vsel %vm8460, %v8543, %v8539
        %v8545 = vlaneseq
        %v8546 = vshrl.u32 %v8545, 7
        %v8547 = vsub.s32 %v8462, %v8546
        %v8548 = vrot.slane %v8073, %v8547
        %v8549 = vsel %vm8467, %v8548, %v8544
        %v8550 = vlaneseq
        %v8551 = vshrl.u32 %v8550, 7
        %v8552 = vsub.s32 %v8469, %v8551
        %v8553 = vrot.slane %v8076, %v8552
        %v8554 = vsel %vm8474, %v8553, %v8549
        %v8555 = vlaneseq
        %v8556 = vshrl.u32 %v8555, 7
        %v8557 = vsub.s32 %v8366, %v8556
        %v8558 = vrot.slane %v8079, %v8557
        %v8559 = vlaneseq
        %v8560 = vshrl.u32 %v8559, 7
        %v8561 = vsub.s32 %v8371, %v8560
        %v8562 = vrot.slane %v8082, %v8561
        %v8563 = vsel %vm8376, %v8562, %v8558
        %v8564 = vlaneseq
        %v8565 = vshrl.u32 %v8564, 7
        %v8566 = vsub.s32 %v8378, %v8565
        %v8567 = vrot.slane %v8085, %v8566
        %v8568 = vsel %vm8383, %v8567, %v8563
        %v8569 = vlaneseq
        %v8570 = vshrl.u32 %v8569, 7
        %v8571 = vsub.s32 %v8385, %v8570
        %v8572 = vrot.slane %v8088, %v8571
        %v8573 = vsel %vm8390, %v8572, %v8568
        %v8574 = vlaneseq
        %v8575 = vshrl.u32 %v8574, 7
        %v8576 = vsub.s32 %v8392, %v8575
        %v8577 = vrot.slane %v8091, %v8576
        %v8578 = vsel %vm8397, %v8577, %v8573
        %v8579 = vlaneseq
        %v8580 = vshrl.u32 %v8579, 7
        %v8581 = vsub.s32 %v8399, %v8580
        %v8582 = vrot.slane %v8094, %v8581
        %v8583 = vsel %vm8404, %v8582, %v8578
        %v8584 = vlaneseq
        %v8585 = vshrl.u32 %v8584, 7
        %v8586 = vsub.s32 %v8406, %v8585
        %v8587 = vrot.slane %v8097, %v8586
        %v8588 = vsel %vm8411, %v8587, %v8583
        %v8589 = vlaneseq
        %v8590 = vshrl.u32 %v8589, 7
        %v8591 = vsub.s32 %v8413, %v8590
        %v8592 = vrot.slane %v8100, %v8591
        %v8593 = vsel %vm8418, %v8592, %v8588
        %v8594 = vlaneseq
        %v8595 = vshrl.u32 %v8594, 7
        %v8596 = vsub.s32 %v8420, %v8595
        %v8597 = vrot.slane %v8103, %v8596
        %v8598 = vsel %vm8425, %v8597, %v8593
        %v8599 = vlaneseq
        %v8600 = vshrl.u32 %v8599, 7
        %v8601 = vsub.s32 %v8427, %v8600
        %v8602 = vrot.slane %v8106, %v8601
        %v8603 = vsel %vm8432, %v8602, %v8598
        %v8604 = vlaneseq
        %v8605 = vshrl.u32 %v8604, 7
        %v8606 = vsub.s32 %v8434, %v8605
        %v8607 = vrot.slane %v8109, %v8606
        %v8608 = vsel %vm8439, %v8607, %v8603
        %v8609 = vlaneseq
        %v8610 = vshrl.u32 %v8609, 7
        %v8611 = vsub.s32 %v8441, %v8610
        %v8612 = vrot.slane %v8112, %v8611
        %v8613 = vsel %vm8446, %v8612, %v8608
        %v8614 = vlaneseq
        %v8615 = vshrl.u32 %v8614, 7
        %v8616 = vsub.s32 %v8448, %v8615
        %v8617 = vrot.slane %v8115, %v8616
        %v8618 = vsel %vm8453, %v8617, %v8613
        %v8619 = vlaneseq
        %v8620 = vshrl.u32 %v8619, 7
        %v8621 = vsub.s32 %v8455, %v8620
        %v8622 = vrot.slane %v8118, %v8621
        %v8623 = vsel %vm8460, %v8622, %v8618
        %v8624 = vlaneseq
        %v8625 = vshrl.u32 %v8624, 7
        %v8626 = vsub.s32 %v8462, %v8625
        %v8627 = vrot.slane %v8121, %v8626
        %v8628 = vsel %vm8467, %v8627, %v8623
        %v8629 = vlaneseq
        %v8630 = vshrl.u32 %v8629, 7
        %v8631 = vsub.s32 %v8469, %v8630
        %v8632 = vrot.slane %v8124, %v8631
        %v8633 = vsel %vm8474, %v8632, %v8628
        %v8634 = vlaneseq
        %v8635 = vshrl.u32 %v8634, 7
        %v8636 = vsub.s32 %v8366, %v8635
        %v8637 = vrot.slane %v8127, %v8636
        %v8638 = vlaneseq
        %v8639 = vshrl.u32 %v8638, 7
        %v8640 = vsub.s32 %v8371, %v8639
        %v8641 = vrot.slane %v8130, %v8640
        %v8642 = vsel %vm8376, %v8641, %v8637
        %v8643 = vlaneseq
        %v8644 = vshrl.u32 %v8643, 7
        %v8645 = vsub.s32 %v8378, %v8644
        %v8646 = vrot.slane %v8133, %v8645
        %v8647 = vsel %vm8383, %v8646, %v8642
        %v8648 = vlaneseq
        %v8649 = vshrl.u32 %v8648, 7
        %v8650 = vsub.s32 %v8385, %v8649
        %v8651 = vrot.slane %v8136, %v8650
        %v8652 = vsel %vm8390, %v8651, %v8647
        %v8653 = vlaneseq
        %v8654 = vshrl.u32 %v8653, 7
        %v8655 = vsub.s32 %v8392, %v8654
        %v8656 = vrot.slane %v8139, %v8655
        %v8657 = vsel %vm8397, %v8656, %v8652
        %v8658 = vlaneseq
        %v8659 = vshrl.u32 %v8658, 7
        %v8660 = vsub.s32 %v8399, %v8659
        %v8661 = vrot.slane %v8142, %v8660
        %v8662 = vsel %vm8404, %v8661, %v8657
        %v8663 = vlaneseq
        %v8664 = vshrl.u32 %v8663, 7
        %v8665 = vsub.s32 %v8406, %v8664
        %v8666 = vrot.slane %v8145, %v8665
        %v8667 = vsel %vm8411, %v8666, %v8662
        %v8668 = vlaneseq
        %v8669 = vshrl.u32 %v8668, 7
        %v8670 = vsub.s32 %v8413, %v8669
        %v8671 = vrot.slane %v8148, %v8670
        %v8672 = vsel %vm8418, %v8671, %v8667
        %v8673 = vlaneseq
        %v8674 = vshrl.u32 %v8673, 7
        %v8675 = vsub.s32 %v8420, %v8674
        %v8676 = vrot.slane %v8151, %v8675
        %v8677 = vsel %vm8425, %v8676, %v8672
        %v8678 = vlaneseq
        %v8679 = vshrl.u32 %v8678, 7
        %v8680 = vsub.s32 %v8427, %v8679
        %v8681 = vrot.slane %v8154, %v8680
        %v8682 = vsel %vm8432, %v8681, %v8677
        %v8683 = vlaneseq
        %v8684 = vshrl.u32 %v8683, 7
        %v8685 = vsub.s32 %v8434, %v8684
        %v8686 = vrot.slane %v8157, %v8685
        %v8687 = vsel %vm8439, %v8686, %v8682
        %v8688 = vlaneseq
        %v8689 = vshrl.u32 %v8688, 7
        %v8690 = vsub.s32 %v8441, %v8689
        %v8691 = vrot.slane %v8160, %v8690
        %v8692 = vsel %vm8446, %v8691, %v8687
        %v8693 = vlaneseq
        %v8694 = vshrl.u32 %v8693, 7
        %v8695 = vsub.s32 %v8448, %v8694
        %v8696 = vrot.slane %v8163, %v8695
        %v8697 = vsel %vm8453, %v8696, %v8692
        %v8698 = vlaneseq
        %v8699 = vshrl.u32 %v8698, 7
        %v8700 = vsub.s32 %v8455, %v8699
        %v8701 = vrot.slane %v8166, %v8700
        %v8702 = vsel %vm8460, %v8701, %v8697
        %v8703 = vlaneseq
        %v8704 = vshrl.u32 %v8703, 7
        %v8705 = vsub.s32 %v8462, %v8704
        %v8706 = vrot.slane %v8169, %v8705
        %v8707 = vsel %vm8467, %v8706, %v8702
        %v8708 = vlaneseq
        %v8709 = vshrl.u32 %v8708, 7
        %v8710 = vsub.s32 %v8469, %v8709
        %v8711 = vrot.slane %v8172, %v8710
        %v8712 = vsel %vm8474, %v8711, %v8707
        %v8713 = vlaneseq
        %v8714 = vshrl.u32 %v8713, 7
        %v8715 = vsub.s32 %v8366, %v8714
        %v8716 = vrot.slane %v8175, %v8715
        %v8717 = vlaneseq
        %v8718 = vshrl.u32 %v8717, 7
        %v8719 = vsub.s32 %v8371, %v8718
        %v8720 = vrot.slane %v8178, %v8719
        %v8721 = vsel %vm8376, %v8720, %v8716
        %v8722 = vlaneseq
        %v8723 = vshrl.u32 %v8722, 7
        %v8724 = vsub.s32 %v8378, %v8723
        %v8725 = vrot.slane %v8181, %v8724
        %v8726 = vsel %vm8383, %v8725, %v8721
        %v8727 = vlaneseq
        %v8728 = vshrl.u32 %v8727, 7
        %v8729 = vsub.s32 %v8385, %v8728
        %v8730 = vrot.slane %v8184, %v8729
        %v8731 = vsel %vm8390, %v8730, %v8726
        %v8732 = vlaneseq
        %v8733 = vshrl.u32 %v8732, 7
        %v8734 = vsub.s32 %v8392, %v8733
        %v8735 = vrot.slane %v8187, %v8734
        %v8736 = vsel %vm8397, %v8735, %v8731
        %v8737 = vlaneseq
        %v8738 = vshrl.u32 %v8737, 7
        %v8739 = vsub.s32 %v8399, %v8738
        %v8740 = vrot.slane %v8190, %v8739
        %v8741 = vsel %vm8404, %v8740, %v8736
        %v8742 = vlaneseq
        %v8743 = vshrl.u32 %v8742, 7
        %v8744 = vsub.s32 %v8406, %v8743
        %v8745 = vrot.slane %v8193, %v8744
        %v8746 = vsel %vm8411, %v8745, %v8741
        %v8747 = vlaneseq
        %v8748 = vshrl.u32 %v8747, 7
        %v8749 = vsub.s32 %v8413, %v8748
        %v8750 = vrot.slane %v8196, %v8749
        %v8751 = vsel %vm8418, %v8750, %v8746
        %v8752 = vlaneseq
        %v8753 = vshrl.u32 %v8752, 7
        %v8754 = vsub.s32 %v8420, %v8753
        %v8755 = vrot.slane %v8199, %v8754
        %v8756 = vsel %vm8425, %v8755, %v8751
        %v8757 = vlaneseq
        %v8758 = vshrl.u32 %v8757, 7
        %v8759 = vsub.s32 %v8427, %v8758
        %v8760 = vrot.slane %v8202, %v8759
        %v8761 = vsel %vm8432, %v8760, %v8756
        %v8762 = vlaneseq
        %v8763 = vshrl.u32 %v8762, 7
        %v8764 = vsub.s32 %v8434, %v8763
        %v8765 = vrot.slane %v8205, %v8764
        %v8766 = vsel %vm8439, %v8765, %v8761
        %v8767 = vlaneseq
        %v8768 = vshrl.u32 %v8767, 7
        %v8769 = vsub.s32 %v8441, %v8768
        %v8770 = vrot.slane %v8208, %v8769
        %v8771 = vsel %vm8446, %v8770, %v8766
        %v8772 = vlaneseq
        %v8773 = vshrl.u32 %v8772, 7
        %v8774 = vsub.s32 %v8448, %v8773
        %v8775 = vrot.slane %v8211, %v8774
        %v8776 = vsel %vm8453, %v8775, %v8771
        %v8777 = vlaneseq
        %v8778 = vshrl.u32 %v8777, 7
        %v8779 = vsub.s32 %v8455, %v8778
        %v8780 = vrot.slane %v8214, %v8779
        %v8781 = vsel %vm8460, %v8780, %v8776
        %v8782 = vlaneseq
        %v8783 = vshrl.u32 %v8782, 7
        %v8784 = vsub.s32 %v8462, %v8783
        %v8785 = vrot.slane %v8217, %v8784
        %v8786 = vsel %vm8467, %v8785, %v8781
        %v8787 = vlaneseq
        %v8788 = vshrl.u32 %v8787, 7
        %v8789 = vsub.s32 %v8469, %v8788
        %v8790 = vrot.slane %v8220, %v8789
        %v8791 = vsel %vm8474, %v8790, %v8786
        %v8792 = vlaneseq
        %v8793 = vshrl.u32 %v8792, 7
        %v8794 = vsub.s32 %v8366, %v8793
        %v8795 = vrot.slane %v8223, %v8794
        %v8796 = vlaneseq
        %v8797 = vshrl.u32 %v8796, 7
        %v8798 = vsub.s32 %v8371, %v8797
        %v8799 = vrot.slane %v8226, %v8798
        %v8800 = vsel %vm8376, %v8799, %v8795
        %v8801 = vlaneseq
        %v8802 = vshrl.u32 %v8801, 7
        %v8803 = vsub.s32 %v8378, %v8802
        %v8804 = vrot.slane %v8229, %v8803
        %v8805 = vsel %vm8383, %v8804, %v8800
        %v8806 = vlaneseq
        %v8807 = vshrl.u32 %v8806, 7
        %v8808 = vsub.s32 %v8385, %v8807
        %v8809 = vrot.slane %v8232, %v8808
        %v8810 = vsel %vm8390, %v8809, %v8805
        %v8811 = vlaneseq
        %v8812 = vshrl.u32 %v8811, 7
        %v8813 = vsub.s32 %v8392, %v8812
        %v8814 = vrot.slane %v8235, %v8813
        %v8815 = vsel %vm8397, %v8814, %v8810
        %v8816 = vlaneseq
        %v8817 = vshrl.u32 %v8816, 7
        %v8818 = vsub.s32 %v8399, %v8817
        %v8819 = vrot.slane %v8238, %v8818
        %v8820 = vsel %vm8404, %v8819, %v8815
        %v8821 = vlaneseq
        %v8822 = vshrl.u32 %v8821, 7
        %v8823 = vsub.s32 %v8406, %v8822
        %v8824 = vrot.slane %v8241, %v8823
        %v8825 = vsel %vm8411, %v8824, %v8820
        %v8826 = vlaneseq
        %v8827 = vshrl.u32 %v8826, 7
        %v8828 = vsub.s32 %v8413, %v8827
        %v8829 = vrot.slane %v8244, %v8828
        %v8830 = vsel %vm8418, %v8829, %v8825
        %v8831 = vlaneseq
        %v8832 = vshrl.u32 %v8831, 7
        %v8833 = vsub.s32 %v8420, %v8832
        %v8834 = vrot.slane %v8247, %v8833
        %v8835 = vsel %vm8425, %v8834, %v8830
        %v8836 = vlaneseq
        %v8837 = vshrl.u32 %v8836, 7
        %v8838 = vsub.s32 %v8427, %v8837
        %v8839 = vrot.slane %v8250, %v8838
        %v8840 = vsel %vm8432, %v8839, %v8835
        %v8841 = vlaneseq
        %v8842 = vshrl.u32 %v8841, 7
        %v8843 = vsub.s32 %v8434, %v8842
        %v8844 = vrot.slane %v8253, %v8843
        %v8845 = vsel %vm8439, %v8844, %v8840
        %v8846 = vlaneseq
        %v8847 = vshrl.u32 %v8846, 7
        %v8848 = vsub.s32 %v8441, %v8847
        %v8849 = vrot.slane %v8256, %v8848
        %v8850 = vsel %vm8446, %v8849, %v8845
        %v8851 = vlaneseq
        %v8852 = vshrl.u32 %v8851, 7
        %v8853 = vsub.s32 %v8448, %v8852
        %v8854 = vrot.slane %v8259, %v8853
        %v8855 = vsel %vm8453, %v8854, %v8850
        %v8856 = vlaneseq
        %v8857 = vshrl.u32 %v8856, 7
        %v8858 = vsub.s32 %v8455, %v8857
        %v8859 = vrot.slane %v8262, %v8858
        %v8860 = vsel %vm8460, %v8859, %v8855
        %v8861 = vlaneseq
        %v8862 = vshrl.u32 %v8861, 7
        %v8863 = vsub.s32 %v8462, %v8862
        %v8864 = vrot.slane %v8265, %v8863
        %v8865 = vsel %vm8467, %v8864, %v8860
        %v8866 = vlaneseq
        %v8867 = vshrl.u32 %v8866, 7
        %v8868 = vsub.s32 %v8469, %v8867
        %v8869 = vrot.slane %v8268, %v8868
        %v8870 = vsel %vm8474, %v8869, %v8865
        %v8871 = vlaneseq
        %v8872 = vshrl.u32 %v8871, 7
        %v8873 = vsub.s32 %v8366, %v8872
        %v8874 = vrot.slane %v8271, %v8873
        %v8875 = vlaneseq
        %v8876 = vshrl.u32 %v8875, 7
        %v8877 = vsub.s32 %v8371, %v8876
        %v8878 = vrot.slane %v8274, %v8877
        %v8879 = vsel %vm8376, %v8878, %v8874
        %v8880 = vlaneseq
        %v8881 = vshrl.u32 %v8880, 7
        %v8882 = vsub.s32 %v8378, %v8881
        %v8883 = vrot.slane %v8277, %v8882
        %v8884 = vsel %vm8383, %v8883, %v8879
        %v8885 = vlaneseq
        %v8886 = vshrl.u32 %v8885, 7
        %v8887 = vsub.s32 %v8385, %v8886
        %v8888 = vrot.slane %v8280, %v8887
        %v8889 = vsel %vm8390, %v8888, %v8884
        %v8890 = vlaneseq
        %v8891 = vshrl.u32 %v8890, 7
        %v8892 = vsub.s32 %v8392, %v8891
        %v8893 = vrot.slane %v8283, %v8892
        %v8894 = vsel %vm8397, %v8893, %v8889
        %v8895 = vlaneseq
        %v8896 = vshrl.u32 %v8895, 7
        %v8897 = vsub.s32 %v8399, %v8896
        %v8898 = vrot.slane %v8286, %v8897
        %v8899 = vsel %vm8404, %v8898, %v8894
        %v8900 = vlaneseq
        %v8901 = vshrl.u32 %v8900, 7
        %v8902 = vsub.s32 %v8406, %v8901
        %v8903 = vrot.slane %v8289, %v8902
        %v8904 = vsel %vm8411, %v8903, %v8899
        %v8905 = vlaneseq
        %v8906 = vshrl.u32 %v8905, 7
        %v8907 = vsub.s32 %v8413, %v8906
        %v8908 = vrot.slane %v8292, %v8907
        %v8909 = vsel %vm8418, %v8908, %v8904
        %v8910 = vlaneseq
        %v8911 = vshrl.u32 %v8910, 7
        %v8912 = vsub.s32 %v8420, %v8911
        %v8913 = vrot.slane %v8295, %v8912
        %v8914 = vsel %vm8425, %v8913, %v8909
        %v8915 = vlaneseq
        %v8916 = vshrl.u32 %v8915, 7
        %v8917 = vsub.s32 %v8427, %v8916
        %v8918 = vrot.slane %v8298, %v8917
        %v8919 = vsel %vm8432, %v8918, %v8914
        %v8920 = vlaneseq
        %v8921 = vshrl.u32 %v8920, 7
        %v8922 = vsub.s32 %v8434, %v8921
        %v8923 = vrot.slane %v8301, %v8922
        %v8924 = vsel %vm8439, %v8923, %v8919
        %v8925 = vlaneseq
        %v8926 = vshrl.u32 %v8925, 7
        %v8927 = vsub.s32 %v8441, %v8926
        %v8928 = vrot.slane %v8304, %v8927
        %v8929 = vsel %vm8446, %v8928, %v8924
        %v8930 = vlaneseq
        %v8931 = vshrl.u32 %v8930, 7
        %v8932 = vsub.s32 %v8448, %v8931
        %v8933 = vrot.slane %v8307, %v8932
        %v8934 = vsel %vm8453, %v8933, %v8929
        %v8935 = vlaneseq
        %v8936 = vshrl.u32 %v8935, 7
        %v8937 = vsub.s32 %v8455, %v8936
        %v8938 = vrot.slane %v8310, %v8937
        %v8939 = vsel %vm8460, %v8938, %v8934
        %v8940 = vlaneseq
        %v8941 = vshrl.u32 %v8940, 7
        %v8942 = vsub.s32 %v8462, %v8941
        %v8943 = vrot.slane %v8313, %v8942
        %v8944 = vsel %vm8467, %v8943, %v8939
        %v8945 = vlaneseq
        %v8946 = vshrl.u32 %v8945, 7
        %v8947 = vsub.s32 %v8469, %v8946
        %v8948 = vrot.slane %v8316, %v8947
        %v8949 = vsel %vm8474, %v8948, %v8944
        %v8950 = vlaneseq
        %v8951 = vshrl.u32 %v8950, 7
        %v8952 = vsub.s32 %v8366, %v8951
        %v8953 = vrot.slane %v8319, %v8952
        %v8954 = vlaneseq
        %v8955 = vshrl.u32 %v8954, 7
        %v8956 = vsub.s32 %v8371, %v8955
        %v8957 = vrot.slane %v8322, %v8956
        %v8958 = vsel %vm8376, %v8957, %v8953
        %v8959 = vlaneseq
        %v8960 = vshrl.u32 %v8959, 7
        %v8961 = vsub.s32 %v8378, %v8960
        %v8962 = vrot.slane %v8325, %v8961
        %v8963 = vsel %vm8383, %v8962, %v8958
        %v8964 = vlaneseq
        %v8965 = vshrl.u32 %v8964, 7
        %v8966 = vsub.s32 %v8385, %v8965
        %v8967 = vrot.slane %v8328, %v8966
        %v8968 = vsel %vm8390, %v8967, %v8963
        %v8969 = vlaneseq
        %v8970 = vshrl.u32 %v8969, 7
        %v8971 = vsub.s32 %v8392, %v8970
        %v8972 = vrot.slane %v8331, %v8971
        %v8973 = vsel %vm8397, %v8972, %v8968
        %v8974 = vlaneseq
        %v8975 = vshrl.u32 %v8974, 7
        %v8976 = vsub.s32 %v8399, %v8975
        %v8977 = vrot.slane %v8334, %v8976
        %v8978 = vsel %vm8404, %v8977, %v8973
        %v8979 = vlaneseq
        %v8980 = vshrl.u32 %v8979, 7
        %v8981 = vsub.s32 %v8406, %v8980
        %v8982 = vrot.slane %v8337, %v8981
        %v8983 = vsel %vm8411, %v8982, %v8978
        %v8984 = vlaneseq
        %v8985 = vshrl.u32 %v8984, 7
        %v8986 = vsub.s32 %v8413, %v8985
        %v8987 = vrot.slane %v8340, %v8986
        %v8988 = vsel %vm8418, %v8987, %v8983
        %v8989 = vlaneseq
        %v8990 = vshrl.u32 %v8989, 7
        %v8991 = vsub.s32 %v8420, %v8990
        %v8992 = vrot.slane %v8343, %v8991
        %v8993 = vsel %vm8425, %v8992, %v8988
        %v8994 = vlaneseq
        %v8995 = vshrl.u32 %v8994, 7
        %v8996 = vsub.s32 %v8427, %v8995
        %v8997 = vrot.slane %v8346, %v8996
        %v8998 = vsel %vm8432, %v8997, %v8993
        %v8999 = vlaneseq
        %v9000 = vshrl.u32 %v8999, 7
        %v9001 = vsub.s32 %v8434, %v9000
        %v9002 = vrot.slane %v8349, %v9001
        %v9003 = vsel %vm8439, %v9002, %v8998
        %v9004 = vlaneseq
        %v9005 = vshrl.u32 %v9004, 7
        %v9006 = vsub.s32 %v8441, %v9005
        %v9007 = vrot.slane %v8352, %v9006
        %v9008 = vsel %vm8446, %v9007, %v9003
        %v9009 = vlaneseq
        %v9010 = vshrl.u32 %v9009, 7
        %v9011 = vsub.s32 %v8448, %v9010
        %v9012 = vrot.slane %v8355, %v9011
        %v9013 = vsel %vm8453, %v9012, %v9008
        %v9014 = vlaneseq
        %v9015 = vshrl.u32 %v9014, 7
        %v9016 = vsub.s32 %v8455, %v9015
        %v9017 = vrot.slane %v8358, %v9016
        %v9018 = vsel %vm8460, %v9017, %v9013
        %v9019 = vlaneseq
        %v9020 = vshrl.u32 %v9019, 7
        %v9021 = vsub.s32 %v8462, %v9020
        %v9022 = vrot.slane %v8361, %v9021
        %v9023 = vsel %vm8467, %v9022, %v9018
        %v9024 = vlaneseq
        %v9025 = vshrl.u32 %v9024, 7
        %v9026 = vsub.s32 %v8469, %v9025
        %v9027 = vrot.slane %v8364, %v9026
        %v9028 = vsel %vm8474, %v9027, %v9023
        %vm9029 = vcmask 1041409
        %v9030 = vsel %vm9029, %v8554, %v8475
        %vm9031 = vcmask 1042434
        %v9032 = vsel %vm9031, %v8633, %v9030
        %vm9033 = vcmask 1043459
        %v9034 = vsel %vm9033, %v8712, %v9032
        %vm9035 = vcmask 1044484
        %v9036 = vsel %vm9035, %v8791, %v9034
        %vm9037 = vcmask 1045509
        %v9038 = vsel %vm9037, %v8870, %v9036
        %vm9039 = vcmask 1046534
        %v9040 = vsel %vm9039, %v8949, %v9038
        %vm9041 = vcmask 1047559
        %v9042 = vsel %vm9041, %v9028, %v9040
        %9044 = vmax.xlane.f32.xlu0 %v9042
        %v9045 = vpop.xlane.xlu0 %9044
        %v9046 = vld [vmem:[#allocation2] sm:$0xff]
        %v9047 = vmax.f32 %v9046, %v9045
        %v9048 = vsub.f32 %v9046, %v9047
        %v9049 = vmul.f32 %v9048, 1.442695
        %v9050 = vpow.pop %v9049
        %9052 = vset.pattern.permute.xlu0 0
        %9053 = vperm.xlu0 %9052, %v9047
        %v9054 = vpop.permute.xlu0 %9053
        %v9055 = vlaneseq
        %v9056 = vshrl.u32 %v9055, 7
        %v9057 = vsub.s32 0, %v9056
        %v9058 = vrot.slane %v9054, %v9057
        %v9059 = vlaneseq
        %v9060 = vshrl.u32 %v9059, 7
        %v9061 = vsub.s32 1, %v9060
        %v9062 = vrot.slane %v9054, %v9061
        %v9063 = vlaneseq
        %v9064 = vshrl.u32 %v9063, 7
        %v9065 = vsub.s32 2, %v9064
        %v9066 = vrot.slane %v9054, %v9065
        %v9067 = vlaneseq
        %v9068 = vshrl.u32 %v9067, 7
        %v9069 = vsub.s32 3, %v9068
        %v9070 = vrot.slane %v9054, %v9069
        %v9071 = vlaneseq
        %v9072 = vshrl.u32 %v9071, 7
        %v9073 = vsub.s32 4, %v9072
        %v9074 = vrot.slane %v9054, %v9073
        %v9075 = vlaneseq
        %v9076 = vshrl.u32 %v9075, 7
        %v9077 = vsub.s32 5, %v9076
        %v9078 = vrot.slane %v9054, %v9077
        %v9079 = vlaneseq
        %v9080 = vshrl.u32 %v9079, 7
        %v9081 = vsub.s32 6, %v9080
        %v9082 = vrot.slane %v9054, %v9081
        %v9083 = vlaneseq
        %v9084 = vshrl.u32 %v9083, 7
        %v9085 = vsub.s32 7, %v9084
        %v9086 = vrot.slane %v9054, %v9085
        %v9095 = vsub.f32 %v7725, %v9058
        %v9096 = vsub.f32 %v7726, %v9058
        %v9097 = vsub.f32 %v7727, %v9058
        %v9098 = vsub.f32 %v7728, %v9058
        %v9099 = vsub.f32 %v7729, %v9058
        %v9100 = vsub.f32 %v7730, %v9058
        %v9101 = vsub.f32 %v7731, %v9058
        %v9102 = vsub.f32 %v7732, %v9058
        %v9103 = vsub.f32 %v7733, %v9058
        %v9104 = vsub.f32 %v7734, %v9058
        %v9105 = vsub.f32 %v7735, %v9058
        %v9106 = vsub.f32 %v7736, %v9058
        %v9107 = vsub.f32 %v7737, %v9058
        %v9108 = vsub.f32 %v7738, %v9058
        %v9109 = vsub.f32 %v7739, %v9058
        %v9110 = vsub.f32 %v7740, %v9058
        %v9111 = vsub.f32 %v7741, %v9062
        %v9112 = vsub.f32 %v7742, %v9062
        %v9113 = vsub.f32 %v7743, %v9062
        %v9114 = vsub.f32 %v7744, %v9062
        %v9115 = vsub.f32 %v7745, %v9062
        %v9116 = vsub.f32 %v7746, %v9062
        %v9117 = vsub.f32 %v7747, %v9062
        %v9118 = vsub.f32 %v7748, %v9062
        %v9119 = vsub.f32 %v7749, %v9062
        %v9120 = vsub.f32 %v7750, %v9062
        %v9121 = vsub.f32 %v7751, %v9062
        %v9122 = vsub.f32 %v7752, %v9062
        %v9123 = vsub.f32 %v7753, %v9062
        %v9124 = vsub.f32 %v7754, %v9062
        %v9125 = vsub.f32 %v7755, %v9062
        %v9126 = vsub.f32 %v7756, %v9062
        %v9127 = vsub.f32 %v7757, %v9066
        %v9128 = vsub.f32 %v7758, %v9066
        %v9129 = vsub.f32 %v7759, %v9066
        %v9130 = vsub.f32 %v7760, %v9066
        %v9131 = vsub.f32 %v7761, %v9066
        %v9132 = vsub.f32 %v7762, %v9066
        %v9133 = vsub.f32 %v7763, %v9066
        %v9134 = vsub.f32 %v7764, %v9066
        %v9135 = vsub.f32 %v7765, %v9066
        %v9136 = vsub.f32 %v7766, %v9066
        %v9137 = vsub.f32 %v7767, %v9066
        %v9138 = vsub.f32 %v7768, %v9066
        %v9139 = vsub.f32 %v7769, %v9066
        %v9140 = vsub.f32 %v7770, %v9066
        %v9141 = vsub.f32 %v7771, %v9066
        %v9142 = vsub.f32 %v7772, %v9066
        %v9143 = vsub.f32 %v7773, %v9070
        %v9144 = vsub.f32 %v7774, %v9070
        %v9145 = vsub.f32 %v7775, %v9070
        %v9146 = vsub.f32 %v7776, %v9070
        %v9147 = vsub.f32 %v7777, %v9070
        %v9148 = vsub.f32 %v7778, %v9070
        %v9149 = vsub.f32 %v7779, %v9070
        %v9150 = vsub.f32 %v7780, %v9070
        %v9151 = vsub.f32 %v7781, %v9070
        %v9152 = vsub.f32 %v7782, %v9070
        %v9153 = vsub.f32 %v7783, %v9070
        %v9154 = vsub.f32 %v7784, %v9070
        %v9155 = vsub.f32 %v7785, %v9070
        %v9156 = vsub.f32 %v7786, %v9070
        %v9157 = vsub.f32 %v7787, %v9070
        %v9158 = vsub.f32 %v7788, %v9070
        %v9159 = vsub.f32 %v7789, %v9074
        %v9160 = vsub.f32 %v7790, %v9074
        %v9161 = vsub.f32 %v7791, %v9074
        %v9162 = vsub.f32 %v7792, %v9074
        %v9163 = vsub.f32 %v7793, %v9074
        %v9164 = vsub.f32 %v7794, %v9074
        %v9165 = vsub.f32 %v7795, %v9074
        %v9166 = vsub.f32 %v7796, %v9074
        %v9167 = vsub.f32 %v7797, %v9074
        %v9168 = vsub.f32 %v7798, %v9074
        %v9169 = vsub.f32 %v7799, %v9074
        %v9170 = vsub.f32 %v7800, %v9074
        %v9171 = vsub.f32 %v7801, %v9074
        %v9172 = vsub.f32 %v7802, %v9074
        %v9173 = vsub.f32 %v7803, %v9074
        %v9174 = vsub.f32 %v7804, %v9074
        %v9175 = vsub.f32 %v7805, %v9078
        %v9176 = vsub.f32 %v7806, %v9078
        %v9177 = vsub.f32 %v7807, %v9078
        %v9178 = vsub.f32 %v7808, %v9078
        %v9179 = vsub.f32 %v7809, %v9078
        %v9180 = vsub.f32 %v7810, %v9078
        %v9181 = vsub.f32 %v7811, %v9078
        %v9182 = vsub.f32 %v7812, %v9078
        %v9183 = vsub.f32 %v7813, %v9078
        %v9184 = vsub.f32 %v7814, %v9078
        %v9185 = vsub.f32 %v7815, %v9078
        %v9186 = vsub.f32 %v7816, %v9078
        %v9187 = vsub.f32 %v7817, %v9078
        %v9188 = vsub.f32 %v7818, %v9078
        %v9189 = vsub.f32 %v7819, %v9078
        %v9190 = vsub.f32 %v7820, %v9078
        %v9191 = vsub.f32 %v7821, %v9082
        %v9192 = vsub.f32 %v7822, %v9082
        %v9193 = vsub.f32 %v7823, %v9082
        %v9194 = vsub.f32 %v7824, %v9082
        %v9195 = vsub.f32 %v7825, %v9082
        %v9196 = vsub.f32 %v7826, %v9082
        %v9197 = vsub.f32 %v7827, %v9082
        %v9198 = vsub.f32 %v7828, %v9082
        %v9199 = vsub.f32 %v7829, %v9082
        %v9200 = vsub.f32 %v7830, %v9082
        %v9201 = vsub.f32 %v7831, %v9082
        %v9202 = vsub.f32 %v7832, %v9082
        %v9203 = vsub.f32 %v7833, %v9082
        %v9204 = vsub.f32 %v7834, %v9082
        %v9205 = vsub.f32 %v7835, %v9082
        %v9206 = vsub.f32 %v7836, %v9082
        %v9207 = vsub.f32 %v7837, %v9086
        %v9208 = vsub.f32 %v7838, %v9086
        %v9209 = vsub.f32 %v7839, %v9086
        %v9210 = vsub.f32 %v7840, %v9086
        %v9211 = vsub.f32 %v7841, %v9086
        %v9212 = vsub.f32 %v7842, %v9086
        %v9213 = vsub.f32 %v7843, %v9086
        %v9214 = vsub.f32 %v7844, %v9086
        %v9215 = vsub.f32 %v7845, %v9086
        %v9216 = vsub.f32 %v7846, %v9086
        %v9217 = vsub.f32 %v7847, %v9086
        %v9218 = vsub.f32 %v7848, %v9086
        %v9219 = vsub.f32 %v7849, %v9086
        %v9220 = vsub.f32 %v7850, %v9086
        %v9221 = vsub.f32 %v7851, %v9086
        %v9222 = vsub.f32 %v7852, %v9086
        %v9223 = vmul.f32 %v9095, 1.442695
        %v9224 = vpow.pop %v9223
        %v9225 = vmul.f32 %v9096, 1.442695
        %v9226 = vpow.pop %v9225
        %v9227 = vmul.f32 %v9097, 1.442695
        %v9228 = vpow.pop %v9227
        %v9229 = vmul.f32 %v9098, 1.442695
        %v9230 = vpow.pop %v9229
        %v9231 = vmul.f32 %v9099, 1.442695
        %v9232 = vpow.pop %v9231
        %v9233 = vmul.f32 %v9100, 1.442695
        %v9234 = vpow.pop %v9233
        %v9235 = vmul.f32 %v9101, 1.442695
        %v9236 = vpow.pop %v9235
        %v9237 = vmul.f32 %v9102, 1.442695
        %v9238 = vpow.pop %v9237
        %v9239 = vmul.f32 %v9103, 1.442695
        %v9240 = vpow.pop %v9239
        %v9241 = vmul.f32 %v9104, 1.442695
        %v9242 = vpow.pop %v9241
        %v9243 = vmul.f32 %v9105, 1.442695
        %v9244 = vpow.pop %v9243
        %v9245 = vmul.f32 %v9106, 1.442695
        %v9246 = vpow.pop %v9245
        %v9247 = vmul.f32 %v9107, 1.442695
        %v9248 = vpow.pop %v9247
        %v9249 = vmul.f32 %v9108, 1.442695
        %v9250 = vpow.pop %v9249
        %v9251 = vmul.f32 %v9109, 1.442695
        %v9252 = vpow.pop %v9251
        %v9253 = vmul.f32 %v9110, 1.442695
        %v9254 = vpow.pop %v9253
        %v9255 = vmul.f32 %v9111, 1.442695
        %v9256 = vpow.pop %v9255
        %v9257 = vmul.f32 %v9112, 1.442695
        %v9258 = vpow.pop %v9257
        %v9259 = vmul.f32 %v9113, 1.442695
        %v9260 = vpow.pop %v9259
        %v9261 = vmul.f32 %v9114, 1.442695
        %v9262 = vpow.pop %v9261
        %v9263 = vmul.f32 %v9115, 1.442695
        %v9264 = vpow.pop %v9263
        %v9265 = vmul.f32 %v9116, 1.442695
        %v9266 = vpow.pop %v9265
        %v9267 = vmul.f32 %v9117, 1.442695
        %v9268 = vpow.pop %v9267
        %v9269 = vmul.f32 %v9118, 1.442695
        %v9270 = vpow.pop %v9269
        %v9271 = vmul.f32 %v9119, 1.442695
        %v9272 = vpow.pop %v9271
        %v9273 = vmul.f32 %v9120, 1.442695
        %v9274 = vpow.pop %v9273
        %v9275 = vmul.f32 %v9121, 1.442695
        %v9276 = vpow.pop %v9275
        %v9277 = vmul.f32 %v9122, 1.442695
        %v9278 = vpow.pop %v9277
        %v9279 = vmul.f32 %v9123, 1.442695
        %v9280 = vpow.pop %v9279
        %v9281 = vmul.f32 %v9124, 1.442695
        %v9282 = vpow.pop %v9281
        %v9283 = vmul.f32 %v9125, 1.442695
        %v9284 = vpow.pop %v9283
        %v9285 = vmul.f32 %v9126, 1.442695
        %v9286 = vpow.pop %v9285
        %v9287 = vmul.f32 %v9127, 1.442695
        %v9288 = vpow.pop %v9287
        %v9289 = vmul.f32 %v9128, 1.442695
        %v9290 = vpow.pop %v9289
        %v9291 = vmul.f32 %v9129, 1.442695
        %v9292 = vpow.pop %v9291
        %v9293 = vmul.f32 %v9130, 1.442695
        %v9294 = vpow.pop %v9293
        %v9295 = vmul.f32 %v9131, 1.442695
        %v9296 = vpow.pop %v9295
        %v9297 = vmul.f32 %v9132, 1.442695
        %v9298 = vpow.pop %v9297
        %v9299 = vmul.f32 %v9133, 1.442695
        %v9300 = vpow.pop %v9299
        %v9301 = vmul.f32 %v9134, 1.442695
        %v9302 = vpow.pop %v9301
        %v9303 = vmul.f32 %v9135, 1.442695
        %v9304 = vpow.pop %v9303
        %v9305 = vmul.f32 %v9136, 1.442695
        %v9306 = vpow.pop %v9305
        %v9307 = vmul.f32 %v9137, 1.442695
        %v9308 = vpow.pop %v9307
        %v9309 = vmul.f32 %v9138, 1.442695
        %v9310 = vpow.pop %v9309
        %v9311 = vmul.f32 %v9139, 1.442695
        %v9312 = vpow.pop %v9311
        %v9313 = vmul.f32 %v9140, 1.442695
        %v9314 = vpow.pop %v9313
        %v9315 = vmul.f32 %v9141, 1.442695
        %v9316 = vpow.pop %v9315
        %v9317 = vmul.f32 %v9142, 1.442695
        %v9318 = vpow.pop %v9317
        %v9319 = vmul.f32 %v9143, 1.442695
        %v9320 = vpow.pop %v9319
        %v9321 = vmul.f32 %v9144, 1.442695
        %v9322 = vpow.pop %v9321
        %v9323 = vmul.f32 %v9145, 1.442695
        %v9324 = vpow.pop %v9323
        %v9325 = vmul.f32 %v9146, 1.442695
        %v9326 = vpow.pop %v9325
        %v9327 = vmul.f32 %v9147, 1.442695
        %v9328 = vpow.pop %v9327
        %v9329 = vmul.f32 %v9148, 1.442695
        %v9330 = vpow.pop %v9329
        %v9331 = vmul.f32 %v9149, 1.442695
        %v9332 = vpow.pop %v9331
        %v9333 = vmul.f32 %v9150, 1.442695
        %v9334 = vpow.pop %v9333
        %v9335 = vmul.f32 %v9151, 1.442695
        %v9336 = vpow.pop %v9335
        %v9337 = vmul.f32 %v9152, 1.442695
        %v9338 = vpow.pop %v9337
        %v9339 = vmul.f32 %v9153, 1.442695
        %v9340 = vpow.pop %v9339
        %v9341 = vmul.f32 %v9154, 1.442695
        %v9342 = vpow.pop %v9341
        %v9343 = vmul.f32 %v9155, 1.442695
        %v9344 = vpow.pop %v9343
        %v9345 = vmul.f32 %v9156, 1.442695
        %v9346 = vpow.pop %v9345
        %v9347 = vmul.f32 %v9157, 1.442695
        %v9348 = vpow.pop %v9347
        %v9349 = vmul.f32 %v9158, 1.442695
        %v9350 = vpow.pop %v9349
        %v9351 = vmul.f32 %v9159, 1.442695
        %v9352 = vpow.pop %v9351
        %v9353 = vmul.f32 %v9160, 1.442695
        %v9354 = vpow.pop %v9353
        %v9355 = vmul.f32 %v9161, 1.442695
        %v9356 = vpow.pop %v9355
        %v9357 = vmul.f32 %v9162, 1.442695
        %v9358 = vpow.pop %v9357
        %v9359 = vmul.f32 %v9163, 1.442695
        %v9360 = vpow.pop %v9359
        %v9361 = vmul.f32 %v9164, 1.442695
        %v9362 = vpow.pop %v9361
        %v9363 = vmul.f32 %v9165, 1.442695
        %v9364 = vpow.pop %v9363
        %v9365 = vmul.f32 %v9166, 1.442695
        %v9366 = vpow.pop %v9365
        %v9367 = vmul.f32 %v9167, 1.442695
        %v9368 = vpow.pop %v9367
        %v9369 = vmul.f32 %v9168, 1.442695
        %v9370 = vpow.pop %v9369
        %v9371 = vmul.f32 %v9169, 1.442695
        %v9372 = vpow.pop %v9371
        %v9373 = vmul.f32 %v9170, 1.442695
        %v9374 = vpow.pop %v9373
        %v9375 = vmul.f32 %v9171, 1.442695
        %v9376 = vpow.pop %v9375
        %v9377 = vmul.f32 %v9172, 1.442695
        %v9378 = vpow.pop %v9377
        %v9379 = vmul.f32 %v9173, 1.442695
        %v9380 = vpow.pop %v9379
        %v9381 = vmul.f32 %v9174, 1.442695
        %v9382 = vpow.pop %v9381
        %v9383 = vmul.f32 %v9175, 1.442695
        %v9384 = vpow.pop %v9383
        %v9385 = vmul.f32 %v9176, 1.442695
        %v9386 = vpow.pop %v9385
        %v9387 = vmul.f32 %v9177, 1.442695
        %v9388 = vpow.pop %v9387
        %v9389 = vmul.f32 %v9178, 1.442695
        %v9390 = vpow.pop %v9389
        %v9391 = vmul.f32 %v9179, 1.442695
        %v9392 = vpow.pop %v9391
        %v9393 = vmul.f32 %v9180, 1.442695
        %v9394 = vpow.pop %v9393
        %v9395 = vmul.f32 %v9181, 1.442695
        %v9396 = vpow.pop %v9395
        %v9397 = vmul.f32 %v9182, 1.442695
        %v9398 = vpow.pop %v9397
        %v9399 = vmul.f32 %v9183, 1.442695
        %v9400 = vpow.pop %v9399
        %v9401 = vmul.f32 %v9184, 1.442695
        %v9402 = vpow.pop %v9401
        %v9403 = vmul.f32 %v9185, 1.442695
        %v9404 = vpow.pop %v9403
        %v9405 = vmul.f32 %v9186, 1.442695
        %v9406 = vpow.pop %v9405
        %v9407 = vmul.f32 %v9187, 1.442695
        %v9408 = vpow.pop %v9407
        %v9409 = vmul.f32 %v9188, 1.442695
        %v9410 = vpow.pop %v9409
        %v9411 = vmul.f32 %v9189, 1.442695
        %v9412 = vpow.pop %v9411
        %v9413 = vmul.f32 %v9190, 1.442695
        %v9414 = vpow.pop %v9413
        %v9415 = vmul.f32 %v9191, 1.442695
        %v9416 = vpow.pop %v9415
        %v9417 = vmul.f32 %v9192, 1.442695
        %v9418 = vpow.pop %v9417
        %v9419 = vmul.f32 %v9193, 1.442695
        %v9420 = vpow.pop %v9419
        %v9421 = vmul.f32 %v9194, 1.442695
        %v9422 = vpow.pop %v9421
        %v9423 = vmul.f32 %v9195, 1.442695
        %v9424 = vpow.pop %v9423
        %v9425 = vmul.f32 %v9196, 1.442695
        %v9426 = vpow.pop %v9425
        %v9427 = vmul.f32 %v9197, 1.442695
        %v9428 = vpow.pop %v9427
        %v9429 = vmul.f32 %v9198, 1.442695
        %v9430 = vpow.pop %v9429
        %v9431 = vmul.f32 %v9199, 1.442695
        %v9432 = vpow.pop %v9431
        %v9433 = vmul.f32 %v9200, 1.442695
        %v9434 = vpow.pop %v9433
        %v9435 = vmul.f32 %v9201, 1.442695
        %v9436 = vpow.pop %v9435
        %v9437 = vmul.f32 %v9202, 1.442695
        %v9438 = vpow.pop %v9437
        %v9439 = vmul.f32 %v9203, 1.442695
        %v9440 = vpow.pop %v9439
        %v9441 = vmul.f32 %v9204, 1.442695
        %v9442 = vpow.pop %v9441
        %v9443 = vmul.f32 %v9205, 1.442695
        %v9444 = vpow.pop %v9443
        %v9445 = vmul.f32 %v9206, 1.442695
        %v9446 = vpow.pop %v9445
        %v9447 = vmul.f32 %v9207, 1.442695
        %v9448 = vpow.pop %v9447
        %v9449 = vmul.f32 %v9208, 1.442695
        %v9450 = vpow.pop %v9449
        %v9451 = vmul.f32 %v9209, 1.442695
        %v9452 = vpow.pop %v9451
        %v9453 = vmul.f32 %v9210, 1.442695
        %v9454 = vpow.pop %v9453
        %v9455 = vmul.f32 %v9211, 1.442695
        %v9456 = vpow.pop %v9455
        %v9457 = vmul.f32 %v9212, 1.442695
        %v9458 = vpow.pop %v9457
        %v9459 = vmul.f32 %v9213, 1.442695
        %v9460 = vpow.pop %v9459
        %v9461 = vmul.f32 %v9214, 1.442695
        %v9462 = vpow.pop %v9461
        %v9463 = vmul.f32 %v9215, 1.442695
        %v9464 = vpow.pop %v9463
        %v9465 = vmul.f32 %v9216, 1.442695
        %v9466 = vpow.pop %v9465
        %v9467 = vmul.f32 %v9217, 1.442695
        %v9468 = vpow.pop %v9467
        %v9469 = vmul.f32 %v9218, 1.442695
        %v9470 = vpow.pop %v9469
        %v9471 = vmul.f32 %v9219, 1.442695
        %v9472 = vpow.pop %v9471
        %v9473 = vmul.f32 %v9220, 1.442695
        %v9474 = vpow.pop %v9473
        %v9475 = vmul.f32 %v9221, 1.442695
        %v9476 = vpow.pop %v9475
        %v9477 = vmul.f32 %v9222, 1.442695
        %v9478 = vpow.pop %v9477
        %v9479 = vld [vmem:[#allocation3] sm:$0xff]
        %v9480 = vmul.f32 %v9050, %v9479
        %9609 = vset.pattern.permute.xlu0 0
        %9610 = vperm.xlu0 %9609, %v9224
        %v9611 = vpop.permute.xlu0 %9610
        %9612 = vset.pattern.permute.xlu0 0
        %9613 = vperm.xlu0 %9612, %v9226
        %v9614 = vpop.permute.xlu0 %9613
        %9615 = vset.pattern.permute.xlu0 0
        %9616 = vperm.xlu0 %9615, %v9228
        %v9617 = vpop.permute.xlu0 %9616
        %9618 = vset.pattern.permute.xlu0 0
        %9619 = vperm.xlu0 %9618, %v9230
        %v9620 = vpop.permute.xlu0 %9619
        %9621 = vset.pattern.permute.xlu0 0
        %9622 = vperm.xlu0 %9621, %v9232
        %v9623 = vpop.permute.xlu0 %9622
        %9624 = vset.pattern.permute.xlu0 0
        %9625 = vperm.xlu0 %9624, %v9234
        %v9626 = vpop.permute.xlu0 %9625
        %9627 = vset.pattern.permute.xlu0 0
        %9628 = vperm.xlu0 %9627, %v9236
        %v9629 = vpop.permute.xlu0 %9628
        %9630 = vset.pattern.permute.xlu0 0
        %9631 = vperm.xlu0 %9630, %v9238
        %v9632 = vpop.permute.xlu0 %9631
        %9633 = vset.pattern.permute.xlu0 0
        %9634 = vperm.xlu0 %9633, %v9240
        %v9635 = vpop.permute.xlu0 %9634
        %9636 = vset.pattern.permute.xlu0 0
        %9637 = vperm.xlu0 %9636, %v9242
        %v9638 = vpop.permute.xlu0 %9637
        %9639 = vset.pattern.permute.xlu0 0
        %9640 = vperm.xlu0 %9639, %v9244
        %v9641 = vpop.permute.xlu0 %9640
        %9642 = vset.pattern.permute.xlu0 0
        %9643 = vperm.xlu0 %9642, %v9246
        %v9644 = vpop.permute.xlu0 %9643
        %9645 = vset.pattern.permute.xlu0 0
        %9646 = vperm.xlu0 %9645, %v9248
        %v9647 = vpop.permute.xlu0 %9646
        %9648 = vset.pattern.permute.xlu0 0
        %9649 = vperm.xlu0 %9648, %v9250
        %v9650 = vpop.permute.xlu0 %9649
        %9651 = vset.pattern.permute.xlu0 0
        %9652 = vperm.xlu0 %9651, %v9252
        %v9653 = vpop.permute.xlu0 %9652
        %9654 = vset.pattern.permute.xlu0 0
        %9655 = vperm.xlu0 %9654, %v9254
        %v9656 = vpop.permute.xlu0 %9655
        %9657 = vset.pattern.permute.xlu0 0
        %9658 = vperm.xlu0 %9657, %v9256
        %v9659 = vpop.permute.xlu0 %9658
        %9660 = vset.pattern.permute.xlu0 0
        %9661 = vperm.xlu0 %9660, %v9258
        %v9662 = vpop.permute.xlu0 %9661
        %9663 = vset.pattern.permute.xlu0 0
        %9664 = vperm.xlu0 %9663, %v9260
        %v9665 = vpop.permute.xlu0 %9664
        %9666 = vset.pattern.permute.xlu0 0
        %9667 = vperm.xlu0 %9666, %v9262
        %v9668 = vpop.permute.xlu0 %9667
        %9669 = vset.pattern.permute.xlu0 0
        %9670 = vperm.xlu0 %9669, %v9264
        %v9671 = vpop.permute.xlu0 %9670
        %9672 = vset.pattern.permute.xlu0 0
        %9673 = vperm.xlu0 %9672, %v9266
        %v9674 = vpop.permute.xlu0 %9673
        %9675 = vset.pattern.permute.xlu0 0
        %9676 = vperm.xlu0 %9675, %v9268
        %v9677 = vpop.permute.xlu0 %9676
        %9678 = vset.pattern.permute.xlu0 0
        %9679 = vperm.xlu0 %9678, %v9270
        %v9680 = vpop.permute.xlu0 %9679
        %9681 = vset.pattern.permute.xlu0 0
        %9682 = vperm.xlu0 %9681, %v9272
        %v9683 = vpop.permute.xlu0 %9682
        %9684 = vset.pattern.permute.xlu0 0
        %9685 = vperm.xlu0 %9684, %v9274
        %v9686 = vpop.permute.xlu0 %9685
        %9687 = vset.pattern.permute.xlu0 0
        %9688 = vperm.xlu0 %9687, %v9276
        %v9689 = vpop.permute.xlu0 %9688
        %9690 = vset.pattern.permute.xlu0 0
        %9691 = vperm.xlu0 %9690, %v9278
        %v9692 = vpop.permute.xlu0 %9691
        %9693 = vset.pattern.permute.xlu0 0
        %9694 = vperm.xlu0 %9693, %v9280
        %v9695 = vpop.permute.xlu0 %9694
        %9696 = vset.pattern.permute.xlu0 0
        %9697 = vperm.xlu0 %9696, %v9282
        %v9698 = vpop.permute.xlu0 %9697
        %9699 = vset.pattern.permute.xlu0 0
        %9700 = vperm.xlu0 %9699, %v9284
        %v9701 = vpop.permute.xlu0 %9700
        %9702 = vset.pattern.permute.xlu0 0
        %9703 = vperm.xlu0 %9702, %v9286
        %v9704 = vpop.permute.xlu0 %9703
        %9705 = vset.pattern.permute.xlu0 0
        %9706 = vperm.xlu0 %9705, %v9288
        %v9707 = vpop.permute.xlu0 %9706
        %9708 = vset.pattern.permute.xlu0 0
        %9709 = vperm.xlu0 %9708, %v9290
        %v9710 = vpop.permute.xlu0 %9709
        %9711 = vset.pattern.permute.xlu0 0
        %9712 = vperm.xlu0 %9711, %v9292
        %v9713 = vpop.permute.xlu0 %9712
        %9714 = vset.pattern.permute.xlu0 0
        %9715 = vperm.xlu0 %9714, %v9294
        %v9716 = vpop.permute.xlu0 %9715
        %9717 = vset.pattern.permute.xlu0 0
        %9718 = vperm.xlu0 %9717, %v9296
        %v9719 = vpop.permute.xlu0 %9718
        %9720 = vset.pattern.permute.xlu0 0
        %9721 = vperm.xlu0 %9720, %v9298
        %v9722 = vpop.permute.xlu0 %9721
        %9723 = vset.pattern.permute.xlu0 0
        %9724 = vperm.xlu0 %9723, %v9300
        %v9725 = vpop.permute.xlu0 %9724
        %9726 = vset.pattern.permute.xlu0 0
        %9727 = vperm.xlu0 %9726, %v9302
        %v9728 = vpop.permute.xlu0 %9727
        %9729 = vset.pattern.permute.xlu0 0
        %9730 = vperm.xlu0 %9729, %v9304
        %v9731 = vpop.permute.xlu0 %9730
        %9732 = vset.pattern.permute.xlu0 0
        %9733 = vperm.xlu0 %9732, %v9306
        %v9734 = vpop.permute.xlu0 %9733
        %9735 = vset.pattern.permute.xlu0 0
        %9736 = vperm.xlu0 %9735, %v9308
        %v9737 = vpop.permute.xlu0 %9736
        %9738 = vset.pattern.permute.xlu0 0
        %9739 = vperm.xlu0 %9738, %v9310
        %v9740 = vpop.permute.xlu0 %9739
        %9741 = vset.pattern.permute.xlu0 0
        %9742 = vperm.xlu0 %9741, %v9312
        %v9743 = vpop.permute.xlu0 %9742
        %9744 = vset.pattern.permute.xlu0 0
        %9745 = vperm.xlu0 %9744, %v9314
        %v9746 = vpop.permute.xlu0 %9745
        %9747 = vset.pattern.permute.xlu0 0
        %9748 = vperm.xlu0 %9747, %v9316
        %v9749 = vpop.permute.xlu0 %9748
        %9750 = vset.pattern.permute.xlu0 0
        %9751 = vperm.xlu0 %9750, %v9318
        %v9752 = vpop.permute.xlu0 %9751
        %9753 = vset.pattern.permute.xlu0 0
        %9754 = vperm.xlu0 %9753, %v9320
        %v9755 = vpop.permute.xlu0 %9754
        %9756 = vset.pattern.permute.xlu0 0
        %9757 = vperm.xlu0 %9756, %v9322
        %v9758 = vpop.permute.xlu0 %9757
        %9759 = vset.pattern.permute.xlu0 0
        %9760 = vperm.xlu0 %9759, %v9324
        %v9761 = vpop.permute.xlu0 %9760
        %9762 = vset.pattern.permute.xlu0 0
        %9763 = vperm.xlu0 %9762, %v9326
        %v9764 = vpop.permute.xlu0 %9763
        %9765 = vset.pattern.permute.xlu0 0
        %9766 = vperm.xlu0 %9765, %v9328
        %v9767 = vpop.permute.xlu0 %9766
        %9768 = vset.pattern.permute.xlu0 0
        %9769 = vperm.xlu0 %9768, %v9330
        %v9770 = vpop.permute.xlu0 %9769
        %9771 = vset.pattern.permute.xlu0 0
        %9772 = vperm.xlu0 %9771, %v9332
        %v9773 = vpop.permute.xlu0 %9772
        %9774 = vset.pattern.permute.xlu0 0
        %9775 = vperm.xlu0 %9774, %v9334
        %v9776 = vpop.permute.xlu0 %9775
        %9777 = vset.pattern.permute.xlu0 0
        %9778 = vperm.xlu0 %9777, %v9336
        %v9779 = vpop.permute.xlu0 %9778
        %9780 = vset.pattern.permute.xlu0 0
        %9781 = vperm.xlu0 %9780, %v9338
        %v9782 = vpop.permute.xlu0 %9781
        %9783 = vset.pattern.permute.xlu0 0
        %9784 = vperm.xlu0 %9783, %v9340
        %v9785 = vpop.permute.xlu0 %9784
        %9786 = vset.pattern.permute.xlu0 0
        %9787 = vperm.xlu0 %9786, %v9342
        %v9788 = vpop.permute.xlu0 %9787
        %9789 = vset.pattern.permute.xlu0 0
        %9790 = vperm.xlu0 %9789, %v9344
        %v9791 = vpop.permute.xlu0 %9790
        %9792 = vset.pattern.permute.xlu0 0
        %9793 = vperm.xlu0 %9792, %v9346
        %v9794 = vpop.permute.xlu0 %9793
        %9795 = vset.pattern.permute.xlu0 0
        %9796 = vperm.xlu0 %9795, %v9348
        %v9797 = vpop.permute.xlu0 %9796
        %9798 = vset.pattern.permute.xlu0 0
        %9799 = vperm.xlu0 %9798, %v9350
        %v9800 = vpop.permute.xlu0 %9799
        %9801 = vset.pattern.permute.xlu0 0
        %9802 = vperm.xlu0 %9801, %v9352
        %v9803 = vpop.permute.xlu0 %9802
        %9804 = vset.pattern.permute.xlu0 0
        %9805 = vperm.xlu0 %9804, %v9354
        %v9806 = vpop.permute.xlu0 %9805
        %9807 = vset.pattern.permute.xlu0 0
        %9808 = vperm.xlu0 %9807, %v9356
        %v9809 = vpop.permute.xlu0 %9808
        %9810 = vset.pattern.permute.xlu0 0
        %9811 = vperm.xlu0 %9810, %v9358
        %v9812 = vpop.permute.xlu0 %9811
        %9813 = vset.pattern.permute.xlu0 0
        %9814 = vperm.xlu0 %9813, %v9360
        %v9815 = vpop.permute.xlu0 %9814
        %9816 = vset.pattern.permute.xlu0 0
        %9817 = vperm.xlu0 %9816, %v9362
        %v9818 = vpop.permute.xlu0 %9817
        %9819 = vset.pattern.permute.xlu0 0
        %9820 = vperm.xlu0 %9819, %v9364
        %v9821 = vpop.permute.xlu0 %9820
        %9822 = vset.pattern.permute.xlu0 0
        %9823 = vperm.xlu0 %9822, %v9366
        %v9824 = vpop.permute.xlu0 %9823
        %9825 = vset.pattern.permute.xlu0 0
        %9826 = vperm.xlu0 %9825, %v9368
        %v9827 = vpop.permute.xlu0 %9826
        %9828 = vset.pattern.permute.xlu0 0
        %9829 = vperm.xlu0 %9828, %v9370
        %v9830 = vpop.permute.xlu0 %9829
        %9831 = vset.pattern.permute.xlu0 0
        %9832 = vperm.xlu0 %9831, %v9372
        %v9833 = vpop.permute.xlu0 %9832
        %9834 = vset.pattern.permute.xlu0 0
        %9835 = vperm.xlu0 %9834, %v9374
        %v9836 = vpop.permute.xlu0 %9835
        %9837 = vset.pattern.permute.xlu0 0
        %9838 = vperm.xlu0 %9837, %v9376
        %v9839 = vpop.permute.xlu0 %9838
        %9840 = vset.pattern.permute.xlu0 0
        %9841 = vperm.xlu0 %9840, %v9378
        %v9842 = vpop.permute.xlu0 %9841
        %9843 = vset.pattern.permute.xlu0 0
        %9844 = vperm.xlu0 %9843, %v9380
        %v9845 = vpop.permute.xlu0 %9844
        %9846 = vset.pattern.permute.xlu0 0
        %9847 = vperm.xlu0 %9846, %v9382
        %v9848 = vpop.permute.xlu0 %9847
        %9849 = vset.pattern.permute.xlu0 0
        %9850 = vperm.xlu0 %9849, %v9384
        %v9851 = vpop.permute.xlu0 %9850
        %9852 = vset.pattern.permute.xlu0 0
        %9853 = vperm.xlu0 %9852, %v9386
        %v9854 = vpop.permute.xlu0 %9853
        %9855 = vset.pattern.permute.xlu0 0
        %9856 = vperm.xlu0 %9855, %v9388
        %v9857 = vpop.permute.xlu0 %9856
        %9858 = vset.pattern.permute.xlu0 0
        %9859 = vperm.xlu0 %9858, %v9390
        %v9860 = vpop.permute.xlu0 %9859
        %9861 = vset.pattern.permute.xlu0 0
        %9862 = vperm.xlu0 %9861, %v9392
        %v9863 = vpop.permute.xlu0 %9862
        %9864 = vset.pattern.permute.xlu0 0
        %9865 = vperm.xlu0 %9864, %v9394
        %v9866 = vpop.permute.xlu0 %9865
        %9867 = vset.pattern.permute.xlu0 0
        %9868 = vperm.xlu0 %9867, %v9396
        %v9869 = vpop.permute.xlu0 %9868
        %9870 = vset.pattern.permute.xlu0 0
        %9871 = vperm.xlu0 %9870, %v9398
        %v9872 = vpop.permute.xlu0 %9871
        %9873 = vset.pattern.permute.xlu0 0
        %9874 = vperm.xlu0 %9873, %v9400
        %v9875 = vpop.permute.xlu0 %9874
        %9876 = vset.pattern.permute.xlu0 0
        %9877 = vperm.xlu0 %9876, %v9402
        %v9878 = vpop.permute.xlu0 %9877
        %9879 = vset.pattern.permute.xlu0 0
        %9880 = vperm.xlu0 %9879, %v9404
        %v9881 = vpop.permute.xlu0 %9880
        %9882 = vset.pattern.permute.xlu0 0
        %9883 = vperm.xlu0 %9882, %v9406
        %v9884 = vpop.permute.xlu0 %9883
        %9885 = vset.pattern.permute.xlu0 0
        %9886 = vperm.xlu0 %9885, %v9408
        %v9887 = vpop.permute.xlu0 %9886
        %9888 = vset.pattern.permute.xlu0 0
        %9889 = vperm.xlu0 %9888, %v9410
        %v9890 = vpop.permute.xlu0 %9889
        %9891 = vset.pattern.permute.xlu0 0
        %9892 = vperm.xlu0 %9891, %v9412
        %v9893 = vpop.permute.xlu0 %9892
        %9894 = vset.pattern.permute.xlu0 0
        %9895 = vperm.xlu0 %9894, %v9414
        %v9896 = vpop.permute.xlu0 %9895
        %9897 = vset.pattern.permute.xlu0 0
        %9898 = vperm.xlu0 %9897, %v9416
        %v9899 = vpop.permute.xlu0 %9898
        %9900 = vset.pattern.permute.xlu0 0
        %9901 = vperm.xlu0 %9900, %v9418
        %v9902 = vpop.permute.xlu0 %9901
        %9903 = vset.pattern.permute.xlu0 0
        %9904 = vperm.xlu0 %9903, %v9420
        %v9905 = vpop.permute.xlu0 %9904
        %9906 = vset.pattern.permute.xlu0 0
        %9907 = vperm.xlu0 %9906, %v9422
        %v9908 = vpop.permute.xlu0 %9907
        %9909 = vset.pattern.permute.xlu0 0
        %9910 = vperm.xlu0 %9909, %v9424
        %v9911 = vpop.permute.xlu0 %9910
        %9912 = vset.pattern.permute.xlu0 0
        %9913 = vperm.xlu0 %9912, %v9426
        %v9914 = vpop.permute.xlu0 %9913
        %9915 = vset.pattern.permute.xlu0 0
        %9916 = vperm.xlu0 %9915, %v9428
        %v9917 = vpop.permute.xlu0 %9916
        %9918 = vset.pattern.permute.xlu0 0
        %9919 = vperm.xlu0 %9918, %v9430
        %v9920 = vpop.permute.xlu0 %9919
        %9921 = vset.pattern.permute.xlu0 0
        %9922 = vperm.xlu0 %9921, %v9432
        %v9923 = vpop.permute.xlu0 %9922
        %9924 = vset.pattern.permute.xlu0 0
        %9925 = vperm.xlu0 %9924, %v9434
        %v9926 = vpop.permute.xlu0 %9925
        %9927 = vset.pattern.permute.xlu0 0
        %9928 = vperm.xlu0 %9927, %v9436
        %v9929 = vpop.permute.xlu0 %9928
        %9930 = vset.pattern.permute.xlu0 0
        %9931 = vperm.xlu0 %9930, %v9438
        %v9932 = vpop.permute.xlu0 %9931
        %9933 = vset.pattern.permute.xlu0 0
        %9934 = vperm.xlu0 %9933, %v9440
        %v9935 = vpop.permute.xlu0 %9934
        %9936 = vset.pattern.permute.xlu0 0
        %9937 = vperm.xlu0 %9936, %v9442
        %v9938 = vpop.permute.xlu0 %9937
        %9939 = vset.pattern.permute.xlu0 0
        %9940 = vperm.xlu0 %9939, %v9444
        %v9941 = vpop.permute.xlu0 %9940
        %9942 = vset.pattern.permute.xlu0 0
        %9943 = vperm.xlu0 %9942, %v9446
        %v9944 = vpop.permute.xlu0 %9943
        %9945 = vset.pattern.permute.xlu0 0
        %9946 = vperm.xlu0 %9945, %v9448
        %v9947 = vpop.permute.xlu0 %9946
        %9948 = vset.pattern.permute.xlu0 0
        %9949 = vperm.xlu0 %9948, %v9450
        %v9950 = vpop.permute.xlu0 %9949
        %9951 = vset.pattern.permute.xlu0 0
        %9952 = vperm.xlu0 %9951, %v9452
        %v9953 = vpop.permute.xlu0 %9952
        %9954 = vset.pattern.permute.xlu0 0
        %9955 = vperm.xlu0 %9954, %v9454
        %v9956 = vpop.permute.xlu0 %9955
        %9957 = vset.pattern.permute.xlu0 0
        %9958 = vperm.xlu0 %9957, %v9456
        %v9959 = vpop.permute.xlu0 %9958
        %9960 = vset.pattern.permute.xlu0 0
        %9961 = vperm.xlu0 %9960, %v9458
        %v9962 = vpop.permute.xlu0 %9961
        %9963 = vset.pattern.permute.xlu0 0
        %9964 = vperm.xlu0 %9963, %v9460
        %v9965 = vpop.permute.xlu0 %9964
        %9966 = vset.pattern.permute.xlu0 0
        %9967 = vperm.xlu0 %9966, %v9462
        %v9968 = vpop.permute.xlu0 %9967
        %9969 = vset.pattern.permute.xlu0 0
        %9970 = vperm.xlu0 %9969, %v9464
        %v9971 = vpop.permute.xlu0 %9970
        %9972 = vset.pattern.permute.xlu0 0
        %9973 = vperm.xlu0 %9972, %v9466
        %v9974 = vpop.permute.xlu0 %9973
        %9975 = vset.pattern.permute.xlu0 0
        %9976 = vperm.xlu0 %9975, %v9468
        %v9977 = vpop.permute.xlu0 %9976
        %9978 = vset.pattern.permute.xlu0 0
        %9979 = vperm.xlu0 %9978, %v9470
        %v9980 = vpop.permute.xlu0 %9979
        %9981 = vset.pattern.permute.xlu0 0
        %9982 = vperm.xlu0 %9981, %v9472
        %v9983 = vpop.permute.xlu0 %9982
        %9984 = vset.pattern.permute.xlu0 0
        %9985 = vperm.xlu0 %9984, %v9474
        %v9986 = vpop.permute.xlu0 %9985
        %9987 = vset.pattern.permute.xlu0 0
        %9988 = vperm.xlu0 %9987, %v9476
        %v9989 = vpop.permute.xlu0 %9988
        %9990 = vset.pattern.permute.xlu0 0
        %9991 = vperm.xlu0 %9990, %v9478
        %v9992 = vpop.permute.xlu0 %9991
        %v9993 = vlaneseq
        %v9994 = vshrl.u32 %v9993, 7
        %v9995 = vsub.s32 %v8366, %v9994
        %v9996 = vrot.slane %v9611, %v9995
        %v9997 = vlaneseq
        %v9998 = vshrl.u32 %v9997, 7
        %v9999 = vsub.s32 %v8371, %v9998
        %v10000 = vrot.slane %v9614, %v9999
        %v10001 = vsel %vm8376, %v10000, %v9996
        %v10002 = vlaneseq
        %v10003 = vshrl.u32 %v10002, 7
        %v10004 = vsub.s32 %v8378, %v10003
        %v10005 = vrot.slane %v9617, %v10004
        %v10006 = vsel %vm8383, %v10005, %v10001
        %v10007 = vlaneseq
        %v10008 = vshrl.u32 %v10007, 7
        %v10009 = vsub.s32 %v8385, %v10008
        %v10010 = vrot.slane %v9620, %v10009
        %v10011 = vsel %vm8390, %v10010, %v10006
        %v10012 = vlaneseq
        %v10013 = vshrl.u32 %v10012, 7
        %v10014 = vsub.s32 %v8392, %v10013
        %v10015 = vrot.slane %v9623, %v10014
        %v10016 = vsel %vm8397, %v10015, %v10011
        %v10017 = vlaneseq
        %v10018 = vshrl.u32 %v10017, 7
        %v10019 = vsub.s32 %v8399, %v10018
        %v10020 = vrot.slane %v9626, %v10019
        %v10021 = vsel %vm8404, %v10020, %v10016
        %v10022 = vlaneseq
        %v10023 = vshrl.u32 %v10022, 7
        %v10024 = vsub.s32 %v8406, %v10023
        %v10025 = vrot.slane %v9629, %v10024
        %v10026 = vsel %vm8411, %v10025, %v10021
        %v10027 = vlaneseq
        %v10028 = vshrl.u32 %v10027, 7
        %v10029 = vsub.s32 %v8413, %v10028
        %v10030 = vrot.slane %v9632, %v10029
        %v10031 = vsel %vm8418, %v10030, %v10026
        %v10032 = vlaneseq
        %v10033 = vshrl.u32 %v10032, 7
        %v10034 = vsub.s32 %v8420, %v10033
        %v10035 = vrot.slane %v9635, %v10034
        %v10036 = vsel %vm8425, %v10035, %v10031
        %v10037 = vlaneseq
        %v10038 = vshrl.u32 %v10037, 7
        %v10039 = vsub.s32 %v8427, %v10038
        %v10040 = vrot.slane %v9638, %v10039
        %v10041 = vsel %vm8432, %v10040, %v10036
        %v10042 = vlaneseq
        %v10043 = vshrl.u32 %v10042, 7
        %v10044 = vsub.s32 %v8434, %v10043
        %v10045 = vrot.slane %v9641, %v10044
        %v10046 = vsel %vm8439, %v10045, %v10041
        %v10047 = vlaneseq
        %v10048 = vshrl.u32 %v10047, 7
        %v10049 = vsub.s32 %v8441, %v10048
        %v10050 = vrot.slane %v9644, %v10049
        %v10051 = vsel %vm8446, %v10050, %v10046
        %v10052 = vlaneseq
        %v10053 = vshrl.u32 %v10052, 7
        %v10054 = vsub.s32 %v8448, %v10053
        %v10055 = vrot.slane %v9647, %v10054
        %v10056 = vsel %vm8453, %v10055, %v10051
        %v10057 = vlaneseq
        %v10058 = vshrl.u32 %v10057, 7
        %v10059 = vsub.s32 %v8455, %v10058
        %v10060 = vrot.slane %v9650, %v10059
        %v10061 = vsel %vm8460, %v10060, %v10056
        %v10062 = vlaneseq
        %v10063 = vshrl.u32 %v10062, 7
        %v10064 = vsub.s32 %v8462, %v10063
        %v10065 = vrot.slane %v9653, %v10064
        %v10066 = vsel %vm8467, %v10065, %v10061
        %v10067 = vlaneseq
        %v10068 = vshrl.u32 %v10067, 7
        %v10069 = vsub.s32 %v8469, %v10068
        %v10070 = vrot.slane %v9656, %v10069
        %v10071 = vsel %vm8474, %v10070, %v10066
        %v10072 = vlaneseq
        %v10073 = vshrl.u32 %v10072, 7
        %v10074 = vsub.s32 %v8366, %v10073
        %v10075 = vrot.slane %v9659, %v10074
        %v10076 = vlaneseq
        %v10077 = vshrl.u32 %v10076, 7
        %v10078 = vsub.s32 %v8371, %v10077
        %v10079 = vrot.slane %v9662, %v10078
        %v10080 = vsel %vm8376, %v10079, %v10075
        %v10081 = vlaneseq
        %v10082 = vshrl.u32 %v10081, 7
        %v10083 = vsub.s32 %v8378, %v10082
        %v10084 = vrot.slane %v9665, %v10083
        %v10085 = vsel %vm8383, %v10084, %v10080
        %v10086 = vlaneseq
        %v10087 = vshrl.u32 %v10086, 7
        %v10088 = vsub.s32 %v8385, %v10087
        %v10089 = vrot.slane %v9668, %v10088
        %v10090 = vsel %vm8390, %v10089, %v10085
        %v10091 = vlaneseq
        %v10092 = vshrl.u32 %v10091, 7
        %v10093 = vsub.s32 %v8392, %v10092
        %v10094 = vrot.slane %v9671, %v10093
        %v10095 = vsel %vm8397, %v10094, %v10090
        %v10096 = vlaneseq
        %v10097 = vshrl.u32 %v10096, 7
        %v10098 = vsub.s32 %v8399, %v10097
        %v10099 = vrot.slane %v9674, %v10098
        %v10100 = vsel %vm8404, %v10099, %v10095
        %v10101 = vlaneseq
        %v10102 = vshrl.u32 %v10101, 7
        %v10103 = vsub.s32 %v8406, %v10102
        %v10104 = vrot.slane %v9677, %v10103
        %v10105 = vsel %vm8411, %v10104, %v10100
        %v10106 = vlaneseq
        %v10107 = vshrl.u32 %v10106, 7
        %v10108 = vsub.s32 %v8413, %v10107
        %v10109 = vrot.slane %v9680, %v10108
        %v10110 = vsel %vm8418, %v10109, %v10105
        %v10111 = vlaneseq
        %v10112 = vshrl.u32 %v10111, 7
        %v10113 = vsub.s32 %v8420, %v10112
        %v10114 = vrot.slane %v9683, %v10113
        %v10115 = vsel %vm8425, %v10114, %v10110
        %v10116 = vlaneseq
        %v10117 = vshrl.u32 %v10116, 7
        %v10118 = vsub.s32 %v8427, %v10117
        %v10119 = vrot.slane %v9686, %v10118
        %v10120 = vsel %vm8432, %v10119, %v10115
        %v10121 = vlaneseq
        %v10122 = vshrl.u32 %v10121, 7
        %v10123 = vsub.s32 %v8434, %v10122
        %v10124 = vrot.slane %v9689, %v10123
        %v10125 = vsel %vm8439, %v10124, %v10120
        %v10126 = vlaneseq
        %v10127 = vshrl.u32 %v10126, 7
        %v10128 = vsub.s32 %v8441, %v10127
        %v10129 = vrot.slane %v9692, %v10128
        %v10130 = vsel %vm8446, %v10129, %v10125
        %v10131 = vlaneseq
        %v10132 = vshrl.u32 %v10131, 7
        %v10133 = vsub.s32 %v8448, %v10132
        %v10134 = vrot.slane %v9695, %v10133
        %v10135 = vsel %vm8453, %v10134, %v10130
        %v10136 = vlaneseq
        %v10137 = vshrl.u32 %v10136, 7
        %v10138 = vsub.s32 %v8455, %v10137
        %v10139 = vrot.slane %v9698, %v10138
        %v10140 = vsel %vm8460, %v10139, %v10135
        %v10141 = vlaneseq
        %v10142 = vshrl.u32 %v10141, 7
        %v10143 = vsub.s32 %v8462, %v10142
        %v10144 = vrot.slane %v9701, %v10143
        %v10145 = vsel %vm8467, %v10144, %v10140
        %v10146 = vlaneseq
        %v10147 = vshrl.u32 %v10146, 7
        %v10148 = vsub.s32 %v8469, %v10147
        %v10149 = vrot.slane %v9704, %v10148
        %v10150 = vsel %vm8474, %v10149, %v10145
        %v10151 = vlaneseq
        %v10152 = vshrl.u32 %v10151, 7
        %v10153 = vsub.s32 %v8366, %v10152
        %v10154 = vrot.slane %v9707, %v10153
        %v10155 = vlaneseq
        %v10156 = vshrl.u32 %v10155, 7
        %v10157 = vsub.s32 %v8371, %v10156
        %v10158 = vrot.slane %v9710, %v10157
        %v10159 = vsel %vm8376, %v10158, %v10154
        %v10160 = vlaneseq
        %v10161 = vshrl.u32 %v10160, 7
        %v10162 = vsub.s32 %v8378, %v10161
        %v10163 = vrot.slane %v9713, %v10162
        %v10164 = vsel %vm8383, %v10163, %v10159
        %v10165 = vlaneseq
        %v10166 = vshrl.u32 %v10165, 7
        %v10167 = vsub.s32 %v8385, %v10166
        %v10168 = vrot.slane %v9716, %v10167
        %v10169 = vsel %vm8390, %v10168, %v10164
        %v10170 = vlaneseq
        %v10171 = vshrl.u32 %v10170, 7
        %v10172 = vsub.s32 %v8392, %v10171
        %v10173 = vrot.slane %v9719, %v10172
        %v10174 = vsel %vm8397, %v10173, %v10169
        %v10175 = vlaneseq
        %v10176 = vshrl.u32 %v10175, 7
        %v10177 = vsub.s32 %v8399, %v10176
        %v10178 = vrot.slane %v9722, %v10177
        %v10179 = vsel %vm8404, %v10178, %v10174
        %v10180 = vlaneseq
        %v10181 = vshrl.u32 %v10180, 7
        %v10182 = vsub.s32 %v8406, %v10181
        %v10183 = vrot.slane %v9725, %v10182
        %v10184 = vsel %vm8411, %v10183, %v10179
        %v10185 = vlaneseq
        %v10186 = vshrl.u32 %v10185, 7
        %v10187 = vsub.s32 %v8413, %v10186
        %v10188 = vrot.slane %v9728, %v10187
        %v10189 = vsel %vm8418, %v10188, %v10184
        %v10190 = vlaneseq
        %v10191 = vshrl.u32 %v10190, 7
        %v10192 = vsub.s32 %v8420, %v10191
        %v10193 = vrot.slane %v9731, %v10192
        %v10194 = vsel %vm8425, %v10193, %v10189
        %v10195 = vlaneseq
        %v10196 = vshrl.u32 %v10195, 7
        %v10197 = vsub.s32 %v8427, %v10196
        %v10198 = vrot.slane %v9734, %v10197
        %v10199 = vsel %vm8432, %v10198, %v10194
        %v10200 = vlaneseq
        %v10201 = vshrl.u32 %v10200, 7
        %v10202 = vsub.s32 %v8434, %v10201
        %v10203 = vrot.slane %v9737, %v10202
        %v10204 = vsel %vm8439, %v10203, %v10199
        %v10205 = vlaneseq
        %v10206 = vshrl.u32 %v10205, 7
        %v10207 = vsub.s32 %v8441, %v10206
        %v10208 = vrot.slane %v9740, %v10207
        %v10209 = vsel %vm8446, %v10208, %v10204
        %v10210 = vlaneseq
        %v10211 = vshrl.u32 %v10210, 7
        %v10212 = vsub.s32 %v8448, %v10211
        %v10213 = vrot.slane %v9743, %v10212
        %v10214 = vsel %vm8453, %v10213, %v10209
        %v10215 = vlaneseq
        %v10216 = vshrl.u32 %v10215, 7
        %v10217 = vsub.s32 %v8455, %v10216
        %v10218 = vrot.slane %v9746, %v10217
        %v10219 = vsel %vm8460, %v10218, %v10214
        %v10220 = vlaneseq
        %v10221 = vshrl.u32 %v10220, 7
        %v10222 = vsub.s32 %v8462, %v10221
        %v10223 = vrot.slane %v9749, %v10222
        %v10224 = vsel %vm8467, %v10223, %v10219
        %v10225 = vlaneseq
        %v10226 = vshrl.u32 %v10225, 7
        %v10227 = vsub.s32 %v8469, %v10226
        %v10228 = vrot.slane %v9752, %v10227
        %v10229 = vsel %vm8474, %v10228, %v10224
        %v10230 = vlaneseq
        %v10231 = vshrl.u32 %v10230, 7
        %v10232 = vsub.s32 %v8366, %v10231
        %v10233 = vrot.slane %v9755, %v10232
        %v10234 = vlaneseq
        %v10235 = vshrl.u32 %v10234, 7
        %v10236 = vsub.s32 %v8371, %v10235
        %v10237 = vrot.slane %v9758, %v10236
        %v10238 = vsel %vm8376, %v10237, %v10233
        %v10239 = vlaneseq
        %v10240 = vshrl.u32 %v10239, 7
        %v10241 = vsub.s32 %v8378, %v10240
        %v10242 = vrot.slane %v9761, %v10241
        %v10243 = vsel %vm8383, %v10242, %v10238
        %v10244 = vlaneseq
        %v10245 = vshrl.u32 %v10244, 7
        %v10246 = vsub.s32 %v8385, %v10245
        %v10247 = vrot.slane %v9764, %v10246
        %v10248 = vsel %vm8390, %v10247, %v10243
        %v10249 = vlaneseq
        %v10250 = vshrl.u32 %v10249, 7
        %v10251 = vsub.s32 %v8392, %v10250
        %v10252 = vrot.slane %v9767, %v10251
        %v10253 = vsel %vm8397, %v10252, %v10248
        %v10254 = vlaneseq
        %v10255 = vshrl.u32 %v10254, 7
        %v10256 = vsub.s32 %v8399, %v10255
        %v10257 = vrot.slane %v9770, %v10256
        %v10258 = vsel %vm8404, %v10257, %v10253
        %v10259 = vlaneseq
        %v10260 = vshrl.u32 %v10259, 7
        %v10261 = vsub.s32 %v8406, %v10260
        %v10262 = vrot.slane %v9773, %v10261
        %v10263 = vsel %vm8411, %v10262, %v10258
        %v10264 = vlaneseq
        %v10265 = vshrl.u32 %v10264, 7
        %v10266 = vsub.s32 %v8413, %v10265
        %v10267 = vrot.slane %v9776, %v10266
        %v10268 = vsel %vm8418, %v10267, %v10263
        %v10269 = vlaneseq
        %v10270 = vshrl.u32 %v10269, 7
        %v10271 = vsub.s32 %v8420, %v10270
        %v10272 = vrot.slane %v9779, %v10271
        %v10273 = vsel %vm8425, %v10272, %v10268
        %v10274 = vlaneseq
        %v10275 = vshrl.u32 %v10274, 7
        %v10276 = vsub.s32 %v8427, %v10275
        %v10277 = vrot.slane %v9782, %v10276
        %v10278 = vsel %vm8432, %v10277, %v10273
        %v10279 = vlaneseq
        %v10280 = vshrl.u32 %v10279, 7
        %v10281 = vsub.s32 %v8434, %v10280
        %v10282 = vrot.slane %v9785, %v10281
        %v10283 = vsel %vm8439, %v10282, %v10278
        %v10284 = vlaneseq
        %v10285 = vshrl.u32 %v10284, 7
        %v10286 = vsub.s32 %v8441, %v10285
        %v10287 = vrot.slane %v9788, %v10286
        %v10288 = vsel %vm8446, %v10287, %v10283
        %v10289 = vlaneseq
        %v10290 = vshrl.u32 %v10289, 7
        %v10291 = vsub.s32 %v8448, %v10290
        %v10292 = vrot.slane %v9791, %v10291
        %v10293 = vsel %vm8453, %v10292, %v10288
        %v10294 = vlaneseq
        %v10295 = vshrl.u32 %v10294, 7
        %v10296 = vsub.s32 %v8455, %v10295
        %v10297 = vrot.slane %v9794, %v10296
        %v10298 = vsel %vm8460, %v10297, %v10293
        %v10299 = vlaneseq
        %v10300 = vshrl.u32 %v10299, 7
        %v10301 = vsub.s32 %v8462, %v10300
        %v10302 = vrot.slane %v9797, %v10301
        %v10303 = vsel %vm8467, %v10302, %v10298
        %v10304 = vlaneseq
        %v10305 = vshrl.u32 %v10304, 7
        %v10306 = vsub.s32 %v8469, %v10305
        %v10307 = vrot.slane %v9800, %v10306
        %v10308 = vsel %vm8474, %v10307, %v10303
        %v10309 = vlaneseq
        %v10310 = vshrl.u32 %v10309, 7
        %v10311 = vsub.s32 %v8366, %v10310
        %v10312 = vrot.slane %v9803, %v10311
        %v10313 = vlaneseq
        %v10314 = vshrl.u32 %v10313, 7
        %v10315 = vsub.s32 %v8371, %v10314
        %v10316 = vrot.slane %v9806, %v10315
        %v10317 = vsel %vm8376, %v10316, %v10312
        %v10318 = vlaneseq
        %v10319 = vshrl.u32 %v10318, 7
        %v10320 = vsub.s32 %v8378, %v10319
        %v10321 = vrot.slane %v9809, %v10320
        %v10322 = vsel %vm8383, %v10321, %v10317
        %v10323 = vlaneseq
        %v10324 = vshrl.u32 %v10323, 7
        %v10325 = vsub.s32 %v8385, %v10324
        %v10326 = vrot.slane %v9812, %v10325
        %v10327 = vsel %vm8390, %v10326, %v10322
        %v10328 = vlaneseq
        %v10329 = vshrl.u32 %v10328, 7
        %v10330 = vsub.s32 %v8392, %v10329
        %v10331 = vrot.slane %v9815, %v10330
        %v10332 = vsel %vm8397, %v10331, %v10327
        %v10333 = vlaneseq
        %v10334 = vshrl.u32 %v10333, 7
        %v10335 = vsub.s32 %v8399, %v10334
        %v10336 = vrot.slane %v9818, %v10335
        %v10337 = vsel %vm8404, %v10336, %v10332
        %v10338 = vlaneseq
        %v10339 = vshrl.u32 %v10338, 7
        %v10340 = vsub.s32 %v8406, %v10339
        %v10341 = vrot.slane %v9821, %v10340
        %v10342 = vsel %vm8411, %v10341, %v10337
        %v10343 = vlaneseq
        %v10344 = vshrl.u32 %v10343, 7
        %v10345 = vsub.s32 %v8413, %v10344
        %v10346 = vrot.slane %v9824, %v10345
        %v10347 = vsel %vm8418, %v10346, %v10342
        %v10348 = vlaneseq
        %v10349 = vshrl.u32 %v10348, 7
        %v10350 = vsub.s32 %v8420, %v10349
        %v10351 = vrot.slane %v9827, %v10350
        %v10352 = vsel %vm8425, %v10351, %v10347
        %v10353 = vlaneseq
        %v10354 = vshrl.u32 %v10353, 7
        %v10355 = vsub.s32 %v8427, %v10354
        %v10356 = vrot.slane %v9830, %v10355
        %v10357 = vsel %vm8432, %v10356, %v10352
        %v10358 = vlaneseq
        %v10359 = vshrl.u32 %v10358, 7
        %v10360 = vsub.s32 %v8434, %v10359
        %v10361 = vrot.slane %v9833, %v10360
        %v10362 = vsel %vm8439, %v10361, %v10357
        %v10363 = vlaneseq
        %v10364 = vshrl.u32 %v10363, 7
        %v10365 = vsub.s32 %v8441, %v10364
        %v10366 = vrot.slane %v9836, %v10365
        %v10367 = vsel %vm8446, %v10366, %v10362
        %v10368 = vlaneseq
        %v10369 = vshrl.u32 %v10368, 7
        %v10370 = vsub.s32 %v8448, %v10369
        %v10371 = vrot.slane %v9839, %v10370
        %v10372 = vsel %vm8453, %v10371, %v10367
        %v10373 = vlaneseq
        %v10374 = vshrl.u32 %v10373, 7
        %v10375 = vsub.s32 %v8455, %v10374
        %v10376 = vrot.slane %v9842, %v10375
        %v10377 = vsel %vm8460, %v10376, %v10372
        %v10378 = vlaneseq
        %v10379 = vshrl.u32 %v10378, 7
        %v10380 = vsub.s32 %v8462, %v10379
        %v10381 = vrot.slane %v9845, %v10380
        %v10382 = vsel %vm8467, %v10381, %v10377
        %v10383 = vlaneseq
        %v10384 = vshrl.u32 %v10383, 7
        %v10385 = vsub.s32 %v8469, %v10384
        %v10386 = vrot.slane %v9848, %v10385
        %v10387 = vsel %vm8474, %v10386, %v10382
        %v10388 = vlaneseq
        %v10389 = vshrl.u32 %v10388, 7
        %v10390 = vsub.s32 %v8366, %v10389
        %v10391 = vrot.slane %v9851, %v10390
        %v10392 = vlaneseq
        %v10393 = vshrl.u32 %v10392, 7
        %v10394 = vsub.s32 %v8371, %v10393
        %v10395 = vrot.slane %v9854, %v10394
        %v10396 = vsel %vm8376, %v10395, %v10391
        %v10397 = vlaneseq
        %v10398 = vshrl.u32 %v10397, 7
        %v10399 = vsub.s32 %v8378, %v10398
        %v10400 = vrot.slane %v9857, %v10399
        %v10401 = vsel %vm8383, %v10400, %v10396
        %v10402 = vlaneseq
        %v10403 = vshrl.u32 %v10402, 7
        %v10404 = vsub.s32 %v8385, %v10403
        %v10405 = vrot.slane %v9860, %v10404
        %v10406 = vsel %vm8390, %v10405, %v10401
        %v10407 = vlaneseq
        %v10408 = vshrl.u32 %v10407, 7
        %v10409 = vsub.s32 %v8392, %v10408
        %v10410 = vrot.slane %v9863, %v10409
        %v10411 = vsel %vm8397, %v10410, %v10406
        %v10412 = vlaneseq
        %v10413 = vshrl.u32 %v10412, 7
        %v10414 = vsub.s32 %v8399, %v10413
        %v10415 = vrot.slane %v9866, %v10414
        %v10416 = vsel %vm8404, %v10415, %v10411
        %v10417 = vlaneseq
        %v10418 = vshrl.u32 %v10417, 7
        %v10419 = vsub.s32 %v8406, %v10418
        %v10420 = vrot.slane %v9869, %v10419
        %v10421 = vsel %vm8411, %v10420, %v10416
        %v10422 = vlaneseq
        %v10423 = vshrl.u32 %v10422, 7
        %v10424 = vsub.s32 %v8413, %v10423
        %v10425 = vrot.slane %v9872, %v10424
        %v10426 = vsel %vm8418, %v10425, %v10421
        %v10427 = vlaneseq
        %v10428 = vshrl.u32 %v10427, 7
        %v10429 = vsub.s32 %v8420, %v10428
        %v10430 = vrot.slane %v9875, %v10429
        %v10431 = vsel %vm8425, %v10430, %v10426
        %v10432 = vlaneseq
        %v10433 = vshrl.u32 %v10432, 7
        %v10434 = vsub.s32 %v8427, %v10433
        %v10435 = vrot.slane %v9878, %v10434
        %v10436 = vsel %vm8432, %v10435, %v10431
        %v10437 = vlaneseq
        %v10438 = vshrl.u32 %v10437, 7
        %v10439 = vsub.s32 %v8434, %v10438
        %v10440 = vrot.slane %v9881, %v10439
        %v10441 = vsel %vm8439, %v10440, %v10436
        %v10442 = vlaneseq
        %v10443 = vshrl.u32 %v10442, 7
        %v10444 = vsub.s32 %v8441, %v10443
        %v10445 = vrot.slane %v9884, %v10444
        %v10446 = vsel %vm8446, %v10445, %v10441
        %v10447 = vlaneseq
        %v10448 = vshrl.u32 %v10447, 7
        %v10449 = vsub.s32 %v8448, %v10448
        %v10450 = vrot.slane %v9887, %v10449
        %v10451 = vsel %vm8453, %v10450, %v10446
        %v10452 = vlaneseq
        %v10453 = vshrl.u32 %v10452, 7
        %v10454 = vsub.s32 %v8455, %v10453
        %v10455 = vrot.slane %v9890, %v10454
        %v10456 = vsel %vm8460, %v10455, %v10451
        %v10457 = vlaneseq
        %v10458 = vshrl.u32 %v10457, 7
        %v10459 = vsub.s32 %v8462, %v10458
        %v10460 = vrot.slane %v9893, %v10459
        %v10461 = vsel %vm8467, %v10460, %v10456
        %v10462 = vlaneseq
        %v10463 = vshrl.u32 %v10462, 7
        %v10464 = vsub.s32 %v8469, %v10463
        %v10465 = vrot.slane %v9896, %v10464
        %v10466 = vsel %vm8474, %v10465, %v10461
        %v10467 = vlaneseq
        %v10468 = vshrl.u32 %v10467, 7
        %v10469 = vsub.s32 %v8366, %v10468
        %v10470 = vrot.slane %v9899, %v10469
        %v10471 = vlaneseq
        %v10472 = vshrl.u32 %v10471, 7
        %v10473 = vsub.s32 %v8371, %v10472
        %v10474 = vrot.slane %v9902, %v10473
        %v10475 = vsel %vm8376, %v10474, %v10470
        %v10476 = vlaneseq
        %v10477 = vshrl.u32 %v10476, 7
        %v10478 = vsub.s32 %v8378, %v10477
        %v10479 = vrot.slane %v9905, %v10478
        %v10480 = vsel %vm8383, %v10479, %v10475
        %v10481 = vlaneseq
        %v10482 = vshrl.u32 %v10481, 7
        %v10483 = vsub.s32 %v8385, %v10482
        %v10484 = vrot.slane %v9908, %v10483
        %v10485 = vsel %vm8390, %v10484, %v10480
        %v10486 = vlaneseq
        %v10487 = vshrl.u32 %v10486, 7
        %v10488 = vsub.s32 %v8392, %v10487
        %v10489 = vrot.slane %v9911, %v10488
        %v10490 = vsel %vm8397, %v10489, %v10485
        %v10491 = vlaneseq
        %v10492 = vshrl.u32 %v10491, 7
        %v10493 = vsub.s32 %v8399, %v10492
        %v10494 = vrot.slane %v9914, %v10493
        %v10495 = vsel %vm8404, %v10494, %v10490
        %v10496 = vlaneseq
        %v10497 = vshrl.u32 %v10496, 7
        %v10498 = vsub.s32 %v8406, %v10497
        %v10499 = vrot.slane %v9917, %v10498
        %v10500 = vsel %vm8411, %v10499, %v10495
        %v10501 = vlaneseq
        %v10502 = vshrl.u32 %v10501, 7
        %v10503 = vsub.s32 %v8413, %v10502
        %v10504 = vrot.slane %v9920, %v10503
        %v10505 = vsel %vm8418, %v10504, %v10500
        %v10506 = vlaneseq
        %v10507 = vshrl.u32 %v10506, 7
        %v10508 = vsub.s32 %v8420, %v10507
        %v10509 = vrot.slane %v9923, %v10508
        %v10510 = vsel %vm8425, %v10509, %v10505
        %v10511 = vlaneseq
        %v10512 = vshrl.u32 %v10511, 7
        %v10513 = vsub.s32 %v8427, %v10512
        %v10514 = vrot.slane %v9926, %v10513
        %v10515 = vsel %vm8432, %v10514, %v10510
        %v10516 = vlaneseq
        %v10517 = vshrl.u32 %v10516, 7
        %v10518 = vsub.s32 %v8434, %v10517
        %v10519 = vrot.slane %v9929, %v10518
        %v10520 = vsel %vm8439, %v10519, %v10515
        %v10521 = vlaneseq
        %v10522 = vshrl.u32 %v10521, 7
        %v10523 = vsub.s32 %v8441, %v10522
        %v10524 = vrot.slane %v9932, %v10523
        %v10525 = vsel %vm8446, %v10524, %v10520
        %v10526 = vlaneseq
        %v10527 = vshrl.u32 %v10526, 7
        %v10528 = vsub.s32 %v8448, %v10527
        %v10529 = vrot.slane %v9935, %v10528
        %v10530 = vsel %vm8453, %v10529, %v10525
        %v10531 = vlaneseq
        %v10532 = vshrl.u32 %v10531, 7
        %v10533 = vsub.s32 %v8455, %v10532
        %v10534 = vrot.slane %v9938, %v10533
        %v10535 = vsel %vm8460, %v10534, %v10530
        %v10536 = vlaneseq
        %v10537 = vshrl.u32 %v10536, 7
        %v10538 = vsub.s32 %v8462, %v10537
        %v10539 = vrot.slane %v9941, %v10538
        %v10540 = vsel %vm8467, %v10539, %v10535
        %v10541 = vlaneseq
        %v10542 = vshrl.u32 %v10541, 7
        %v10543 = vsub.s32 %v8469, %v10542
        %v10544 = vrot.slane %v9944, %v10543
        %v10545 = vsel %vm8474, %v10544, %v10540
        %v10546 = vlaneseq
        %v10547 = vshrl.u32 %v10546, 7
        %v10548 = vsub.s32 %v8366, %v10547
        %v10549 = vrot.slane %v9947, %v10548
        %v10550 = vlaneseq
        %v10551 = vshrl.u32 %v10550, 7
        %v10552 = vsub.s32 %v8371, %v10551
        %v10553 = vrot.slane %v9950, %v10552
        %v10554 = vsel %vm8376, %v10553, %v10549
        %v10555 = vlaneseq
        %v10556 = vshrl.u32 %v10555, 7
        %v10557 = vsub.s32 %v8378, %v10556
        %v10558 = vrot.slane %v9953, %v10557
        %v10559 = vsel %vm8383, %v10558, %v10554
        %v10560 = vlaneseq
        %v10561 = vshrl.u32 %v10560, 7
        %v10562 = vsub.s32 %v8385, %v10561
        %v10563 = vrot.slane %v9956, %v10562
        %v10564 = vsel %vm8390, %v10563, %v10559
        %v10565 = vlaneseq
        %v10566 = vshrl.u32 %v10565, 7
        %v10567 = vsub.s32 %v8392, %v10566
        %v10568 = vrot.slane %v9959, %v10567
        %v10569 = vsel %vm8397, %v10568, %v10564
        %v10570 = vlaneseq
        %v10571 = vshrl.u32 %v10570, 7
        %v10572 = vsub.s32 %v8399, %v10571
        %v10573 = vrot.slane %v9962, %v10572
        %v10574 = vsel %vm8404, %v10573, %v10569
        %v10575 = vlaneseq
        %v10576 = vshrl.u32 %v10575, 7
        %v10577 = vsub.s32 %v8406, %v10576
        %v10578 = vrot.slane %v9965, %v10577
        %v10579 = vsel %vm8411, %v10578, %v10574
        %v10580 = vlaneseq
        %v10581 = vshrl.u32 %v10580, 7
        %v10582 = vsub.s32 %v8413, %v10581
        %v10583 = vrot.slane %v9968, %v10582
        %v10584 = vsel %vm8418, %v10583, %v10579
        %v10585 = vlaneseq
        %v10586 = vshrl.u32 %v10585, 7
        %v10587 = vsub.s32 %v8420, %v10586
        %v10588 = vrot.slane %v9971, %v10587
        %v10589 = vsel %vm8425, %v10588, %v10584
        %v10590 = vlaneseq
        %v10591 = vshrl.u32 %v10590, 7
        %v10592 = vsub.s32 %v8427, %v10591
        %v10593 = vrot.slane %v9974, %v10592
        %v10594 = vsel %vm8432, %v10593, %v10589
        %v10595 = vlaneseq
        %v10596 = vshrl.u32 %v10595, 7
        %v10597 = vsub.s32 %v8434, %v10596
        %v10598 = vrot.slane %v9977, %v10597
        %v10599 = vsel %vm8439, %v10598, %v10594
        %v10600 = vlaneseq
        %v10601 = vshrl.u32 %v10600, 7
        %v10602 = vsub.s32 %v8441, %v10601
        %v10603 = vrot.slane %v9980, %v10602
        %v10604 = vsel %vm8446, %v10603, %v10599
        %v10605 = vlaneseq
        %v10606 = vshrl.u32 %v10605, 7
        %v10607 = vsub.s32 %v8448, %v10606
        %v10608 = vrot.slane %v9983, %v10607
        %v10609 = vsel %vm8453, %v10608, %v10604
        %v10610 = vlaneseq
        %v10611 = vshrl.u32 %v10610, 7
        %v10612 = vsub.s32 %v8455, %v10611
        %v10613 = vrot.slane %v9986, %v10612
        %v10614 = vsel %vm8460, %v10613, %v10609
        %v10615 = vlaneseq
        %v10616 = vshrl.u32 %v10615, 7
        %v10617 = vsub.s32 %v8462, %v10616
        %v10618 = vrot.slane %v9989, %v10617
        %v10619 = vsel %vm8467, %v10618, %v10614
        %v10620 = vlaneseq
        %v10621 = vshrl.u32 %v10620, 7
        %v10622 = vsub.s32 %v8469, %v10621
        %v10623 = vrot.slane %v9992, %v10622
        %v10624 = vsel %vm8474, %v10623, %v10619
        %v10625 = vsel %vm9029, %v10150, %v10071
        %v10626 = vsel %vm9031, %v10229, %v10625
        %v10627 = vsel %vm9033, %v10308, %v10626
        %v10628 = vsel %vm9035, %v10387, %v10627
        %v10629 = vsel %vm9037, %v10466, %v10628
        %v10630 = vsel %vm9039, %v10545, %v10629
        %v10631 = vsel %vm9041, %v10624, %v10630
        %10633 = vadd.xlane.f32.xlu0 %v10631
        %v10634 = vpop.xlane.xlu0 %10633
        %v10635 = vadd.f32 %v9480, %v10634
        %vm10636 = vcmask 7168
        %10637 = vst.msk [vmem:[#allocation3] sm:$0xff] %vm10636, %v10635
        %v10638 = vld [vmem:[#allocation4] sm:$0xff]
        %10640 = vset.pattern.permute.xlu0 0
        %10641 = vperm.xlu0 %10640, %v9050
        %v10642 = vpop.permute.xlu0 %10641
        %v10644 = vmul.f32 %v10642, %v10638
        %v10773 = vmul.f32 %v9611, %v4844
        %v10774 = vmul.f32 %v9614, %v4845
        %v10775 = vmul.f32 %v9617, %v4846
        %v10776 = vmul.f32 %v9620, %v4847
        %v10777 = vmul.f32 %v9623, %v4848
        %v10778 = vmul.f32 %v9626, %v4849
        %v10779 = vmul.f32 %v9629, %v4850
        %v10780 = vmul.f32 %v9632, %v4851
        %v10781 = vmul.f32 %v9635, %v4852
        %v10782 = vmul.f32 %v9638, %v4853
        %v10783 = vmul.f32 %v9641, %v4854
        %v10784 = vmul.f32 %v9644, %v4855
        %v10785 = vmul.f32 %v9647, %v4856
        %v10786 = vmul.f32 %v9650, %v4857
        %v10787 = vmul.f32 %v9653, %v4858
        %v10788 = vmul.f32 %v9656, %v4859
        %v10789 = vmul.f32 %v9659, %v4860
        %v10790 = vmul.f32 %v9662, %v4861
        %v10791 = vmul.f32 %v9665, %v4862
        %v10792 = vmul.f32 %v9668, %v4863
        %v10793 = vmul.f32 %v9671, %v4864
        %v10794 = vmul.f32 %v9674, %v4865
        %v10795 = vmul.f32 %v9677, %v4866
        %v10796 = vmul.f32 %v9680, %v4867
        %v10797 = vmul.f32 %v9683, %v4868
        %v10798 = vmul.f32 %v9686, %v4869
        %v10799 = vmul.f32 %v9689, %v4870
        %v10800 = vmul.f32 %v9692, %v4871
        %v10801 = vmul.f32 %v9695, %v4872
        %v10802 = vmul.f32 %v9698, %v4873
        %v10803 = vmul.f32 %v9701, %v4874
        %v10804 = vmul.f32 %v9704, %v4875
        %v10805 = vmul.f32 %v9707, %v4876
        %v10806 = vmul.f32 %v9710, %v4877
        %v10807 = vmul.f32 %v9713, %v4878
        %v10808 = vmul.f32 %v9716, %v4879
        %v10809 = vmul.f32 %v9719, %v4880
        %v10810 = vmul.f32 %v9722, %v4881
        %v10811 = vmul.f32 %v9725, %v4882
        %v10812 = vmul.f32 %v9728, %v4883
        %v10813 = vmul.f32 %v9731, %v4884
        %v10814 = vmul.f32 %v9734, %v4885
        %v10815 = vmul.f32 %v9737, %v4886
        %v10816 = vmul.f32 %v9740, %v4887
        %v10817 = vmul.f32 %v9743, %v4888
        %v10818 = vmul.f32 %v9746, %v4889
        %v10819 = vmul.f32 %v9749, %v4890
        %v10820 = vmul.f32 %v9752, %v4891
        %v10821 = vmul.f32 %v9755, %v4892
        %v10822 = vmul.f32 %v9758, %v4893
        %v10823 = vmul.f32 %v9761, %v4894
        %v10824 = vmul.f32 %v9764, %v4895
        %v10825 = vmul.f32 %v9767, %v4896
        %v10826 = vmul.f32 %v9770, %v4897
        %v10827 = vmul.f32 %v9773, %v4898
        %v10828 = vmul.f32 %v9776, %v4899
        %v10829 = vmul.f32 %v9779, %v4900
        %v10830 = vmul.f32 %v9782, %v4901
        %v10831 = vmul.f32 %v9785, %v4902
        %v10832 = vmul.f32 %v9788, %v4903
        %v10833 = vmul.f32 %v9791, %v4904
        %v10834 = vmul.f32 %v9794, %v4905
        %v10835 = vmul.f32 %v9797, %v4906
        %v10836 = vmul.f32 %v9800, %v4907
        %v10837 = vmul.f32 %v9803, %v4908
        %v10838 = vmul.f32 %v9806, %v4909
        %v10839 = vmul.f32 %v9809, %v4910
        %v10840 = vmul.f32 %v9812, %v4911
        %v10841 = vmul.f32 %v9815, %v4912
        %v10842 = vmul.f32 %v9818, %v4913
        %v10843 = vmul.f32 %v9821, %v4914
        %v10844 = vmul.f32 %v9824, %v4915
        %v10845 = vmul.f32 %v9827, %v4916
        %v10846 = vmul.f32 %v9830, %v4917
        %v10847 = vmul.f32 %v9833, %v4918
        %v10848 = vmul.f32 %v9836, %v4919
        %v10849 = vmul.f32 %v9839, %v4920
        %v10850 = vmul.f32 %v9842, %v4921
        %v10851 = vmul.f32 %v9845, %v4922
        %v10852 = vmul.f32 %v9848, %v4923
        %v10853 = vmul.f32 %v9851, %v4924
        %v10854 = vmul.f32 %v9854, %v4925
        %v10855 = vmul.f32 %v9857, %v4926
        %v10856 = vmul.f32 %v9860, %v4927
        %v10857 = vmul.f32 %v9863, %v4928
        %v10858 = vmul.f32 %v9866, %v4929
        %v10859 = vmul.f32 %v9869, %v4930
        %v10860 = vmul.f32 %v9872, %v4931
        %v10861 = vmul.f32 %v9875, %v4932
        %v10862 = vmul.f32 %v9878, %v4933
        %v10863 = vmul.f32 %v9881, %v4934
        %v10864 = vmul.f32 %v9884, %v4935
        %v10865 = vmul.f32 %v9887, %v4936
        %v10866 = vmul.f32 %v9890, %v4937
        %v10867 = vmul.f32 %v9893, %v4938
        %v10868 = vmul.f32 %v9896, %v4939
        %v10869 = vmul.f32 %v9899, %v4940
        %v10870 = vmul.f32 %v9902, %v4941
        %v10871 = vmul.f32 %v9905, %v4942
        %v10872 = vmul.f32 %v9908, %v4943
        %v10873 = vmul.f32 %v9911, %v4944
        %v10874 = vmul.f32 %v9914, %v4945
        %v10875 = vmul.f32 %v9917, %v4946
        %v10876 = vmul.f32 %v9920, %v4947
        %v10877 = vmul.f32 %v9923, %v4948
        %v10878 = vmul.f32 %v9926, %v4949
        %v10879 = vmul.f32 %v9929, %v4950
        %v10880 = vmul.f32 %v9932, %v4951
        %v10881 = vmul.f32 %v9935, %v4952
        %v10882 = vmul.f32 %v9938, %v4953
        %v10883 = vmul.f32 %v9941, %v4954
        %v10884 = vmul.f32 %v9944, %v4955
        %v10885 = vmul.f32 %v9947, %v4956
        %v10886 = vmul.f32 %v9950, %v4957
        %v10887 = vmul.f32 %v9953, %v4958
        %v10888 = vmul.f32 %v9956, %v4959
        %v10889 = vmul.f32 %v9959, %v4960
        %v10890 = vmul.f32 %v9962, %v4961
        %v10891 = vmul.f32 %v9965, %v4962
        %v10892 = vmul.f32 %v9968, %v4963
        %v10893 = vmul.f32 %v9971, %v4964
        %v10894 = vmul.f32 %v9974, %v4965
        %v10895 = vmul.f32 %v9977, %v4966
        %v10896 = vmul.f32 %v9980, %v4967
        %v10897 = vmul.f32 %v9983, %v4968
        %v10898 = vmul.f32 %v9986, %v4969
        %v10899 = vmul.f32 %v9989, %v4970
        %v10900 = vmul.f32 %v9992, %v4971
        %v10901 = vadd.f32 %v10773, %v10774
        %v10902 = vadd.f32 %v10901, %v10775
        %v10903 = vadd.f32 %v10902, %v10776
        %v10904 = vadd.f32 %v10903, %v10777
        %v10905 = vadd.f32 %v10904, %v10778
        %v10906 = vadd.f32 %v10905, %v10779
        %v10907 = vadd.f32 %v10906, %v10780
        %v10908 = vadd.f32 %v10907, %v10781
        %v10909 = vadd.f32 %v10908, %v10782
        %v10910 = vadd.f32 %v10909, %v10783
        %v10911 = vadd.f32 %v10910, %v10784
        %v10912 = vadd.f32 %v10911, %v10785
        %v10913 = vadd.f32 %v10912, %v10786
        %v10914 = vadd.f32 %v10913, %v10787
        %v10915 = vadd.f32 %v10914, %v10788
        %v10916 = vrot.slane %v10915, 4
        %v10917 = vadd.f32 %v10915, %v10916
        %v10918 = vrot.slane %v10917, 2
        %v10919 = vadd.f32 %v10917, %v10918
        %v10920 = vrot.slane %v10919, 1
        %v10921 = vadd.f32 %v10919, %v10920
        %v10922 = vadd.f32 %v10789, %v10790
        %v10923 = vadd.f32 %v10922, %v10791
        %v10924 = vadd.f32 %v10923, %v10792
        %v10925 = vadd.f32 %v10924, %v10793
        %v10926 = vadd.f32 %v10925, %v10794
        %v10927 = vadd.f32 %v10926, %v10795
        %v10928 = vadd.f32 %v10927, %v10796
        %v10929 = vadd.f32 %v10928, %v10797
        %v10930 = vadd.f32 %v10929, %v10798
        %v10931 = vadd.f32 %v10930, %v10799
        %v10932 = vadd.f32 %v10931, %v10800
        %v10933 = vadd.f32 %v10932, %v10801
        %v10934 = vadd.f32 %v10933, %v10802
        %v10935 = vadd.f32 %v10934, %v10803
        %v10936 = vadd.f32 %v10935, %v10804
        %v10937 = vrot.slane %v10936, 4
        %v10938 = vadd.f32 %v10936, %v10937
        %v10939 = vrot.slane %v10938, 2
        %v10940 = vadd.f32 %v10938, %v10939
        %v10941 = vrot.slane %v10940, 1
        %v10942 = vadd.f32 %v10940, %v10941
        %v10943 = vadd.f32 %v10805, %v10806
        %v10944 = vadd.f32 %v10943, %v10807
        %v10945 = vadd.f32 %v10944, %v10808
        %v10946 = vadd.f32 %v10945, %v10809
        %v10947 = vadd.f32 %v10946, %v10810
        %v10948 = vadd.f32 %v10947, %v10811
        %v10949 = vadd.f32 %v10948, %v10812
        %v10950 = vadd.f32 %v10949, %v10813
        %v10951 = vadd.f32 %v10950, %v10814
        %v10952 = vadd.f32 %v10951, %v10815
        %v10953 = vadd.f32 %v10952, %v10816
        %v10954 = vadd.f32 %v10953, %v10817
        %v10955 = vadd.f32 %v10954, %v10818
        %v10956 = vadd.f32 %v10955, %v10819
        %v10957 = vadd.f32 %v10956, %v10820
        %v10958 = vrot.slane %v10957, 4
        %v10959 = vadd.f32 %v10957, %v10958
        %v10960 = vrot.slane %v10959, 2
        %v10961 = vadd.f32 %v10959, %v10960
        %v10962 = vrot.slane %v10961, 1
        %v10963 = vadd.f32 %v10961, %v10962
        %v10964 = vadd.f32 %v10821, %v10822
        %v10965 = vadd.f32 %v10964, %v10823
        %v10966 = vadd.f32 %v10965, %v10824
        %v10967 = vadd.f32 %v10966, %v10825
        %v10968 = vadd.f32 %v10967, %v10826
        %v10969 = vadd.f32 %v10968, %v10827
        %v10970 = vadd.f32 %v10969, %v10828
        %v10971 = vadd.f32 %v10970, %v10829
        %v10972 = vadd.f32 %v10971, %v10830
        %v10973 = vadd.f32 %v10972, %v10831
        %v10974 = vadd.f32 %v10973, %v10832
        %v10975 = vadd.f32 %v10974, %v10833
        %v10976 = vadd.f32 %v10975, %v10834
        %v10977 = vadd.f32 %v10976, %v10835
        %v10978 = vadd.f32 %v10977, %v10836
        %v10979 = vrot.slane %v10978, 4
        %v10980 = vadd.f32 %v10978, %v10979
        %v10981 = vrot.slane %v10980, 2
        %v10982 = vadd.f32 %v10980, %v10981
        %v10983 = vrot.slane %v10982, 1
        %v10984 = vadd.f32 %v10982, %v10983
        %v10985 = vadd.f32 %v10837, %v10838
        %v10986 = vadd.f32 %v10985, %v10839
        %v10987 = vadd.f32 %v10986, %v10840
        %v10988 = vadd.f32 %v10987, %v10841
        %v10989 = vadd.f32 %v10988, %v10842
        %v10990 = vadd.f32 %v10989, %v10843
        %v10991 = vadd.f32 %v10990, %v10844
        %v10992 = vadd.f32 %v10991, %v10845
        %v10993 = vadd.f32 %v10992, %v10846
        %v10994 = vadd.f32 %v10993, %v10847
        %v10995 = vadd.f32 %v10994, %v10848
        %v10996 = vadd.f32 %v10995, %v10849
        %v10997 = vadd.f32 %v10996, %v10850
        %v10998 = vadd.f32 %v10997, %v10851
        %v10999 = vadd.f32 %v10998, %v10852
        %v11000 = vrot.slane %v10999, 4
        %v11001 = vadd.f32 %v10999, %v11000
        %v11002 = vrot.slane %v11001, 2
        %v11003 = vadd.f32 %v11001, %v11002
        %v11004 = vrot.slane %v11003, 1
        %v11005 = vadd.f32 %v11003, %v11004
        %v11006 = vadd.f32 %v10853, %v10854
        %v11007 = vadd.f32 %v11006, %v10855
        %v11008 = vadd.f32 %v11007, %v10856
        %v11009 = vadd.f32 %v11008, %v10857
        %v11010 = vadd.f32 %v11009, %v10858
        %v11011 = vadd.f32 %v11010, %v10859
        %v11012 = vadd.f32 %v11011, %v10860
        %v11013 = vadd.f32 %v11012, %v10861
        %v11014 = vadd.f32 %v11013, %v10862
        %v11015 = vadd.f32 %v11014, %v10863
        %v11016 = vadd.f32 %v11015, %v10864
        %v11017 = vadd.f32 %v11016, %v10865
        %v11018 = vadd.f32 %v11017, %v10866
        %v11019 = vadd.f32 %v11018, %v10867
        %v11020 = vadd.f32 %v11019, %v10868
        %v11021 = vrot.slane %v11020, 4
        %v11022 = vadd.f32 %v11020, %v11021
        %v11023 = vrot.slane %v11022, 2
        %v11024 = vadd.f32 %v11022, %v11023
        %v11025 = vrot.slane %v11024, 1
        %v11026 = vadd.f32 %v11024, %v11025
        %v11027 = vadd.f32 %v10869, %v10870
        %v11028 = vadd.f32 %v11027, %v10871
        %v11029 = vadd.f32 %v11028, %v10872
        %v11030 = vadd.f32 %v11029, %v10873
        %v11031 = vadd.f32 %v11030, %v10874
        %v11032 = vadd.f32 %v11031, %v10875
        %v11033 = vadd.f32 %v11032, %v10876
        %v11034 = vadd.f32 %v11033, %v10877
        %v11035 = vadd.f32 %v11034, %v10878
        %v11036 = vadd.f32 %v11035, %v10879
        %v11037 = vadd.f32 %v11036, %v10880
        %v11038 = vadd.f32 %v11037, %v10881
        %v11039 = vadd.f32 %v11038, %v10882
        %v11040 = vadd.f32 %v11039, %v10883
        %v11041 = vadd.f32 %v11040, %v10884
        %v11042 = vrot.slane %v11041, 4
        %v11043 = vadd.f32 %v11041, %v11042
        %v11044 = vrot.slane %v11043, 2
        %v11045 = vadd.f32 %v11043, %v11044
        %v11046 = vrot.slane %v11045, 1
        %v11047 = vadd.f32 %v11045, %v11046
        %v11048 = vadd.f32 %v10885, %v10886
        %v11049 = vadd.f32 %v11048, %v10887
        %v11050 = vadd.f32 %v11049, %v10888
        %v11051 = vadd.f32 %v11050, %v10889
        %v11052 = vadd.f32 %v11051, %v10890
        %v11053 = vadd.f32 %v11052, %v10891
        %v11054 = vadd.f32 %v11053, %v10892
        %v11055 = vadd.f32 %v11054, %v10893
        %v11056 = vadd.f32 %v11055, %v10894
        %v11057 = vadd.f32 %v11056, %v10895
        %v11058 = vadd.f32 %v11057, %v10896
        %v11059 = vadd.f32 %v11058, %v10897
        %v11060 = vadd.f32 %v11059, %v10898
        %v11061 = vadd.f32 %v11060, %v10899
        %v11062 = vadd.f32 %v11061, %v10900
        %v11063 = vrot.slane %v11062, 4
        %v11064 = vadd.f32 %v11062, %v11063
        %v11065 = vrot.slane %v11064, 2
        %v11066 = vadd.f32 %v11064, %v11065
        %v11067 = vrot.slane %v11066, 1
        %v11068 = vadd.f32 %v11066, %v11067
        %v11077 = vsel %vm9029, %v10942, %v10921
        %v11078 = vsel %vm9031, %v10963, %v11077
        %v11079 = vsel %vm9033, %v10984, %v11078
        %v11080 = vsel %vm9035, %v11005, %v11079
        %v11081 = vsel %vm9037, %v11026, %v11080
        %v11082 = vsel %vm9039, %v11047, %v11081
        %v11083 = vsel %vm9041, %v11068, %v11082
        %v11085 = vadd.f32 %v10644, %v11083
        %11086 = vst [vmem:[#allocation4] sm:$0xff] %v11085
        %11087 = vst.msk [vmem:[#allocation2] sm:$0xff] %vm10636, %v9047
        %p11088 = scmp.eq.s32.totalorder %s34, 1
        // Predicated region
        $region69: #{tpu_custom_call.1} parent=43 // pred_check
          %p11089 = pneg %p11088
        $region70: #{tpu_custom_call.1} parent=43 // pred_check_branch
          %11091 = sbr.rel (%p11089) target = $region72
        $region71: #{tpu_custom_call.1} parent=43 // pred_region
          %v11092 = vld [vmem:[#allocation3] sm:$0xff]
          %v11093 = vrcp.pop %v11092
          %v11094 = vld [vmem:[#allocation4] sm:$0xff]
          %11096 = vset.pattern.permute.xlu0 0
          %11097 = vperm.xlu0 %11096, %v11093
          %v11098 = vpop.permute.xlu0 %11097
          %v11100 = vmul.f32 %v11094, %v11098
          %11101 = vst [vmem:[%s453] sm:$0xff] %v11100
        $region72: #{tpu_custom_call.1} parent=43 // pred_fallthru
          _
        %s11102 = sand.u32 %s196, 1
        %s11103 = scalar_lea.sflag [#allocation8], %s11102
        %s11104 = sand.u32 %s196, 1
        %s11105 = smul.addr %s11104, 8
        %s11106 = scalar_lea.vmem [#allocation16], %s11105
        // Predicated region
        $region73: #{tpu_custom_call.1} parent=43 // pred_check
          %p11107 = pneg %p206
        $region74: #{tpu_custom_call.1} parent=43 // pred_check_branch
          %11109 = sbr.rel (%p11107) target = $region76
        $region75: #{tpu_custom_call.1} parent=43 // pred_region
          %s11111 = ssub.s32 128, 128
          %11112 = vsyncadd %s11103, %s11111
          %s11113 = smul.addr %s33, 128
          %s11114 = scalar_lea.hbm %s6, %s11113
          %s11116 = sshll.u32 %s11106, 4
          %s11117 = int_to_ptr.vmem [resolvable:$true] %s11116
          %11119 = dma.vmem_to_hbm [thread:$0]  %s11117, 128, %s11114, %s11103
        $region76: #{tpu_custom_call.1} parent=43 // pred_fallthru
          _
      $region44: #{tpu_custom_call.1} parent=5 // pred_fallthru
        _
      %p11120 = scmp.le.s32.totalorder 2, %s24
      // Predicated region
      $region77: #{tpu_custom_call.1} parent=5 // pred_check
        %p11121 = pneg %p11120
      $region78: #{tpu_custom_call.1} parent=5 // pred_check_branch
        %11123 = sbr.rel (%p11121) target = $region80
      $region79: #{tpu_custom_call.1} parent=5 // pred_region
        %s11124 = ssub.s32 %s24, 2
        // Predicated region
        $region81: #{tpu_custom_call.1} parent=79 // pred_check
          %p11125 = pneg %p212
        $region82: #{tpu_custom_call.1} parent=79 // pred_check_branch
          %11127 = sbr.rel (%p11125) target = $region84
        $region83: #{tpu_custom_call.1} parent=79 // pred_region
          %s11128 = sand.u32 %s197, 1
          %s11129 = scalar_lea.sflag [#allocation8], %s11128
          %s11130 = sand.u32 %s197, 1
          %s11131 = smul.addr %s11130, 8
          %s11132 = scalar_lea.vmem [#allocation16], %s11131
          %11133 = dma.done %s11129, 128
        $region84: #{tpu_custom_call.1} parent=79 // pred_fallthru
          _
      $region80: #{tpu_custom_call.1} parent=5 // pred_fallthru
        _
    $region6: #{tpu_custom_call.1} parent=1 // loop_footer
      %s28 = sadd.s32 1, %s24
    $region7: #{tpu_custom_call.1} parent=1 // loop_footer_branch
      %23 = sbr.rel target = $region3
    $region8: #{tpu_custom_call.1} parent=1 // loop_exit
      _
    %11134 = vsyncpa [#allocation7], 1
    %s11135 = scalar_lea.sflag [#allocation7], 1
    %11136 = vsyncpa %s11135, 1
    %11137 = vsyncpa [#allocation12], 1
    %s11138 = scalar_lea.sflag [#allocation12], 1
    %11139 = vsyncpa %s11138, 1
    %11140 = vsyncpa [#allocation15], 1
    %11141 = vsyncpa [#allocation8], 1
    %s11142 = scalar_lea.sflag [#allocation8], 1
    %11143 = vsyncpa %s11142, 1
    %11144 = vsyncpa [#allocation9], 1
    %s11145 = scalar_lea.sflag [#allocation9], 1
    %11146 = vsyncpa %s11145, 1

</llo_original>
